<compile_context>
chip_gen: v7x
topology: tpu7x:2x2x1
jax: 0.10.0
libtpu: 0.0.40
codegen_flags: <defaults>
</compile_context>

<pallas_src>
import functools

import jax
import jax.numpy as jnp
from jax import lax
from jax.experimental import pallas as pl
from jax.experimental.pallas import tpu as pltpu


NHIDDEN = 128               # fixed in SPADE.__init__
LANE = 128
EPS = 1e-5


def _rup(c, m):
    return ((c + m - 1) // m) * m


def _vmem_limit_bytes():
    # Per-generation scoped-VMEM budget (leave ~1/4 headroom); safe fallback.
    try:
        cap = getattr(pltpu.get_tpu_info(), "vmem_capacity_bytes", None)
        if cap:
            return int(min(cap * 3 // 4, 100 * 1024 * 1024))
    except Exception:
        pass
    return 32 * 1024 * 1024


def _compiler_params():
    return pltpu.CompilerParams(dimension_semantics=("parallel",),
                                vmem_limit_bytes=_vmem_limit_bytes())


# -------------------------------- Pallas kernel ------------------------------ #

def spade_conv_kernel(*refs, H, W, lrelu_slope, conv_is_3x3, has_bias,
                      has_residual):
    """Fused SPADE (shared conv+ReLU, gamma/beta conv, InstanceNorm, modulation)
    + optional LeakyReLU + following conv (3x3 or 1x1) + optional residual add.
    One image per grid step."""
    x_ref, seg_ref, sw_ref, sb_ref, gbw_ref, gbb_ref, cw_ref = refs[:7]
    pos = 7
    cb_ref = refs[pos] if has_bias else None
    pos += int(has_bias)
    r_ref = refs[pos] if has_residual else None
    pos += int(has_residual)
    o_ref = refs[pos]
    segp_ref, actp_ref = refs[pos + 1], refs[pos + 2]
    modp_ref = refs[pos + 3] if conv_is_3x3 else None

    Cs = seg_ref.shape[-1]
    Ch = actp_ref.shape[-1]
    Cx = x_ref.shape[-1]
    Cxp = gbb_ref.shape[-1] // 2
    Cout = o_ref.shape[-1]
    HW = H * W

    def tap(scr, kh, kw, c):
        # Shifted (H, W, c) window of the halo scratch -> bf16 MXU LHS.
        t = scr[pl.ds(kh, H), pl.ds(kw, W), :]
        return t.reshape(HW, c).astype(jnp.bfloat16)

    # ---- zero the halo borders once; interiors are rewritten every step -----
    # Invariant: nothing below ever writes the 1-px border of the scratches.
    @pl.when(pl.program_id(0) == 0)
    def _init():
        segp_ref[...] = jnp.zeros_like(segp_ref)
        actp_ref[...] = jnp.zeros_like(actp_ref)
        if modp_ref is not None:
            modp_ref[...] = jnp.zeros_like(modp_ref)

    # ---- mlp_shared: 3x3 conv + ReLU (9 accumulated taps, K = Cs) -----------
    segp_ref[pl.ds(1, H), pl.ds(1, W), :] = seg_ref[0].astype(jnp.float32)
    actv = jnp.zeros((HW, Ch), jnp.float32)
    for kk in range(9):
        kh, kw = divmod(kk, 3)
        actv = actv + jnp.dot(tap(segp_ref, kh, kw, Cs), sw_ref[kk],
                              preferred_element_type=jnp.float32)
    actv = jnp.maximum(actv + sb_ref[...], 0.0)

    # ---- mlp_gamma & mlp_beta: one weight slab (N = 2*Cxp), 9 taps, K = Ch ---
    actp_ref[pl.ds(1, H), pl.ds(1, W), :] = actv.reshape(H, W, Ch)
    gb = jnp.zeros((HW, 2 * Cxp), jnp.float32)
    for kk in range(9):
        kh, kw = divmod(kk, 3)
        gb = gb + jnp.dot(tap(actp_ref, kh, kw, Ch), gbw_ref[kk],
                          preferred_element_type=jnp.float32)
    gb = gb + gbb_ref[...]
    gamma1 = gb[:, :Cx]                 # (1 + gamma); the +1 is folded in bias
    beta = gb[:, Cxp:Cxp + Cx]          # 128-aligned offset slice

    # ---- InstanceNorm2d(affine=False): two-pass stats in f32 ----------------
    x = x_ref[0].reshape(HW, Cx)
    inv_n = 1.0 / HW
    mean = jnp.sum(x, axis=0, keepdims=True) * inv_n
    xc = x - mean
    var = jnp.sum(xc * xc, axis=0, keepdims=True) * inv_n
    out = xc * lax.rsqrt(var + EPS) * gamma1 + beta
    if lrelu_slope is not None:
        out = jnp.where(out >= 0.0, out, lrelu_slope * out)

    # ---- fused conv: 3x3 (conv_0 / conv_1) or 1x1 (conv_s), + residual ------
    if conv_is_3x3:
        modp_ref[pl.ds(1, H), pl.ds(1, W), :] = out.reshape(H, W, Cx)
        y = jnp.zeros((HW, Cout), jnp.float32)
        for kk in range(9):
            kh, kw = divmod(kk, 3)
            y = y + jnp.dot(tap(modp_ref, kh, kw, Cx), cw_ref[kk],
                            preferred_element_type=jnp.float32)
    else:
        y = jnp.dot(out.astype(jnp.bfloat16), cw_ref[...],
                    preferred_element_type=jnp.float32)
    if cb_ref is not None:
        y = y + cb_ref[...]
    if r_ref is not None:
        y = y + r_ref[0].reshape(HW, Cout)
    o_ref[0] = y.reshape(H, W, Cout)


# ------------------------------ pallas_call wrapper -------------------------- #

def spade_conv(x, seg, sp, conv_w, conv_b=None, residual=None, lrelu_slope=None):
    """One fused SPADE(+activation)+conv pallas_call.  conv_w is (9, Cin, Cout)
    for a 3x3 conv or (Cin, Cout) for the bias-free 1x1 shortcut conv."""
    B, H, W, Cx = x.shape
    Cs = seg.shape[-1]
    Ch = sp["shared_w"].shape[-1]
    conv_is_3x3 = conv_w.ndim == 3
    Cout = conv_w.shape[-1]
    cw_idx = (0,) * conv_w.ndim

    kernel = functools.partial(
        spade_conv_kernel, H=H, W=W, lrelu_slope=lrelu_slope,
        conv_is_3x3=conv_is_3x3, has_bias=conv_b is not None,
        has_residual=residual is not None)

    in_specs = [
        pl.BlockSpec((1, H, W, Cx), lambda b: (b, 0, 0, 0)),
        pl.BlockSpec((1, H, W, Cs), lambda b: (b, 0, 0, 0)),
        pl.BlockSpec(sp["shared_w"].shape, lambda b: (0, 0, 0)),
        pl.BlockSpec(sp["shared_b"].shape, lambda b: (0, 0)),
        pl.BlockSpec(sp["gb_w"].shape, lambda b: (0, 0, 0)),
        pl.BlockSpec(sp["gb_b"].shape, lambda b: (0, 0)),
        pl.BlockSpec(conv_w.shape, lambda b: cw_idx),
    ]
    args = [x, seg, sp["shared_w"], sp["shared_b"], sp["gb_w"], sp["gb_b"], conv_w]
    if conv_b is not None:
        in_specs.append(pl.BlockSpec(conv_b.shape, lambda b: (0, 0)))
        args.append(conv_b)
    if residual is not None:
        in_specs.append(pl.BlockSpec((1, H, W, Cout), lambda b: (b, 0, 0, 0)))
        args.append(residual)

    scratch = [pltpu.VMEM((H + 2, W + 2, Cs), jnp.float32),
               pltpu.VMEM((H + 2, W + 2, Ch), jnp.float32)]
    if conv_is_3x3:
        scratch.append(pltpu.VMEM((H + 2, W + 2, Cx), jnp.float32))

    return pl.pallas_call(
        kernel,
        out_shape=jax.ShapeDtypeStruct((B, H, W, Cout), jnp.float32),
        grid=(B,),
        in_specs=in_specs,
        out_specs=pl.BlockSpec((1, H, W, Cout), lambda b: (b, 0, 0, 0)),
        scratch_shapes=scratch,
        compiler_params=_compiler_params(),
    )(*args)


# ---------------------------------- module glue ------------------------------ #

def nearest_resize(seg, H, W):
    # F.interpolate(mode='nearest'): src = floor(dst * in / out)
    B, Hs, Ws, C = seg.shape
    src_h = (jnp.arange(H) * Hs) // H
    src_w = (jnp.arange(W) * Ws) // W
    return seg[:, src_h[:, None], src_w[None, :], :]


def _pad_axis(a, axis, size):
    pads = [(0, 0)] * a.ndim
    pads[axis] = (0, size - a.shape[axis])
    return jnp.pad(a, pads)


def spade_resnet_block(x, seg, kp, learned_shortcut):
    B, H, W, fin = x.shape
    # segmap resized once; kept at (near-)real channel count, bf16 in HBM.
    seg_r = nearest_resize(seg, H, W)
    seg_r = _pad_axis(seg_r, 3, _rup(seg_r.shape[-1], 8)).astype(jnp.bfloat16)

    if learned_shortcut:
        # norm_s + conv_s (1x1, bias-free) in one fused kernel
        x_s = spade_conv(x, seg_r, kp["norm_s"], kp["conv_s_w"])
    else:
        x_s = x

    dx = spade_conv(x, seg_r, kp["norm_0"], *kp["conv_0"], lrelu_slope=0.2)
    out = spade_conv(dx, seg_r, kp["norm_1"], *kp["conv_1"],
                     residual=x_s, lrelu_slope=0.2)
    return out


# --------------------------- parameter construction -------------------------- #

def make_spade_params(key, norm_nc, label_nc):
    ks = jax.random.split(key, 6)
    s = 0.05
    return {
        "shared_w": s * jax.random.normal(ks[0], (3, 3, label_nc, NHIDDEN), jnp.float32),
        "shared_b": s * jax.random.normal(ks[1], (NHIDDEN,), jnp.float32),
        "gamma_w": s * jax.random.normal(ks[2], (3, 3, NHIDDEN, norm_nc), jnp.float32),
        "gamma_b": s * jax.random.normal(ks[3], (norm_nc,), jnp.float32),
        "beta_w": s * jax.random.normal(ks[4], (3, 3, NHIDDEN, norm_nc), jnp.float32),
        "beta_b": s * jax.random.normal(ks[5], (norm_nc,), jnp.float32),
    }


def make_block_params(key, fin, fout, semantic_nc):
    fmid = min(fin, fout)
    ks = jax.random.split(key, 8)
    s = 0.05
    p = {
        "conv_0_w": s * jax.random.normal(ks[0], (3, 3, fin, fmid), jnp.float32),
        "conv_0_b": s * jax.random.normal(ks[1], (fmid,), jnp.float32),
        "conv_1_w": s * jax.random.normal(ks[2], (3, 3, fmid, fout), jnp.float32),
        "conv_1_b": s * jax.random.normal(ks[3], (fout,), jnp.float32),
        "norm_0": make_spade_params(ks[4], fin, semantic_nc),
        "norm_1": make_spade_params(ks[5], fmid, semantic_nc),
    }
    if fin != fout:
        p["conv_s_w"] = s * jax.random.normal(ks[6], (fin, fout), jnp.float32)
        p["norm_s"] = make_spade_params(ks[7], fin, semantic_nc)
    return p


def _prep_conv3x3(w, b):
    """(3,3,Cin,Cout) HWIO -> per-tap (9,Cin,Cout) bf16 slab + (1,Cout) f32 bias."""
    cin, cout = w.shape[2], w.shape[3]
    return (w.reshape(9, cin, cout).astype(jnp.bfloat16),
            b.reshape(1, cout).astype(jnp.float32))


def _prep_spade(p):
    cs, ch = p["shared_w"].shape[2], p["shared_w"].shape[3]
    csq = _rup(cs, 8)                      # even, sublane-friendly bf16 K
    cx = p["gamma_w"].shape[3]
    cxp = _rup(cx, LANE)                   # lane-aligned gamma/beta split
    sw = _pad_axis(p["shared_w"], 2, csq).reshape(9, csq, ch).astype(jnp.bfloat16)
    sb = p["shared_b"].reshape(1, ch).astype(jnp.float32)
    gw = _pad_axis(p["gamma_w"], 3, cxp)
    bw = _pad_axis(p["beta_w"], 3, cxp)
    gb_w = jnp.concatenate([gw, bw], axis=3).reshape(9, ch, 2 * cxp).astype(jnp.bfloat16)
    gb_b = jnp.concatenate([_pad_axis(p["gamma_b"] + 1.0, 0, cxp),   # fold (1+gamma)
                            _pad_axis(p["beta_b"], 0, cxp)], axis=0)
    return {"shared_w": sw, "shared_b": sb, "gb_w": gb_w,
            "gb_b": gb_b.reshape(1, 2 * cxp).astype(jnp.float32)}


def prep_block_params(p):
    kp = {"conv_0": _prep_conv3x3(p["conv_0_w"], p["conv_0_b"]),
          "conv_1": _prep_conv3x3(p["conv_1_w"], p["conv_1_b"]),
          "norm_0": _prep_spade(p["norm_0"]),
          "norm_1": _prep_spade(p["norm_1"])}
    if "conv_s_w" in p:
        kp["conv_s_w"] = p["conv_s_w"].astype(jnp.bfloat16)
        kp["norm_s"] = _prep_spade(p["norm_s"])
    return kp


# ------------------------------ pure-JAX reference --------------------------- #
# Matches the kernels' precision policy: conv/matmul inputs cast to bf16, f32
# accumulation, InstanceNorm / modulation / residual in f32.

def _conv3x3_ref(x, w, b):
    y = lax.conv_general_dilated(x.astype(jnp.bfloat16), w.astype(jnp.bfloat16),
                                 (1, 1), "SAME",
                                 dimension_numbers=("NHWC", "HWIO", "NHWC"),
                                 preferred_element_type=jnp.float32)
    return y + b.reshape(1, 1, 1, -1)


def _instance_norm_ref(x, eps=EPS):
    mean = x.mean(axis=(1, 2), keepdims=True)
    var = ((x - mean) ** 2).mean(axis=(1, 2), keepdims=True)
    return (x - mean) * lax.rsqrt(var + eps)


def _spade_ref(x, seg_r, p):
    actv = jnp.maximum(_conv3x3_ref(seg_r, p["shared_w"], p["shared_b"]), 0.0)
    gamma = _conv3x3_ref(actv, p["gamma_w"], p["gamma_b"])
    beta = _conv3x3_ref(actv, p["beta_w"], p["beta_b"])
    return _instance_norm_ref(x) * (1.0 + gamma) + beta


def _block_ref(x, seg, p, learned_shortcut):
    B, H, W, _ = x.shape
    seg_r = nearest_resize(seg, H, W)
    if learned_shortcut:
        ns = _spade_ref(x, seg_r, p["norm_s"])
        x_s = jnp.einsum("bhwc,cd->bhwd", ns.astype(jnp.bfloat16),
                         p["conv_s_w"].astype(jnp.bfloat16),
                         preferred_element_type=jnp.float32)
    else:
        x_s = x
    lrelu = lambda v: jnp.where(v >= 0.0, v, 0.2 * v)
    dx = _conv3x3_ref(lrelu(_spade_ref(x, seg_r, p["norm_0"])),
                      p["conv_0_w"], p["conv_0_b"])
    dx = _conv3x3_ref(lrelu(_spade_ref(dx, seg_r, p["norm_1"])),
                      p["conv_1_w"], p["conv_1_b"])
    return x_s + dx


# ----------------------------------- main ------------------------------------ #

if __name__ == "__main__":
    key = jax.random.PRNGKey(0)
    k_x, k_seg, k_p = jax.random.split(key, 3)

    B, H, W = 2, 16, 16
    fin, fout, semantic_nc = 4, 8, 3
    learned_shortcut = fin != fout

    # PyTorch NCHW (2, 4, 16, 16) -> NHWC here; segmap at half resolution.
    x = jax.random.normal(k_x, (B, H, W, fin), jnp.float32)
    seg = jax.random.normal(k_seg, (B, H // 2, W // 2, semantic_nc), jnp.float32)

    raw_params = make_block_params(k_p, fin, fout, semantic_nc)
    kparams = prep_block_params(raw_params)

    out = spade_resnet_block(x, seg, kparams, learned_shortcut)
    out = jax.block_until_ready(out)

    ref = _block_ref(x, seg, raw_params, learned_shortcut)
    assert out.shape == (B, H, W, fout)
    # Tolerance covers bf16 rounding-boundary divergence between the per-tap
    # accumulation order and lax.conv's accumulation order.
    err = float(jnp.max(jnp.abs(out - ref)))
    assert jnp.allclose(out, ref, atol=1e-2, rtol=1e-2), err

    print("KERNEL_OK")
</pallas_src>

<mosaic_0001>
module attributes {stable_mosaic.version = 11 : i64} {
  func.func @spade_conv_kernel(%arg0: i32, %arg1: memref<1x16x16x4xf32, #tpu.memory_space<vmem>>, %arg2: memref<1x16x16x8xbf16, #tpu.memory_space<vmem>>, %arg3: memref<9x8x128xbf16, #tpu.memory_space<vmem>>, %arg4: memref<1x128xf32, #tpu.memory_space<vmem>>, %arg5: memref<9x128x256xbf16, #tpu.memory_space<vmem>>, %arg6: memref<1x256xf32, #tpu.memory_space<vmem>>, %arg7: memref<4x8xbf16, #tpu.memory_space<vmem>>, %arg8: memref<1x16x16x8xf32, #tpu.memory_space<vmem>>, %arg9: memref<18x18x8xf32, #tpu.memory_space<vmem>>, %arg10: memref<18x18x128xf32, #tpu.memory_space<vmem>>) attributes {dimension_semantics = [#tpu.dimension_semantics<parallel>], iteration_bounds = array<i64: 2>, scalar_prefetch = 0 : i64, scratch_operands = 2 : i64, tpu.core_type = #tpu.core_type<tc>, window_params = [{transform_indices = @transform_0, window_bounds = array<i64: 1, 16, 16, 4>}, {transform_indices = @transform_1, window_bounds = array<i64: 1, 16, 16, 8>}, {pipeline_mode = #tpu.pipeline_mode<synchronous>, transform_indices = @transform_2, window_bounds = array<i64: 9, 8, 128>}, {pipeline_mode = #tpu.pipeline_mode<synchronous>, transform_indices = @transform_3, window_bounds = array<i64: 1, 128>}, {pipeline_mode = #tpu.pipeline_mode<synchronous>, transform_indices = @transform_4, window_bounds = array<i64: 9, 128, 256>}, {pipeline_mode = #tpu.pipeline_mode<synchronous>, transform_indices = @transform_5, window_bounds = array<i64: 1, 256>}, {pipeline_mode = #tpu.pipeline_mode<synchronous>, transform_indices = @transform_6, window_bounds = array<i64: 4, 8>}, {transform_indices = @transform_7, window_bounds = array<i64: 1, 16, 16, 8>}]} {
    %c0_i32 = arith.constant 0 : i32
    %0 = arith.cmpi eq, %arg0, %c0_i32 : i32
    %1 = arith.extui %0 : i1 to i32
    %c0_i32_0 = arith.constant 0 : i32
    %2 = arith.cmpi ne, %1, %c0_i32_0 : i32
    scf.if %2 {
      %cst_150 = arith.constant 0.000000e+00 : f32
      %175 = vector.broadcast %cst_150 : f32 to vector<18x18x8xf32>
      %c0_151 = arith.constant 0 : index
      %c0_152 = arith.constant 0 : index
      %c0_153 = arith.constant 0 : index
      %176 = vector.load %arg9[%c0_151, %c0_152, %c0_153] : memref<18x18x8xf32, #tpu.memory_space<vmem>>, vector<18x18x8xf32>
      tpu.vector_store %arg9[%c0_151, %c0_152, %c0_153], %175 {strides = array<i32>} : memref<18x18x8xf32, #tpu.memory_space<vmem>>, vector<18x18x8xf32>,
      %cst_154 = arith.constant 0.000000e+00 : f32
      %177 = vector.broadcast %cst_154 : f32 to vector<18x18x128xf32>
      %c0_155 = arith.constant 0 : index
      %c0_156 = arith.constant 0 : index
      %c0_157 = arith.constant 0 : index
      %178 = vector.load %arg10[%c0_155, %c0_156, %c0_157] : memref<18x18x128xf32, #tpu.memory_space<vmem>>, vector<18x18x128xf32>
      tpu.vector_store %arg10[%c0_155, %c0_156, %c0_157], %177 {strides = array<i32>} : memref<18x18x128xf32, #tpu.memory_space<vmem>>, vector<18x18x128xf32>,
    } else {
    }
    %c0 = arith.constant 0 : index
    %c0_1 = arith.constant 0 : index
    %c0_2 = arith.constant 0 : index
    %c0_3 = arith.constant 0 : index
    %3 = vector.load %arg2[%c0, %c0_1, %c0_2, %c0_3] : memref<1x16x16x8xbf16, #tpu.memory_space<vmem>>, vector<1x16x16x8xbf16>
    %4 = vector.shape_cast %3 : vector<1x16x16x8xbf16> to vector<16x16x8xbf16>
    %5 = arith.extf %4 : vector<16x16x8xbf16> to vector<16x16x8xf32>
    %c1 = arith.constant 1 : index
    %c1_4 = arith.constant 1 : index
    %c0_5 = arith.constant 0 : index
    %6 = vector.load %arg9[%c1, %c1_4, %c0_5] : memref<18x18x8xf32, #tpu.memory_space<vmem>>, vector<16x16x8xf32>
    tpu.vector_store %arg9[%c1, %c1_4, %c0_5], %5 {strides = array<i32>} : memref<18x18x8xf32, #tpu.memory_space<vmem>>, vector<16x16x8xf32>,
    %cst = arith.constant 0.000000e+00 : f32
    %7 = vector.broadcast %cst : f32 to vector<256x128xf32>
    %c0_6 = arith.constant 0 : index
    %c0_7 = arith.constant 0 : index
    %c0_8 = arith.constant 0 : index
    %8 = vector.load %arg9[%c0_6, %c0_7, %c0_8] : memref<18x18x8xf32, #tpu.memory_space<vmem>>, vector<16x16x8xf32>
    %9 = vector.shape_cast %8 : vector<16x16x8xf32> to vector<256x8xf32>
    %10 = arith.truncf %9 : vector<256x8xf32> to vector<256x8xbf16>
    %c0_9 = arith.constant 0 : index
    %c0_10 = arith.constant 0 : index
    %c0_11 = arith.constant 0 : index
    %11 = vector.load %arg3[%c0_9, %c0_10, %c0_11] : memref<9x8x128xbf16, #tpu.memory_space<vmem>>, vector<1x8x128xbf16>
    %12 = vector.shape_cast %11 : vector<1x8x128xbf16> to vector<8x128xbf16>
    %cst_12 = arith.constant dense<0.000000e+00> : vector<256x128xf32>
    %13 = tpu.matmul %10, %12, %cst_12 {dimension_numbers = #tpu.dot_dimension_numbers<[1], [0], [0], [1], [0, 0, 1, 1], [], []>} : vector<256x8xbf16>, vector<8x128xbf16>, vector<256x128xf32> -> vector<256x128xf32>
    %14 = arith.addf %7, %13 : vector<256x128xf32>
    %c0_13 = arith.constant 0 : index
    %c1_14 = arith.constant 1 : index
    %c0_15 = arith.constant 0 : index
    %15 = vector.load %arg9[%c0_13, %c1_14, %c0_15] : memref<18x18x8xf32, #tpu.memory_space<vmem>>, vector<16x16x8xf32>
    %16 = vector.shape_cast %15 : vector<16x16x8xf32> to vector<256x8xf32>
    %17 = arith.truncf %16 : vector<256x8xf32> to vector<256x8xbf16>
    %c1_16 = arith.constant 1 : index
    %c0_17 = arith.constant 0 : index
    %c0_18 = arith.constant 0 : index
    %18 = vector.load %arg3[%c1_16, %c0_17, %c0_18] : memref<9x8x128xbf16, #tpu.memory_space<vmem>>, vector<1x8x128xbf16>
    %19 = vector.shape_cast %18 : vector<1x8x128xbf16> to vector<8x128xbf16>
    %cst_19 = arith.constant dense<0.000000e+00> : vector<256x128xf32>
    %20 = tpu.matmul %17, %19, %cst_19 {dimension_numbers = #tpu.dot_dimension_numbers<[1], [0], [0], [1], [0, 0, 1, 1], [], []>} : vector<256x8xbf16>, vector<8x128xbf16>, vector<256x128xf32> -> vector<256x128xf32>
    %21 = arith.addf %14, %20 : vector<256x128xf32>
    %c0_20 = arith.constant 0 : index
    %c2 = arith.constant 2 : index
    %c0_21 = arith.constant 0 : index
    %22 = vector.load %arg9[%c0_20, %c2, %c0_21] : memref<18x18x8xf32, #tpu.memory_space<vmem>>, vector<16x16x8xf32>
    %23 = vector.shape_cast %22 : vector<16x16x8xf32> to vector<256x8xf32>
    %24 = arith.truncf %23 : vector<256x8xf32> to vector<256x8xbf16>
    %c2_22 = arith.constant 2 : index
    %c0_23 = arith.constant 0 : index
    %c0_24 = arith.constant 0 : index
    %25 = vector.load %arg3[%c2_22, %c0_23, %c0_24] : memref<9x8x128xbf16, #tpu.memory_space<vmem>>, vector<1x8x128xbf16>
    %26 = vector.shape_cast %25 : vector<1x8x128xbf16> to vector<8x128xbf16>
    %cst_25 = arith.constant dense<0.000000e+00> : vector<256x128xf32>
    %27 = tpu.matmul %24, %26, %cst_25 {dimension_numbers = #tpu.dot_dimension_numbers<[1], [0], [0], [1], [0, 0, 1, 1], [], []>} : vector<256x8xbf16>, vector<8x128xbf16>, vector<256x128xf32> -> vector<256x128xf32>
    %28 = arith.addf %21, %27 : vector<256x128xf32>
    %c1_26 = arith.constant 1 : index
    %c0_27 = arith.constant 0 : index
    %c0_28 = arith.constant 0 : index
    %29 = vector.load %arg9[%c1_26, %c0_27, %c0_28] : memref<18x18x8xf32, #tpu.memory_space<vmem>>, vector<16x16x8xf32>
    %30 = vector.shape_cast %29 : vector<16x16x8xf32> to vector<256x8xf32>
    %31 = arith.truncf %30 : vector<256x8xf32> to vector<256x8xbf16>
    %c3 = arith.constant 3 : index
    %c0_29 = arith.constant 0 : index
    %c0_30 = arith.constant 0 : index
    %32 = vector.load %arg3[%c3, %c0_29, %c0_30] : memref<9x8x128xbf16, #tpu.memory_space<vmem>>, vector<1x8x128xbf16>
    %33 = vector.shape_cast %32 : vector<1x8x128xbf16> to vector<8x128xbf16>
    %cst_31 = arith.constant dense<0.000000e+00> : vector<256x128xf32>
    %34 = tpu.matmul %31, %33, %cst_31 {dimension_numbers = #tpu.dot_dimension_numbers<[1], [0], [0], [1], [0, 0, 1, 1], [], []>} : vector<256x8xbf16>, vector<8x128xbf16>, vector<256x128xf32> -> vector<256x128xf32>
    %35 = arith.addf %28, %34 : vector<256x128xf32>
    %c1_32 = arith.constant 1 : index
    %c1_33 = arith.constant 1 : index
    %c0_34 = arith.constant 0 : index
    %36 = vector.load %arg9[%c1_32, %c1_33, %c0_34] : memref<18x18x8xf32, #tpu.memory_space<vmem>>, vector<16x16x8xf32>
    %37 = vector.shape_cast %36 : vector<16x16x8xf32> to vector<256x8xf32>
    %38 = arith.truncf %37 : vector<256x8xf32> to vector<256x8xbf16>
    %c4 = arith.constant 4 : index
    %c0_35 = arith.constant 0 : index
    %c0_36 = arith.constant 0 : index
    %39 = vector.load %arg3[%c4, %c0_35, %c0_36] : memref<9x8x128xbf16, #tpu.memory_space<vmem>>, vector<1x8x128xbf16>
    %40 = vector.shape_cast %39 : vector<1x8x128xbf16> to vector<8x128xbf16>
    %cst_37 = arith.constant dense<0.000000e+00> : vector<256x128xf32>
    %41 = tpu.matmul %38, %40, %cst_37 {dimension_numbers = #tpu.dot_dimension_numbers<[1], [0], [0], [1], [0, 0, 1, 1], [], []>} : vector<256x8xbf16>, vector<8x128xbf16>, vector<256x128xf32> -> vector<256x128xf32>
    %42 = arith.addf %35, %41 : vector<256x128xf32>
    %c1_38 = arith.constant 1 : index
    %c2_39 = arith.constant 2 : index
    %c0_40 = arith.constant 0 : index
    %43 = vector.load %arg9[%c1_38, %c2_39, %c0_40] : memref<18x18x8xf32, #tpu.memory_space<vmem>>, vector<16x16x8xf32>
    %44 = vector.shape_cast %43 : vector<16x16x8xf32> to vector<256x8xf32>
    %45 = arith.truncf %44 : vector<256x8xf32> to vector<256x8xbf16>
    %c5 = arith.constant 5 : index
    %c0_41 = arith.constant 0 : index
    %c0_42 = arith.constant 0 : index
    %46 = vector.load %arg3[%c5, %c0_41, %c0_42] : memref<9x8x128xbf16, #tpu.memory_space<vmem>>, vector<1x8x128xbf16>
    %47 = vector.shape_cast %46 : vector<1x8x128xbf16> to vector<8x128xbf16>
    %cst_43 = arith.constant dense<0.000000e+00> : vector<256x128xf32>
    %48 = tpu.matmul %45, %47, %cst_43 {dimension_numbers = #tpu.dot_dimension_numbers<[1], [0], [0], [1], [0, 0, 1, 1], [], []>} : vector<256x8xbf16>, vector<8x128xbf16>, vector<256x128xf32> -> vector<256x128xf32>
    %49 = arith.addf %42, %48 : vector<256x128xf32>
    %c2_44 = arith.constant 2 : index
    %c0_45 = arith.constant 0 : index
    %c0_46 = arith.constant 0 : index
    %50 = vector.load %arg9[%c2_44, %c0_45, %c0_46] : memref<18x18x8xf32, #tpu.memory_space<vmem>>, vector<16x16x8xf32>
    %51 = vector.shape_cast %50 : vector<16x16x8xf32> to vector<256x8xf32>
    %52 = arith.truncf %51 : vector<256x8xf32> to vector<256x8xbf16>
    %c6 = arith.constant 6 : index
    %c0_47 = arith.constant 0 : index
    %c0_48 = arith.constant 0 : index
    %53 = vector.load %arg3[%c6, %c0_47, %c0_48] : memref<9x8x128xbf16, #tpu.memory_space<vmem>>, vector<1x8x128xbf16>
    %54 = vector.shape_cast %53 : vector<1x8x128xbf16> to vector<8x128xbf16>
    %cst_49 = arith.constant dense<0.000000e+00> : vector<256x128xf32>
    %55 = tpu.matmul %52, %54, %cst_49 {dimension_numbers = #tpu.dot_dimension_numbers<[1], [0], [0], [1], [0, 0, 1, 1], [], []>} : vector<256x8xbf16>, vector<8x128xbf16>, vector<256x128xf32> -> vector<256x128xf32>
    %56 = arith.addf %49, %55 : vector<256x128xf32>
    %c2_50 = arith.constant 2 : index
    %c1_51 = arith.constant 1 : index
    %c0_52 = arith.constant 0 : index
    %57 = vector.load %arg9[%c2_50, %c1_51, %c0_52] : memref<18x18x8xf32, #tpu.memory_space<vmem>>, vector<16x16x8xf32>
    %58 = vector.shape_cast %57 : vector<16x16x8xf32> to vector<256x8xf32>
    %59 = arith.truncf %58 : vector<256x8xf32> to vector<256x8xbf16>
    %c7 = arith.constant 7 : index
    %c0_53 = arith.constant 0 : index
    %c0_54 = arith.constant 0 : index
    %60 = vector.load %arg3[%c7, %c0_53, %c0_54] : memref<9x8x128xbf16, #tpu.memory_space<vmem>>, vector<1x8x128xbf16>
    %61 = vector.shape_cast %60 : vector<1x8x128xbf16> to vector<8x128xbf16>
    %cst_55 = arith.constant dense<0.000000e+00> : vector<256x128xf32>
    %62 = tpu.matmul %59, %61, %cst_55 {dimension_numbers = #tpu.dot_dimension_numbers<[1], [0], [0], [1], [0, 0, 1, 1], [], []>} : vector<256x8xbf16>, vector<8x128xbf16>, vector<256x128xf32> -> vector<256x128xf32>
    %63 = arith.addf %56, %62 : vector<256x128xf32>
    %c2_56 = arith.constant 2 : index
    %c2_57 = arith.constant 2 : index
    %c0_58 = arith.constant 0 : index
    %64 = vector.load %arg9[%c2_56, %c2_57, %c0_58] : memref<18x18x8xf32, #tpu.memory_space<vmem>>, vector<16x16x8xf32>
    %65 = vector.shape_cast %64 : vector<16x16x8xf32> to vector<256x8xf32>
    %66 = arith.truncf %65 : vector<256x8xf32> to vector<256x8xbf16>
    %c8 = arith.constant 8 : index
    %c0_59 = arith.constant 0 : index
    %c0_60 = arith.constant 0 : index
    %67 = vector.load %arg3[%c8, %c0_59, %c0_60] : memref<9x8x128xbf16, #tpu.memory_space<vmem>>, vector<1x8x128xbf16>
    %68 = vector.shape_cast %67 : vector<1x8x128xbf16> to vector<8x128xbf16>
    %cst_61 = arith.constant dense<0.000000e+00> : vector<256x128xf32>
    %69 = tpu.matmul %66, %68, %cst_61 {dimension_numbers = #tpu.dot_dimension_numbers<[1], [0], [0], [1], [0, 0, 1, 1], [], []>} : vector<256x8xbf16>, vector<8x128xbf16>, vector<256x128xf32> -> vector<256x128xf32>
    %70 = arith.addf %63, %69 : vector<256x128xf32>
    %c0_62 = arith.constant 0 : index
    %c0_63 = arith.constant 0 : index
    %71 = vector.load %arg4[%c0_62, %c0_63] : memref<1x128xf32, #tpu.memory_space<vmem>>, vector<1x128xf32>
    %72 = vector.broadcast %71 : vector<1x128xf32> to vector<256x128xf32>
    %73 = arith.addf %70, %72 : vector<256x128xf32>
    %cst_64 = arith.constant 0.000000e+00 : f32
    %74 = vector.broadcast %cst_64 : f32 to vector<256x128xf32>
    %75 = arith.maximumf %73, %74 : vector<256x128xf32>
    %76 = vector.shape_cast %75 : vector<256x128xf32> to vector<16x16x128xf32>
    %c1_65 = arith.constant 1 : index
    %c1_66 = arith.constant 1 : index
    %c0_67 = arith.constant 0 : index
    %77 = vector.load %arg10[%c1_65, %c1_66, %c0_67] : memref<18x18x128xf32, #tpu.memory_space<vmem>>, vector<16x16x128xf32>
    tpu.vector_store %arg10[%c1_65, %c1_66, %c0_67], %76 {strides = array<i32>} : memref<18x18x128xf32, #tpu.memory_space<vmem>>, vector<16x16x128xf32>,
    %cst_68 = arith.constant 0.000000e+00 : f32
    %78 = vector.broadcast %cst_68 : f32 to vector<256x256xf32>
    %c0_69 = arith.constant 0 : index
    %c0_70 = arith.constant 0 : index
    %c0_71 = arith.constant 0 : index
    %79 = vector.load %arg10[%c0_69, %c0_70, %c0_71] : memref<18x18x128xf32, #tpu.memory_space<vmem>>, vector<16x16x128xf32>
    %80 = vector.shape_cast %79 : vector<16x16x128xf32> to vector<256x128xf32>
    %81 = arith.truncf %80 : vector<256x128xf32> to vector<256x128xbf16>
    %c0_72 = arith.constant 0 : index
    %c0_73 = arith.constant 0 : index
    %c0_74 = arith.constant 0 : index
    %82 = vector.load %arg5[%c0_72, %c0_73, %c0_74] : memref<9x128x256xbf16, #tpu.memory_space<vmem>>, vector<1x128x256xbf16>
    %83 = vector.shape_cast %82 : vector<1x128x256xbf16> to vector<128x256xbf16>
    %cst_75 = arith.constant dense<0.000000e+00> : vector<256x256xf32>
    %84 = tpu.matmul %81, %83, %cst_75 {dimension_numbers = #tpu.dot_dimension_numbers<[1], [0], [0], [1], [0, 0, 1, 1], [], []>} : vector<256x128xbf16>, vector<128x256xbf16>, vector<256x256xf32> -> vector<256x256xf32>
    %85 = arith.addf %78, %84 : vector<256x256xf32>
    %c0_76 = arith.constant 0 : index
    %c1_77 = arith.constant 1 : index
    %c0_78 = arith.constant 0 : index
    %86 = vector.load %arg10[%c0_76, %c1_77, %c0_78] : memref<18x18x128xf32, #tpu.memory_space<vmem>>, vector<16x16x128xf32>
    %87 = vector.shape_cast %86 : vector<16x16x128xf32> to vector<256x128xf32>
    %88 = arith.truncf %87 : vector<256x128xf32> to vector<256x128xbf16>
    %c1_79 = arith.constant 1 : index
    %c0_80 = arith.constant 0 : index
    %c0_81 = arith.constant 0 : index
    %89 = vector.load %arg5[%c1_79, %c0_80, %c0_81] : memref<9x128x256xbf16, #tpu.memory_space<vmem>>, vector<1x128x256xbf16>
    %90 = vector.shape_cast %89 : vector<1x128x256xbf16> to vector<128x256xbf16>
    %cst_82 = arith.constant dense<0.000000e+00> : vector<256x256xf32>
    %91 = tpu.matmul %88, %90, %cst_82 {dimension_numbers = #tpu.dot_dimension_numbers<[1], [0], [0], [1], [0, 0, 1, 1], [], []>} : vector<256x128xbf16>, vector<128x256xbf16>, vector<256x256xf32> -> vector<256x256xf32>
    %92 = arith.addf %85, %91 : vector<256x256xf32>
    %c0_83 = arith.constant 0 : index
    %c2_84 = arith.constant 2 : index
    %c0_85 = arith.constant 0 : index
    %93 = vector.load %arg10[%c0_83, %c2_84, %c0_85] : memref<18x18x128xf32, #tpu.memory_space<vmem>>, vector<16x16x128xf32>
    %94 = vector.shape_cast %93 : vector<16x16x128xf32> to vector<256x128xf32>
    %95 = arith.truncf %94 : vector<256x128xf32> to vector<256x128xbf16>
    %c2_86 = arith.constant 2 : index
    %c0_87 = arith.constant 0 : index
    %c0_88 = arith.constant 0 : index
    %96 = vector.load %arg5[%c2_86, %c0_87, %c0_88] : memref<9x128x256xbf16, #tpu.memory_space<vmem>>, vector<1x128x256xbf16>
    %97 = vector.shape_cast %96 : vector<1x128x256xbf16> to vector<128x256xbf16>
    %cst_89 = arith.constant dense<0.000000e+00> : vector<256x256xf32>
    %98 = tpu.matmul %95, %97, %cst_89 {dimension_numbers = #tpu.dot_dimension_numbers<[1], [0], [0], [1], [0, 0, 1, 1], [], []>} : vector<256x128xbf16>, vector<128x256xbf16>, vector<256x256xf32> -> vector<256x256xf32>
    %99 = arith.addf %92, %98 : vector<256x256xf32>
    %c1_90 = arith.constant 1 : index
    %c0_91 = arith.constant 0 : index
    %c0_92 = arith.constant 0 : index
    %100 = vector.load %arg10[%c1_90, %c0_91, %c0_92] : memref<18x18x128xf32, #tpu.memory_space<vmem>>, vector<16x16x128xf32>
    %101 = vector.shape_cast %100 : vector<16x16x128xf32> to vector<256x128xf32>
    %102 = arith.truncf %101 : vector<256x128xf32> to vector<256x128xbf16>
    %c3_93 = arith.constant 3 : index
    %c0_94 = arith.constant 0 : index
    %c0_95 = arith.constant 0 : index
    %103 = vector.load %arg5[%c3_93, %c0_94, %c0_95] : memref<9x128x256xbf16, #tpu.memory_space<vmem>>, vector<1x128x256xbf16>
    %104 = vector.shape_cast %103 : vector<1x128x256xbf16> to vector<128x256xbf16>
    %cst_96 = arith.constant dense<0.000000e+00> : vector<256x256xf32>
    %105 = tpu.matmul %102, %104, %cst_96 {dimension_numbers = #tpu.dot_dimension_numbers<[1], [0], [0], [1], [0, 0, 1, 1], [], []>} : vector<256x128xbf16>, vector<128x256xbf16>, vector<256x256xf32> -> vector<256x256xf32>
    %106 = arith.addf %99, %105 : vector<256x256xf32>
    %c1_97 = arith.constant 1 : index
    %c1_98 = arith.constant 1 : index
    %c0_99 = arith.constant 0 : index
    %107 = vector.load %arg10[%c1_97, %c1_98, %c0_99] : memref<18x18x128xf32, #tpu.memory_space<vmem>>, vector<16x16x128xf32>
    %108 = vector.shape_cast %107 : vector<16x16x128xf32> to vector<256x128xf32>
    %109 = arith.truncf %108 : vector<256x128xf32> to vector<256x128xbf16>
    %c4_100 = arith.constant 4 : index
    %c0_101 = arith.constant 0 : index
    %c0_102 = arith.constant 0 : index
    %110 = vector.load %arg5[%c4_100, %c0_101, %c0_102] : memref<9x128x256xbf16, #tpu.memory_space<vmem>>, vector<1x128x256xbf16>
    %111 = vector.shape_cast %110 : vector<1x128x256xbf16> to vector<128x256xbf16>
    %cst_103 = arith.constant dense<0.000000e+00> : vector<256x256xf32>
    %112 = tpu.matmul %109, %111, %cst_103 {dimension_numbers = #tpu.dot_dimension_numbers<[1], [0], [0], [1], [0, 0, 1, 1], [], []>} : vector<256x128xbf16>, vector<128x256xbf16>, vector<256x256xf32> -> vector<256x256xf32>
    %113 = arith.addf %106, %112 : vector<256x256xf32>
    %c1_104 = arith.constant 1 : index
    %c2_105 = arith.constant 2 : index
    %c0_106 = arith.constant 0 : index
    %114 = vector.load %arg10[%c1_104, %c2_105, %c0_106] : memref<18x18x128xf32, #tpu.memory_space<vmem>>, vector<16x16x128xf32>
    %115 = vector.shape_cast %114 : vector<16x16x128xf32> to vector<256x128xf32>
    %116 = arith.truncf %115 : vector<256x128xf32> to vector<256x128xbf16>
    %c5_107 = arith.constant 5 : index
    %c0_108 = arith.constant 0 : index
    %c0_109 = arith.constant 0 : index
    %117 = vector.load %arg5[%c5_107, %c0_108, %c0_109] : memref<9x128x256xbf16, #tpu.memory_space<vmem>>, vector<1x128x256xbf16>
    %118 = vector.shape_cast %117 : vector<1x128x256xbf16> to vector<128x256xbf16>
    %cst_110 = arith.constant dense<0.000000e+00> : vector<256x256xf32>
    %119 = tpu.matmul %116, %118, %cst_110 {dimension_numbers = #tpu.dot_dimension_numbers<[1], [0], [0], [1], [0, 0, 1, 1], [], []>} : vector<256x128xbf16>, vector<128x256xbf16>, vector<256x256xf32> -> vector<256x256xf32>
    %120 = arith.addf %113, %119 : vector<256x256xf32>
    %c2_111 = arith.constant 2 : index
    %c0_112 = arith.constant 0 : index
    %c0_113 = arith.constant 0 : index
    %121 = vector.load %arg10[%c2_111, %c0_112, %c0_113] : memref<18x18x128xf32, #tpu.memory_space<vmem>>, vector<16x16x128xf32>
    %122 = vector.shape_cast %121 : vector<16x16x128xf32> to vector<256x128xf32>
    %123 = arith.truncf %122 : vector<256x128xf32> to vector<256x128xbf16>
    %c6_114 = arith.constant 6 : index
    %c0_115 = arith.constant 0 : index
    %c0_116 = arith.constant 0 : index
    %124 = vector.load %arg5[%c6_114, %c0_115, %c0_116] : memref<9x128x256xbf16, #tpu.memory_space<vmem>>, vector<1x128x256xbf16>
    %125 = vector.shape_cast %124 : vector<1x128x256xbf16> to vector<128x256xbf16>
    %cst_117 = arith.constant dense<0.000000e+00> : vector<256x256xf32>
    %126 = tpu.matmul %123, %125, %cst_117 {dimension_numbers = #tpu.dot_dimension_numbers<[1], [0], [0], [1], [0, 0, 1, 1], [], []>} : vector<256x128xbf16>, vector<128x256xbf16>, vector<256x256xf32> -> vector<256x256xf32>
    %127 = arith.addf %120, %126 : vector<256x256xf32>
    %c2_118 = arith.constant 2 : index
    %c1_119 = arith.constant 1 : index
    %c0_120 = arith.constant 0 : index
    %128 = vector.load %arg10[%c2_118, %c1_119, %c0_120] : memref<18x18x128xf32, #tpu.memory_space<vmem>>, vector<16x16x128xf32>
    %129 = vector.shape_cast %128 : vector<16x16x128xf32> to vector<256x128xf32>
    %130 = arith.truncf %129 : vector<256x128xf32> to vector<256x128xbf16>
    %c7_121 = arith.constant 7 : index
    %c0_122 = arith.constant 0 : index
    %c0_123 = arith.constant 0 : index
    %131 = vector.load %arg5[%c7_121, %c0_122, %c0_123] : memref<9x128x256xbf16, #tpu.memory_space<vmem>>, vector<1x128x256xbf16>
    %132 = vector.shape_cast %131 : vector<1x128x256xbf16> to vector<128x256xbf16>
    %cst_124 = arith.constant dense<0.000000e+00> : vector<256x256xf32>
    %133 = tpu.matmul %130, %132, %cst_124 {dimension_numbers = #tpu.dot_dimension_numbers<[1], [0], [0], [1], [0, 0, 1, 1], [], []>} : vector<256x128xbf16>, vector<128x256xbf16>, vector<256x256xf32> -> vector<256x256xf32>
    %134 = arith.addf %127, %133 : vector<256x256xf32>
    %c2_125 = arith.constant 2 : index
    %c2_126 = arith.constant 2 : index
    %c0_127 = arith.constant 0 : index
    %135 = vector.load %arg10[%c2_125, %c2_126, %c0_127] : memref<18x18x128xf32, #tpu.memory_space<vmem>>, vector<16x16x128xf32>
    %136 = vector.shape_cast %135 : vector<16x16x128xf32> to vector<256x128xf32>
    %137 = arith.truncf %136 : vector<256x128xf32> to vector<256x128xbf16>
    %c8_128 = arith.constant 8 : index
    %c0_129 = arith.constant 0 : index
    %c0_130 = arith.constant 0 : index
    %138 = vector.load %arg5[%c8_128, %c0_129, %c0_130] : memref<9x128x256xbf16, #tpu.memory_space<vmem>>, vector<1x128x256xbf16>
    %139 = vector.shape_cast %138 : vector<1x128x256xbf16> to vector<128x256xbf16>
    %cst_131 = arith.constant dense<0.000000e+00> : vector<256x256xf32>
    %140 = tpu.matmul %137, %139, %cst_131 {dimension_numbers = #tpu.dot_dimension_numbers<[1], [0], [0], [1], [0, 0, 1, 1], [], []>} : vector<256x128xbf16>, vector<128x256xbf16>, vector<256x256xf32> -> vector<256x256xf32>
    %141 = arith.addf %134, %140 : vector<256x256xf32>
    %c0_132 = arith.constant 0 : index
    %c0_133 = arith.constant 0 : index
    %142 = vector.load %arg6[%c0_132, %c0_133] : memref<1x256xf32, #tpu.memory_space<vmem>>, vector<1x256xf32>
    %143 = vector.broadcast %142 : vector<1x256xf32> to vector<256x256xf32>
    %144 = arith.addf %141, %143 : vector<256x256xf32>
    %145 = vector.extract_strided_slice %144 {offsets = [0, 0], sizes = [256, 4], strides = [1, 1]} : vector<256x256xf32> to vector<256x4xf32>
    %146 = vector.extract_strided_slice %144 {offsets = [0, 128], sizes = [256, 4], strides = [1, 1]} : vector<256x256xf32> to vector<256x4xf32>
    %c0_134 = arith.constant 0 : index
    %c0_135 = arith.constant 0 : index
    %c0_136 = arith.constant 0 : index
    %c0_137 = arith.constant 0 : index
    %147 = vector.load %arg1[%c0_134, %c0_135, %c0_136, %c0_137] : memref<1x16x16x4xf32, #tpu.memory_space<vmem>>, vector<1x16x16x4xf32>
    %148 = vector.shape_cast %147 : vector<1x16x16x4xf32> to vector<16x16x4xf32>
    %149 = vector.shape_cast %148 : vector<16x16x4xf32> to vector<256x4xf32>
    %cst_138 = arith.constant dense<0.000000e+00> : vector<4xf32>
    %150 = vector.multi_reduction <add>, %149, %cst_138 [0] : vector<256x4xf32> to vector<4xf32>
    %151 = vector.shape_cast %150 : vector<4xf32> to vector<1x4xf32>
    %cst_139 = arith.constant 3.906250e-03 : f32
    %152 = vector.broadcast %cst_139 : f32 to vector<1x4xf32>
    %153 = arith.mulf %151, %152 : vector<1x4xf32>
    %154 = vector.broadcast %153 : vector<1x4xf32> to vector<256x4xf32>
    %155 = arith.subf %149, %154 : vector<256x4xf32>
    %156 = arith.mulf %155, %155 : vector<256x4xf32>
    %cst_140 = arith.constant dense<0.000000e+00> : vector<4xf32>
    %157 = vector.multi_reduction <add>, %156, %cst_140 [0] : vector<256x4xf32> to vector<4xf32>
    %158 = vector.shape_cast %157 : vector<4xf32> to vector<1x4xf32>
    %cst_141 = arith.constant 3.906250e-03 : f32
    %159 = vector.broadcast %cst_141 : f32 to vector<1x4xf32>
    %160 = arith.mulf %158, %159 : vector<1x4xf32>
    %cst_142 = arith.constant 9.99999974E-6 : f32
    %161 = vector.broadcast %cst_142 : f32 to vector<1x4xf32>
    %162 = arith.addf %160, %161 : vector<1x4xf32>
    %163 = math.rsqrt %162 : vector<1x4xf32>
    %164 = vector.broadcast %163 : vector<1x4xf32> to vector<256x4xf32>
    %165 = arith.mulf %155, %164 : vector<256x4xf32>
    %166 = arith.mulf %165, %145 : vector<256x4xf32>
    %167 = arith.addf %166, %146 : vector<256x4xf32>
    %168 = arith.truncf %167 : vector<256x4xf32> to vector<256x4xbf16>
    %c0_143 = arith.constant 0 : index
    %c0_144 = arith.constant 0 : index
    %169 = vector.load %arg7[%c0_143, %c0_144] : memref<4x8xbf16, #tpu.memory_space<vmem>>, vector<4x8xbf16>
    %cst_145 = arith.constant dense<0.000000e+00> : vector<256x8xf32>
    %170 = tpu.matmul %168, %169, %cst_145 {dimension_numbers = #tpu.dot_dimension_numbers<[1], [0], [0], [1], [0, 0, 1, 1], [], []>} : vector<256x4xbf16>, vector<4x8xbf16>, vector<256x8xf32> -> vector<256x8xf32>
    %171 = vector.shape_cast %170 : vector<256x8xf32> to vector<16x16x8xf32>
    %c0_146 = arith.constant 0 : index
    %c0_147 = arith.constant 0 : index
    %c0_148 = arith.constant 0 : index
    %c0_149 = arith.constant 0 : index
    %172 = vector.load %arg8[%c0_146, %c0_147, %c0_148, %c0_149] : memref<1x16x16x8xf32, #tpu.memory_space<vmem>>, vector<1x16x16x8xf32>
    %173 = vector.shape_cast %172 : vector<1x16x16x8xf32> to vector<16x16x8xf32>
    %174 = vector.shape_cast %171 : vector<16x16x8xf32> to vector<1x16x16x8xf32>
    tpu.vector_store %arg8[%c0_146, %c0_147, %c0_148, %c0_149], %174 {strides = array<i32>} : memref<1x16x16x8xf32, #tpu.memory_space<vmem>>, vector<1x16x16x8xf32>,
    return
  }
  func.func @transform_0(%arg0: i32) -> (i32, i32, i32, i32) {
    %c0_i32 = arith.constant 0 : i32
    %c0_i32_0 = arith.constant 0 : i32
    %c0_i32_1 = arith.constant 0 : i32
    %c0_i32_2 = arith.constant 0 : i32
    return %arg0, %c0_i32, %c0_i32_0, %c0_i32_1 : i32, i32, i32, i32
  }
  func.func @transform_1(%arg0: i32) -> (i32, i32, i32, i32) {
    %c0_i32 = arith.constant 0 : i32
    %c0_i32_0 = arith.constant 0 : i32
    %c0_i32_1 = arith.constant 0 : i32
    %c0_i32_2 = arith.constant 0 : i32
    return %arg0, %c0_i32, %c0_i32_0, %c0_i32_1 : i32, i32, i32, i32
  }
  func.func @transform_2(%arg0: i32) -> (i32, i32, i32) {
    %c0_i32 = arith.constant 0 : i32
    %c0_i32_0 = arith.constant 0 : i32
    %c0_i32_1 = arith.constant 0 : i32
    %c0_i32_2 = arith.constant 0 : i32
    return %c0_i32, %c0_i32_0, %c0_i32_1 : i32, i32, i32
  }
  func.func @transform_3(%arg0: i32) -> (i32, i32) {
    %c0_i32 = arith.constant 0 : i32
    %c0_i32_0 = arith.constant 0 : i32
    %c0_i32_1 = arith.constant 0 : i32
    return %c0_i32, %c0_i32_0 : i32, i32
  }
  func.func @transform_4(%arg0: i32) -> (i32, i32, i32) {
    %c0_i32 = arith.constant 0 : i32
    %c0_i32_0 = arith.constant 0 : i32
    %c0_i32_1 = arith.constant 0 : i32
    %c0_i32_2 = arith.constant 0 : i32
    return %c0_i32, %c0_i32_0, %c0_i32_1 : i32, i32, i32
  }
  func.func @transform_5(%arg0: i32) -> (i32, i32) {
    %c0_i32 = arith.constant 0 : i32
    %c0_i32_0 = arith.constant 0 : i32
    %c0_i32_1 = arith.constant 0 : i32
    return %c0_i32, %c0_i32_0 : i32, i32
  }
  func.func @transform_6(%arg0: i32) -> (i32, i32) {
    %c0_i32 = arith.constant 0 : i32
    %c0_i32_0 = arith.constant 0 : i32
    %c0_i32_1 = arith.constant 0 : i32
    return %c0_i32, %c0_i32_0 : i32, i32
  }
  func.func @transform_7(%arg0: i32) -> (i32, i32, i32, i32) {
    %c0_i32 = arith.constant 0 : i32
    %c0_i32_0 = arith.constant 0 : i32
    %c0_i32_1 = arith.constant 0 : i32
    %c0_i32_2 = arith.constant 0 : i32
    return %arg0, %c0_i32, %c0_i32_0, %c0_i32_1 : i32, i32, i32, i32
  }
}

</mosaic_0001>

<llo_original>
// kernel: tpu_custom_call.1
$region0: #{tpu_custom_call.1}
  #allocation0 [shape = 'u32[]', space=smem, size = 0x4, offset = 0x4, fixed_abs, tag = 'smem constant byte address 0x4 - core index']
  #allocation1 [shape = 'u32[144,128]{1,0:T(1,128)}', space=vmem, size = 0x12000, scoped, tag = 'internal scratch']
  #allocation2 [shape = 'f32[18,18,8]{2,1,0:T(8,128)}', space=vmem, size = 0x36000, scoped, tag = 'scratch operand']
  #allocation3 [shape = 'f32[18,18,128]{2,1,0:T(8,128)}', space=vmem, size = 0x36000, scoped, tag = 'scratch operand']
  %s0 = inlined_call_operand.vmem [shape: f32[2,16,16,4], index: 0, kind: input, shape index: {}]
  %s1 = inlined_call_operand.vmem [shape: bf16[2,16,16,8], index: 1, kind: input, shape index: {}]
  %s2 = inlined_call_operand.vmem [shape: bf16[9,8,128], index: 2, kind: input, shape index: {}]
  %s3 = inlined_call_operand.vmem [shape: f32[1,128], index: 3, kind: input, shape index: {}]
  %s4 = inlined_call_operand.hbm [shape: bf16[9,128,256], index: 4, kind: input, shape index: {}]
  %s5 = inlined_call_operand.vmem [shape: f32[1,256], index: 5, kind: input, shape index: {}]
  %s6 = inlined_call_operand.vmem [shape: bf16[4,8], index: 6, kind: input, shape index: {}]
  %s7 = inlined_call_operand.vmem [shape: f32[2,16,16,8], index: 7, kind: output, shape index: {}]
  %s8 = sld [smem:[#allocation0]]
  $region69: #{tpu_custom_call.1} parent=0
    _
  %s10 = ssub.s32 1, %s8
  %s11 = scalar_select 0, %s10, %s8
  $region1: #{tpu_custom_call.1} parent=0
    #allocation4 [shape = 'u8[589824]{0}', space=vmem, size = 0x90000, scoped, tag = 'input window, operand 4, single buffered']
    #allocation5 [shape = 's32[2]{0}', space=sflag, size = 0x8, scoped, tag = 'scoped memory for tpu_custom_call.1']
    %12 = vsyncpa [#allocation5], 0
    loop: start=0, step=1, limit=4
    $region2: #{tpu_custom_call.1} parent=1 // loop_pre_header
      _
    $region3: #{tpu_custom_call.1} parent=1 // loop_header
      %s14 = sphi 0, %s18
      %p15 = scmp.ge.s32.totalorder %s14, 4
      %s24 = sphi 0, %s26
      %s27 = sphi 0, %s24
      %s28 = sphi 0, %s27
      %s44 = sphi 0, %s28
      %s50 = sphi 0, %s52
      %s53 = sphi 0, %s50
      %s54 = sphi 0, %s53
      %s70 = sphi 0, %s54
      %s74 = sphi 0, %s74
      %s76 = sphi 0, %s74
      %s77 = sphi 0, %s76
      %s91 = sphi 0, %s77
      %s95 = sphi 0, %s95
      %s97 = sphi 0, %s95
      %s98 = sphi 0, %s97
      %s112 = sphi 0, %s98
      %s116 = sphi 0, %s116
      %s118 = sphi 0, %s116
      %s119 = sphi 0, %s118
      %s133 = sphi 0, %s119
      %s137 = sphi 0, %s137
      %s139 = sphi 0, %s137
      %s140 = sphi 0, %s139
      %s154 = sphi 0, %s140
      %s158 = sphi 0, %s158
      %s160 = sphi 0, %s158
      %s161 = sphi 0, %s160
      %s175 = sphi 0, %s161
      %s181 = sphi 0, %s183
      %s184 = sphi 0, %s181
      %s185 = sphi 0, %s184
      %s201 = sphi 0, %s185
    $region4: #{tpu_custom_call.1} parent=1 // loop_header_branch
      %17 = sbr.rel (%p15) target = $region8
    $region5: #{tpu_custom_call.1} parent=1 // loop_body
      %s19 = ssub.s32 %s14, 1
      %s20 = ssub.s32 %s14, 2
      %s21 = sadd.s32 %s14, 1
      %s22 = ssub.s32 %s14, %s21
      %p23 = scmp.eq.s32.totalorder %s22, 0
      %s25 = sadd.s32 %s24, 1
      %s26 = scalar_select %p23, %s24, %s25
      %p29 = pneg %p23
      %p30 = scmp.eq.s32.totalorder %s14, 1
      %p31 = por %p29, %p30
      %p32 = scmp.ne.s32.totalorder %s24, %s27
      %p33 = scmp.eq.s32.totalorder %s14, 0
      %p34 = por %p32, %p33
      %p35 = scmp.ne.s32.totalorder %s24, %s27
      %p36 = scmp.eq.s32.totalorder %s19, 1
      %p37 = por %p35, %p36
      %p38 = scmp.ne.s32.totalorder %s27, %s28
      %p39 = scmp.eq.s32.totalorder %s19, 0
      %p40 = por %p38, %p39
      %p41 = scmp.ne.s32.totalorder %s27, %s28
      %p42 = scmp.eq.s32.totalorder %s20, 1
      %p43 = por %p41, %p42
      %p45 = scmp.ne.s32.totalorder %s28, %s44
      %p46 = scmp.eq.s32.totalorder %s20, 0
      %p47 = por %p45, %p46
      %s48 = ssub.s32 %s14, %s21
      %p49 = scmp.eq.s32.totalorder %s48, 0
      %s51 = sadd.s32 %s50, 1
      %s52 = scalar_select %p49, %s50, %s51
      %p55 = pneg %p49
      %p56 = scmp.eq.s32.totalorder %s14, 1
      %p57 = por %p55, %p56
      %p58 = scmp.ne.s32.totalorder %s50, %s53
      %p59 = scmp.eq.s32.totalorder %s14, 0
      %p60 = por %p58, %p59
      %p61 = scmp.ne.s32.totalorder %s50, %s53
      %p62 = scmp.eq.s32.totalorder %s19, 1
      %p63 = por %p61, %p62
      %p64 = scmp.ne.s32.totalorder %s53, %s54
      %p65 = scmp.eq.s32.totalorder %s19, 0
      %p66 = por %p64, %p65
      %p67 = scmp.ne.s32.totalorder %s53, %s54
      %p68 = scmp.eq.s32.totalorder %s20, 1
      %p69 = por %p67, %p68
      %p71 = scmp.ne.s32.totalorder %s54, %s70
      %p72 = scmp.eq.s32.totalorder %s20, 0
      %p73 = por %p71, %p72
      %s75 = sadd.s32 %s74, 1
      %p78 = scmp.eq.s32.totalorder %s14, 1
      %p79 = scmp.ne.s32.totalorder %s74, %s76
      %p80 = scmp.eq.s32.totalorder %s14, 0
      %p81 = por %p79, %p80
      %p82 = scmp.ne.s32.totalorder %s74, %s76
      %p83 = scmp.eq.s32.totalorder %s19, 1
      %p84 = por %p82, %p83
      %p85 = scmp.ne.s32.totalorder %s76, %s77
      %p86 = scmp.eq.s32.totalorder %s19, 0
      %p87 = por %p85, %p86
      %p88 = scmp.ne.s32.totalorder %s76, %s77
      %p89 = scmp.eq.s32.totalorder %s20, 1
      %p90 = por %p88, %p89
      %p92 = scmp.ne.s32.totalorder %s77, %s91
      %p93 = scmp.eq.s32.totalorder %s20, 0
      %p94 = por %p92, %p93
      %s96 = sadd.s32 %s95, 1
      %p99 = scmp.eq.s32.totalorder %s14, 1
      %p100 = scmp.ne.s32.totalorder %s95, %s97
      %p101 = scmp.eq.s32.totalorder %s14, 0
      %p102 = por %p100, %p101
      %p103 = scmp.ne.s32.totalorder %s95, %s97
      %p104 = scmp.eq.s32.totalorder %s19, 1
      %p105 = por %p103, %p104
      %p106 = scmp.ne.s32.totalorder %s97, %s98
      %p107 = scmp.eq.s32.totalorder %s19, 0
      %p108 = por %p106, %p107
      %p109 = scmp.ne.s32.totalorder %s97, %s98
      %p110 = scmp.eq.s32.totalorder %s20, 1
      %p111 = por %p109, %p110
      %p113 = scmp.ne.s32.totalorder %s98, %s112
      %p114 = scmp.eq.s32.totalorder %s20, 0
      %p115 = por %p113, %p114
      %s117 = sadd.s32 %s116, 1
      %p120 = scmp.eq.s32.totalorder %s14, 1
      %p121 = scmp.ne.s32.totalorder %s116, %s118
      %p122 = scmp.eq.s32.totalorder %s14, 0
      %p123 = por %p121, %p122
      %p124 = scmp.ne.s32.totalorder %s116, %s118
      %p125 = scmp.eq.s32.totalorder %s19, 1
      %p126 = por %p124, %p125
      %p127 = scmp.ne.s32.totalorder %s118, %s119
      %p128 = scmp.eq.s32.totalorder %s19, 0
      %p129 = por %p127, %p128
      %p130 = scmp.ne.s32.totalorder %s118, %s119
      %p131 = scmp.eq.s32.totalorder %s20, 1
      %p132 = por %p130, %p131
      %p134 = scmp.ne.s32.totalorder %s119, %s133
      %p135 = scmp.eq.s32.totalorder %s20, 0
      %p136 = por %p134, %p135
      %s138 = sadd.s32 %s137, 1
      %p141 = scmp.eq.s32.totalorder %s14, 1
      %p142 = scmp.ne.s32.totalorder %s137, %s139
      %p143 = scmp.eq.s32.totalorder %s14, 0
      %p144 = por %p142, %p143
      %p145 = scmp.ne.s32.totalorder %s137, %s139
      %p146 = scmp.eq.s32.totalorder %s19, 1
      %p147 = por %p145, %p146
      %p148 = scmp.ne.s32.totalorder %s139, %s140
      %p149 = scmp.eq.s32.totalorder %s19, 0
      %p150 = por %p148, %p149
      %p151 = scmp.ne.s32.totalorder %s139, %s140
      %p152 = scmp.eq.s32.totalorder %s20, 1
      %p153 = por %p151, %p152
      %p155 = scmp.ne.s32.totalorder %s140, %s154
      %p156 = scmp.eq.s32.totalorder %s20, 0
      %p157 = por %p155, %p156
      %s159 = sadd.s32 %s158, 1
      %p162 = scmp.eq.s32.totalorder %s14, 1
      %p163 = scmp.ne.s32.totalorder %s158, %s160
      %p164 = scmp.eq.s32.totalorder %s14, 0
      %p165 = por %p163, %p164
      %p166 = scmp.ne.s32.totalorder %s158, %s160
      %p167 = scmp.eq.s32.totalorder %s19, 1
      %p168 = por %p166, %p167
      %p169 = scmp.ne.s32.totalorder %s160, %s161
      %p170 = scmp.eq.s32.totalorder %s19, 0
      %p171 = por %p169, %p170
      %p172 = scmp.ne.s32.totalorder %s160, %s161
      %p173 = scmp.eq.s32.totalorder %s20, 1
      %p174 = por %p172, %p173
      %p176 = scmp.ne.s32.totalorder %s161, %s175
      %p177 = scmp.eq.s32.totalorder %s20, 0
      %p178 = por %p176, %p177
      %s179 = ssub.s32 %s14, %s21
      %p180 = scmp.eq.s32.totalorder %s179, 0
      %s182 = sadd.s32 %s181, 1
      %s183 = scalar_select %p180, %s181, %s182
      %p186 = pneg %p180
      %p187 = scmp.eq.s32.totalorder %s14, 1
      %p188 = por %p186, %p187
      %p189 = scmp.ne.s32.totalorder %s181, %s184
      %p190 = scmp.eq.s32.totalorder %s14, 0
      %p191 = por %p189, %p190
      %p192 = scmp.ne.s32.totalorder %s181, %s184
      %p193 = scmp.eq.s32.totalorder %s19, 1
      %p194 = por %p192, %p193
      %p195 = scmp.ne.s32.totalorder %s184, %s185
      %p196 = scmp.eq.s32.totalorder %s19, 0
      %p197 = por %p195, %p196
      %p198 = scmp.ne.s32.totalorder %s184, %s185
      %p199 = scmp.eq.s32.totalorder %s20, 1
      %p200 = por %p198, %p199
      %p202 = scmp.ne.s32.totalorder %s185, %s201
      %p203 = scmp.eq.s32.totalorder %s20, 0
      %p204 = por %p202, %p203
      %p205 = scmp.le.s32.totalorder 1, %s14
      %p206 = scmp.lt.s32.totalorder %s14, 3
      %p207 = pnand %p205, %p206
      %p208 = pneg %p207
      // Predicated region
      $region9: #{tpu_custom_call.1} parent=5 // pred_check
        _
      $region10: #{tpu_custom_call.1} parent=5 // pred_check_branch
        %210 = sbr.rel (%p207) target = $region12
      $region11: #{tpu_custom_call.1} parent=5 // pred_region
        %s211 = ssub.s32 %s14, 1
        // Predicated region
        $region13: #{tpu_custom_call.1} parent=11 // pred_check
          %p212 = pneg %p87
        $region14: #{tpu_custom_call.1} parent=11 // pred_check_branch
          %214 = sbr.rel (%p212) target = $region16
        $region15: #{tpu_custom_call.1} parent=11 // pred_region
          _
        $region16: #{tpu_custom_call.1} parent=11 // pred_fallthru
          _
        // Predicated region
        $region17: #{tpu_custom_call.1} parent=11 // pred_check
          %p215 = pneg %p108
        $region18: #{tpu_custom_call.1} parent=11 // pred_check_branch
          %217 = sbr.rel (%p215) target = $region20
        $region19: #{tpu_custom_call.1} parent=11 // pred_region
          _
        $region20: #{tpu_custom_call.1} parent=11 // pred_fallthru
          _
        // Predicated region
        $region21: #{tpu_custom_call.1} parent=11 // pred_check
          %p218 = pneg %p129
        $region22: #{tpu_custom_call.1} parent=11 // pred_check_branch
          %220 = sbr.rel (%p218) target = $region24
        $region23: #{tpu_custom_call.1} parent=11 // pred_region
          %s222 = ssub.s32 18432, 18432
          %223 = vsyncadd [#allocation5], %s222
          %s224 = sshll.u32 [#allocation4], 4
          %s225 = int_to_ptr.vmem [resolvable:$true] %s224
          %230 = dma.hbm_to_vmem [thread:$0]  %s4, 18432, %s225, [#allocation5], 128, 128, 8
        $region24: #{tpu_custom_call.1} parent=11 // pred_fallthru
          _
        // Predicated region
        $region25: #{tpu_custom_call.1} parent=11 // pred_check
          %p231 = pneg %p150
        $region26: #{tpu_custom_call.1} parent=11 // pred_check_branch
          %233 = sbr.rel (%p231) target = $region28
        $region27: #{tpu_custom_call.1} parent=11 // pred_region
          _
        $region28: #{tpu_custom_call.1} parent=11 // pred_fallthru
          _
        // Predicated region
        $region29: #{tpu_custom_call.1} parent=11 // pred_check
          %p234 = pneg %p171
        $region30: #{tpu_custom_call.1} parent=11 // pred_check_branch
          %236 = sbr.rel (%p234) target = $region32
        $region31: #{tpu_custom_call.1} parent=11 // pred_region
          _
        $region32: #{tpu_custom_call.1} parent=11 // pred_fallthru
          _
      $region12: #{tpu_custom_call.1} parent=5 // pred_fallthru
        _
      %p237 = scmp.lt.s32.totalorder %s14, 2
      // Predicated region
      $region33: #{tpu_custom_call.1} parent=5 // pred_check
        %p238 = pneg %p237
      $region34: #{tpu_custom_call.1} parent=5 // pred_check_branch
        %240 = sbr.rel (%p238) target = $region36
      $region35: #{tpu_custom_call.1} parent=5 // pred_region
        // Predicated region
        $region37: #{tpu_custom_call.1} parent=35 // pred_check
          %p241 = pneg %p34
        $region38: #{tpu_custom_call.1} parent=35 // pred_check_branch
          %243 = sbr.rel (%p241) target = $region40
        $region39: #{tpu_custom_call.1} parent=35 // pred_region
          %p244 = scmp.lt.s32.totalorder %s14, 1
          %s245 = scalar_select %p244, %s14, 1
          %s246 = smul.addr %s245, 32
          %s247 = smul.addr %s246, 8
          %s248 = scalar_lea.vmem %s0, %s247
        $region40: #{tpu_custom_call.1} parent=35 // pred_fallthru
          _
        // Predicated region
        $region41: #{tpu_custom_call.1} parent=35 // pred_check
          %p249 = pneg %p60
        $region42: #{tpu_custom_call.1} parent=35 // pred_check_branch
          %251 = sbr.rel (%p249) target = $region44
        $region43: #{tpu_custom_call.1} parent=35 // pred_region
          %p252 = scmp.lt.s32.totalorder %s14, 1
          %s253 = scalar_select %p252, %s14, 1
          %s254 = smul.addr %s253, 32
          %s255 = smul.addr %s254, 4
          %s256 = scalar_lea.vmem %s1, %s255
        $region44: #{tpu_custom_call.1} parent=35 // pred_fallthru
          _
      $region36: #{tpu_custom_call.1} parent=5 // pred_fallthru
        _
      %p257 = scmp.le.s32.totalorder 1, %s14
      %p258 = scmp.lt.s32.totalorder %s14, 3
      %p259 = pnand %p257, %p258
      %p260 = pneg %p259
      // Predicated region
      $region45: #{tpu_custom_call.1} parent=5 // pred_check
        _
      $region46: #{tpu_custom_call.1} parent=5 // pred_check_branch
        %262 = sbr.rel (%p259) target = $region48
      $region47: #{tpu_custom_call.1} parent=5 // pred_region
        %s263 = ssub.s32 %s14, 1
        // Predicated region
        $region49: #{tpu_custom_call.1} parent=47 // pred_check
          %p264 = pneg %p129
        $region50: #{tpu_custom_call.1} parent=47 // pred_check_branch
          %266 = sbr.rel (%p264) target = $region52
        $region51: #{tpu_custom_call.1} parent=47 // pred_region
          %267 = dma.done [#allocation5], 18432
        $region52: #{tpu_custom_call.1} parent=47 // pred_fallthru
          _
        %p268 = scmp.lt.s32.totalorder %s19, 1
        %s269 = scalar_select %p268, %s19, 1
        %s270 = smul.addr %s269, 32
        %s271 = smul.addr %s270, 8
        %s272 = scalar_lea.vmem %s0, %s271
        %p273 = pneg %p40
        %p274 = pneg %p37
        %p275 = scmp.lt.s32.totalorder %s19, 1
        %s276 = scalar_select %p275, %s19, 1
        %s277 = smul.addr %s276, 32
        %s278 = smul.addr %s277, 4
        %s279 = scalar_lea.vmem %s1, %s278
        %p280 = pneg %p66
        %p281 = pneg %p63
        %p282 = pneg %p87
        %p283 = pneg %p84
        %p284 = pneg %p108
        %p285 = pneg %p105
        %p286 = pneg %p129
        %p287 = pneg %p126
        %p288 = pneg %p150
        %p289 = pneg %p147
        %p290 = pneg %p171
        %p291 = pneg %p168
        %p292 = pneg %p197
        %p293 = pneg %p194
        %p294 = scmp.lt.s32.totalorder %s19, 1
        %s295 = scalar_select %p294, %s19, 1
        %s296 = smul.addr %s295, 32
        %s297 = smul.addr %s296, 8
        %s298 = scalar_lea.vmem %s7, %s297
        %p299 = scmp.lt.s32.totalorder %s19, 1
        %s300 = scalar_select %p299, %s19, 1
        %s301 = smul.addr %s300, 32
        %s302 = smul.addr %s301, 8
        %s303 = scalar_lea.vmem %s0, %s302
        %p304 = scmp.lt.s32.totalorder %s19, 1
        %s305 = scalar_select %p304, %s19, 1
        %s306 = smul.addr %s305, 32
        %s307 = smul.addr %s306, 4
        %s308 = scalar_lea.vmem %s1, %s307
        %p309 = scmp.lt.s32.totalorder %s19, 1
        %s310 = scalar_select %p309, %s19, 1
        %s311 = smul.addr %s310, 32
        %s312 = smul.addr %s311, 8
        %s313 = scalar_lea.vmem %s7, %s312
        %p315 = scmp.eq.s32.totalorder %s19, 0
        // Predicated region
        $region53: #{tpu_custom_call.1} parent=47 // pred_check
          %p316 = pneg %p315
        $region54: #{tpu_custom_call.1} parent=47 // pred_check_branch
          %318 = sbr.rel (%p316) target = $region56
        $region55: #{tpu_custom_call.1} parent=47 // pred_region
          %vm319 = vcmask 64512
          %320 = vst.msk [vmem:[#allocation2] sm:$0xff] %vm319, 0.0
          %321 = vst.msk [vmem:[#allocation2 + $0x8] sm:$0xff] %vm319, 0.0
          %vm322 = vcmask 58368
          %323 = vst.msk [vmem:[#allocation2 + $0x10] sm:$0x3] %vm322, 0.0
          %324 = vst.msk [vmem:[#allocation2 + $0x18] sm:$0xff] %vm319, 0.0
          %325 = vst.msk [vmem:[#allocation2 + $0x20] sm:$0xff] %vm319, 0.0
          %326 = vst.msk [vmem:[#allocation2 + $0x28] sm:$0x3] %vm322, 0.0
          %327 = vst.msk [vmem:[#allocation2 + $0x30] sm:$0xff] %vm319, 0.0
          %328 = vst.msk [vmem:[#allocation2 + $0x38] sm:$0xff] %vm319, 0.0
          %329 = vst.msk [vmem:[#allocation2 + $0x40] sm:$0x3] %vm322, 0.0
          %330 = vst.msk [vmem:[#allocation2 + $0x48] sm:$0xff] %vm319, 0.0
          %331 = vst.msk [vmem:[#allocation2 + $0x50] sm:$0xff] %vm319, 0.0
          %332 = vst.msk [vmem:[#allocation2 + $0x58] sm:$0x3] %vm322, 0.0
          %333 = vst.msk [vmem:[#allocation2 + $0x60] sm:$0xff] %vm319, 0.0
          %334 = vst.msk [vmem:[#allocation2 + $0x68] sm:$0xff] %vm319, 0.0
          %335 = vst.msk [vmem:[#allocation2 + $0x70] sm:$0x3] %vm322, 0.0
          %336 = vst.msk [vmem:[#allocation2 + $0x78] sm:$0xff] %vm319, 0.0
          %337 = vst.msk [vmem:[#allocation2 + $0x80] sm:$0xff] %vm319, 0.0
          %338 = vst.msk [vmem:[#allocation2 + $0x88] sm:$0x3] %vm322, 0.0
          %339 = vst.msk [vmem:[#allocation2 + $0x90] sm:$0xff] %vm319, 0.0
          %340 = vst.msk [vmem:[#allocation2 + $0x98] sm:$0xff] %vm319, 0.0
          %341 = vst.msk [vmem:[#allocation2 + $0xa0] sm:$0x3] %vm322, 0.0
          %342 = vst.msk [vmem:[#allocation2 + $0xa8] sm:$0xff] %vm319, 0.0
          %343 = vst.msk [vmem:[#allocation2 + $0xb0] sm:$0xff] %vm319, 0.0
          %344 = vst.msk [vmem:[#allocation2 + $0xb8] sm:$0x3] %vm322, 0.0
          %345 = vst.msk [vmem:[#allocation2 + $0xc0] sm:$0xff] %vm319, 0.0
          %346 = vst.msk [vmem:[#allocation2 + $0xc8] sm:$0xff] %vm319, 0.0
          %347 = vst.msk [vmem:[#allocation2 + $0xd0] sm:$0x3] %vm322, 0.0
          %348 = vst.msk [vmem:[#allocation2 + $0xd8] sm:$0xff] %vm319, 0.0
          %349 = vst.msk [vmem:[#allocation2 + $0xe0] sm:$0xff] %vm319, 0.0
          %350 = vst.msk [vmem:[#allocation2 + $0xe8] sm:$0x3] %vm322, 0.0
          %351 = vst.msk [vmem:[#allocation2 + $0xf0] sm:$0xff] %vm319, 0.0
          %352 = vst.msk [vmem:[#allocation2 + $0xf8] sm:$0xff] %vm319, 0.0
          %353 = vst.msk [vmem:[#allocation2 + $0x100] sm:$0x3] %vm322, 0.0
          %354 = vst.msk [vmem:[#allocation2 + $0x108] sm:$0xff] %vm319, 0.0
          %355 = vst.msk [vmem:[#allocation2 + $0x110] sm:$0xff] %vm319, 0.0
          %356 = vst.msk [vmem:[#allocation2 + $0x118] sm:$0x3] %vm322, 0.0
          %357 = vst.msk [vmem:[#allocation2 + $0x120] sm:$0xff] %vm319, 0.0
          %358 = vst.msk [vmem:[#allocation2 + $0x128] sm:$0xff] %vm319, 0.0
          %359 = vst.msk [vmem:[#allocation2 + $0x130] sm:$0x3] %vm322, 0.0
          %360 = vst.msk [vmem:[#allocation2 + $0x138] sm:$0xff] %vm319, 0.0
          %361 = vst.msk [vmem:[#allocation2 + $0x140] sm:$0xff] %vm319, 0.0
          %362 = vst.msk [vmem:[#allocation2 + $0x148] sm:$0x3] %vm322, 0.0
          %363 = vst.msk [vmem:[#allocation2 + $0x150] sm:$0xff] %vm319, 0.0
          %364 = vst.msk [vmem:[#allocation2 + $0x158] sm:$0xff] %vm319, 0.0
          %365 = vst.msk [vmem:[#allocation2 + $0x160] sm:$0x3] %vm322, 0.0
          %366 = vst.msk [vmem:[#allocation2 + $0x168] sm:$0xff] %vm319, 0.0
          %367 = vst.msk [vmem:[#allocation2 + $0x170] sm:$0xff] %vm319, 0.0
          %368 = vst.msk [vmem:[#allocation2 + $0x178] sm:$0x3] %vm322, 0.0
          %369 = vst.msk [vmem:[#allocation2 + $0x180] sm:$0xff] %vm319, 0.0
          %370 = vst.msk [vmem:[#allocation2 + $0x188] sm:$0xff] %vm319, 0.0
          %371 = vst.msk [vmem:[#allocation2 + $0x190] sm:$0x3] %vm322, 0.0
          %372 = vst.msk [vmem:[#allocation2 + $0x198] sm:$0xff] %vm319, 0.0
          %373 = vst.msk [vmem:[#allocation2 + $0x1a0] sm:$0xff] %vm319, 0.0
          %374 = vst.msk [vmem:[#allocation2 + $0x1a8] sm:$0x3] %vm322, 0.0
          %375 = vst [vmem:[#allocation3] sm:$0xff] 0.0
          %376 = vst [vmem:[#allocation3 + $0x8] sm:$0xff] 0.0
          %377 = vst [vmem:[#allocation3 + $0x10] sm:$0x3] 0.0
          %378 = vst [vmem:[#allocation3 + $0x18] sm:$0xff] 0.0
          %379 = vst [vmem:[#allocation3 + $0x20] sm:$0xff] 0.0
          %380 = vst [vmem:[#allocation3 + $0x28] sm:$0x3] 0.0
          %381 = vst [vmem:[#allocation3 + $0x30] sm:$0xff] 0.0
          %382 = vst [vmem:[#allocation3 + $0x38] sm:$0xff] 0.0
          %383 = vst [vmem:[#allocation3 + $0x40] sm:$0x3] 0.0
          %384 = vst [vmem:[#allocation3 + $0x48] sm:$0xff] 0.0
          %385 = vst [vmem:[#allocation3 + $0x50] sm:$0xff] 0.0
          %386 = vst [vmem:[#allocation3 + $0x58] sm:$0x3] 0.0
          %387 = vst [vmem:[#allocation3 + $0x60] sm:$0xff] 0.0
          %388 = vst [vmem:[#allocation3 + $0x68] sm:$0xff] 0.0
          %389 = vst [vmem:[#allocation3 + $0x70] sm:$0x3] 0.0
          %390 = vst [vmem:[#allocation3 + $0x78] sm:$0xff] 0.0
          %391 = vst [vmem:[#allocation3 + $0x80] sm:$0xff] 0.0
          %392 = vst [vmem:[#allocation3 + $0x88] sm:$0x3] 0.0
          %393 = vst [vmem:[#allocation3 + $0x90] sm:$0xff] 0.0
          %394 = vst [vmem:[#allocation3 + $0x98] sm:$0xff] 0.0
          %395 = vst [vmem:[#allocation3 + $0xa0] sm:$0x3] 0.0
          %396 = vst [vmem:[#allocation3 + $0xa8] sm:$0xff] 0.0
          %397 = vst [vmem:[#allocation3 + $0xb0] sm:$0xff] 0.0
          %398 = vst [vmem:[#allocation3 + $0xb8] sm:$0x3] 0.0
          %399 = vst [vmem:[#allocation3 + $0xc0] sm:$0xff] 0.0
          %400 = vst [vmem:[#allocation3 + $0xc8] sm:$0xff] 0.0
          %401 = vst [vmem:[#allocation3 + $0xd0] sm:$0x3] 0.0
          %402 = vst [vmem:[#allocation3 + $0xd8] sm:$0xff] 0.0
          %403 = vst [vmem:[#allocation3 + $0xe0] sm:$0xff] 0.0
          %404 = vst [vmem:[#allocation3 + $0xe8] sm:$0x3] 0.0
          %405 = vst [vmem:[#allocation3 + $0xf0] sm:$0xff] 0.0
          %406 = vst [vmem:[#allocation3 + $0xf8] sm:$0xff] 0.0
          %407 = vst [vmem:[#allocation3 + $0x100] sm:$0x3] 0.0
          %408 = vst [vmem:[#allocation3 + $0x108] sm:$0xff] 0.0
          %409 = vst [vmem:[#allocation3 + $0x110] sm:$0xff] 0.0
          %410 = vst [vmem:[#allocation3 + $0x118] sm:$0x3] 0.0
          %411 = vst [vmem:[#allocation3 + $0x120] sm:$0xff] 0.0
          %412 = vst [vmem:[#allocation3 + $0x128] sm:$0xff] 0.0
          %413 = vst [vmem:[#allocation3 + $0x130] sm:$0x3] 0.0
          %414 = vst [vmem:[#allocation3 + $0x138] sm:$0xff] 0.0
          %415 = vst [vmem:[#allocation3 + $0x140] sm:$0xff] 0.0
          %416 = vst [vmem:[#allocation3 + $0x148] sm:$0x3] 0.0
          %417 = vst [vmem:[#allocation3 + $0x150] sm:$0xff] 0.0
          %418 = vst [vmem:[#allocation3 + $0x158] sm:$0xff] 0.0
          %419 = vst [vmem:[#allocation3 + $0x160] sm:$0x3] 0.0
          %420 = vst [vmem:[#allocation3 + $0x168] sm:$0xff] 0.0
          %421 = vst [vmem:[#allocation3 + $0x170] sm:$0xff] 0.0
          %422 = vst [vmem:[#allocation3 + $0x178] sm:$0x3] 0.0
          %423 = vst [vmem:[#allocation3 + $0x180] sm:$0xff] 0.0
          %424 = vst [vmem:[#allocation3 + $0x188] sm:$0xff] 0.0
          %425 = vst [vmem:[#allocation3 + $0x190] sm:$0x3] 0.0
          %426 = vst [vmem:[#allocation3 + $0x198] sm:$0xff] 0.0
          %427 = vst [vmem:[#allocation3 + $0x1a0] sm:$0xff] 0.0
          %428 = vst [vmem:[#allocation3 + $0x1a8] sm:$0x3] 0.0
        $region56: #{tpu_custom_call.1} parent=47 // pred_fallthru
          _
        %v429 = vld [vmem:[%s308] sm:$0xf]
        %v430 = vld [vmem:[%s308 + $0x4] sm:$0xf]
        %v431 = vld [vmem:[%s308 + $0x8] sm:$0xf]
        %v432 = vld [vmem:[%s308 + $0xc] sm:$0xf]
        %v433 = vld [vmem:[%s308 + $0x10] sm:$0xf]
        %v434 = vld [vmem:[%s308 + $0x14] sm:$0xf]
        %v435 = vld [vmem:[%s308 + $0x18] sm:$0xf]
        %v436 = vld [vmem:[%s308 + $0x1c] sm:$0xf]
        %v437 = vld [vmem:[%s308 + $0x20] sm:$0xf]
        %v438 = vld [vmem:[%s308 + $0x24] sm:$0xf]
        %v439 = vld [vmem:[%s308 + $0x28] sm:$0xf]
        %v440 = vld [vmem:[%s308 + $0x2c] sm:$0xf]
        %v441 = vld [vmem:[%s308 + $0x30] sm:$0xf]
        %v442 = vld [vmem:[%s308 + $0x34] sm:$0xf]
        %v443 = vld [vmem:[%s308 + $0x38] sm:$0xf]
        %v444 = vld [vmem:[%s308 + $0x3c] sm:$0xf]
        %v445 = vld [vmem:[%s308 + $0x40] sm:$0xf]
        %v446 = vld [vmem:[%s308 + $0x44] sm:$0xf]
        %v447 = vld [vmem:[%s308 + $0x48] sm:$0xf]
        %v448 = vld [vmem:[%s308 + $0x4c] sm:$0xf]
        %v449 = vld [vmem:[%s308 + $0x50] sm:$0xf]
        %v450 = vld [vmem:[%s308 + $0x54] sm:$0xf]
        %v451 = vld [vmem:[%s308 + $0x58] sm:$0xf]
        %v452 = vld [vmem:[%s308 + $0x5c] sm:$0xf]
        %v453 = vld [vmem:[%s308 + $0x60] sm:$0xf]
        %v454 = vld [vmem:[%s308 + $0x64] sm:$0xf]
        %v455 = vld [vmem:[%s308 + $0x68] sm:$0xf]
        %v456 = vld [vmem:[%s308 + $0x6c] sm:$0xf]
        %v457 = vld [vmem:[%s308 + $0x70] sm:$0xf]
        %v458 = vld [vmem:[%s308 + $0x74] sm:$0xf]
        %v459 = vld [vmem:[%s308 + $0x78] sm:$0xf]
        %v460 = vld [vmem:[%s308 + $0x7c] sm:$0xf]
        %v461 = vunpack.c.l.bf16 %v429
        %v462 = vunpack.c.l.bf16 %v430
        %v463 = vunpack.c.l.bf16 %v431
        %v464 = vunpack.c.l.bf16 %v432
        %v465 = vunpack.c.l.bf16 %v433
        %v466 = vunpack.c.l.bf16 %v434
        %v467 = vunpack.c.l.bf16 %v435
        %v468 = vunpack.c.l.bf16 %v436
        %v469 = vunpack.c.l.bf16 %v437
        %v470 = vunpack.c.l.bf16 %v438
        %v471 = vunpack.c.l.bf16 %v439
        %v472 = vunpack.c.l.bf16 %v440
        %v473 = vunpack.c.l.bf16 %v441
        %v474 = vunpack.c.l.bf16 %v442
        %v475 = vunpack.c.l.bf16 %v443
        %v476 = vunpack.c.l.bf16 %v444
        %v477 = vunpack.c.l.bf16 %v445
        %v478 = vunpack.c.l.bf16 %v446
        %v479 = vunpack.c.l.bf16 %v447
        %v480 = vunpack.c.l.bf16 %v448
        %v481 = vunpack.c.l.bf16 %v449
        %v482 = vunpack.c.l.bf16 %v450
        %v483 = vunpack.c.l.bf16 %v451
        %v484 = vunpack.c.l.bf16 %v452
        %v485 = vunpack.c.l.bf16 %v453
        %v486 = vunpack.c.l.bf16 %v454
        %v487 = vunpack.c.l.bf16 %v455
        %v488 = vunpack.c.l.bf16 %v456
        %v489 = vunpack.c.l.bf16 %v457
        %v490 = vunpack.c.l.bf16 %v458
        %v491 = vunpack.c.l.bf16 %v459
        %v492 = vunpack.c.l.bf16 %v460
        %s493 = scalar_lea.vmem [#allocation2], 24
        %vm494 = vcmask 64512
        %495 = vst.msk [vmem:[%s493 + $0x1] sm:$0xff] %vm494, %v461
        %496 = vst.msk [vmem:[%s493 + $0x9] sm:$0xff] %vm494, %v462
        %497 = vst.msk [vmem:[%s493 + $0x19] sm:$0xff] %vm494, %v463
        %498 = vst.msk [vmem:[%s493 + $0x21] sm:$0xff] %vm494, %v464
        %499 = vst.msk [vmem:[%s493 + $0x31] sm:$0xff] %vm494, %v465
        %500 = vst.msk [vmem:[%s493 + $0x39] sm:$0xff] %vm494, %v466
        %501 = vst.msk [vmem:[%s493 + $0x49] sm:$0xff] %vm494, %v467
        %502 = vst.msk [vmem:[%s493 + $0x51] sm:$0xff] %vm494, %v468
        %503 = vst.msk [vmem:[%s493 + $0x61] sm:$0xff] %vm494, %v469
        %504 = vst.msk [vmem:[%s493 + $0x69] sm:$0xff] %vm494, %v470
        %505 = vst.msk [vmem:[%s493 + $0x79] sm:$0xff] %vm494, %v471
        %506 = vst.msk [vmem:[%s493 + $0x81] sm:$0xff] %vm494, %v472
        %507 = vst.msk [vmem:[%s493 + $0x91] sm:$0xff] %vm494, %v473
        %508 = vst.msk [vmem:[%s493 + $0x99] sm:$0xff] %vm494, %v474
        %509 = vst.msk [vmem:[%s493 + $0xa9] sm:$0xff] %vm494, %v475
        %510 = vst.msk [vmem:[%s493 + $0xb1] sm:$0xff] %vm494, %v476
        %511 = vst.msk [vmem:[%s493 + $0xc1] sm:$0xff] %vm494, %v477
        %512 = vst.msk [vmem:[%s493 + $0xc9] sm:$0xff] %vm494, %v478
        %513 = vst.msk [vmem:[%s493 + $0xd9] sm:$0xff] %vm494, %v479
        %514 = vst.msk [vmem:[%s493 + $0xe1] sm:$0xff] %vm494, %v480
        %515 = vst.msk [vmem:[%s493 + $0xf1] sm:$0xff] %vm494, %v481
        %516 = vst.msk [vmem:[%s493 + $0xf9] sm:$0xff] %vm494, %v482
        %517 = vst.msk [vmem:[%s493 + $0x109] sm:$0xff] %vm494, %v483
        %518 = vst.msk [vmem:[%s493 + $0x111] sm:$0xff] %vm494, %v484
        %519 = vst.msk [vmem:[%s493 + $0x121] sm:$0xff] %vm494, %v485
        %520 = vst.msk [vmem:[%s493 + $0x129] sm:$0xff] %vm494, %v486
        %521 = vst.msk [vmem:[%s493 + $0x139] sm:$0xff] %vm494, %v487
        %522 = vst.msk [vmem:[%s493 + $0x141] sm:$0xff] %vm494, %v488
        %523 = vst.msk [vmem:[%s493 + $0x151] sm:$0xff] %vm494, %v489
        %524 = vst.msk [vmem:[%s493 + $0x159] sm:$0xff] %vm494, %v490
        %525 = vst.msk [vmem:[%s493 + $0x169] sm:$0xff] %vm494, %v491
        %526 = vst.msk [vmem:[%s493 + $0x171] sm:$0xff] %vm494, %v492
        %v527 = vld [vmem:[#allocation2] sm:$0xff]
        %v528 = vld [vmem:[#allocation2 + $0x8] sm:$0xff]
        %v529 = vld [vmem:[#allocation2 + $0x18] sm:$0xff]
        %v530 = vld [vmem:[#allocation2 + $0x20] sm:$0xff]
        %v531 = vld [vmem:[#allocation2 + $0x30] sm:$0xff]
        %v532 = vld [vmem:[#allocation2 + $0x38] sm:$0xff]
        %v533 = vld [vmem:[#allocation2 + $0x48] sm:$0xff]
        %v534 = vld [vmem:[#allocation2 + $0x50] sm:$0xff]
        %v535 = vld [vmem:[#allocation2 + $0x60] sm:$0xff]
        %v536 = vld [vmem:[#allocation2 + $0x68] sm:$0xff]
        %v537 = vld [vmem:[#allocation2 + $0x78] sm:$0xff]
        %v538 = vld [vmem:[#allocation2 + $0x80] sm:$0xff]
        %v539 = vld [vmem:[#allocation2 + $0x90] sm:$0xff]
        %v540 = vld [vmem:[#allocation2 + $0x98] sm:$0xff]
        %v541 = vld [vmem:[#allocation2 + $0xa8] sm:$0xff]
        %v542 = vld [vmem:[#allocation2 + $0xb0] sm:$0xff]
        %v543 = vld [vmem:[#allocation2 + $0xc0] sm:$0xff]
        %v544 = vld [vmem:[#allocation2 + $0xc8] sm:$0xff]
        %v545 = vld [vmem:[#allocation2 + $0xd8] sm:$0xff]
        %v546 = vld [vmem:[#allocation2 + $0xe0] sm:$0xff]
        %v547 = vld [vmem:[#allocation2 + $0xf0] sm:$0xff]
        %v548 = vld [vmem:[#allocation2 + $0xf8] sm:$0xff]
        %v549 = vld [vmem:[#allocation2 + $0x108] sm:$0xff]
        %v550 = vld [vmem:[#allocation2 + $0x110] sm:$0xff]
        %v551 = vld [vmem:[#allocation2 + $0x120] sm:$0xff]
        %v552 = vld [vmem:[#allocation2 + $0x128] sm:$0xff]
        %v553 = vld [vmem:[#allocation2 + $0x138] sm:$0xff]
        %v554 = vld [vmem:[#allocation2 + $0x140] sm:$0xff]
        %v555 = vld [vmem:[#allocation2 + $0x150] sm:$0xff]
        %v556 = vld [vmem:[#allocation2 + $0x158] sm:$0xff]
        %v557 = vld [vmem:[#allocation2 + $0x168] sm:$0xff]
        %v558 = vld [vmem:[#allocation2 + $0x170] sm:$0xff]
        %v559 = vpack.c.bf16 %v528, %v527
        %v560 = vpack.c.bf16 %v530, %v529
        %v561 = vpack.c.bf16 %v532, %v531
        %v562 = vpack.c.bf16 %v534, %v533
        %v563 = vpack.c.bf16 %v536, %v535
        %v564 = vpack.c.bf16 %v538, %v537
        %v565 = vpack.c.bf16 %v540, %v539
        %v566 = vpack.c.bf16 %v542, %v541
        %v567 = vpack.c.bf16 %v544, %v543
        %v568 = vpack.c.bf16 %v546, %v545
        %v569 = vpack.c.bf16 %v548, %v547
        %v570 = vpack.c.bf16 %v550, %v549
        %v571 = vpack.c.bf16 %v552, %v551
        %v572 = vpack.c.bf16 %v554, %v553
        %v573 = vpack.c.bf16 %v556, %v555
        %v574 = vpack.c.bf16 %v558, %v557
        %v575 = vld [vmem:[%s2] sm:$0xf]
        %v576 = vld [vmem:[#allocation2 + $0x1] sm:$0xff]
        %v577 = vld [vmem:[#allocation2 + $0x9] sm:$0xff]
        %v578 = vld [vmem:[#allocation2 + $0x19] sm:$0xff]
        %v579 = vld [vmem:[#allocation2 + $0x21] sm:$0xff]
        %v580 = vld [vmem:[#allocation2 + $0x31] sm:$0xff]
        %v581 = vld [vmem:[#allocation2 + $0x39] sm:$0xff]
        %v582 = vld [vmem:[#allocation2 + $0x49] sm:$0xff]
        %v583 = vld [vmem:[#allocation2 + $0x51] sm:$0xff]
        %v584 = vld [vmem:[#allocation2 + $0x61] sm:$0xff]
        %v585 = vld [vmem:[#allocation2 + $0x69] sm:$0xff]
        %v586 = vld [vmem:[#allocation2 + $0x79] sm:$0xff]
        %v587 = vld [vmem:[#allocation2 + $0x81] sm:$0xff]
        %v588 = vld [vmem:[#allocation2 + $0x91] sm:$0xff]
        %v589 = vld [vmem:[#allocation2 + $0x99] sm:$0xff]
        %v590 = vld [vmem:[#allocation2 + $0xa9] sm:$0xff]
        %v591 = vld [vmem:[#allocation2 + $0xb1] sm:$0xff]
        %v592 = vld [vmem:[#allocation2 + $0xc1] sm:$0xff]
        %v593 = vld [vmem:[#allocation2 + $0xc9] sm:$0xff]
        %v594 = vld [vmem:[#allocation2 + $0xd9] sm:$0xff]
        %v595 = vld [vmem:[#allocation2 + $0xe1] sm:$0xff]
        %v596 = vld [vmem:[#allocation2 + $0xf1] sm:$0xff]
        %v597 = vld [vmem:[#allocation2 + $0xf9] sm:$0xff]
        %v598 = vld [vmem:[#allocation2 + $0x109] sm:$0xff]
        %v599 = vld [vmem:[#allocation2 + $0x111] sm:$0xff]
        %v600 = vld [vmem:[#allocation2 + $0x121] sm:$0xff]
        %v601 = vld [vmem:[#allocation2 + $0x129] sm:$0xff]
        %v602 = vld [vmem:[#allocation2 + $0x139] sm:$0xff]
        %v603 = vld [vmem:[#allocation2 + $0x141] sm:$0xff]
        %v604 = vld [vmem:[#allocation2 + $0x151] sm:$0xff]
        %v605 = vld [vmem:[#allocation2 + $0x159] sm:$0xff]
        %v606 = vld [vmem:[#allocation2 + $0x169] sm:$0xff]
        %v607 = vld [vmem:[#allocation2 + $0x171] sm:$0xff]
        %v608 = vpack.c.bf16 %v577, %v576
        %v609 = vpack.c.bf16 %v579, %v578
        %v610 = vpack.c.bf16 %v581, %v580
        %v611 = vpack.c.bf16 %v583, %v582
        %v612 = vpack.c.bf16 %v585, %v584
        %v613 = vpack.c.bf16 %v587, %v586
        %v614 = vpack.c.bf16 %v589, %v588
        %v615 = vpack.c.bf16 %v591, %v590
        %v616 = vpack.c.bf16 %v593, %v592
        %v617 = vpack.c.bf16 %v595, %v594
        %v618 = vpack.c.bf16 %v597, %v596
        %v619 = vpack.c.bf16 %v599, %v598
        %v620 = vpack.c.bf16 %v601, %v600
        %v621 = vpack.c.bf16 %v603, %v602
        %v622 = vpack.c.bf16 %v605, %v604
        %v623 = vpack.c.bf16 %v607, %v606
        %s624 = scalar_lea.vmem %s2, 4
        %v625 = vld [vmem:[%s624] sm:$0xf]
        %v627 = vsel %vm494, %v608, 0
        %v630 = vsel %vm494, %v609, 0
        %v633 = vsel %vm494, %v610, 0
        %v636 = vsel %vm494, %v611, 0
        %v639 = vsel %vm494, %v612, 0
        %v642 = vsel %vm494, %v613, 0
        %v645 = vsel %vm494, %v614, 0
        %v648 = vsel %vm494, %v615, 0
        %v651 = vsel %vm494, %v616, 0
        %v654 = vsel %vm494, %v617, 0
        %v657 = vsel %vm494, %v618, 0
        %v660 = vsel %vm494, %v619, 0
        %v663 = vsel %vm494, %v620, 0
        %v666 = vsel %vm494, %v621, 0
        %v669 = vsel %vm494, %v622, 0
        %v672 = vsel %vm494, %v623, 0
        %vm674 = vcmask 1043456
        %v676 = vsel %vm674, %v625, 0
        %678 = vmatprep.subr.bf16.mxu0 0
        %679 = vmatpush1.bf16.msra.mxu0 %v676
        %680 = vmatprep.subr.bf16.mxu0 0
        %681 = vmatpush1.bf16.msra.mxu0 0
        %682 = vmatprep.subr.bf16.mxu0 0
        %683 = vmatpush1.bf16.msra.mxu0 0
        %684 = vmatprep.subr.bf16.mxu0 0
        %685 = vmatpush1.bf16.msra.mxu0 0
        %686 = vmatprep.subr.bf16.mxu0 0
        %687 = vmatpush1.bf16.msra.mxu0 0
        %688 = vmatprep.subr.bf16.mxu0 0
        %689 = vmatpush1.bf16.msra.mxu0 0
        %690 = vmatprep.subr.bf16.mxu0 0
        %691 = vmatpush1.bf16.msra.mxu0 0
        %692 = vmatprep.subr.bf16.mxu0 0
        %693 = vmatpush1.bf16.msra.mxu0 0
        %694 = vmatprep.subr.bf16.mxu0 0
        %695 = vmatpush1.bf16.msra.mxu0 0
        %696 = vmatprep.subr.bf16.mxu0 0
        %697 = vmatpush1.bf16.msra.mxu0 0
        %698 = vmatprep.subr.bf16.mxu0 0
        %699 = vmatpush1.bf16.msra.mxu0 0
        %700 = vmatprep.subr.bf16.mxu0 0
        %701 = vmatpush1.bf16.msra.mxu0 0
        %702 = vmatprep.subr.bf16.mxu0 0
        %703 = vmatpush1.bf16.msra.mxu0 0
        %704 = vmatprep.subr.bf16.mxu0 0
        %705 = vmatpush1.bf16.msra.mxu0 0
        %706 = vmatprep.subr.bf16.mxu0 0
        %707 = vmatpush1.bf16.msra.mxu0 0
        %708 = vmatprep.subr.bf16.mxu0 0
        %709 = vmatpush1.bf16.msra.mxu0 0
        %710 = vmatprep.mubr.bf16.mxu0 0
        %711 = vmatmul.mubr.bf16.gmra.mrb[0].mxu0 %v627
        %v712 = vpop.f32.mrb[0].mxu0
        %v713 = vadd.f32 0.0, %v712
        %v714 = vpop.f32.mrb[0].mxu0
        %v715 = vpop.f32.mrb[0].mxu0
        %v716 = vadd.f32 0.0, %v715
        %v717 = vpop.f32.mrb[0].mxu0
        %718 = vmatprep.mubr.bf16.mxu0 0
        %719 = vmatmul.mubr.bf16.gmra.mrb[0].mxu0 %v630
        %v720 = vpop.f32.mrb[0].mxu0
        %v721 = vadd.f32 0.0, %v720
        %v722 = vpop.f32.mrb[0].mxu0
        %v723 = vpop.f32.mrb[0].mxu0
        %v724 = vadd.f32 0.0, %v723
        %v725 = vpop.f32.mrb[0].mxu0
        %726 = vmatprep.mubr.bf16.mxu0 0
        %727 = vmatmul.mubr.bf16.gmra.mrb[0].mxu0 %v633
        %v728 = vpop.f32.mrb[0].mxu0
        %v729 = vadd.f32 0.0, %v728
        %v730 = vpop.f32.mrb[0].mxu0
        %v731 = vpop.f32.mrb[0].mxu0
        %v732 = vadd.f32 0.0, %v731
        %v733 = vpop.f32.mrb[0].mxu0
        %734 = vmatprep.mubr.bf16.mxu0 0
        %735 = vmatmul.mubr.bf16.gmra.mrb[0].mxu0 %v636
        %v736 = vpop.f32.mrb[0].mxu0
        %v737 = vadd.f32 0.0, %v736
        %v738 = vpop.f32.mrb[0].mxu0
        %v739 = vpop.f32.mrb[0].mxu0
        %v740 = vadd.f32 0.0, %v739
        %v741 = vpop.f32.mrb[0].mxu0
        %742 = vmatprep.mubr.bf16.mxu0 0
        %743 = vmatmul.mubr.bf16.gmra.mrb[0].mxu0 %v639
        %v744 = vpop.f32.mrb[0].mxu0
        %v745 = vadd.f32 0.0, %v744
        %v746 = vpop.f32.mrb[0].mxu0
        %v747 = vpop.f32.mrb[0].mxu0
        %v748 = vadd.f32 0.0, %v747
        %v749 = vpop.f32.mrb[0].mxu0
        %750 = vmatprep.mubr.bf16.mxu0 0
        %751 = vmatmul.mubr.bf16.gmra.mrb[0].mxu0 %v642
        %v752 = vpop.f32.mrb[0].mxu0
        %v753 = vadd.f32 0.0, %v752
        %v754 = vpop.f32.mrb[0].mxu0
        %v755 = vpop.f32.mrb[0].mxu0
        %v756 = vadd.f32 0.0, %v755
        %v757 = vpop.f32.mrb[0].mxu0
        %758 = vmatprep.mubr.bf16.mxu0 0
        %759 = vmatmul.mubr.bf16.gmra.mrb[0].mxu0 %v645
        %v760 = vpop.f32.mrb[0].mxu0
        %v761 = vadd.f32 0.0, %v760
        %v762 = vpop.f32.mrb[0].mxu0
        %v763 = vpop.f32.mrb[0].mxu0
        %v764 = vadd.f32 0.0, %v763
        %v765 = vpop.f32.mrb[0].mxu0
        %766 = vmatprep.mubr.bf16.mxu0 0
        %767 = vmatmul.mubr.bf16.gmra.mrb[0].mxu0 %v648
        %v768 = vpop.f32.mrb[0].mxu0
        %v769 = vadd.f32 0.0, %v768
        %v770 = vpop.f32.mrb[0].mxu0
        %v771 = vpop.f32.mrb[0].mxu0
        %v772 = vadd.f32 0.0, %v771
        %v773 = vpop.f32.mrb[0].mxu0
        %774 = vmatprep.mubr.bf16.mxu0 0
        %775 = vmatmul.mubr.bf16.gmra.mrb[0].mxu0 %v651
        %v776 = vpop.f32.mrb[0].mxu0
        %v777 = vadd.f32 0.0, %v776
        %v778 = vpop.f32.mrb[0].mxu0
        %v779 = vpop.f32.mrb[0].mxu0
        %v780 = vadd.f32 0.0, %v779
        %v781 = vpop.f32.mrb[0].mxu0
        %782 = vmatprep.mubr.bf16.mxu0 0
        %783 = vmatmul.mubr.bf16.gmra.mrb[0].mxu0 %v654
        %v784 = vpop.f32.mrb[0].mxu0
        %v785 = vadd.f32 0.0, %v784
        %v786 = vpop.f32.mrb[0].mxu0
        %v787 = vpop.f32.mrb[0].mxu0
        %v788 = vadd.f32 0.0, %v787
        %v789 = vpop.f32.mrb[0].mxu0
        %790 = vmatprep.mubr.bf16.mxu0 0
        %791 = vmatmul.mubr.bf16.gmra.mrb[0].mxu0 %v657
        %v792 = vpop.f32.mrb[0].mxu0
        %v793 = vadd.f32 0.0, %v792
        %v794 = vpop.f32.mrb[0].mxu0
        %v795 = vpop.f32.mrb[0].mxu0
        %v796 = vadd.f32 0.0, %v795
        %v797 = vpop.f32.mrb[0].mxu0
        %798 = vmatprep.mubr.bf16.mxu0 0
        %799 = vmatmul.mubr.bf16.gmra.mrb[0].mxu0 %v660
        %v800 = vpop.f32.mrb[0].mxu0
        %v801 = vadd.f32 0.0, %v800
        %v802 = vpop.f32.mrb[0].mxu0
        %v803 = vpop.f32.mrb[0].mxu0
        %v804 = vadd.f32 0.0, %v803
        %v805 = vpop.f32.mrb[0].mxu0
        %806 = vmatprep.mubr.bf16.mxu0 0
        %807 = vmatmul.mubr.bf16.gmra.mrb[0].mxu0 %v663
        %v808 = vpop.f32.mrb[0].mxu0
        %v809 = vadd.f32 0.0, %v808
        %v810 = vpop.f32.mrb[0].mxu0
        %v811 = vpop.f32.mrb[0].mxu0
        %v812 = vadd.f32 0.0, %v811
        %v813 = vpop.f32.mrb[0].mxu0
        %814 = vmatprep.mubr.bf16.mxu0 0
        %815 = vmatmul.mubr.bf16.gmra.mrb[0].mxu0 %v666
        %v816 = vpop.f32.mrb[0].mxu0
        %v817 = vadd.f32 0.0, %v816
        %v818 = vpop.f32.mrb[0].mxu0
        %v819 = vpop.f32.mrb[0].mxu0
        %v820 = vadd.f32 0.0, %v819
        %v821 = vpop.f32.mrb[0].mxu0
        %822 = vmatprep.mubr.bf16.mxu0 0
        %823 = vmatmul.mubr.bf16.gmra.mrb[0].mxu0 %v669
        %v824 = vpop.f32.mrb[0].mxu0
        %v825 = vadd.f32 0.0, %v824
        %v826 = vpop.f32.mrb[0].mxu0
        %v827 = vpop.f32.mrb[0].mxu0
        %v828 = vadd.f32 0.0, %v827
        %v829 = vpop.f32.mrb[0].mxu0
        %830 = vmatprep.mubr.bf16.mxu0 0
        %831 = vmatmul.mubr.bf16.gmra.mrb[0].mxu0 %v672
        %v832 = vpop.f32.mrb[0].mxu0
        %v833 = vadd.f32 0.0, %v832
        %v834 = vpop.f32.mrb[0].mxu0
        %v835 = vpop.f32.mrb[0].mxu0
        %v836 = vadd.f32 0.0, %v835
        %v837 = vpop.f32.mrb[0].mxu0
        %838 = vdwg.mxu0
        %v840 = vsel %vm494, %v559, 0
        %v843 = vsel %vm494, %v560, 0
        %v846 = vsel %vm494, %v561, 0
        %v849 = vsel %vm494, %v562, 0
        %v852 = vsel %vm494, %v563, 0
        %v855 = vsel %vm494, %v564, 0
        %v858 = vsel %vm494, %v565, 0
        %v861 = vsel %vm494, %v566, 0
        %v864 = vsel %vm494, %v567, 0
        %v867 = vsel %vm494, %v568, 0
        %v870 = vsel %vm494, %v569, 0
        %v873 = vsel %vm494, %v570, 0
        %v876 = vsel %vm494, %v571, 0
        %v879 = vsel %vm494, %v572, 0
        %v882 = vsel %vm494, %v573, 0
        %v885 = vsel %vm494, %v574, 0
        %v888 = vsel %vm674, %v575, 0
        %890 = vmatprep.subr.bf16.mxu0 0
        %891 = vmatpush1.bf16.msra.mxu0 %v888
        %892 = vmatprep.subr.bf16.mxu0 0
        %893 = vmatpush1.bf16.msra.mxu0 0
        %894 = vmatprep.subr.bf16.mxu0 0
        %895 = vmatpush1.bf16.msra.mxu0 0
        %896 = vmatprep.subr.bf16.mxu0 0
        %897 = vmatpush1.bf16.msra.mxu0 0
        %898 = vmatprep.subr.bf16.mxu0 0
        %899 = vmatpush1.bf16.msra.mxu0 0
        %900 = vmatprep.subr.bf16.mxu0 0
        %901 = vmatpush1.bf16.msra.mxu0 0
        %902 = vmatprep.subr.bf16.mxu0 0
        %903 = vmatpush1.bf16.msra.mxu0 0
        %904 = vmatprep.subr.bf16.mxu0 0
        %905 = vmatpush1.bf16.msra.mxu0 0
        %906 = vmatprep.subr.bf16.mxu0 0
        %907 = vmatpush1.bf16.msra.mxu0 0
        %908 = vmatprep.subr.bf16.mxu0 0
        %909 = vmatpush1.bf16.msra.mxu0 0
        %910 = vmatprep.subr.bf16.mxu0 0
        %911 = vmatpush1.bf16.msra.mxu0 0
        %912 = vmatprep.subr.bf16.mxu0 0
        %913 = vmatpush1.bf16.msra.mxu0 0
        %914 = vmatprep.subr.bf16.mxu0 0
        %915 = vmatpush1.bf16.msra.mxu0 0
        %916 = vmatprep.subr.bf16.mxu0 0
        %917 = vmatpush1.bf16.msra.mxu0 0
        %918 = vmatprep.subr.bf16.mxu0 0
        %919 = vmatpush1.bf16.msra.mxu0 0
        %920 = vmatprep.subr.bf16.mxu0 0
        %921 = vmatpush1.bf16.msra.mxu0 0
        %922 = vmatprep.mubr.bf16.mxu0 0
        %923 = vmatmul.mubr.bf16.gmra.mrb[0].mxu0 %v840
        %v924 = vpop.f32.mrb[0].mxu0
        %v925 = vadd.f32 %v713, %v924
        %v926 = vpop.f32.mrb[0].mxu0
        %v927 = vpop.f32.mrb[0].mxu0
        %v928 = vadd.f32 %v716, %v927
        %v929 = vpop.f32.mrb[0].mxu0
        %930 = vmatprep.mubr.bf16.mxu0 0
        %931 = vmatmul.mubr.bf16.gmra.mrb[0].mxu0 %v843
        %v932 = vpop.f32.mrb[0].mxu0
        %v933 = vadd.f32 %v721, %v932
        %v934 = vpop.f32.mrb[0].mxu0
        %v935 = vpop.f32.mrb[0].mxu0
        %v936 = vadd.f32 %v724, %v935
        %v937 = vpop.f32.mrb[0].mxu0
        %938 = vmatprep.mubr.bf16.mxu0 0
        %939 = vmatmul.mubr.bf16.gmra.mrb[0].mxu0 %v846
        %v940 = vpop.f32.mrb[0].mxu0
        %v941 = vadd.f32 %v729, %v940
        %v942 = vpop.f32.mrb[0].mxu0
        %v943 = vpop.f32.mrb[0].mxu0
        %v944 = vadd.f32 %v732, %v943
        %v945 = vpop.f32.mrb[0].mxu0
        %946 = vmatprep.mubr.bf16.mxu0 0
        %947 = vmatmul.mubr.bf16.gmra.mrb[0].mxu0 %v849
        %v948 = vpop.f32.mrb[0].mxu0
        %v949 = vadd.f32 %v737, %v948
        %v950 = vpop.f32.mrb[0].mxu0
        %v951 = vpop.f32.mrb[0].mxu0
        %v952 = vadd.f32 %v740, %v951
        %v953 = vpop.f32.mrb[0].mxu0
        %954 = vmatprep.mubr.bf16.mxu0 0
        %955 = vmatmul.mubr.bf16.gmra.mrb[0].mxu0 %v852
        %v956 = vpop.f32.mrb[0].mxu0
        %v957 = vadd.f32 %v745, %v956
        %v958 = vpop.f32.mrb[0].mxu0
        %v959 = vpop.f32.mrb[0].mxu0
        %v960 = vadd.f32 %v748, %v959
        %v961 = vpop.f32.mrb[0].mxu0
        %962 = vmatprep.mubr.bf16.mxu0 0
        %963 = vmatmul.mubr.bf16.gmra.mrb[0].mxu0 %v855
        %v964 = vpop.f32.mrb[0].mxu0
        %v965 = vadd.f32 %v753, %v964
        %v966 = vpop.f32.mrb[0].mxu0
        %v967 = vpop.f32.mrb[0].mxu0
        %v968 = vadd.f32 %v756, %v967
        %v969 = vpop.f32.mrb[0].mxu0
        %970 = vmatprep.mubr.bf16.mxu0 0
        %971 = vmatmul.mubr.bf16.gmra.mrb[0].mxu0 %v858
        %v972 = vpop.f32.mrb[0].mxu0
        %v973 = vadd.f32 %v761, %v972
        %v974 = vpop.f32.mrb[0].mxu0
        %v975 = vpop.f32.mrb[0].mxu0
        %v976 = vadd.f32 %v764, %v975
        %v977 = vpop.f32.mrb[0].mxu0
        %978 = vmatprep.mubr.bf16.mxu0 0
        %979 = vmatmul.mubr.bf16.gmra.mrb[0].mxu0 %v861
        %v980 = vpop.f32.mrb[0].mxu0
        %v981 = vadd.f32 %v769, %v980
        %v982 = vpop.f32.mrb[0].mxu0
        %v983 = vpop.f32.mrb[0].mxu0
        %v984 = vadd.f32 %v772, %v983
        %v985 = vpop.f32.mrb[0].mxu0
        %986 = vmatprep.mubr.bf16.mxu0 0
        %987 = vmatmul.mubr.bf16.gmra.mrb[0].mxu0 %v864
        %v988 = vpop.f32.mrb[0].mxu0
        %v989 = vadd.f32 %v777, %v988
        %v990 = vpop.f32.mrb[0].mxu0
        %v991 = vpop.f32.mrb[0].mxu0
        %v992 = vadd.f32 %v780, %v991
        %v993 = vpop.f32.mrb[0].mxu0
        %994 = vmatprep.mubr.bf16.mxu0 0
        %995 = vmatmul.mubr.bf16.gmra.mrb[0].mxu0 %v867
        %v996 = vpop.f32.mrb[0].mxu0
        %v997 = vadd.f32 %v785, %v996
        %v998 = vpop.f32.mrb[0].mxu0
        %v999 = vpop.f32.mrb[0].mxu0
        %v1000 = vadd.f32 %v788, %v999
        %v1001 = vpop.f32.mrb[0].mxu0
        %1002 = vmatprep.mubr.bf16.mxu0 0
        %1003 = vmatmul.mubr.bf16.gmra.mrb[0].mxu0 %v870
        %v1004 = vpop.f32.mrb[0].mxu0
        %v1005 = vadd.f32 %v793, %v1004
        %v1006 = vpop.f32.mrb[0].mxu0
        %v1007 = vpop.f32.mrb[0].mxu0
        %v1008 = vadd.f32 %v796, %v1007
        %v1009 = vpop.f32.mrb[0].mxu0
        %1010 = vmatprep.mubr.bf16.mxu0 0
        %1011 = vmatmul.mubr.bf16.gmra.mrb[0].mxu0 %v873
        %v1012 = vpop.f32.mrb[0].mxu0
        %v1013 = vadd.f32 %v801, %v1012
        %v1014 = vpop.f32.mrb[0].mxu0
        %v1015 = vpop.f32.mrb[0].mxu0
        %v1016 = vadd.f32 %v804, %v1015
        %v1017 = vpop.f32.mrb[0].mxu0
        %1018 = vmatprep.mubr.bf16.mxu0 0
        %1019 = vmatmul.mubr.bf16.gmra.mrb[0].mxu0 %v876
        %v1020 = vpop.f32.mrb[0].mxu0
        %v1021 = vadd.f32 %v809, %v1020
        %v1022 = vpop.f32.mrb[0].mxu0
        %v1023 = vpop.f32.mrb[0].mxu0
        %v1024 = vadd.f32 %v812, %v1023
        %v1025 = vpop.f32.mrb[0].mxu0
        %1026 = vmatprep.mubr.bf16.mxu0 0
        %1027 = vmatmul.mubr.bf16.gmra.mrb[0].mxu0 %v879
        %v1028 = vpop.f32.mrb[0].mxu0
        %v1029 = vadd.f32 %v817, %v1028
        %v1030 = vpop.f32.mrb[0].mxu0
        %v1031 = vpop.f32.mrb[0].mxu0
        %v1032 = vadd.f32 %v820, %v1031
        %v1033 = vpop.f32.mrb[0].mxu0
        %1034 = vmatprep.mubr.bf16.mxu0 0
        %1035 = vmatmul.mubr.bf16.gmra.mrb[0].mxu0 %v882
        %v1036 = vpop.f32.mrb[0].mxu0
        %v1037 = vadd.f32 %v825, %v1036
        %v1038 = vpop.f32.mrb[0].mxu0
        %v1039 = vpop.f32.mrb[0].mxu0
        %v1040 = vadd.f32 %v828, %v1039
        %v1041 = vpop.f32.mrb[0].mxu0
        %1042 = vmatprep.mubr.bf16.mxu0 0
        %1043 = vmatmul.mubr.bf16.gmra.mrb[0].mxu0 %v885
        %v1044 = vpop.f32.mrb[0].mxu0
        %v1045 = vadd.f32 %v833, %v1044
        %v1046 = vpop.f32.mrb[0].mxu0
        %v1047 = vpop.f32.mrb[0].mxu0
        %v1048 = vadd.f32 %v836, %v1047
        %v1049 = vpop.f32.mrb[0].mxu0
        %1050 = vdwg.mxu0
        %v1051 = vld [vmem:[#allocation2 + $0x2] sm:$0xff]
        %v1052 = vld [vmem:[#allocation2 + $0xa] sm:$0xff]
        %v1053 = vld [vmem:[#allocation2 + $0x1a] sm:$0xff]
        %v1054 = vld [vmem:[#allocation2 + $0x22] sm:$0xff]
        %v1055 = vld [vmem:[#allocation2 + $0x32] sm:$0xff]
        %v1056 = vld [vmem:[#allocation2 + $0x3a] sm:$0xff]
        %v1057 = vld [vmem:[#allocation2 + $0x4a] sm:$0xff]
        %v1058 = vld [vmem:[#allocation2 + $0x52] sm:$0xff]
        %v1059 = vld [vmem:[#allocation2 + $0x62] sm:$0xff]
        %v1060 = vld [vmem:[#allocation2 + $0x6a] sm:$0xff]
        %v1061 = vld [vmem:[#allocation2 + $0x7a] sm:$0xff]
        %v1062 = vld [vmem:[#allocation2 + $0x82] sm:$0xff]
        %v1063 = vld [vmem:[#allocation2 + $0x92] sm:$0xff]
        %v1064 = vld [vmem:[#allocation2 + $0x9a] sm:$0xff]
        %v1065 = vld [vmem:[#allocation2 + $0xaa] sm:$0xff]
        %v1066 = vld [vmem:[#allocation2 + $0xb2] sm:$0xff]
        %v1067 = vld [vmem:[#allocation2 + $0xc2] sm:$0xff]
        %v1068 = vld [vmem:[#allocation2 + $0xca] sm:$0xff]
        %v1069 = vld [vmem:[#allocation2 + $0xda] sm:$0xff]
        %v1070 = vld [vmem:[#allocation2 + $0xe2] sm:$0xff]
        %v1071 = vld [vmem:[#allocation2 + $0xf2] sm:$0xff]
        %v1072 = vld [vmem:[#allocation2 + $0xfa] sm:$0xff]
        %v1073 = vld [vmem:[#allocation2 + $0x10a] sm:$0xff]
        %v1074 = vld [vmem:[#allocation2 + $0x112] sm:$0xff]
        %v1075 = vld [vmem:[#allocation2 + $0x122] sm:$0xff]
        %v1076 = vld [vmem:[#allocation2 + $0x12a] sm:$0xff]
        %v1077 = vld [vmem:[#allocation2 + $0x13a] sm:$0xff]
        %v1078 = vld [vmem:[#allocation2 + $0x142] sm:$0xff]
        %v1079 = vld [vmem:[#allocation2 + $0x152] sm:$0xff]
        %v1080 = vld [vmem:[#allocation2 + $0x15a] sm:$0xff]
        %v1081 = vld [vmem:[#allocation2 + $0x16a] sm:$0xff]
        %v1082 = vld [vmem:[#allocation2 + $0x172] sm:$0xff]
        %v1083 = vpack.c.bf16 %v1052, %v1051
        %v1084 = vpack.c.bf16 %v1054, %v1053
        %v1085 = vpack.c.bf16 %v1056, %v1055
        %v1086 = vpack.c.bf16 %v1058, %v1057
        %v1087 = vpack.c.bf16 %v1060, %v1059
        %v1088 = vpack.c.bf16 %v1062, %v1061
        %v1089 = vpack.c.bf16 %v1064, %v1063
        %v1090 = vpack.c.bf16 %v1066, %v1065
        %v1091 = vpack.c.bf16 %v1068, %v1067
        %v1092 = vpack.c.bf16 %v1070, %v1069
        %v1093 = vpack.c.bf16 %v1072, %v1071
        %v1094 = vpack.c.bf16 %v1074, %v1073
        %v1095 = vpack.c.bf16 %v1076, %v1075
        %v1096 = vpack.c.bf16 %v1078, %v1077
        %v1097 = vpack.c.bf16 %v1080, %v1079
        %v1098 = vpack.c.bf16 %v1082, %v1081
        %s1099 = scalar_lea.vmem %s2, 8
        %v1100 = vld [vmem:[%s1099] sm:$0xf]
        %v1102 = vsel %vm494, %v1083, 0
        %v1105 = vsel %vm494, %v1084, 0
        %v1108 = vsel %vm494, %v1085, 0
        %v1111 = vsel %vm494, %v1086, 0
        %v1114 = vsel %vm494, %v1087, 0
        %v1117 = vsel %vm494, %v1088, 0
        %v1120 = vsel %vm494, %v1089, 0
        %v1123 = vsel %vm494, %v1090, 0
        %v1126 = vsel %vm494, %v1091, 0
        %v1129 = vsel %vm494, %v1092, 0
        %v1132 = vsel %vm494, %v1093, 0
        %v1135 = vsel %vm494, %v1094, 0
        %v1138 = vsel %vm494, %v1095, 0
        %v1141 = vsel %vm494, %v1096, 0
        %v1144 = vsel %vm494, %v1097, 0
        %v1147 = vsel %vm494, %v1098, 0
        %v1150 = vsel %vm674, %v1100, 0
        %1152 = vmatprep.subr.bf16.mxu0 0
        %1153 = vmatpush1.bf16.msra.mxu0 %v1150
        %1154 = vmatprep.subr.bf16.mxu0 0
        %1155 = vmatpush1.bf16.msra.mxu0 0
        %1156 = vmatprep.subr.bf16.mxu0 0
        %1157 = vmatpush1.bf16.msra.mxu0 0
        %1158 = vmatprep.subr.bf16.mxu0 0
        %1159 = vmatpush1.bf16.msra.mxu0 0
        %1160 = vmatprep.subr.bf16.mxu0 0
        %1161 = vmatpush1.bf16.msra.mxu0 0
        %1162 = vmatprep.subr.bf16.mxu0 0
        %1163 = vmatpush1.bf16.msra.mxu0 0
        %1164 = vmatprep.subr.bf16.mxu0 0
        %1165 = vmatpush1.bf16.msra.mxu0 0
        %1166 = vmatprep.subr.bf16.mxu0 0
        %1167 = vmatpush1.bf16.msra.mxu0 0
        %1168 = vmatprep.subr.bf16.mxu0 0
        %1169 = vmatpush1.bf16.msra.mxu0 0
        %1170 = vmatprep.subr.bf16.mxu0 0
        %1171 = vmatpush1.bf16.msra.mxu0 0
        %1172 = vmatprep.subr.bf16.mxu0 0
        %1173 = vmatpush1.bf16.msra.mxu0 0
        %1174 = vmatprep.subr.bf16.mxu0 0
        %1175 = vmatpush1.bf16.msra.mxu0 0
        %1176 = vmatprep.subr.bf16.mxu0 0
        %1177 = vmatpush1.bf16.msra.mxu0 0
        %1178 = vmatprep.subr.bf16.mxu0 0
        %1179 = vmatpush1.bf16.msra.mxu0 0
        %1180 = vmatprep.subr.bf16.mxu0 0
        %1181 = vmatpush1.bf16.msra.mxu0 0
        %1182 = vmatprep.subr.bf16.mxu0 0
        %1183 = vmatpush1.bf16.msra.mxu0 0
        %1184 = vmatprep.mubr.bf16.mxu0 0
        %1185 = vmatmul.mubr.bf16.gmra.mrb[0].mxu0 %v1102
        %v1186 = vpop.f32.mrb[0].mxu0
        %v1187 = vadd.f32 0.0, %v1186
        %v1188 = vpop.f32.mrb[0].mxu0
        %v1189 = vpop.f32.mrb[0].mxu0
        %v1190 = vadd.f32 0.0, %v1189
        %v1191 = vpop.f32.mrb[0].mxu0
        %1192 = vmatprep.mubr.bf16.mxu0 0
        %1193 = vmatmul.mubr.bf16.gmra.mrb[0].mxu0 %v1105
        %v1194 = vpop.f32.mrb[0].mxu0
        %v1195 = vadd.f32 0.0, %v1194
        %v1196 = vpop.f32.mrb[0].mxu0
        %v1197 = vpop.f32.mrb[0].mxu0
        %v1198 = vadd.f32 0.0, %v1197
        %v1199 = vpop.f32.mrb[0].mxu0
        %1200 = vmatprep.mubr.bf16.mxu0 0
        %1201 = vmatmul.mubr.bf16.gmra.mrb[0].mxu0 %v1108
        %v1202 = vpop.f32.mrb[0].mxu0
        %v1203 = vadd.f32 0.0, %v1202
        %v1204 = vpop.f32.mrb[0].mxu0
        %v1205 = vpop.f32.mrb[0].mxu0
        %v1206 = vadd.f32 0.0, %v1205
        %v1207 = vpop.f32.mrb[0].mxu0
        %1208 = vmatprep.mubr.bf16.mxu0 0
        %1209 = vmatmul.mubr.bf16.gmra.mrb[0].mxu0 %v1111
        %v1210 = vpop.f32.mrb[0].mxu0
        %v1211 = vadd.f32 0.0, %v1210
        %v1212 = vpop.f32.mrb[0].mxu0
        %v1213 = vpop.f32.mrb[0].mxu0
        %v1214 = vadd.f32 0.0, %v1213
        %v1215 = vpop.f32.mrb[0].mxu0
        %1216 = vmatprep.mubr.bf16.mxu0 0
        %1217 = vmatmul.mubr.bf16.gmra.mrb[0].mxu0 %v1114
        %v1218 = vpop.f32.mrb[0].mxu0
        %v1219 = vadd.f32 0.0, %v1218
        %v1220 = vpop.f32.mrb[0].mxu0
        %v1221 = vpop.f32.mrb[0].mxu0
        %v1222 = vadd.f32 0.0, %v1221
        %v1223 = vpop.f32.mrb[0].mxu0
        %1224 = vmatprep.mubr.bf16.mxu0 0
        %1225 = vmatmul.mubr.bf16.gmra.mrb[0].mxu0 %v1117
        %v1226 = vpop.f32.mrb[0].mxu0
        %v1227 = vadd.f32 0.0, %v1226
        %v1228 = vpop.f32.mrb[0].mxu0
        %v1229 = vpop.f32.mrb[0].mxu0
        %v1230 = vadd.f32 0.0, %v1229
        %v1231 = vpop.f32.mrb[0].mxu0
        %1232 = vmatprep.mubr.bf16.mxu0 0
        %1233 = vmatmul.mubr.bf16.gmra.mrb[0].mxu0 %v1120
        %v1234 = vpop.f32.mrb[0].mxu0
        %v1235 = vadd.f32 0.0, %v1234
        %v1236 = vpop.f32.mrb[0].mxu0
        %v1237 = vpop.f32.mrb[0].mxu0
        %v1238 = vadd.f32 0.0, %v1237
        %v1239 = vpop.f32.mrb[0].mxu0
        %1240 = vmatprep.mubr.bf16.mxu0 0
        %1241 = vmatmul.mubr.bf16.gmra.mrb[0].mxu0 %v1123
        %v1242 = vpop.f32.mrb[0].mxu0
        %v1243 = vadd.f32 0.0, %v1242
        %v1244 = vpop.f32.mrb[0].mxu0
        %v1245 = vpop.f32.mrb[0].mxu0
        %v1246 = vadd.f32 0.0, %v1245
        %v1247 = vpop.f32.mrb[0].mxu0
        %1248 = vmatprep.mubr.bf16.mxu0 0
        %1249 = vmatmul.mubr.bf16.gmra.mrb[0].mxu0 %v1126
        %v1250 = vpop.f32.mrb[0].mxu0
        %v1251 = vadd.f32 0.0, %v1250
        %v1252 = vpop.f32.mrb[0].mxu0
        %v1253 = vpop.f32.mrb[0].mxu0
        %v1254 = vadd.f32 0.0, %v1253
        %v1255 = vpop.f32.mrb[0].mxu0
        %1256 = vmatprep.mubr.bf16.mxu0 0
        %1257 = vmatmul.mubr.bf16.gmra.mrb[0].mxu0 %v1129
        %v1258 = vpop.f32.mrb[0].mxu0
        %v1259 = vadd.f32 0.0, %v1258
        %v1260 = vpop.f32.mrb[0].mxu0
        %v1261 = vpop.f32.mrb[0].mxu0
        %v1262 = vadd.f32 0.0, %v1261
        %v1263 = vpop.f32.mrb[0].mxu0
        %1264 = vmatprep.mubr.bf16.mxu0 0
        %1265 = vmatmul.mubr.bf16.gmra.mrb[0].mxu0 %v1132
        %v1266 = vpop.f32.mrb[0].mxu0
        %v1267 = vadd.f32 0.0, %v1266
        %v1268 = vpop.f32.mrb[0].mxu0
        %v1269 = vpop.f32.mrb[0].mxu0
        %v1270 = vadd.f32 0.0, %v1269
        %v1271 = vpop.f32.mrb[0].mxu0
        %1272 = vmatprep.mubr.bf16.mxu0 0
        %1273 = vmatmul.mubr.bf16.gmra.mrb[0].mxu0 %v1135
        %v1274 = vpop.f32.mrb[0].mxu0
        %v1275 = vadd.f32 0.0, %v1274
        %v1276 = vpop.f32.mrb[0].mxu0
        %v1277 = vpop.f32.mrb[0].mxu0
        %v1278 = vadd.f32 0.0, %v1277
        %v1279 = vpop.f32.mrb[0].mxu0
        %1280 = vmatprep.mubr.bf16.mxu0 0
        %1281 = vmatmul.mubr.bf16.gmra.mrb[0].mxu0 %v1138
        %v1282 = vpop.f32.mrb[0].mxu0
        %v1283 = vadd.f32 0.0, %v1282
        %v1284 = vpop.f32.mrb[0].mxu0
        %v1285 = vpop.f32.mrb[0].mxu0
        %v1286 = vadd.f32 0.0, %v1285
        %v1287 = vpop.f32.mrb[0].mxu0
        %1288 = vmatprep.mubr.bf16.mxu0 0
        %1289 = vmatmul.mubr.bf16.gmra.mrb[0].mxu0 %v1141
        %v1290 = vpop.f32.mrb[0].mxu0
        %v1291 = vadd.f32 0.0, %v1290
        %v1292 = vpop.f32.mrb[0].mxu0
        %v1293 = vpop.f32.mrb[0].mxu0
        %v1294 = vadd.f32 0.0, %v1293
        %v1295 = vpop.f32.mrb[0].mxu0
        %1296 = vmatprep.mubr.bf16.mxu0 0
        %1297 = vmatmul.mubr.bf16.gmra.mrb[0].mxu0 %v1144
        %v1298 = vpop.f32.mrb[0].mxu0
        %v1299 = vadd.f32 0.0, %v1298
        %v1300 = vpop.f32.mrb[0].mxu0
        %v1301 = vpop.f32.mrb[0].mxu0
        %v1302 = vadd.f32 0.0, %v1301
        %v1303 = vpop.f32.mrb[0].mxu0
        %1304 = vmatprep.mubr.bf16.mxu0 0
        %1305 = vmatmul.mubr.bf16.gmra.mrb[0].mxu0 %v1147
        %v1306 = vpop.f32.mrb[0].mxu0
        %v1307 = vadd.f32 0.0, %v1306
        %v1308 = vpop.f32.mrb[0].mxu0
        %v1309 = vpop.f32.mrb[0].mxu0
        %v1310 = vadd.f32 0.0, %v1309
        %v1311 = vpop.f32.mrb[0].mxu0
        %1312 = vdwg.mxu0
        %v1313 = vadd.f32 %v925, %v1187
        %v1314 = vadd.f32 %v928, %v1190
        %v1315 = vadd.f32 %v933, %v1195
        %v1316 = vadd.f32 %v936, %v1198
        %v1317 = vadd.f32 %v941, %v1203
        %v1318 = vadd.f32 %v944, %v1206
        %v1319 = vadd.f32 %v949, %v1211
        %v1320 = vadd.f32 %v952, %v1214
        %v1321 = vadd.f32 %v957, %v1219
        %v1322 = vadd.f32 %v960, %v1222
        %v1323 = vadd.f32 %v965, %v1227
        %v1324 = vadd.f32 %v968, %v1230
        %v1325 = vadd.f32 %v973, %v1235
        %v1326 = vadd.f32 %v976, %v1238
        %v1327 = vadd.f32 %v981, %v1243
        %v1328 = vadd.f32 %v984, %v1246
        %v1329 = vadd.f32 %v989, %v1251
        %v1330 = vadd.f32 %v992, %v1254
        %v1331 = vadd.f32 %v997, %v1259
        %v1332 = vadd.f32 %v1000, %v1262
        %v1333 = vadd.f32 %v1005, %v1267
        %v1334 = vadd.f32 %v1008, %v1270
        %v1335 = vadd.f32 %v1013, %v1275
        %v1336 = vadd.f32 %v1016, %v1278
        %v1337 = vadd.f32 %v1021, %v1283
        %v1338 = vadd.f32 %v1024, %v1286
        %v1339 = vadd.f32 %v1029, %v1291
        %v1340 = vadd.f32 %v1032, %v1294
        %v1341 = vadd.f32 %v1037, %v1299
        %v1342 = vadd.f32 %v1040, %v1302
        %v1343 = vadd.f32 %v1045, %v1307
        %v1344 = vadd.f32 %v1048, %v1310
        %v1345 = vld [vmem:[%s493] sm:$0xff]
        %v1346 = vld [vmem:[%s493 + $0x8] sm:$0xff]
        %v1347 = vld [vmem:[%s493 + $0x18] sm:$0xff]
        %v1348 = vld [vmem:[%s493 + $0x20] sm:$0xff]
        %v1349 = vld [vmem:[%s493 + $0x30] sm:$0xff]
        %v1350 = vld [vmem:[%s493 + $0x38] sm:$0xff]
        %v1351 = vld [vmem:[%s493 + $0x48] sm:$0xff]
        %v1352 = vld [vmem:[%s493 + $0x50] sm:$0xff]
        %v1353 = vld [vmem:[%s493 + $0x60] sm:$0xff]
        %v1354 = vld [vmem:[%s493 + $0x68] sm:$0xff]
        %v1355 = vld [vmem:[%s493 + $0x78] sm:$0xff]
        %v1356 = vld [vmem:[%s493 + $0x80] sm:$0xff]
        %v1357 = vld [vmem:[%s493 + $0x90] sm:$0xff]
        %v1358 = vld [vmem:[%s493 + $0x98] sm:$0xff]
        %v1359 = vld [vmem:[%s493 + $0xa8] sm:$0xff]
        %v1360 = vld [vmem:[%s493 + $0xb0] sm:$0xff]
        %v1361 = vld [vmem:[%s493 + $0xc0] sm:$0xff]
        %v1362 = vld [vmem:[%s493 + $0xc8] sm:$0xff]
        %v1363 = vld [vmem:[%s493 + $0xd8] sm:$0xff]
        %v1364 = vld [vmem:[%s493 + $0xe0] sm:$0xff]
        %v1365 = vld [vmem:[%s493 + $0xf0] sm:$0xff]
        %v1366 = vld [vmem:[%s493 + $0xf8] sm:$0xff]
        %v1367 = vld [vmem:[%s493 + $0x108] sm:$0xff]
        %v1368 = vld [vmem:[%s493 + $0x110] sm:$0xff]
        %v1369 = vld [vmem:[%s493 + $0x120] sm:$0xff]
        %v1370 = vld [vmem:[%s493 + $0x128] sm:$0xff]
        %v1371 = vld [vmem:[%s493 + $0x138] sm:$0xff]
        %v1372 = vld [vmem:[%s493 + $0x140] sm:$0xff]
        %v1373 = vld [vmem:[%s493 + $0x150] sm:$0xff]
        %v1374 = vld [vmem:[%s493 + $0x158] sm:$0xff]
        %v1375 = vld [vmem:[%s493 + $0x168] sm:$0xff]
        %v1376 = vld [vmem:[%s493 + $0x170] sm:$0xff]
        %v1377 = vpack.c.bf16 %v1346, %v1345
        %v1378 = vpack.c.bf16 %v1348, %v1347
        %v1379 = vpack.c.bf16 %v1350, %v1349
        %v1380 = vpack.c.bf16 %v1352, %v1351
        %v1381 = vpack.c.bf16 %v1354, %v1353
        %v1382 = vpack.c.bf16 %v1356, %v1355
        %v1383 = vpack.c.bf16 %v1358, %v1357
        %v1384 = vpack.c.bf16 %v1360, %v1359
        %v1385 = vpack.c.bf16 %v1362, %v1361
        %v1386 = vpack.c.bf16 %v1364, %v1363
        %v1387 = vpack.c.bf16 %v1366, %v1365
        %v1388 = vpack.c.bf16 %v1368, %v1367
        %v1389 = vpack.c.bf16 %v1370, %v1369
        %v1390 = vpack.c.bf16 %v1372, %v1371
        %v1391 = vpack.c.bf16 %v1374, %v1373
        %v1392 = vpack.c.bf16 %v1376, %v1375
        %s1393 = scalar_lea.vmem %s2, 12
        %v1394 = vld [vmem:[%s1393] sm:$0xf]
        %v1396 = vsel %vm494, %v1377, 0
        %v1399 = vsel %vm494, %v1378, 0
        %v1402 = vsel %vm494, %v1379, 0
        %v1405 = vsel %vm494, %v1380, 0
        %v1408 = vsel %vm494, %v1381, 0
        %v1411 = vsel %vm494, %v1382, 0
        %v1414 = vsel %vm494, %v1383, 0
        %v1417 = vsel %vm494, %v1384, 0
        %v1420 = vsel %vm494, %v1385, 0
        %v1423 = vsel %vm494, %v1386, 0
        %v1426 = vsel %vm494, %v1387, 0
        %v1429 = vsel %vm494, %v1388, 0
        %v1432 = vsel %vm494, %v1389, 0
        %v1435 = vsel %vm494, %v1390, 0
        %v1438 = vsel %vm494, %v1391, 0
        %v1441 = vsel %vm494, %v1392, 0
        %v1444 = vsel %vm674, %v1394, 0
        %1446 = vmatprep.subr.bf16.mxu0 0
        %1447 = vmatpush1.bf16.msra.mxu0 %v1444
        %1448 = vmatprep.subr.bf16.mxu0 0
        %1449 = vmatpush1.bf16.msra.mxu0 0
        %1450 = vmatprep.subr.bf16.mxu0 0
        %1451 = vmatpush1.bf16.msra.mxu0 0
        %1452 = vmatprep.subr.bf16.mxu0 0
        %1453 = vmatpush1.bf16.msra.mxu0 0
        %1454 = vmatprep.subr.bf16.mxu0 0
        %1455 = vmatpush1.bf16.msra.mxu0 0
        %1456 = vmatprep.subr.bf16.mxu0 0
        %1457 = vmatpush1.bf16.msra.mxu0 0
        %1458 = vmatprep.subr.bf16.mxu0 0
        %1459 = vmatpush1.bf16.msra.mxu0 0
        %1460 = vmatprep.subr.bf16.mxu0 0
        %1461 = vmatpush1.bf16.msra.mxu0 0
        %1462 = vmatprep.subr.bf16.mxu0 0
        %1463 = vmatpush1.bf16.msra.mxu0 0
        %1464 = vmatprep.subr.bf16.mxu0 0
        %1465 = vmatpush1.bf16.msra.mxu0 0
        %1466 = vmatprep.subr.bf16.mxu0 0
        %1467 = vmatpush1.bf16.msra.mxu0 0
        %1468 = vmatprep.subr.bf16.mxu0 0
        %1469 = vmatpush1.bf16.msra.mxu0 0
        %1470 = vmatprep.subr.bf16.mxu0 0
        %1471 = vmatpush1.bf16.msra.mxu0 0
        %1472 = vmatprep.subr.bf16.mxu0 0
        %1473 = vmatpush1.bf16.msra.mxu0 0
        %1474 = vmatprep.subr.bf16.mxu0 0
        %1475 = vmatpush1.bf16.msra.mxu0 0
        %1476 = vmatprep.subr.bf16.mxu0 0
        %1477 = vmatpush1.bf16.msra.mxu0 0
        %1478 = vmatprep.mubr.bf16.mxu0 0
        %1479 = vmatmul.mubr.bf16.gmra.mrb[0].mxu0 %v1396
        %v1480 = vpop.f32.mrb[0].mxu0
        %v1481 = vadd.f32 0.0, %v1480
        %v1482 = vpop.f32.mrb[0].mxu0
        %v1483 = vpop.f32.mrb[0].mxu0
        %v1484 = vadd.f32 0.0, %v1483
        %v1485 = vpop.f32.mrb[0].mxu0
        %1486 = vmatprep.mubr.bf16.mxu0 0
        %1487 = vmatmul.mubr.bf16.gmra.mrb[0].mxu0 %v1399
        %v1488 = vpop.f32.mrb[0].mxu0
        %v1489 = vadd.f32 0.0, %v1488
        %v1490 = vpop.f32.mrb[0].mxu0
        %v1491 = vpop.f32.mrb[0].mxu0
        %v1492 = vadd.f32 0.0, %v1491
        %v1493 = vpop.f32.mrb[0].mxu0
        %1494 = vmatprep.mubr.bf16.mxu0 0
        %1495 = vmatmul.mubr.bf16.gmra.mrb[0].mxu0 %v1402
        %v1496 = vpop.f32.mrb[0].mxu0
        %v1497 = vadd.f32 0.0, %v1496
        %v1498 = vpop.f32.mrb[0].mxu0
        %v1499 = vpop.f32.mrb[0].mxu0
        %v1500 = vadd.f32 0.0, %v1499
        %v1501 = vpop.f32.mrb[0].mxu0
        %1502 = vmatprep.mubr.bf16.mxu0 0
        %1503 = vmatmul.mubr.bf16.gmra.mrb[0].mxu0 %v1405
        %v1504 = vpop.f32.mrb[0].mxu0
        %v1505 = vadd.f32 0.0, %v1504
        %v1506 = vpop.f32.mrb[0].mxu0
        %v1507 = vpop.f32.mrb[0].mxu0
        %v1508 = vadd.f32 0.0, %v1507
        %v1509 = vpop.f32.mrb[0].mxu0
        %1510 = vmatprep.mubr.bf16.mxu0 0
        %1511 = vmatmul.mubr.bf16.gmra.mrb[0].mxu0 %v1408
        %v1512 = vpop.f32.mrb[0].mxu0
        %v1513 = vadd.f32 0.0, %v1512
        %v1514 = vpop.f32.mrb[0].mxu0
        %v1515 = vpop.f32.mrb[0].mxu0
        %v1516 = vadd.f32 0.0, %v1515
        %v1517 = vpop.f32.mrb[0].mxu0
        %1518 = vmatprep.mubr.bf16.mxu0 0
        %1519 = vmatmul.mubr.bf16.gmra.mrb[0].mxu0 %v1411
        %v1520 = vpop.f32.mrb[0].mxu0
        %v1521 = vadd.f32 0.0, %v1520
        %v1522 = vpop.f32.mrb[0].mxu0
        %v1523 = vpop.f32.mrb[0].mxu0
        %v1524 = vadd.f32 0.0, %v1523
        %v1525 = vpop.f32.mrb[0].mxu0
        %1526 = vmatprep.mubr.bf16.mxu0 0
        %1527 = vmatmul.mubr.bf16.gmra.mrb[0].mxu0 %v1414
        %v1528 = vpop.f32.mrb[0].mxu0
        %v1529 = vadd.f32 0.0, %v1528
        %v1530 = vpop.f32.mrb[0].mxu0
        %v1531 = vpop.f32.mrb[0].mxu0
        %v1532 = vadd.f32 0.0, %v1531
        %v1533 = vpop.f32.mrb[0].mxu0
        %1534 = vmatprep.mubr.bf16.mxu0 0
        %1535 = vmatmul.mubr.bf16.gmra.mrb[0].mxu0 %v1417
        %v1536 = vpop.f32.mrb[0].mxu0
        %v1537 = vadd.f32 0.0, %v1536
        %v1538 = vpop.f32.mrb[0].mxu0
        %v1539 = vpop.f32.mrb[0].mxu0
        %v1540 = vadd.f32 0.0, %v1539
        %v1541 = vpop.f32.mrb[0].mxu0
        %1542 = vmatprep.mubr.bf16.mxu0 0
        %1543 = vmatmul.mubr.bf16.gmra.mrb[0].mxu0 %v1420
        %v1544 = vpop.f32.mrb[0].mxu0
        %v1545 = vadd.f32 0.0, %v1544
        %v1546 = vpop.f32.mrb[0].mxu0
        %v1547 = vpop.f32.mrb[0].mxu0
        %v1548 = vadd.f32 0.0, %v1547
        %v1549 = vpop.f32.mrb[0].mxu0
        %1550 = vmatprep.mubr.bf16.mxu0 0
        %1551 = vmatmul.mubr.bf16.gmra.mrb[0].mxu0 %v1423
        %v1552 = vpop.f32.mrb[0].mxu0
        %v1553 = vadd.f32 0.0, %v1552
        %v1554 = vpop.f32.mrb[0].mxu0
        %v1555 = vpop.f32.mrb[0].mxu0
        %v1556 = vadd.f32 0.0, %v1555
        %v1557 = vpop.f32.mrb[0].mxu0
        %1558 = vmatprep.mubr.bf16.mxu0 0
        %1559 = vmatmul.mubr.bf16.gmra.mrb[0].mxu0 %v1426
        %v1560 = vpop.f32.mrb[0].mxu0
        %v1561 = vadd.f32 0.0, %v1560
        %v1562 = vpop.f32.mrb[0].mxu0
        %v1563 = vpop.f32.mrb[0].mxu0
        %v1564 = vadd.f32 0.0, %v1563
        %v1565 = vpop.f32.mrb[0].mxu0
        %1566 = vmatprep.mubr.bf16.mxu0 0
        %1567 = vmatmul.mubr.bf16.gmra.mrb[0].mxu0 %v1429
        %v1568 = vpop.f32.mrb[0].mxu0
        %v1569 = vadd.f32 0.0, %v1568
        %v1570 = vpop.f32.mrb[0].mxu0
        %v1571 = vpop.f32.mrb[0].mxu0
        %v1572 = vadd.f32 0.0, %v1571
        %v1573 = vpop.f32.mrb[0].mxu0
        %1574 = vmatprep.mubr.bf16.mxu0 0
        %1575 = vmatmul.mubr.bf16.gmra.mrb[0].mxu0 %v1432
        %v1576 = vpop.f32.mrb[0].mxu0
        %v1577 = vadd.f32 0.0, %v1576
        %v1578 = vpop.f32.mrb[0].mxu0
        %v1579 = vpop.f32.mrb[0].mxu0
        %v1580 = vadd.f32 0.0, %v1579
        %v1581 = vpop.f32.mrb[0].mxu0
        %1582 = vmatprep.mubr.bf16.mxu0 0
        %1583 = vmatmul.mubr.bf16.gmra.mrb[0].mxu0 %v1435
        %v1584 = vpop.f32.mrb[0].mxu0
        %v1585 = vadd.f32 0.0, %v1584
        %v1586 = vpop.f32.mrb[0].mxu0
        %v1587 = vpop.f32.mrb[0].mxu0
        %v1588 = vadd.f32 0.0, %v1587
        %v1589 = vpop.f32.mrb[0].mxu0
        %1590 = vmatprep.mubr.bf16.mxu0 0
        %1591 = vmatmul.mubr.bf16.gmra.mrb[0].mxu0 %v1438
        %v1592 = vpop.f32.mrb[0].mxu0
        %v1593 = vadd.f32 0.0, %v1592
        %v1594 = vpop.f32.mrb[0].mxu0
        %v1595 = vpop.f32.mrb[0].mxu0
        %v1596 = vadd.f32 0.0, %v1595
        %v1597 = vpop.f32.mrb[0].mxu0
        %1598 = vmatprep.mubr.bf16.mxu0 0
        %1599 = vmatmul.mubr.bf16.gmra.mrb[0].mxu0 %v1441
        %v1600 = vpop.f32.mrb[0].mxu0
        %v1601 = vadd.f32 0.0, %v1600
        %v1602 = vpop.f32.mrb[0].mxu0
        %v1603 = vpop.f32.mrb[0].mxu0
        %v1604 = vadd.f32 0.0, %v1603
        %v1605 = vpop.f32.mrb[0].mxu0
        %1606 = vdwg.mxu0
        %v1607 = vadd.f32 %v1313, %v1481
        %v1608 = vadd.f32 %v1314, %v1484
        %v1609 = vadd.f32 %v1315, %v1489
        %v1610 = vadd.f32 %v1316, %v1492
        %v1611 = vadd.f32 %v1317, %v1497
        %v1612 = vadd.f32 %v1318, %v1500
        %v1613 = vadd.f32 %v1319, %v1505
        %v1614 = vadd.f32 %v1320, %v1508
        %v1615 = vadd.f32 %v1321, %v1513
        %v1616 = vadd.f32 %v1322, %v1516
        %v1617 = vadd.f32 %v1323, %v1521
        %v1618 = vadd.f32 %v1324, %v1524
        %v1619 = vadd.f32 %v1325, %v1529
        %v1620 = vadd.f32 %v1326, %v1532
        %v1621 = vadd.f32 %v1327, %v1537
        %v1622 = vadd.f32 %v1328, %v1540
        %v1623 = vadd.f32 %v1329, %v1545
        %v1624 = vadd.f32 %v1330, %v1548
        %v1625 = vadd.f32 %v1331, %v1553
        %v1626 = vadd.f32 %v1332, %v1556
        %v1627 = vadd.f32 %v1333, %v1561
        %v1628 = vadd.f32 %v1334, %v1564
        %v1629 = vadd.f32 %v1335, %v1569
        %v1630 = vadd.f32 %v1336, %v1572
        %v1631 = vadd.f32 %v1337, %v1577
        %v1632 = vadd.f32 %v1338, %v1580
        %v1633 = vadd.f32 %v1339, %v1585
        %v1634 = vadd.f32 %v1340, %v1588
        %v1635 = vadd.f32 %v1341, %v1593
        %v1636 = vadd.f32 %v1342, %v1596
        %v1637 = vadd.f32 %v1343, %v1601
        %v1638 = vadd.f32 %v1344, %v1604
        %v1639 = vld [vmem:[%s493 + $0x1] sm:$0xff]
        %v1640 = vld [vmem:[%s493 + $0x9] sm:$0xff]
        %v1641 = vld [vmem:[%s493 + $0x19] sm:$0xff]
        %v1642 = vld [vmem:[%s493 + $0x21] sm:$0xff]
        %v1643 = vld [vmem:[%s493 + $0x31] sm:$0xff]
        %v1644 = vld [vmem:[%s493 + $0x39] sm:$0xff]
        %v1645 = vld [vmem:[%s493 + $0x49] sm:$0xff]
        %v1646 = vld [vmem:[%s493 + $0x51] sm:$0xff]
        %v1647 = vld [vmem:[%s493 + $0x61] sm:$0xff]
        %v1648 = vld [vmem:[%s493 + $0x69] sm:$0xff]
        %v1649 = vld [vmem:[%s493 + $0x79] sm:$0xff]
        %v1650 = vld [vmem:[%s493 + $0x81] sm:$0xff]
        %v1651 = vld [vmem:[%s493 + $0x91] sm:$0xff]
        %v1652 = vld [vmem:[%s493 + $0x99] sm:$0xff]
        %v1653 = vld [vmem:[%s493 + $0xa9] sm:$0xff]
        %v1654 = vld [vmem:[%s493 + $0xb1] sm:$0xff]
        %v1655 = vld [vmem:[%s493 + $0xc1] sm:$0xff]
        %v1656 = vld [vmem:[%s493 + $0xc9] sm:$0xff]
        %v1657 = vld [vmem:[%s493 + $0xd9] sm:$0xff]
        %v1658 = vld [vmem:[%s493 + $0xe1] sm:$0xff]
        %v1659 = vld [vmem:[%s493 + $0xf1] sm:$0xff]
        %v1660 = vld [vmem:[%s493 + $0xf9] sm:$0xff]
        %v1661 = vld [vmem:[%s493 + $0x109] sm:$0xff]
        %v1662 = vld [vmem:[%s493 + $0x111] sm:$0xff]
        %v1663 = vld [vmem:[%s493 + $0x121] sm:$0xff]
        %v1664 = vld [vmem:[%s493 + $0x129] sm:$0xff]
        %v1665 = vld [vmem:[%s493 + $0x139] sm:$0xff]
        %v1666 = vld [vmem:[%s493 + $0x141] sm:$0xff]
        %v1667 = vld [vmem:[%s493 + $0x151] sm:$0xff]
        %v1668 = vld [vmem:[%s493 + $0x159] sm:$0xff]
        %v1669 = vld [vmem:[%s493 + $0x169] sm:$0xff]
        %v1670 = vld [vmem:[%s493 + $0x171] sm:$0xff]
        %v1671 = vpack.c.bf16 %v1640, %v1639
        %v1672 = vpack.c.bf16 %v1642, %v1641
        %v1673 = vpack.c.bf16 %v1644, %v1643
        %v1674 = vpack.c.bf16 %v1646, %v1645
        %v1675 = vpack.c.bf16 %v1648, %v1647
        %v1676 = vpack.c.bf16 %v1650, %v1649
        %v1677 = vpack.c.bf16 %v1652, %v1651
        %v1678 = vpack.c.bf16 %v1654, %v1653
        %v1679 = vpack.c.bf16 %v1656, %v1655
        %v1680 = vpack.c.bf16 %v1658, %v1657
        %v1681 = vpack.c.bf16 %v1660, %v1659
        %v1682 = vpack.c.bf16 %v1662, %v1661
        %v1683 = vpack.c.bf16 %v1664, %v1663
        %v1684 = vpack.c.bf16 %v1666, %v1665
        %v1685 = vpack.c.bf16 %v1668, %v1667
        %v1686 = vpack.c.bf16 %v1670, %v1669
        %s1687 = scalar_lea.vmem %s2, 16
        %v1688 = vld [vmem:[%s1687] sm:$0xf]
        %v1690 = vsel %vm494, %v1671, 0
        %v1693 = vsel %vm494, %v1672, 0
        %v1696 = vsel %vm494, %v1673, 0
        %v1699 = vsel %vm494, %v1674, 0
        %v1702 = vsel %vm494, %v1675, 0
        %v1705 = vsel %vm494, %v1676, 0
        %v1708 = vsel %vm494, %v1677, 0
        %v1711 = vsel %vm494, %v1678, 0
        %v1714 = vsel %vm494, %v1679, 0
        %v1717 = vsel %vm494, %v1680, 0
        %v1720 = vsel %vm494, %v1681, 0
        %v1723 = vsel %vm494, %v1682, 0
        %v1726 = vsel %vm494, %v1683, 0
        %v1729 = vsel %vm494, %v1684, 0
        %v1732 = vsel %vm494, %v1685, 0
        %v1735 = vsel %vm494, %v1686, 0
        %v1738 = vsel %vm674, %v1688, 0
        %1740 = vmatprep.subr.bf16.mxu0 0
        %1741 = vmatpush1.bf16.msra.mxu0 %v1738
        %1742 = vmatprep.subr.bf16.mxu0 0
        %1743 = vmatpush1.bf16.msra.mxu0 0
        %1744 = vmatprep.subr.bf16.mxu0 0
        %1745 = vmatpush1.bf16.msra.mxu0 0
        %1746 = vmatprep.subr.bf16.mxu0 0
        %1747 = vmatpush1.bf16.msra.mxu0 0
        %1748 = vmatprep.subr.bf16.mxu0 0
        %1749 = vmatpush1.bf16.msra.mxu0 0
        %1750 = vmatprep.subr.bf16.mxu0 0
        %1751 = vmatpush1.bf16.msra.mxu0 0
        %1752 = vmatprep.subr.bf16.mxu0 0
        %1753 = vmatpush1.bf16.msra.mxu0 0
        %1754 = vmatprep.subr.bf16.mxu0 0
        %1755 = vmatpush1.bf16.msra.mxu0 0
        %1756 = vmatprep.subr.bf16.mxu0 0
        %1757 = vmatpush1.bf16.msra.mxu0 0
        %1758 = vmatprep.subr.bf16.mxu0 0
        %1759 = vmatpush1.bf16.msra.mxu0 0
        %1760 = vmatprep.subr.bf16.mxu0 0
        %1761 = vmatpush1.bf16.msra.mxu0 0
        %1762 = vmatprep.subr.bf16.mxu0 0
        %1763 = vmatpush1.bf16.msra.mxu0 0
        %1764 = vmatprep.subr.bf16.mxu0 0
        %1765 = vmatpush1.bf16.msra.mxu0 0
        %1766 = vmatprep.subr.bf16.mxu0 0
        %1767 = vmatpush1.bf16.msra.mxu0 0
        %1768 = vmatprep.subr.bf16.mxu0 0
        %1769 = vmatpush1.bf16.msra.mxu0 0
        %1770 = vmatprep.subr.bf16.mxu0 0
        %1771 = vmatpush1.bf16.msra.mxu0 0
        %1772 = vmatprep.mubr.bf16.mxu0 0
        %1773 = vmatmul.mubr.bf16.gmra.mrb[0].mxu0 %v1690
        %v1774 = vpop.f32.mrb[0].mxu0
        %v1775 = vadd.f32 0.0, %v1774
        %v1776 = vpop.f32.mrb[0].mxu0
        %v1777 = vpop.f32.mrb[0].mxu0
        %v1778 = vadd.f32 0.0, %v1777
        %v1779 = vpop.f32.mrb[0].mxu0
        %1780 = vmatprep.mubr.bf16.mxu0 0
        %1781 = vmatmul.mubr.bf16.gmra.mrb[0].mxu0 %v1693
        %v1782 = vpop.f32.mrb[0].mxu0
        %v1783 = vadd.f32 0.0, %v1782
        %v1784 = vpop.f32.mrb[0].mxu0
        %v1785 = vpop.f32.mrb[0].mxu0
        %v1786 = vadd.f32 0.0, %v1785
        %v1787 = vpop.f32.mrb[0].mxu0
        %1788 = vmatprep.mubr.bf16.mxu0 0
        %1789 = vmatmul.mubr.bf16.gmra.mrb[0].mxu0 %v1696
        %v1790 = vpop.f32.mrb[0].mxu0
        %v1791 = vadd.f32 0.0, %v1790
        %v1792 = vpop.f32.mrb[0].mxu0
        %v1793 = vpop.f32.mrb[0].mxu0
        %v1794 = vadd.f32 0.0, %v1793
        %v1795 = vpop.f32.mrb[0].mxu0
        %1796 = vmatprep.mubr.bf16.mxu0 0
        %1797 = vmatmul.mubr.bf16.gmra.mrb[0].mxu0 %v1699
        %v1798 = vpop.f32.mrb[0].mxu0
        %v1799 = vadd.f32 0.0, %v1798
        %v1800 = vpop.f32.mrb[0].mxu0
        %v1801 = vpop.f32.mrb[0].mxu0
        %v1802 = vadd.f32 0.0, %v1801
        %v1803 = vpop.f32.mrb[0].mxu0
        %1804 = vmatprep.mubr.bf16.mxu0 0
        %1805 = vmatmul.mubr.bf16.gmra.mrb[0].mxu0 %v1702
        %v1806 = vpop.f32.mrb[0].mxu0
        %v1807 = vadd.f32 0.0, %v1806
        %v1808 = vpop.f32.mrb[0].mxu0
        %v1809 = vpop.f32.mrb[0].mxu0
        %v1810 = vadd.f32 0.0, %v1809
        %v1811 = vpop.f32.mrb[0].mxu0
        %1812 = vmatprep.mubr.bf16.mxu0 0
        %1813 = vmatmul.mubr.bf16.gmra.mrb[0].mxu0 %v1705
        %v1814 = vpop.f32.mrb[0].mxu0
        %v1815 = vadd.f32 0.0, %v1814
        %v1816 = vpop.f32.mrb[0].mxu0
        %v1817 = vpop.f32.mrb[0].mxu0
        %v1818 = vadd.f32 0.0, %v1817
        %v1819 = vpop.f32.mrb[0].mxu0
        %1820 = vmatprep.mubr.bf16.mxu0 0
        %1821 = vmatmul.mubr.bf16.gmra.mrb[0].mxu0 %v1708
        %v1822 = vpop.f32.mrb[0].mxu0
        %v1823 = vadd.f32 0.0, %v1822
        %v1824 = vpop.f32.mrb[0].mxu0
        %v1825 = vpop.f32.mrb[0].mxu0
        %v1826 = vadd.f32 0.0, %v1825
        %v1827 = vpop.f32.mrb[0].mxu0
        %1828 = vmatprep.mubr.bf16.mxu0 0
        %1829 = vmatmul.mubr.bf16.gmra.mrb[0].mxu0 %v1711
        %v1830 = vpop.f32.mrb[0].mxu0
        %v1831 = vadd.f32 0.0, %v1830
        %v1832 = vpop.f32.mrb[0].mxu0
        %v1833 = vpop.f32.mrb[0].mxu0
        %v1834 = vadd.f32 0.0, %v1833
        %v1835 = vpop.f32.mrb[0].mxu0
        %1836 = vmatprep.mubr.bf16.mxu0 0
        %1837 = vmatmul.mubr.bf16.gmra.mrb[0].mxu0 %v1714
        %v1838 = vpop.f32.mrb[0].mxu0
        %v1839 = vadd.f32 0.0, %v1838
        %v1840 = vpop.f32.mrb[0].mxu0
        %v1841 = vpop.f32.mrb[0].mxu0
        %v1842 = vadd.f32 0.0, %v1841
        %v1843 = vpop.f32.mrb[0].mxu0
        %1844 = vmatprep.mubr.bf16.mxu0 0
        %1845 = vmatmul.mubr.bf16.gmra.mrb[0].mxu0 %v1717
        %v1846 = vpop.f32.mrb[0].mxu0
        %v1847 = vadd.f32 0.0, %v1846
        %v1848 = vpop.f32.mrb[0].mxu0
        %v1849 = vpop.f32.mrb[0].mxu0
        %v1850 = vadd.f32 0.0, %v1849
        %v1851 = vpop.f32.mrb[0].mxu0
        %1852 = vmatprep.mubr.bf16.mxu0 0
        %1853 = vmatmul.mubr.bf16.gmra.mrb[0].mxu0 %v1720
        %v1854 = vpop.f32.mrb[0].mxu0
        %v1855 = vadd.f32 0.0, %v1854
        %v1856 = vpop.f32.mrb[0].mxu0
        %v1857 = vpop.f32.mrb[0].mxu0
        %v1858 = vadd.f32 0.0, %v1857
        %v1859 = vpop.f32.mrb[0].mxu0
        %1860 = vmatprep.mubr.bf16.mxu0 0
        %1861 = vmatmul.mubr.bf16.gmra.mrb[0].mxu0 %v1723
        %v1862 = vpop.f32.mrb[0].mxu0
        %v1863 = vadd.f32 0.0, %v1862
        %v1864 = vpop.f32.mrb[0].mxu0
        %v1865 = vpop.f32.mrb[0].mxu0
        %v1866 = vadd.f32 0.0, %v1865
        %v1867 = vpop.f32.mrb[0].mxu0
        %1868 = vmatprep.mubr.bf16.mxu0 0
        %1869 = vmatmul.mubr.bf16.gmra.mrb[0].mxu0 %v1726
        %v1870 = vpop.f32.mrb[0].mxu0
        %v1871 = vadd.f32 0.0, %v1870
        %v1872 = vpop.f32.mrb[0].mxu0
        %v1873 = vpop.f32.mrb[0].mxu0
        %v1874 = vadd.f32 0.0, %v1873
        %v1875 = vpop.f32.mrb[0].mxu0
        %1876 = vmatprep.mubr.bf16.mxu0 0
        %1877 = vmatmul.mubr.bf16.gmra.mrb[0].mxu0 %v1729
        %v1878 = vpop.f32.mrb[0].mxu0
        %v1879 = vadd.f32 0.0, %v1878
        %v1880 = vpop.f32.mrb[0].mxu0
        %v1881 = vpop.f32.mrb[0].mxu0
        %v1882 = vadd.f32 0.0, %v1881
        %v1883 = vpop.f32.mrb[0].mxu0
        %1884 = vmatprep.mubr.bf16.mxu0 0
        %1885 = vmatmul.mubr.bf16.gmra.mrb[0].mxu0 %v1732
        %v1886 = vpop.f32.mrb[0].mxu0
        %v1887 = vadd.f32 0.0, %v1886
        %v1888 = vpop.f32.mrb[0].mxu0
        %v1889 = vpop.f32.mrb[0].mxu0
        %v1890 = vadd.f32 0.0, %v1889
        %v1891 = vpop.f32.mrb[0].mxu0
        %1892 = vmatprep.mubr.bf16.mxu0 0
        %1893 = vmatmul.mubr.bf16.gmra.mrb[0].mxu0 %v1735
        %v1894 = vpop.f32.mrb[0].mxu0
        %v1895 = vadd.f32 0.0, %v1894
        %v1896 = vpop.f32.mrb[0].mxu0
        %v1897 = vpop.f32.mrb[0].mxu0
        %v1898 = vadd.f32 0.0, %v1897
        %v1899 = vpop.f32.mrb[0].mxu0
        %1900 = vdwg.mxu0
        %v1901 = vadd.f32 %v1607, %v1775
        %v1902 = vadd.f32 %v1608, %v1778
        %v1903 = vadd.f32 %v1609, %v1783
        %v1904 = vadd.f32 %v1610, %v1786
        %v1905 = vadd.f32 %v1611, %v1791
        %v1906 = vadd.f32 %v1612, %v1794
        %v1907 = vadd.f32 %v1613, %v1799
        %v1908 = vadd.f32 %v1614, %v1802
        %v1909 = vadd.f32 %v1615, %v1807
        %v1910 = vadd.f32 %v1616, %v1810
        %v1911 = vadd.f32 %v1617, %v1815
        %v1912 = vadd.f32 %v1618, %v1818
        %v1913 = vadd.f32 %v1619, %v1823
        %v1914 = vadd.f32 %v1620, %v1826
        %v1915 = vadd.f32 %v1621, %v1831
        %v1916 = vadd.f32 %v1622, %v1834
        %v1917 = vadd.f32 %v1623, %v1839
        %v1918 = vadd.f32 %v1624, %v1842
        %v1919 = vadd.f32 %v1625, %v1847
        %v1920 = vadd.f32 %v1626, %v1850
        %v1921 = vadd.f32 %v1627, %v1855
        %v1922 = vadd.f32 %v1628, %v1858
        %v1923 = vadd.f32 %v1629, %v1863
        %v1924 = vadd.f32 %v1630, %v1866
        %v1925 = vadd.f32 %v1631, %v1871
        %v1926 = vadd.f32 %v1632, %v1874
        %v1927 = vadd.f32 %v1633, %v1879
        %v1928 = vadd.f32 %v1634, %v1882
        %v1929 = vadd.f32 %v1635, %v1887
        %v1930 = vadd.f32 %v1636, %v1890
        %v1931 = vadd.f32 %v1637, %v1895
        %v1932 = vadd.f32 %v1638, %v1898
        %v1933 = vld [vmem:[%s493 + $0x2] sm:$0xff]
        %v1934 = vld [vmem:[%s493 + $0xa] sm:$0xff]
        %v1935 = vld [vmem:[%s493 + $0x1a] sm:$0xff]
        %v1936 = vld [vmem:[%s493 + $0x22] sm:$0xff]
        %v1937 = vld [vmem:[%s493 + $0x32] sm:$0xff]
        %v1938 = vld [vmem:[%s493 + $0x3a] sm:$0xff]
        %v1939 = vld [vmem:[%s493 + $0x4a] sm:$0xff]
        %v1940 = vld [vmem:[%s493 + $0x52] sm:$0xff]
        %v1941 = vld [vmem:[%s493 + $0x62] sm:$0xff]
        %v1942 = vld [vmem:[%s493 + $0x6a] sm:$0xff]
        %v1943 = vld [vmem:[%s493 + $0x7a] sm:$0xff]
        %v1944 = vld [vmem:[%s493 + $0x82] sm:$0xff]
        %v1945 = vld [vmem:[%s493 + $0x92] sm:$0xff]
        %v1946 = vld [vmem:[%s493 + $0x9a] sm:$0xff]
        %v1947 = vld [vmem:[%s493 + $0xaa] sm:$0xff]
        %v1948 = vld [vmem:[%s493 + $0xb2] sm:$0xff]
        %v1949 = vld [vmem:[%s493 + $0xc2] sm:$0xff]
        %v1950 = vld [vmem:[%s493 + $0xca] sm:$0xff]
        %v1951 = vld [vmem:[%s493 + $0xda] sm:$0xff]
        %v1952 = vld [vmem:[%s493 + $0xe2] sm:$0xff]
        %v1953 = vld [vmem:[%s493 + $0xf2] sm:$0xff]
        %v1954 = vld [vmem:[%s493 + $0xfa] sm:$0xff]
        %v1955 = vld [vmem:[%s493 + $0x10a] sm:$0xff]
        %v1956 = vld [vmem:[%s493 + $0x112] sm:$0xff]
        %v1957 = vld [vmem:[%s493 + $0x122] sm:$0xff]
        %v1958 = vld [vmem:[%s493 + $0x12a] sm:$0xff]
        %v1959 = vld [vmem:[%s493 + $0x13a] sm:$0xff]
        %v1960 = vld [vmem:[%s493 + $0x142] sm:$0xff]
        %v1961 = vld [vmem:[%s493 + $0x152] sm:$0xff]
        %v1962 = vld [vmem:[%s493 + $0x15a] sm:$0xff]
        %v1963 = vld [vmem:[%s493 + $0x16a] sm:$0xff]
        %v1964 = vld [vmem:[%s493 + $0x172] sm:$0xff]
        %v1965 = vpack.c.bf16 %v1934, %v1933
        %v1966 = vpack.c.bf16 %v1936, %v1935
        %v1967 = vpack.c.bf16 %v1938, %v1937
        %v1968 = vpack.c.bf16 %v1940, %v1939
        %v1969 = vpack.c.bf16 %v1942, %v1941
        %v1970 = vpack.c.bf16 %v1944, %v1943
        %v1971 = vpack.c.bf16 %v1946, %v1945
        %v1972 = vpack.c.bf16 %v1948, %v1947
        %v1973 = vpack.c.bf16 %v1950, %v1949
        %v1974 = vpack.c.bf16 %v1952, %v1951
        %v1975 = vpack.c.bf16 %v1954, %v1953
        %v1976 = vpack.c.bf16 %v1956, %v1955
        %v1977 = vpack.c.bf16 %v1958, %v1957
        %v1978 = vpack.c.bf16 %v1960, %v1959
        %v1979 = vpack.c.bf16 %v1962, %v1961
        %v1980 = vpack.c.bf16 %v1964, %v1963
        %s1981 = scalar_lea.vmem %s2, 20
        %v1982 = vld [vmem:[%s1981] sm:$0xf]
        %v1984 = vsel %vm494, %v1965, 0
        %v1987 = vsel %vm494, %v1966, 0
        %v1990 = vsel %vm494, %v1967, 0
        %v1993 = vsel %vm494, %v1968, 0
        %v1996 = vsel %vm494, %v1969, 0
        %v1999 = vsel %vm494, %v1970, 0
        %v2002 = vsel %vm494, %v1971, 0
        %v2005 = vsel %vm494, %v1972, 0
        %v2008 = vsel %vm494, %v1973, 0
        %v2011 = vsel %vm494, %v1974, 0
        %v2014 = vsel %vm494, %v1975, 0
        %v2017 = vsel %vm494, %v1976, 0
        %v2020 = vsel %vm494, %v1977, 0
        %v2023 = vsel %vm494, %v1978, 0
        %v2026 = vsel %vm494, %v1979, 0
        %v2029 = vsel %vm494, %v1980, 0
        %v2032 = vsel %vm674, %v1982, 0
        %2034 = vmatprep.subr.bf16.mxu0 0
        %2035 = vmatpush1.bf16.msra.mxu0 %v2032
        %2036 = vmatprep.subr.bf16.mxu0 0
        %2037 = vmatpush1.bf16.msra.mxu0 0
        %2038 = vmatprep.subr.bf16.mxu0 0
        %2039 = vmatpush1.bf16.msra.mxu0 0
        %2040 = vmatprep.subr.bf16.mxu0 0
        %2041 = vmatpush1.bf16.msra.mxu0 0
        %2042 = vmatprep.subr.bf16.mxu0 0
        %2043 = vmatpush1.bf16.msra.mxu0 0
        %2044 = vmatprep.subr.bf16.mxu0 0
        %2045 = vmatpush1.bf16.msra.mxu0 0
        %2046 = vmatprep.subr.bf16.mxu0 0
        %2047 = vmatpush1.bf16.msra.mxu0 0
        %2048 = vmatprep.subr.bf16.mxu0 0
        %2049 = vmatpush1.bf16.msra.mxu0 0
        %2050 = vmatprep.subr.bf16.mxu0 0
        %2051 = vmatpush1.bf16.msra.mxu0 0
        %2052 = vmatprep.subr.bf16.mxu0 0
        %2053 = vmatpush1.bf16.msra.mxu0 0
        %2054 = vmatprep.subr.bf16.mxu0 0
        %2055 = vmatpush1.bf16.msra.mxu0 0
        %2056 = vmatprep.subr.bf16.mxu0 0
        %2057 = vmatpush1.bf16.msra.mxu0 0
        %2058 = vmatprep.subr.bf16.mxu0 0
        %2059 = vmatpush1.bf16.msra.mxu0 0
        %2060 = vmatprep.subr.bf16.mxu0 0
        %2061 = vmatpush1.bf16.msra.mxu0 0
        %2062 = vmatprep.subr.bf16.mxu0 0
        %2063 = vmatpush1.bf16.msra.mxu0 0
        %2064 = vmatprep.subr.bf16.mxu0 0
        %2065 = vmatpush1.bf16.msra.mxu0 0
        %2066 = vmatprep.mubr.bf16.mxu0 0
        %2067 = vmatmul.mubr.bf16.gmra.mrb[0].mxu0 %v1984
        %v2068 = vpop.f32.mrb[0].mxu0
        %v2069 = vadd.f32 0.0, %v2068
        %v2070 = vpop.f32.mrb[0].mxu0
        %v2071 = vpop.f32.mrb[0].mxu0
        %v2072 = vadd.f32 0.0, %v2071
        %v2073 = vpop.f32.mrb[0].mxu0
        %2074 = vmatprep.mubr.bf16.mxu0 0
        %2075 = vmatmul.mubr.bf16.gmra.mrb[0].mxu0 %v1987
        %v2076 = vpop.f32.mrb[0].mxu0
        %v2077 = vadd.f32 0.0, %v2076
        %v2078 = vpop.f32.mrb[0].mxu0
        %v2079 = vpop.f32.mrb[0].mxu0
        %v2080 = vadd.f32 0.0, %v2079
        %v2081 = vpop.f32.mrb[0].mxu0
        %2082 = vmatprep.mubr.bf16.mxu0 0
        %2083 = vmatmul.mubr.bf16.gmra.mrb[0].mxu0 %v1990
        %v2084 = vpop.f32.mrb[0].mxu0
        %v2085 = vadd.f32 0.0, %v2084
        %v2086 = vpop.f32.mrb[0].mxu0
        %v2087 = vpop.f32.mrb[0].mxu0
        %v2088 = vadd.f32 0.0, %v2087
        %v2089 = vpop.f32.mrb[0].mxu0
        %2090 = vmatprep.mubr.bf16.mxu0 0
        %2091 = vmatmul.mubr.bf16.gmra.mrb[0].mxu0 %v1993
        %v2092 = vpop.f32.mrb[0].mxu0
        %v2093 = vadd.f32 0.0, %v2092
        %v2094 = vpop.f32.mrb[0].mxu0
        %v2095 = vpop.f32.mrb[0].mxu0
        %v2096 = vadd.f32 0.0, %v2095
        %v2097 = vpop.f32.mrb[0].mxu0
        %2098 = vmatprep.mubr.bf16.mxu0 0
        %2099 = vmatmul.mubr.bf16.gmra.mrb[0].mxu0 %v1996
        %v2100 = vpop.f32.mrb[0].mxu0
        %v2101 = vadd.f32 0.0, %v2100
        %v2102 = vpop.f32.mrb[0].mxu0
        %v2103 = vpop.f32.mrb[0].mxu0
        %v2104 = vadd.f32 0.0, %v2103
        %v2105 = vpop.f32.mrb[0].mxu0
        %2106 = vmatprep.mubr.bf16.mxu0 0
        %2107 = vmatmul.mubr.bf16.gmra.mrb[0].mxu0 %v1999
        %v2108 = vpop.f32.mrb[0].mxu0
        %v2109 = vadd.f32 0.0, %v2108
        %v2110 = vpop.f32.mrb[0].mxu0
        %v2111 = vpop.f32.mrb[0].mxu0
        %v2112 = vadd.f32 0.0, %v2111
        %v2113 = vpop.f32.mrb[0].mxu0
        %2114 = vmatprep.mubr.bf16.mxu0 0
        %2115 = vmatmul.mubr.bf16.gmra.mrb[0].mxu0 %v2002
        %v2116 = vpop.f32.mrb[0].mxu0
        %v2117 = vadd.f32 0.0, %v2116
        %v2118 = vpop.f32.mrb[0].mxu0
        %v2119 = vpop.f32.mrb[0].mxu0
        %v2120 = vadd.f32 0.0, %v2119
        %v2121 = vpop.f32.mrb[0].mxu0
        %2122 = vmatprep.mubr.bf16.mxu0 0
        %2123 = vmatmul.mubr.bf16.gmra.mrb[0].mxu0 %v2005
        %v2124 = vpop.f32.mrb[0].mxu0
        %v2125 = vadd.f32 0.0, %v2124
        %v2126 = vpop.f32.mrb[0].mxu0
        %v2127 = vpop.f32.mrb[0].mxu0
        %v2128 = vadd.f32 0.0, %v2127
        %v2129 = vpop.f32.mrb[0].mxu0
        %2130 = vmatprep.mubr.bf16.mxu0 0
        %2131 = vmatmul.mubr.bf16.gmra.mrb[0].mxu0 %v2008
        %v2132 = vpop.f32.mrb[0].mxu0
        %v2133 = vadd.f32 0.0, %v2132
        %v2134 = vpop.f32.mrb[0].mxu0
        %v2135 = vpop.f32.mrb[0].mxu0
        %v2136 = vadd.f32 0.0, %v2135
        %v2137 = vpop.f32.mrb[0].mxu0
        %2138 = vmatprep.mubr.bf16.mxu0 0
        %2139 = vmatmul.mubr.bf16.gmra.mrb[0].mxu0 %v2011
        %v2140 = vpop.f32.mrb[0].mxu0
        %v2141 = vadd.f32 0.0, %v2140
        %v2142 = vpop.f32.mrb[0].mxu0
        %v2143 = vpop.f32.mrb[0].mxu0
        %v2144 = vadd.f32 0.0, %v2143
        %v2145 = vpop.f32.mrb[0].mxu0
        %2146 = vmatprep.mubr.bf16.mxu0 0
        %2147 = vmatmul.mubr.bf16.gmra.mrb[0].mxu0 %v2014
        %v2148 = vpop.f32.mrb[0].mxu0
        %v2149 = vadd.f32 0.0, %v2148
        %v2150 = vpop.f32.mrb[0].mxu0
        %v2151 = vpop.f32.mrb[0].mxu0
        %v2152 = vadd.f32 0.0, %v2151
        %v2153 = vpop.f32.mrb[0].mxu0
        %2154 = vmatprep.mubr.bf16.mxu0 0
        %2155 = vmatmul.mubr.bf16.gmra.mrb[0].mxu0 %v2017
        %v2156 = vpop.f32.mrb[0].mxu0
        %v2157 = vadd.f32 0.0, %v2156
        %v2158 = vpop.f32.mrb[0].mxu0
        %v2159 = vpop.f32.mrb[0].mxu0
        %v2160 = vadd.f32 0.0, %v2159
        %v2161 = vpop.f32.mrb[0].mxu0
        %2162 = vmatprep.mubr.bf16.mxu0 0
        %2163 = vmatmul.mubr.bf16.gmra.mrb[0].mxu0 %v2020
        %v2164 = vpop.f32.mrb[0].mxu0
        %v2165 = vadd.f32 0.0, %v2164
        %v2166 = vpop.f32.mrb[0].mxu0
        %v2167 = vpop.f32.mrb[0].mxu0
        %v2168 = vadd.f32 0.0, %v2167
        %v2169 = vpop.f32.mrb[0].mxu0
        %2170 = vmatprep.mubr.bf16.mxu0 0
        %2171 = vmatmul.mubr.bf16.gmra.mrb[0].mxu0 %v2023
        %v2172 = vpop.f32.mrb[0].mxu0
        %v2173 = vadd.f32 0.0, %v2172
        %v2174 = vpop.f32.mrb[0].mxu0
        %v2175 = vpop.f32.mrb[0].mxu0
        %v2176 = vadd.f32 0.0, %v2175
        %v2177 = vpop.f32.mrb[0].mxu0
        %2178 = vmatprep.mubr.bf16.mxu0 0
        %2179 = vmatmul.mubr.bf16.gmra.mrb[0].mxu0 %v2026
        %v2180 = vpop.f32.mrb[0].mxu0
        %v2181 = vadd.f32 0.0, %v2180
        %v2182 = vpop.f32.mrb[0].mxu0
        %v2183 = vpop.f32.mrb[0].mxu0
        %v2184 = vadd.f32 0.0, %v2183
        %v2185 = vpop.f32.mrb[0].mxu0
        %2186 = vmatprep.mubr.bf16.mxu0 0
        %2187 = vmatmul.mubr.bf16.gmra.mrb[0].mxu0 %v2029
        %v2188 = vpop.f32.mrb[0].mxu0
        %v2189 = vadd.f32 0.0, %v2188
        %v2190 = vpop.f32.mrb[0].mxu0
        %v2191 = vpop.f32.mrb[0].mxu0
        %v2192 = vadd.f32 0.0, %v2191
        %v2193 = vpop.f32.mrb[0].mxu0
        %2194 = vdwg.mxu0
        %v2195 = vadd.f32 %v1901, %v2069
        %v2196 = vadd.f32 %v1902, %v2072
        %v2197 = vadd.f32 %v1903, %v2077
        %v2198 = vadd.f32 %v1904, %v2080
        %v2199 = vadd.f32 %v1905, %v2085
        %v2200 = vadd.f32 %v1906, %v2088
        %v2201 = vadd.f32 %v1907, %v2093
        %v2202 = vadd.f32 %v1908, %v2096
        %v2203 = vadd.f32 %v1909, %v2101
        %v2204 = vadd.f32 %v1910, %v2104
        %v2205 = vadd.f32 %v1911, %v2109
        %v2206 = vadd.f32 %v1912, %v2112
        %v2207 = vadd.f32 %v1913, %v2117
        %v2208 = vadd.f32 %v1914, %v2120
        %v2209 = vadd.f32 %v1915, %v2125
        %v2210 = vadd.f32 %v1916, %v2128
        %v2211 = vadd.f32 %v1917, %v2133
        %v2212 = vadd.f32 %v1918, %v2136
        %v2213 = vadd.f32 %v1919, %v2141
        %v2214 = vadd.f32 %v1920, %v2144
        %v2215 = vadd.f32 %v1921, %v2149
        %v2216 = vadd.f32 %v1922, %v2152
        %v2217 = vadd.f32 %v1923, %v2157
        %v2218 = vadd.f32 %v1924, %v2160
        %v2219 = vadd.f32 %v1925, %v2165
        %v2220 = vadd.f32 %v1926, %v2168
        %v2221 = vadd.f32 %v1927, %v2173
        %v2222 = vadd.f32 %v1928, %v2176
        %v2223 = vadd.f32 %v1929, %v2181
        %v2224 = vadd.f32 %v1930, %v2184
        %v2225 = vadd.f32 %v1931, %v2189
        %v2226 = vadd.f32 %v1932, %v2192
        %s2227 = scalar_lea.vmem [#allocation2], 48
        %v2228 = vld [vmem:[%s2227] sm:$0xff]
        %v2229 = vld [vmem:[%s2227 + $0x8] sm:$0xff]
        %v2230 = vld [vmem:[%s2227 + $0x18] sm:$0xff]
        %v2231 = vld [vmem:[%s2227 + $0x20] sm:$0xff]
        %v2232 = vld [vmem:[%s2227 + $0x30] sm:$0xff]
        %v2233 = vld [vmem:[%s2227 + $0x38] sm:$0xff]
        %v2234 = vld [vmem:[%s2227 + $0x48] sm:$0xff]
        %v2235 = vld [vmem:[%s2227 + $0x50] sm:$0xff]
        %v2236 = vld [vmem:[%s2227 + $0x60] sm:$0xff]
        %v2237 = vld [vmem:[%s2227 + $0x68] sm:$0xff]
        %v2238 = vld [vmem:[%s2227 + $0x78] sm:$0xff]
        %v2239 = vld [vmem:[%s2227 + $0x80] sm:$0xff]
        %v2240 = vld [vmem:[%s2227 + $0x90] sm:$0xff]
        %v2241 = vld [vmem:[%s2227 + $0x98] sm:$0xff]
        %v2242 = vld [vmem:[%s2227 + $0xa8] sm:$0xff]
        %v2243 = vld [vmem:[%s2227 + $0xb0] sm:$0xff]
        %v2244 = vld [vmem:[%s2227 + $0xc0] sm:$0xff]
        %v2245 = vld [vmem:[%s2227 + $0xc8] sm:$0xff]
        %v2246 = vld [vmem:[%s2227 + $0xd8] sm:$0xff]
        %v2247 = vld [vmem:[%s2227 + $0xe0] sm:$0xff]
        %v2248 = vld [vmem:[%s2227 + $0xf0] sm:$0xff]
        %v2249 = vld [vmem:[%s2227 + $0xf8] sm:$0xff]
        %v2250 = vld [vmem:[%s2227 + $0x108] sm:$0xff]
        %v2251 = vld [vmem:[%s2227 + $0x110] sm:$0xff]
        %v2252 = vld [vmem:[%s2227 + $0x120] sm:$0xff]
        %v2253 = vld [vmem:[%s2227 + $0x128] sm:$0xff]
        %v2254 = vld [vmem:[%s2227 + $0x138] sm:$0xff]
        %v2255 = vld [vmem:[%s2227 + $0x140] sm:$0xff]
        %v2256 = vld [vmem:[%s2227 + $0x150] sm:$0xff]
        %v2257 = vld [vmem:[%s2227 + $0x158] sm:$0xff]
        %v2258 = vld [vmem:[%s2227 + $0x168] sm:$0xff]
        %v2259 = vld [vmem:[%s2227 + $0x170] sm:$0xff]
        %v2260 = vpack.c.bf16 %v2229, %v2228
        %v2261 = vpack.c.bf16 %v2231, %v2230
        %v2262 = vpack.c.bf16 %v2233, %v2232
        %v2263 = vpack.c.bf16 %v2235, %v2234
        %v2264 = vpack.c.bf16 %v2237, %v2236
        %v2265 = vpack.c.bf16 %v2239, %v2238
        %v2266 = vpack.c.bf16 %v2241, %v2240
        %v2267 = vpack.c.bf16 %v2243, %v2242
        %v2268 = vpack.c.bf16 %v2245, %v2244
        %v2269 = vpack.c.bf16 %v2247, %v2246
        %v2270 = vpack.c.bf16 %v2249, %v2248
        %v2271 = vpack.c.bf16 %v2251, %v2250
        %v2272 = vpack.c.bf16 %v2253, %v2252
        %v2273 = vpack.c.bf16 %v2255, %v2254
        %v2274 = vpack.c.bf16 %v2257, %v2256
        %v2275 = vpack.c.bf16 %v2259, %v2258
        %s2276 = scalar_lea.vmem %s2, 24
        %v2277 = vld [vmem:[%s2276] sm:$0xf]
        %v2279 = vsel %vm494, %v2260, 0
        %v2282 = vsel %vm494, %v2261, 0
        %v2285 = vsel %vm494, %v2262, 0
        %v2288 = vsel %vm494, %v2263, 0
        %v2291 = vsel %vm494, %v2264, 0
        %v2294 = vsel %vm494, %v2265, 0
        %v2297 = vsel %vm494, %v2266, 0
        %v2300 = vsel %vm494, %v2267, 0
        %v2303 = vsel %vm494, %v2268, 0
        %v2306 = vsel %vm494, %v2269, 0
        %v2309 = vsel %vm494, %v2270, 0
        %v2312 = vsel %vm494, %v2271, 0
        %v2315 = vsel %vm494, %v2272, 0
        %v2318 = vsel %vm494, %v2273, 0
        %v2321 = vsel %vm494, %v2274, 0
        %v2324 = vsel %vm494, %v2275, 0
        %v2327 = vsel %vm674, %v2277, 0
        %2329 = vmatprep.subr.bf16.mxu0 0
        %2330 = vmatpush1.bf16.msra.mxu0 %v2327
        %2331 = vmatprep.subr.bf16.mxu0 0
        %2332 = vmatpush1.bf16.msra.mxu0 0
        %2333 = vmatprep.subr.bf16.mxu0 0
        %2334 = vmatpush1.bf16.msra.mxu0 0
        %2335 = vmatprep.subr.bf16.mxu0 0
        %2336 = vmatpush1.bf16.msra.mxu0 0
        %2337 = vmatprep.subr.bf16.mxu0 0
        %2338 = vmatpush1.bf16.msra.mxu0 0
        %2339 = vmatprep.subr.bf16.mxu0 0
        %2340 = vmatpush1.bf16.msra.mxu0 0
        %2341 = vmatprep.subr.bf16.mxu0 0
        %2342 = vmatpush1.bf16.msra.mxu0 0
        %2343 = vmatprep.subr.bf16.mxu0 0
        %2344 = vmatpush1.bf16.msra.mxu0 0
        %2345 = vmatprep.subr.bf16.mxu0 0
        %2346 = vmatpush1.bf16.msra.mxu0 0
        %2347 = vmatprep.subr.bf16.mxu0 0
        %2348 = vmatpush1.bf16.msra.mxu0 0
        %2349 = vmatprep.subr.bf16.mxu0 0
        %2350 = vmatpush1.bf16.msra.mxu0 0
        %2351 = vmatprep.subr.bf16.mxu0 0
        %2352 = vmatpush1.bf16.msra.mxu0 0
        %2353 = vmatprep.subr.bf16.mxu0 0
        %2354 = vmatpush1.bf16.msra.mxu0 0
        %2355 = vmatprep.subr.bf16.mxu0 0
        %2356 = vmatpush1.bf16.msra.mxu0 0
        %2357 = vmatprep.subr.bf16.mxu0 0
        %2358 = vmatpush1.bf16.msra.mxu0 0
        %2359 = vmatprep.subr.bf16.mxu0 0
        %2360 = vmatpush1.bf16.msra.mxu0 0
        %2361 = vmatprep.mubr.bf16.mxu0 0
        %2362 = vmatmul.mubr.bf16.gmra.mrb[0].mxu0 %v2279
        %v2363 = vpop.f32.mrb[0].mxu0
        %v2364 = vadd.f32 0.0, %v2363
        %v2365 = vpop.f32.mrb[0].mxu0
        %v2366 = vpop.f32.mrb[0].mxu0
        %v2367 = vadd.f32 0.0, %v2366
        %v2368 = vpop.f32.mrb[0].mxu0
        %2369 = vmatprep.mubr.bf16.mxu0 0
        %2370 = vmatmul.mubr.bf16.gmra.mrb[0].mxu0 %v2282
        %v2371 = vpop.f32.mrb[0].mxu0
        %v2372 = vadd.f32 0.0, %v2371
        %v2373 = vpop.f32.mrb[0].mxu0
        %v2374 = vpop.f32.mrb[0].mxu0
        %v2375 = vadd.f32 0.0, %v2374
        %v2376 = vpop.f32.mrb[0].mxu0
        %2377 = vmatprep.mubr.bf16.mxu0 0
        %2378 = vmatmul.mubr.bf16.gmra.mrb[0].mxu0 %v2285
        %v2379 = vpop.f32.mrb[0].mxu0
        %v2380 = vadd.f32 0.0, %v2379
        %v2381 = vpop.f32.mrb[0].mxu0
        %v2382 = vpop.f32.mrb[0].mxu0
        %v2383 = vadd.f32 0.0, %v2382
        %v2384 = vpop.f32.mrb[0].mxu0
        %2385 = vmatprep.mubr.bf16.mxu0 0
        %2386 = vmatmul.mubr.bf16.gmra.mrb[0].mxu0 %v2288
        %v2387 = vpop.f32.mrb[0].mxu0
        %v2388 = vadd.f32 0.0, %v2387
        %v2389 = vpop.f32.mrb[0].mxu0
        %v2390 = vpop.f32.mrb[0].mxu0
        %v2391 = vadd.f32 0.0, %v2390
        %v2392 = vpop.f32.mrb[0].mxu0
        %2393 = vmatprep.mubr.bf16.mxu0 0
        %2394 = vmatmul.mubr.bf16.gmra.mrb[0].mxu0 %v2291
        %v2395 = vpop.f32.mrb[0].mxu0
        %v2396 = vadd.f32 0.0, %v2395
        %v2397 = vpop.f32.mrb[0].mxu0
        %v2398 = vpop.f32.mrb[0].mxu0
        %v2399 = vadd.f32 0.0, %v2398
        %v2400 = vpop.f32.mrb[0].mxu0
        %2401 = vmatprep.mubr.bf16.mxu0 0
        %2402 = vmatmul.mubr.bf16.gmra.mrb[0].mxu0 %v2294
        %v2403 = vpop.f32.mrb[0].mxu0
        %v2404 = vadd.f32 0.0, %v2403
        %v2405 = vpop.f32.mrb[0].mxu0
        %v2406 = vpop.f32.mrb[0].mxu0
        %v2407 = vadd.f32 0.0, %v2406
        %v2408 = vpop.f32.mrb[0].mxu0
        %2409 = vmatprep.mubr.bf16.mxu0 0
        %2410 = vmatmul.mubr.bf16.gmra.mrb[0].mxu0 %v2297
        %v2411 = vpop.f32.mrb[0].mxu0
        %v2412 = vadd.f32 0.0, %v2411
        %v2413 = vpop.f32.mrb[0].mxu0
        %v2414 = vpop.f32.mrb[0].mxu0
        %v2415 = vadd.f32 0.0, %v2414
        %v2416 = vpop.f32.mrb[0].mxu0
        %2417 = vmatprep.mubr.bf16.mxu0 0
        %2418 = vmatmul.mubr.bf16.gmra.mrb[0].mxu0 %v2300
        %v2419 = vpop.f32.mrb[0].mxu0
        %v2420 = vadd.f32 0.0, %v2419
        %v2421 = vpop.f32.mrb[0].mxu0
        %v2422 = vpop.f32.mrb[0].mxu0
        %v2423 = vadd.f32 0.0, %v2422
        %v2424 = vpop.f32.mrb[0].mxu0
        %2425 = vmatprep.mubr.bf16.mxu0 0
        %2426 = vmatmul.mubr.bf16.gmra.mrb[0].mxu0 %v2303
        %v2427 = vpop.f32.mrb[0].mxu0
        %v2428 = vadd.f32 0.0, %v2427
        %v2429 = vpop.f32.mrb[0].mxu0
        %v2430 = vpop.f32.mrb[0].mxu0
        %v2431 = vadd.f32 0.0, %v2430
        %v2432 = vpop.f32.mrb[0].mxu0
        %2433 = vmatprep.mubr.bf16.mxu0 0
        %2434 = vmatmul.mubr.bf16.gmra.mrb[0].mxu0 %v2306
        %v2435 = vpop.f32.mrb[0].mxu0
        %v2436 = vadd.f32 0.0, %v2435
        %v2437 = vpop.f32.mrb[0].mxu0
        %v2438 = vpop.f32.mrb[0].mxu0
        %v2439 = vadd.f32 0.0, %v2438
        %v2440 = vpop.f32.mrb[0].mxu0
        %2441 = vmatprep.mubr.bf16.mxu0 0
        %2442 = vmatmul.mubr.bf16.gmra.mrb[0].mxu0 %v2309
        %v2443 = vpop.f32.mrb[0].mxu0
        %v2444 = vadd.f32 0.0, %v2443
        %v2445 = vpop.f32.mrb[0].mxu0
        %v2446 = vpop.f32.mrb[0].mxu0
        %v2447 = vadd.f32 0.0, %v2446
        %v2448 = vpop.f32.mrb[0].mxu0
        %2449 = vmatprep.mubr.bf16.mxu0 0
        %2450 = vmatmul.mubr.bf16.gmra.mrb[0].mxu0 %v2312
        %v2451 = vpop.f32.mrb[0].mxu0
        %v2452 = vadd.f32 0.0, %v2451
        %v2453 = vpop.f32.mrb[0].mxu0
        %v2454 = vpop.f32.mrb[0].mxu0
        %v2455 = vadd.f32 0.0, %v2454
        %v2456 = vpop.f32.mrb[0].mxu0
        %2457 = vmatprep.mubr.bf16.mxu0 0
        %2458 = vmatmul.mubr.bf16.gmra.mrb[0].mxu0 %v2315
        %v2459 = vpop.f32.mrb[0].mxu0
        %v2460 = vadd.f32 0.0, %v2459
        %v2461 = vpop.f32.mrb[0].mxu0
        %v2462 = vpop.f32.mrb[0].mxu0
        %v2463 = vadd.f32 0.0, %v2462
        %v2464 = vpop.f32.mrb[0].mxu0
        %2465 = vmatprep.mubr.bf16.mxu0 0
        %2466 = vmatmul.mubr.bf16.gmra.mrb[0].mxu0 %v2318
        %v2467 = vpop.f32.mrb[0].mxu0
        %v2468 = vadd.f32 0.0, %v2467
        %v2469 = vpop.f32.mrb[0].mxu0
        %v2470 = vpop.f32.mrb[0].mxu0
        %v2471 = vadd.f32 0.0, %v2470
        %v2472 = vpop.f32.mrb[0].mxu0
        %2473 = vmatprep.mubr.bf16.mxu0 0
        %2474 = vmatmul.mubr.bf16.gmra.mrb[0].mxu0 %v2321
        %v2475 = vpop.f32.mrb[0].mxu0
        %v2476 = vadd.f32 0.0, %v2475
        %v2477 = vpop.f32.mrb[0].mxu0
        %v2478 = vpop.f32.mrb[0].mxu0
        %v2479 = vadd.f32 0.0, %v2478
        %v2480 = vpop.f32.mrb[0].mxu0
        %2481 = vmatprep.mubr.bf16.mxu0 0
        %2482 = vmatmul.mubr.bf16.gmra.mrb[0].mxu0 %v2324
        %v2483 = vpop.f32.mrb[0].mxu0
        %v2484 = vadd.f32 0.0, %v2483
        %v2485 = vpop.f32.mrb[0].mxu0
        %v2486 = vpop.f32.mrb[0].mxu0
        %v2487 = vadd.f32 0.0, %v2486
        %v2488 = vpop.f32.mrb[0].mxu0
        %2489 = vdwg.mxu0
        %v2490 = vadd.f32 %v2195, %v2364
        %v2491 = vadd.f32 %v2196, %v2367
        %v2492 = vadd.f32 %v2197, %v2372
        %v2493 = vadd.f32 %v2198, %v2375
        %v2494 = vadd.f32 %v2199, %v2380
        %v2495 = vadd.f32 %v2200, %v2383
        %v2496 = vadd.f32 %v2201, %v2388
        %v2497 = vadd.f32 %v2202, %v2391
        %v2498 = vadd.f32 %v2203, %v2396
        %v2499 = vadd.f32 %v2204, %v2399
        %v2500 = vadd.f32 %v2205, %v2404
        %v2501 = vadd.f32 %v2206, %v2407
        %v2502 = vadd.f32 %v2207, %v2412
        %v2503 = vadd.f32 %v2208, %v2415
        %v2504 = vadd.f32 %v2209, %v2420
        %v2505 = vadd.f32 %v2210, %v2423
        %v2506 = vadd.f32 %v2211, %v2428
        %v2507 = vadd.f32 %v2212, %v2431
        %v2508 = vadd.f32 %v2213, %v2436
        %v2509 = vadd.f32 %v2214, %v2439
        %v2510 = vadd.f32 %v2215, %v2444
        %v2511 = vadd.f32 %v2216, %v2447
        %v2512 = vadd.f32 %v2217, %v2452
        %v2513 = vadd.f32 %v2218, %v2455
        %v2514 = vadd.f32 %v2219, %v2460
        %v2515 = vadd.f32 %v2220, %v2463
        %v2516 = vadd.f32 %v2221, %v2468
        %v2517 = vadd.f32 %v2222, %v2471
        %v2518 = vadd.f32 %v2223, %v2476
        %v2519 = vadd.f32 %v2224, %v2479
        %v2520 = vadd.f32 %v2225, %v2484
        %v2521 = vadd.f32 %v2226, %v2487
        %v2522 = vld [vmem:[%s2227 + $0x1] sm:$0xff]
        %v2523 = vld [vmem:[%s2227 + $0x9] sm:$0xff]
        %v2524 = vld [vmem:[%s2227 + $0x19] sm:$0xff]
        %v2525 = vld [vmem:[%s2227 + $0x21] sm:$0xff]
        %v2526 = vld [vmem:[%s2227 + $0x31] sm:$0xff]
        %v2527 = vld [vmem:[%s2227 + $0x39] sm:$0xff]
        %v2528 = vld [vmem:[%s2227 + $0x49] sm:$0xff]
        %v2529 = vld [vmem:[%s2227 + $0x51] sm:$0xff]
        %v2530 = vld [vmem:[%s2227 + $0x61] sm:$0xff]
        %v2531 = vld [vmem:[%s2227 + $0x69] sm:$0xff]
        %v2532 = vld [vmem:[%s2227 + $0x79] sm:$0xff]
        %v2533 = vld [vmem:[%s2227 + $0x81] sm:$0xff]
        %v2534 = vld [vmem:[%s2227 + $0x91] sm:$0xff]
        %v2535 = vld [vmem:[%s2227 + $0x99] sm:$0xff]
        %v2536 = vld [vmem:[%s2227 + $0xa9] sm:$0xff]
        %v2537 = vld [vmem:[%s2227 + $0xb1] sm:$0xff]
        %v2538 = vld [vmem:[%s2227 + $0xc1] sm:$0xff]
        %v2539 = vld [vmem:[%s2227 + $0xc9] sm:$0xff]
        %v2540 = vld [vmem:[%s2227 + $0xd9] sm:$0xff]
        %v2541 = vld [vmem:[%s2227 + $0xe1] sm:$0xff]
        %v2542 = vld [vmem:[%s2227 + $0xf1] sm:$0xff]
        %v2543 = vld [vmem:[%s2227 + $0xf9] sm:$0xff]
        %v2544 = vld [vmem:[%s2227 + $0x109] sm:$0xff]
        %v2545 = vld [vmem:[%s2227 + $0x111] sm:$0xff]
        %v2546 = vld [vmem:[%s2227 + $0x121] sm:$0xff]
        %v2547 = vld [vmem:[%s2227 + $0x129] sm:$0xff]
        %v2548 = vld [vmem:[%s2227 + $0x139] sm:$0xff]
        %v2549 = vld [vmem:[%s2227 + $0x141] sm:$0xff]
        %v2550 = vld [vmem:[%s2227 + $0x151] sm:$0xff]
        %v2551 = vld [vmem:[%s2227 + $0x159] sm:$0xff]
        %v2552 = vld [vmem:[%s2227 + $0x169] sm:$0xff]
        %v2553 = vld [vmem:[%s2227 + $0x171] sm:$0xff]
        %v2554 = vpack.c.bf16 %v2523, %v2522
        %v2555 = vpack.c.bf16 %v2525, %v2524
        %v2556 = vpack.c.bf16 %v2527, %v2526
        %v2557 = vpack.c.bf16 %v2529, %v2528
        %v2558 = vpack.c.bf16 %v2531, %v2530
        %v2559 = vpack.c.bf16 %v2533, %v2532
        %v2560 = vpack.c.bf16 %v2535, %v2534
        %v2561 = vpack.c.bf16 %v2537, %v2536
        %v2562 = vpack.c.bf16 %v2539, %v2538
        %v2563 = vpack.c.bf16 %v2541, %v2540
        %v2564 = vpack.c.bf16 %v2543, %v2542
        %v2565 = vpack.c.bf16 %v2545, %v2544
        %v2566 = vpack.c.bf16 %v2547, %v2546
        %v2567 = vpack.c.bf16 %v2549, %v2548
        %v2568 = vpack.c.bf16 %v2551, %v2550
        %v2569 = vpack.c.bf16 %v2553, %v2552
        %s2570 = scalar_lea.vmem %s2, 28
        %v2571 = vld [vmem:[%s2570] sm:$0xf]
        %v2573 = vsel %vm494, %v2554, 0
        %v2576 = vsel %vm494, %v2555, 0
        %v2579 = vsel %vm494, %v2556, 0
        %v2582 = vsel %vm494, %v2557, 0
        %v2585 = vsel %vm494, %v2558, 0
        %v2588 = vsel %vm494, %v2559, 0
        %v2591 = vsel %vm494, %v2560, 0
        %v2594 = vsel %vm494, %v2561, 0
        %v2597 = vsel %vm494, %v2562, 0
        %v2600 = vsel %vm494, %v2563, 0
        %v2603 = vsel %vm494, %v2564, 0
        %v2606 = vsel %vm494, %v2565, 0
        %v2609 = vsel %vm494, %v2566, 0
        %v2612 = vsel %vm494, %v2567, 0
        %v2615 = vsel %vm494, %v2568, 0
        %v2618 = vsel %vm494, %v2569, 0
        %v2621 = vsel %vm674, %v2571, 0
        %2623 = vmatprep.subr.bf16.mxu0 0
        %2624 = vmatpush1.bf16.msra.mxu0 %v2621
        %2625 = vmatprep.subr.bf16.mxu0 0
        %2626 = vmatpush1.bf16.msra.mxu0 0
        %2627 = vmatprep.subr.bf16.mxu0 0
        %2628 = vmatpush1.bf16.msra.mxu0 0
        %2629 = vmatprep.subr.bf16.mxu0 0
        %2630 = vmatpush1.bf16.msra.mxu0 0
        %2631 = vmatprep.subr.bf16.mxu0 0
        %2632 = vmatpush1.bf16.msra.mxu0 0
        %2633 = vmatprep.subr.bf16.mxu0 0
        %2634 = vmatpush1.bf16.msra.mxu0 0
        %2635 = vmatprep.subr.bf16.mxu0 0
        %2636 = vmatpush1.bf16.msra.mxu0 0
        %2637 = vmatprep.subr.bf16.mxu0 0
        %2638 = vmatpush1.bf16.msra.mxu0 0
        %2639 = vmatprep.subr.bf16.mxu0 0
        %2640 = vmatpush1.bf16.msra.mxu0 0
        %2641 = vmatprep.subr.bf16.mxu0 0
        %2642 = vmatpush1.bf16.msra.mxu0 0
        %2643 = vmatprep.subr.bf16.mxu0 0
        %2644 = vmatpush1.bf16.msra.mxu0 0
        %2645 = vmatprep.subr.bf16.mxu0 0
        %2646 = vmatpush1.bf16.msra.mxu0 0
        %2647 = vmatprep.subr.bf16.mxu0 0
        %2648 = vmatpush1.bf16.msra.mxu0 0
        %2649 = vmatprep.subr.bf16.mxu0 0
        %2650 = vmatpush1.bf16.msra.mxu0 0
        %2651 = vmatprep.subr.bf16.mxu0 0
        %2652 = vmatpush1.bf16.msra.mxu0 0
        %2653 = vmatprep.subr.bf16.mxu0 0
        %2654 = vmatpush1.bf16.msra.mxu0 0
        %2655 = vmatprep.mubr.bf16.mxu0 0
        %2656 = vmatmul.mubr.bf16.gmra.mrb[0].mxu0 %v2573
        %v2657 = vpop.f32.mrb[0].mxu0
        %v2658 = vadd.f32 0.0, %v2657
        %v2659 = vpop.f32.mrb[0].mxu0
        %v2660 = vpop.f32.mrb[0].mxu0
        %v2661 = vadd.f32 0.0, %v2660
        %v2662 = vpop.f32.mrb[0].mxu0
        %2663 = vmatprep.mubr.bf16.mxu0 0
        %2664 = vmatmul.mubr.bf16.gmra.mrb[0].mxu0 %v2576
        %v2665 = vpop.f32.mrb[0].mxu0
        %v2666 = vadd.f32 0.0, %v2665
        %v2667 = vpop.f32.mrb[0].mxu0
        %v2668 = vpop.f32.mrb[0].mxu0
        %v2669 = vadd.f32 0.0, %v2668
        %v2670 = vpop.f32.mrb[0].mxu0
        %2671 = vmatprep.mubr.bf16.mxu0 0
        %2672 = vmatmul.mubr.bf16.gmra.mrb[0].mxu0 %v2579
        %v2673 = vpop.f32.mrb[0].mxu0
        %v2674 = vadd.f32 0.0, %v2673
        %v2675 = vpop.f32.mrb[0].mxu0
        %v2676 = vpop.f32.mrb[0].mxu0
        %v2677 = vadd.f32 0.0, %v2676
        %v2678 = vpop.f32.mrb[0].mxu0
        %2679 = vmatprep.mubr.bf16.mxu0 0
        %2680 = vmatmul.mubr.bf16.gmra.mrb[0].mxu0 %v2582
        %v2681 = vpop.f32.mrb[0].mxu0
        %v2682 = vadd.f32 0.0, %v2681
        %v2683 = vpop.f32.mrb[0].mxu0
        %v2684 = vpop.f32.mrb[0].mxu0
        %v2685 = vadd.f32 0.0, %v2684
        %v2686 = vpop.f32.mrb[0].mxu0
        %2687 = vmatprep.mubr.bf16.mxu0 0
        %2688 = vmatmul.mubr.bf16.gmra.mrb[0].mxu0 %v2585
        %v2689 = vpop.f32.mrb[0].mxu0
        %v2690 = vadd.f32 0.0, %v2689
        %v2691 = vpop.f32.mrb[0].mxu0
        %v2692 = vpop.f32.mrb[0].mxu0
        %v2693 = vadd.f32 0.0, %v2692
        %v2694 = vpop.f32.mrb[0].mxu0
        %2695 = vmatprep.mubr.bf16.mxu0 0
        %2696 = vmatmul.mubr.bf16.gmra.mrb[0].mxu0 %v2588
        %v2697 = vpop.f32.mrb[0].mxu0
        %v2698 = vadd.f32 0.0, %v2697
        %v2699 = vpop.f32.mrb[0].mxu0
        %v2700 = vpop.f32.mrb[0].mxu0
        %v2701 = vadd.f32 0.0, %v2700
        %v2702 = vpop.f32.mrb[0].mxu0
        %2703 = vmatprep.mubr.bf16.mxu0 0
        %2704 = vmatmul.mubr.bf16.gmra.mrb[0].mxu0 %v2591
        %v2705 = vpop.f32.mrb[0].mxu0
        %v2706 = vadd.f32 0.0, %v2705
        %v2707 = vpop.f32.mrb[0].mxu0
        %v2708 = vpop.f32.mrb[0].mxu0
        %v2709 = vadd.f32 0.0, %v2708
        %v2710 = vpop.f32.mrb[0].mxu0
        %2711 = vmatprep.mubr.bf16.mxu0 0
        %2712 = vmatmul.mubr.bf16.gmra.mrb[0].mxu0 %v2594
        %v2713 = vpop.f32.mrb[0].mxu0
        %v2714 = vadd.f32 0.0, %v2713
        %v2715 = vpop.f32.mrb[0].mxu0
        %v2716 = vpop.f32.mrb[0].mxu0
        %v2717 = vadd.f32 0.0, %v2716
        %v2718 = vpop.f32.mrb[0].mxu0
        %2719 = vmatprep.mubr.bf16.mxu0 0
        %2720 = vmatmul.mubr.bf16.gmra.mrb[0].mxu0 %v2597
        %v2721 = vpop.f32.mrb[0].mxu0
        %v2722 = vadd.f32 0.0, %v2721
        %v2723 = vpop.f32.mrb[0].mxu0
        %v2724 = vpop.f32.mrb[0].mxu0
        %v2725 = vadd.f32 0.0, %v2724
        %v2726 = vpop.f32.mrb[0].mxu0
        %2727 = vmatprep.mubr.bf16.mxu0 0
        %2728 = vmatmul.mubr.bf16.gmra.mrb[0].mxu0 %v2600
        %v2729 = vpop.f32.mrb[0].mxu0
        %v2730 = vadd.f32 0.0, %v2729
        %v2731 = vpop.f32.mrb[0].mxu0
        %v2732 = vpop.f32.mrb[0].mxu0
        %v2733 = vadd.f32 0.0, %v2732
        %v2734 = vpop.f32.mrb[0].mxu0
        %2735 = vmatprep.mubr.bf16.mxu0 0
        %2736 = vmatmul.mubr.bf16.gmra.mrb[0].mxu0 %v2603
        %v2737 = vpop.f32.mrb[0].mxu0
        %v2738 = vadd.f32 0.0, %v2737
        %v2739 = vpop.f32.mrb[0].mxu0
        %v2740 = vpop.f32.mrb[0].mxu0
        %v2741 = vadd.f32 0.0, %v2740
        %v2742 = vpop.f32.mrb[0].mxu0
        %2743 = vmatprep.mubr.bf16.mxu0 0
        %2744 = vmatmul.mubr.bf16.gmra.mrb[0].mxu0 %v2606
        %v2745 = vpop.f32.mrb[0].mxu0
        %v2746 = vadd.f32 0.0, %v2745
        %v2747 = vpop.f32.mrb[0].mxu0
        %v2748 = vpop.f32.mrb[0].mxu0
        %v2749 = vadd.f32 0.0, %v2748
        %v2750 = vpop.f32.mrb[0].mxu0
        %2751 = vmatprep.mubr.bf16.mxu0 0
        %2752 = vmatmul.mubr.bf16.gmra.mrb[0].mxu0 %v2609
        %v2753 = vpop.f32.mrb[0].mxu0
        %v2754 = vadd.f32 0.0, %v2753
        %v2755 = vpop.f32.mrb[0].mxu0
        %v2756 = vpop.f32.mrb[0].mxu0
        %v2757 = vadd.f32 0.0, %v2756
        %v2758 = vpop.f32.mrb[0].mxu0
        %2759 = vmatprep.mubr.bf16.mxu0 0
        %2760 = vmatmul.mubr.bf16.gmra.mrb[0].mxu0 %v2612
        %v2761 = vpop.f32.mrb[0].mxu0
        %v2762 = vadd.f32 0.0, %v2761
        %v2763 = vpop.f32.mrb[0].mxu0
        %v2764 = vpop.f32.mrb[0].mxu0
        %v2765 = vadd.f32 0.0, %v2764
        %v2766 = vpop.f32.mrb[0].mxu0
        %2767 = vmatprep.mubr.bf16.mxu0 0
        %2768 = vmatmul.mubr.bf16.gmra.mrb[0].mxu0 %v2615
        %v2769 = vpop.f32.mrb[0].mxu0
        %v2770 = vadd.f32 0.0, %v2769
        %v2771 = vpop.f32.mrb[0].mxu0
        %v2772 = vpop.f32.mrb[0].mxu0
        %v2773 = vadd.f32 0.0, %v2772
        %v2774 = vpop.f32.mrb[0].mxu0
        %2775 = vmatprep.mubr.bf16.mxu0 0
        %2776 = vmatmul.mubr.bf16.gmra.mrb[0].mxu0 %v2618
        %v2777 = vpop.f32.mrb[0].mxu0
        %v2778 = vadd.f32 0.0, %v2777
        %v2779 = vpop.f32.mrb[0].mxu0
        %v2780 = vpop.f32.mrb[0].mxu0
        %v2781 = vadd.f32 0.0, %v2780
        %v2782 = vpop.f32.mrb[0].mxu0
        %2783 = vdwg.mxu0
        %v2784 = vadd.f32 %v2490, %v2658
        %v2785 = vadd.f32 %v2491, %v2661
        %v2786 = vadd.f32 %v2492, %v2666
        %v2787 = vadd.f32 %v2493, %v2669
        %v2788 = vadd.f32 %v2494, %v2674
        %v2789 = vadd.f32 %v2495, %v2677
        %v2790 = vadd.f32 %v2496, %v2682
        %v2791 = vadd.f32 %v2497, %v2685
        %v2792 = vadd.f32 %v2498, %v2690
        %v2793 = vadd.f32 %v2499, %v2693
        %v2794 = vadd.f32 %v2500, %v2698
        %v2795 = vadd.f32 %v2501, %v2701
        %v2796 = vadd.f32 %v2502, %v2706
        %v2797 = vadd.f32 %v2503, %v2709
        %v2798 = vadd.f32 %v2504, %v2714
        %v2799 = vadd.f32 %v2505, %v2717
        %v2800 = vadd.f32 %v2506, %v2722
        %v2801 = vadd.f32 %v2507, %v2725
        %v2802 = vadd.f32 %v2508, %v2730
        %v2803 = vadd.f32 %v2509, %v2733
        %v2804 = vadd.f32 %v2510, %v2738
        %v2805 = vadd.f32 %v2511, %v2741
        %v2806 = vadd.f32 %v2512, %v2746
        %v2807 = vadd.f32 %v2513, %v2749
        %v2808 = vadd.f32 %v2514, %v2754
        %v2809 = vadd.f32 %v2515, %v2757
        %v2810 = vadd.f32 %v2516, %v2762
        %v2811 = vadd.f32 %v2517, %v2765
        %v2812 = vadd.f32 %v2518, %v2770
        %v2813 = vadd.f32 %v2519, %v2773
        %v2814 = vadd.f32 %v2520, %v2778
        %v2815 = vadd.f32 %v2521, %v2781
        %v2816 = vld [vmem:[%s2227 + $0x2] sm:$0xff]
        %v2817 = vld [vmem:[%s2227 + $0xa] sm:$0xff]
        %v2818 = vld [vmem:[%s2227 + $0x1a] sm:$0xff]
        %v2819 = vld [vmem:[%s2227 + $0x22] sm:$0xff]
        %v2820 = vld [vmem:[%s2227 + $0x32] sm:$0xff]
        %v2821 = vld [vmem:[%s2227 + $0x3a] sm:$0xff]
        %v2822 = vld [vmem:[%s2227 + $0x4a] sm:$0xff]
        %v2823 = vld [vmem:[%s2227 + $0x52] sm:$0xff]
        %v2824 = vld [vmem:[%s2227 + $0x62] sm:$0xff]
        %v2825 = vld [vmem:[%s2227 + $0x6a] sm:$0xff]
        %v2826 = vld [vmem:[%s2227 + $0x7a] sm:$0xff]
        %v2827 = vld [vmem:[%s2227 + $0x82] sm:$0xff]
        %v2828 = vld [vmem:[%s2227 + $0x92] sm:$0xff]
        %v2829 = vld [vmem:[%s2227 + $0x9a] sm:$0xff]
        %v2830 = vld [vmem:[%s2227 + $0xaa] sm:$0xff]
        %v2831 = vld [vmem:[%s2227 + $0xb2] sm:$0xff]
        %v2832 = vld [vmem:[%s2227 + $0xc2] sm:$0xff]
        %v2833 = vld [vmem:[%s2227 + $0xca] sm:$0xff]
        %v2834 = vld [vmem:[%s2227 + $0xda] sm:$0xff]
        %v2835 = vld [vmem:[%s2227 + $0xe2] sm:$0xff]
        %v2836 = vld [vmem:[%s2227 + $0xf2] sm:$0xff]
        %v2837 = vld [vmem:[%s2227 + $0xfa] sm:$0xff]
        %v2838 = vld [vmem:[%s2227 + $0x10a] sm:$0xff]
        %v2839 = vld [vmem:[%s2227 + $0x112] sm:$0xff]
        %v2840 = vld [vmem:[%s2227 + $0x122] sm:$0xff]
        %v2841 = vld [vmem:[%s2227 + $0x12a] sm:$0xff]
        %v2842 = vld [vmem:[%s2227 + $0x13a] sm:$0xff]
        %v2843 = vld [vmem:[%s2227 + $0x142] sm:$0xff]
        %v2844 = vld [vmem:[%s2227 + $0x152] sm:$0xff]
        %v2845 = vld [vmem:[%s2227 + $0x15a] sm:$0xff]
        %v2846 = vld [vmem:[%s2227 + $0x16a] sm:$0xff]
        %v2847 = vld [vmem:[%s2227 + $0x172] sm:$0xff]
        %v2848 = vpack.c.bf16 %v2817, %v2816
        %v2849 = vpack.c.bf16 %v2819, %v2818
        %v2850 = vpack.c.bf16 %v2821, %v2820
        %v2851 = vpack.c.bf16 %v2823, %v2822
        %v2852 = vpack.c.bf16 %v2825, %v2824
        %v2853 = vpack.c.bf16 %v2827, %v2826
        %v2854 = vpack.c.bf16 %v2829, %v2828
        %v2855 = vpack.c.bf16 %v2831, %v2830
        %v2856 = vpack.c.bf16 %v2833, %v2832
        %v2857 = vpack.c.bf16 %v2835, %v2834
        %v2858 = vpack.c.bf16 %v2837, %v2836
        %v2859 = vpack.c.bf16 %v2839, %v2838
        %v2860 = vpack.c.bf16 %v2841, %v2840
        %v2861 = vpack.c.bf16 %v2843, %v2842
        %v2862 = vpack.c.bf16 %v2845, %v2844
        %v2863 = vpack.c.bf16 %v2847, %v2846
        %s2864 = scalar_lea.vmem %s2, 32
        %v2865 = vld [vmem:[%s2864] sm:$0xf]
        %v2867 = vsel %vm494, %v2848, 0
        %v2870 = vsel %vm494, %v2849, 0
        %v2873 = vsel %vm494, %v2850, 0
        %v2876 = vsel %vm494, %v2851, 0
        %v2879 = vsel %vm494, %v2852, 0
        %v2882 = vsel %vm494, %v2853, 0
        %v2885 = vsel %vm494, %v2854, 0
        %v2888 = vsel %vm494, %v2855, 0
        %v2891 = vsel %vm494, %v2856, 0
        %v2894 = vsel %vm494, %v2857, 0
        %v2897 = vsel %vm494, %v2858, 0
        %v2900 = vsel %vm494, %v2859, 0
        %v2903 = vsel %vm494, %v2860, 0
        %v2906 = vsel %vm494, %v2861, 0
        %v2909 = vsel %vm494, %v2862, 0
        %v2912 = vsel %vm494, %v2863, 0
        %v2915 = vsel %vm674, %v2865, 0
        %2917 = vmatprep.subr.bf16.mxu0 0
        %2918 = vmatpush1.bf16.msra.mxu0 %v2915
        %2919 = vmatprep.subr.bf16.mxu0 0
        %2920 = vmatpush1.bf16.msra.mxu0 0
        %2921 = vmatprep.subr.bf16.mxu0 0
        %2922 = vmatpush1.bf16.msra.mxu0 0
        %2923 = vmatprep.subr.bf16.mxu0 0
        %2924 = vmatpush1.bf16.msra.mxu0 0
        %2925 = vmatprep.subr.bf16.mxu0 0
        %2926 = vmatpush1.bf16.msra.mxu0 0
        %2927 = vmatprep.subr.bf16.mxu0 0
        %2928 = vmatpush1.bf16.msra.mxu0 0
        %2929 = vmatprep.subr.bf16.mxu0 0
        %2930 = vmatpush1.bf16.msra.mxu0 0
        %2931 = vmatprep.subr.bf16.mxu0 0
        %2932 = vmatpush1.bf16.msra.mxu0 0
        %2933 = vmatprep.subr.bf16.mxu0 0
        %2934 = vmatpush1.bf16.msra.mxu0 0
        %2935 = vmatprep.subr.bf16.mxu0 0
        %2936 = vmatpush1.bf16.msra.mxu0 0
        %2937 = vmatprep.subr.bf16.mxu0 0
        %2938 = vmatpush1.bf16.msra.mxu0 0
        %2939 = vmatprep.subr.bf16.mxu0 0
        %2940 = vmatpush1.bf16.msra.mxu0 0
        %2941 = vmatprep.subr.bf16.mxu0 0
        %2942 = vmatpush1.bf16.msra.mxu0 0
        %2943 = vmatprep.subr.bf16.mxu0 0
        %2944 = vmatpush1.bf16.msra.mxu0 0
        %2945 = vmatprep.subr.bf16.mxu0 0
        %2946 = vmatpush1.bf16.msra.mxu0 0
        %2947 = vmatprep.subr.bf16.mxu0 0
        %2948 = vmatpush1.bf16.msra.mxu0 0
        %2949 = vmatprep.mubr.bf16.mxu0 0
        %2950 = vmatmul.mubr.bf16.gmra.mrb[0].mxu0 %v2867
        %v2951 = vpop.f32.mrb[0].mxu0
        %v2952 = vadd.f32 0.0, %v2951
        %v2953 = vpop.f32.mrb[0].mxu0
        %v2954 = vpop.f32.mrb[0].mxu0
        %v2955 = vadd.f32 0.0, %v2954
        %v2956 = vpop.f32.mrb[0].mxu0
        %2957 = vmatprep.mubr.bf16.mxu0 0
        %2958 = vmatmul.mubr.bf16.gmra.mrb[0].mxu0 %v2870
        %v2959 = vpop.f32.mrb[0].mxu0
        %v2960 = vadd.f32 0.0, %v2959
        %v2961 = vpop.f32.mrb[0].mxu0
        %v2962 = vpop.f32.mrb[0].mxu0
        %v2963 = vadd.f32 0.0, %v2962
        %v2964 = vpop.f32.mrb[0].mxu0
        %2965 = vmatprep.mubr.bf16.mxu0 0
        %2966 = vmatmul.mubr.bf16.gmra.mrb[0].mxu0 %v2873
        %v2967 = vpop.f32.mrb[0].mxu0
        %v2968 = vadd.f32 0.0, %v2967
        %v2969 = vpop.f32.mrb[0].mxu0
        %v2970 = vpop.f32.mrb[0].mxu0
        %v2971 = vadd.f32 0.0, %v2970
        %v2972 = vpop.f32.mrb[0].mxu0
        %2973 = vmatprep.mubr.bf16.mxu0 0
        %2974 = vmatmul.mubr.bf16.gmra.mrb[0].mxu0 %v2876
        %v2975 = vpop.f32.mrb[0].mxu0
        %v2976 = vadd.f32 0.0, %v2975
        %v2977 = vpop.f32.mrb[0].mxu0
        %v2978 = vpop.f32.mrb[0].mxu0
        %v2979 = vadd.f32 0.0, %v2978
        %v2980 = vpop.f32.mrb[0].mxu0
        %2981 = vmatprep.mubr.bf16.mxu0 0
        %2982 = vmatmul.mubr.bf16.gmra.mrb[0].mxu0 %v2879
        %v2983 = vpop.f32.mrb[0].mxu0
        %v2984 = vadd.f32 0.0, %v2983
        %v2985 = vpop.f32.mrb[0].mxu0
        %v2986 = vpop.f32.mrb[0].mxu0
        %v2987 = vadd.f32 0.0, %v2986
        %v2988 = vpop.f32.mrb[0].mxu0
        %2989 = vmatprep.mubr.bf16.mxu0 0
        %2990 = vmatmul.mubr.bf16.gmra.mrb[0].mxu0 %v2882
        %v2991 = vpop.f32.mrb[0].mxu0
        %v2992 = vadd.f32 0.0, %v2991
        %v2993 = vpop.f32.mrb[0].mxu0
        %v2994 = vpop.f32.mrb[0].mxu0
        %v2995 = vadd.f32 0.0, %v2994
        %v2996 = vpop.f32.mrb[0].mxu0
        %2997 = vmatprep.mubr.bf16.mxu0 0
        %2998 = vmatmul.mubr.bf16.gmra.mrb[0].mxu0 %v2885
        %v2999 = vpop.f32.mrb[0].mxu0
        %v3000 = vadd.f32 0.0, %v2999
        %v3001 = vpop.f32.mrb[0].mxu0
        %v3002 = vpop.f32.mrb[0].mxu0
        %v3003 = vadd.f32 0.0, %v3002
        %v3004 = vpop.f32.mrb[0].mxu0
        %3005 = vmatprep.mubr.bf16.mxu0 0
        %3006 = vmatmul.mubr.bf16.gmra.mrb[0].mxu0 %v2888
        %v3007 = vpop.f32.mrb[0].mxu0
        %v3008 = vadd.f32 0.0, %v3007
        %v3009 = vpop.f32.mrb[0].mxu0
        %v3010 = vpop.f32.mrb[0].mxu0
        %v3011 = vadd.f32 0.0, %v3010
        %v3012 = vpop.f32.mrb[0].mxu0
        %3013 = vmatprep.mubr.bf16.mxu0 0
        %3014 = vmatmul.mubr.bf16.gmra.mrb[0].mxu0 %v2891
        %v3015 = vpop.f32.mrb[0].mxu0
        %v3016 = vadd.f32 0.0, %v3015
        %v3017 = vpop.f32.mrb[0].mxu0
        %v3018 = vpop.f32.mrb[0].mxu0
        %v3019 = vadd.f32 0.0, %v3018
        %v3020 = vpop.f32.mrb[0].mxu0
        %3021 = vmatprep.mubr.bf16.mxu0 0
        %3022 = vmatmul.mubr.bf16.gmra.mrb[0].mxu0 %v2894
        %v3023 = vpop.f32.mrb[0].mxu0
        %v3024 = vadd.f32 0.0, %v3023
        %v3025 = vpop.f32.mrb[0].mxu0
        %v3026 = vpop.f32.mrb[0].mxu0
        %v3027 = vadd.f32 0.0, %v3026
        %v3028 = vpop.f32.mrb[0].mxu0
        %3029 = vmatprep.mubr.bf16.mxu0 0
        %3030 = vmatmul.mubr.bf16.gmra.mrb[0].mxu0 %v2897
        %v3031 = vpop.f32.mrb[0].mxu0
        %v3032 = vadd.f32 0.0, %v3031
        %v3033 = vpop.f32.mrb[0].mxu0
        %v3034 = vpop.f32.mrb[0].mxu0
        %v3035 = vadd.f32 0.0, %v3034
        %v3036 = vpop.f32.mrb[0].mxu0
        %3037 = vmatprep.mubr.bf16.mxu0 0
        %3038 = vmatmul.mubr.bf16.gmra.mrb[0].mxu0 %v2900
        %v3039 = vpop.f32.mrb[0].mxu0
        %v3040 = vadd.f32 0.0, %v3039
        %v3041 = vpop.f32.mrb[0].mxu0
        %v3042 = vpop.f32.mrb[0].mxu0
        %v3043 = vadd.f32 0.0, %v3042
        %v3044 = vpop.f32.mrb[0].mxu0
        %3045 = vmatprep.mubr.bf16.mxu0 0
        %3046 = vmatmul.mubr.bf16.gmra.mrb[0].mxu0 %v2903
        %v3047 = vpop.f32.mrb[0].mxu0
        %v3048 = vadd.f32 0.0, %v3047
        %v3049 = vpop.f32.mrb[0].mxu0
        %v3050 = vpop.f32.mrb[0].mxu0
        %v3051 = vadd.f32 0.0, %v3050
        %v3052 = vpop.f32.mrb[0].mxu0
        %3053 = vmatprep.mubr.bf16.mxu0 0
        %3054 = vmatmul.mubr.bf16.gmra.mrb[0].mxu0 %v2906
        %v3055 = vpop.f32.mrb[0].mxu0
        %v3056 = vadd.f32 0.0, %v3055
        %v3057 = vpop.f32.mrb[0].mxu0
        %v3058 = vpop.f32.mrb[0].mxu0
        %v3059 = vadd.f32 0.0, %v3058
        %v3060 = vpop.f32.mrb[0].mxu0
        %3061 = vmatprep.mubr.bf16.mxu0 0
        %3062 = vmatmul.mubr.bf16.gmra.mrb[0].mxu0 %v2909
        %v3063 = vpop.f32.mrb[0].mxu0
        %v3064 = vadd.f32 0.0, %v3063
        %v3065 = vpop.f32.mrb[0].mxu0
        %v3066 = vpop.f32.mrb[0].mxu0
        %v3067 = vadd.f32 0.0, %v3066
        %v3068 = vpop.f32.mrb[0].mxu0
        %3069 = vmatprep.mubr.bf16.mxu0 0
        %3070 = vmatmul.mubr.bf16.gmra.mrb[0].mxu0 %v2912
        %v3071 = vpop.f32.mrb[0].mxu0
        %v3072 = vadd.f32 0.0, %v3071
        %v3073 = vpop.f32.mrb[0].mxu0
        %v3074 = vpop.f32.mrb[0].mxu0
        %v3075 = vadd.f32 0.0, %v3074
        %v3076 = vpop.f32.mrb[0].mxu0
        %3077 = vdwg.mxu0
        %v3078 = vadd.f32 %v2784, %v2952
        %v3079 = vadd.f32 %v2785, %v2955
        %v3080 = vadd.f32 %v2786, %v2960
        %v3081 = vadd.f32 %v2787, %v2963
        %v3082 = vadd.f32 %v2788, %v2968
        %v3083 = vadd.f32 %v2789, %v2971
        %v3084 = vadd.f32 %v2790, %v2976
        %v3085 = vadd.f32 %v2791, %v2979
        %v3086 = vadd.f32 %v2792, %v2984
        %v3087 = vadd.f32 %v2793, %v2987
        %v3088 = vadd.f32 %v2794, %v2992
        %v3089 = vadd.f32 %v2795, %v2995
        %v3090 = vadd.f32 %v2796, %v3000
        %v3091 = vadd.f32 %v2797, %v3003
        %v3092 = vadd.f32 %v2798, %v3008
        %v3093 = vadd.f32 %v2799, %v3011
        %v3094 = vadd.f32 %v2800, %v3016
        %v3095 = vadd.f32 %v2801, %v3019
        %v3096 = vadd.f32 %v2802, %v3024
        %v3097 = vadd.f32 %v2803, %v3027
        %v3098 = vadd.f32 %v2804, %v3032
        %v3099 = vadd.f32 %v2805, %v3035
        %v3100 = vadd.f32 %v2806, %v3040
        %v3101 = vadd.f32 %v2807, %v3043
        %v3102 = vadd.f32 %v2808, %v3048
        %v3103 = vadd.f32 %v2809, %v3051
        %v3104 = vadd.f32 %v2810, %v3056
        %v3105 = vadd.f32 %v2811, %v3059
        %v3106 = vadd.f32 %v2812, %v3064
        %v3107 = vadd.f32 %v2813, %v3067
        %v3108 = vadd.f32 %v2814, %v3072
        %v3109 = vadd.f32 %v2815, %v3075
        %v3110 = vld [vmem:[%s3] sm:$0x1]
        %v3112 = vlaneseq
        %v3113 = vshrl.u32 %v3112, 7
        %v3114 = vsub.s32 0, %v3113
        %v3115 = vrot.slane %v3110, %v3114
        %v3117 = vadd.f32 %v3078, %v3115
        %v3118 = vadd.f32 %v3079, %v3115
        %v3119 = vadd.f32 %v3080, %v3115
        %v3120 = vadd.f32 %v3081, %v3115
        %v3121 = vadd.f32 %v3082, %v3115
        %v3122 = vadd.f32 %v3083, %v3115
        %v3123 = vadd.f32 %v3084, %v3115
        %v3124 = vadd.f32 %v3085, %v3115
        %v3125 = vadd.f32 %v3086, %v3115
        %v3126 = vadd.f32 %v3087, %v3115
        %v3127 = vadd.f32 %v3088, %v3115
        %v3128 = vadd.f32 %v3089, %v3115
        %v3129 = vadd.f32 %v3090, %v3115
        %v3130 = vadd.f32 %v3091, %v3115
        %v3131 = vadd.f32 %v3092, %v3115
        %v3132 = vadd.f32 %v3093, %v3115
        %v3133 = vadd.f32 %v3094, %v3115
        %v3134 = vadd.f32 %v3095, %v3115
        %v3135 = vadd.f32 %v3096, %v3115
        %v3136 = vadd.f32 %v3097, %v3115
        %v3137 = vadd.f32 %v3098, %v3115
        %v3138 = vadd.f32 %v3099, %v3115
        %v3139 = vadd.f32 %v3100, %v3115
        %v3140 = vadd.f32 %v3101, %v3115
        %v3141 = vadd.f32 %v3102, %v3115
        %v3142 = vadd.f32 %v3103, %v3115
        %v3143 = vadd.f32 %v3104, %v3115
        %v3144 = vadd.f32 %v3105, %v3115
        %v3145 = vadd.f32 %v3106, %v3115
        %v3146 = vadd.f32 %v3107, %v3115
        %v3147 = vadd.f32 %v3108, %v3115
        %v3148 = vadd.f32 %v3109, %v3115
        %v3149 = vmax.f32 %v3117, 0.0
        %v3150 = vmax.f32 %v3118, 0.0
        %v3151 = vmax.f32 %v3119, 0.0
        %v3152 = vmax.f32 %v3120, 0.0
        %v3153 = vmax.f32 %v3121, 0.0
        %v3154 = vmax.f32 %v3122, 0.0
        %v3155 = vmax.f32 %v3123, 0.0
        %v3156 = vmax.f32 %v3124, 0.0
        %v3157 = vmax.f32 %v3125, 0.0
        %v3158 = vmax.f32 %v3126, 0.0
        %v3159 = vmax.f32 %v3127, 0.0
        %v3160 = vmax.f32 %v3128, 0.0
        %v3161 = vmax.f32 %v3129, 0.0
        %v3162 = vmax.f32 %v3130, 0.0
        %v3163 = vmax.f32 %v3131, 0.0
        %v3164 = vmax.f32 %v3132, 0.0
        %v3165 = vmax.f32 %v3133, 0.0
        %v3166 = vmax.f32 %v3134, 0.0
        %v3167 = vmax.f32 %v3135, 0.0
        %v3168 = vmax.f32 %v3136, 0.0
        %v3169 = vmax.f32 %v3137, 0.0
        %v3170 = vmax.f32 %v3138, 0.0
        %v3171 = vmax.f32 %v3139, 0.0
        %v3172 = vmax.f32 %v3140, 0.0
        %v3173 = vmax.f32 %v3141, 0.0
        %v3174 = vmax.f32 %v3142, 0.0
        %v3175 = vmax.f32 %v3143, 0.0
        %v3176 = vmax.f32 %v3144, 0.0
        %v3177 = vmax.f32 %v3145, 0.0
        %v3178 = vmax.f32 %v3146, 0.0
        %v3179 = vmax.f32 %v3147, 0.0
        %v3180 = vmax.f32 %v3148, 0.0
        %s3181 = scalar_lea.vmem [#allocation3], 24
        %3182 = vst [vmem:[%s3181 + $0x1] sm:$0xff] %v3149
        %3183 = vst [vmem:[%s3181 + $0x9] sm:$0xff] %v3150
        %3184 = vst [vmem:[%s3181 + $0x19] sm:$0xff] %v3151
        %3185 = vst [vmem:[%s3181 + $0x21] sm:$0xff] %v3152
        %3186 = vst [vmem:[%s3181 + $0x31] sm:$0xff] %v3153
        %3187 = vst [vmem:[%s3181 + $0x39] sm:$0xff] %v3154
        %3188 = vst [vmem:[%s3181 + $0x49] sm:$0xff] %v3155
        %3189 = vst [vmem:[%s3181 + $0x51] sm:$0xff] %v3156
        %3190 = vst [vmem:[%s3181 + $0x61] sm:$0xff] %v3157
        %3191 = vst [vmem:[%s3181 + $0x69] sm:$0xff] %v3158
        %3192 = vst [vmem:[%s3181 + $0x79] sm:$0xff] %v3159
        %3193 = vst [vmem:[%s3181 + $0x81] sm:$0xff] %v3160
        %3194 = vst [vmem:[%s3181 + $0x91] sm:$0xff] %v3161
        %3195 = vst [vmem:[%s3181 + $0x99] sm:$0xff] %v3162
        %3196 = vst [vmem:[%s3181 + $0xa9] sm:$0xff] %v3163
        %3197 = vst [vmem:[%s3181 + $0xb1] sm:$0xff] %v3164
        %3198 = vst [vmem:[%s3181 + $0xc1] sm:$0xff] %v3165
        %3199 = vst [vmem:[%s3181 + $0xc9] sm:$0xff] %v3166
        %3200 = vst [vmem:[%s3181 + $0xd9] sm:$0xff] %v3167
        %3201 = vst [vmem:[%s3181 + $0xe1] sm:$0xff] %v3168
        %3202 = vst [vmem:[%s3181 + $0xf1] sm:$0xff] %v3169
        %3203 = vst [vmem:[%s3181 + $0xf9] sm:$0xff] %v3170
        %3204 = vst [vmem:[%s3181 + $0x109] sm:$0xff] %v3171
        %3205 = vst [vmem:[%s3181 + $0x111] sm:$0xff] %v3172
        %3206 = vst [vmem:[%s3181 + $0x121] sm:$0xff] %v3173
        %3207 = vst [vmem:[%s3181 + $0x129] sm:$0xff] %v3174
        %3208 = vst [vmem:[%s3181 + $0x139] sm:$0xff] %v3175
        %3209 = vst [vmem:[%s3181 + $0x141] sm:$0xff] %v3176
        %3210 = vst [vmem:[%s3181 + $0x151] sm:$0xff] %v3177
        %3211 = vst [vmem:[%s3181 + $0x159] sm:$0xff] %v3178
        %3212 = vst [vmem:[%s3181 + $0x169] sm:$0xff] %v3179
        %3213 = vst [vmem:[%s3181 + $0x171] sm:$0xff] %v3180
        %v3214 = vld [vmem:[#allocation3] sm:$0xff]
        %v3215 = vld [vmem:[#allocation3 + $0x8] sm:$0xff]
        %v3216 = vld [vmem:[#allocation3 + $0x18] sm:$0xff]
        %v3217 = vld [vmem:[#allocation3 + $0x20] sm:$0xff]
        %v3218 = vld [vmem:[#allocation3 + $0x30] sm:$0xff]
        %v3219 = vld [vmem:[#allocation3 + $0x38] sm:$0xff]
        %v3220 = vld [vmem:[#allocation3 + $0x48] sm:$0xff]
        %v3221 = vld [vmem:[#allocation3 + $0x50] sm:$0xff]
        %v3222 = vld [vmem:[#allocation3 + $0x60] sm:$0xff]
        %v3223 = vld [vmem:[#allocation3 + $0x68] sm:$0xff]
        %v3224 = vld [vmem:[#allocation3 + $0x78] sm:$0xff]
        %v3225 = vld [vmem:[#allocation3 + $0x80] sm:$0xff]
        %v3226 = vld [vmem:[#allocation3 + $0x90] sm:$0xff]
        %v3227 = vld [vmem:[#allocation3 + $0x98] sm:$0xff]
        %v3228 = vld [vmem:[#allocation3 + $0xa8] sm:$0xff]
        %v3229 = vld [vmem:[#allocation3 + $0xb0] sm:$0xff]
        %v3230 = vld [vmem:[#allocation3 + $0xc0] sm:$0xff]
        %v3231 = vld [vmem:[#allocation3 + $0xc8] sm:$0xff]
        %v3232 = vld [vmem:[#allocation3 + $0xd8] sm:$0xff]
        %v3233 = vld [vmem:[#allocation3 + $0xe0] sm:$0xff]
        %v3234 = vld [vmem:[#allocation3 + $0xf0] sm:$0xff]
        %v3235 = vld [vmem:[#allocation3 + $0xf8] sm:$0xff]
        %v3236 = vld [vmem:[#allocation3 + $0x108] sm:$0xff]
        %v3237 = vld [vmem:[#allocation3 + $0x110] sm:$0xff]
        %v3238 = vld [vmem:[#allocation3 + $0x120] sm:$0xff]
        %v3239 = vld [vmem:[#allocation3 + $0x128] sm:$0xff]
        %v3240 = vld [vmem:[#allocation3 + $0x138] sm:$0xff]
        %v3241 = vld [vmem:[#allocation3 + $0x140] sm:$0xff]
        %v3242 = vld [vmem:[#allocation3 + $0x150] sm:$0xff]
        %v3243 = vld [vmem:[#allocation3 + $0x158] sm:$0xff]
        %v3244 = vld [vmem:[#allocation3 + $0x168] sm:$0xff]
        %v3245 = vld [vmem:[#allocation3 + $0x170] sm:$0xff]
        %v3246 = vpack.c.bf16 %v3215, %v3214
        %v3247 = vpack.c.bf16 %v3217, %v3216
        %v3248 = vpack.c.bf16 %v3219, %v3218
        %v3249 = vpack.c.bf16 %v3221, %v3220
        %v3250 = vpack.c.bf16 %v3223, %v3222
        %v3251 = vpack.c.bf16 %v3225, %v3224
        %v3252 = vpack.c.bf16 %v3227, %v3226
        %v3253 = vpack.c.bf16 %v3229, %v3228
        %v3254 = vpack.c.bf16 %v3231, %v3230
        %v3255 = vpack.c.bf16 %v3233, %v3232
        %v3256 = vpack.c.bf16 %v3235, %v3234
        %v3257 = vpack.c.bf16 %v3237, %v3236
        %v3258 = vpack.c.bf16 %v3239, %v3238
        %v3259 = vpack.c.bf16 %v3241, %v3240
        %v3260 = vpack.c.bf16 %v3243, %v3242
        %v3261 = vpack.c.bf16 %v3245, %v3244
        %v3262 = vld [vmem:[#allocation4] sm:$0xff]
        %v3263 = vld [vmem:[#allocation4 + $0x8] sm:$0xff]
        %v3264 = vld [vmem:[#allocation4 + $0x10] sm:$0xff]
        %v3265 = vld [vmem:[#allocation4 + $0x18] sm:$0xff]
        %v3266 = vld [vmem:[#allocation4 + $0x20] sm:$0xff]
        %v3267 = vld [vmem:[#allocation4 + $0x28] sm:$0xff]
        %v3268 = vld [vmem:[#allocation4 + $0x30] sm:$0xff]
        %v3269 = vld [vmem:[#allocation4 + $0x38] sm:$0xff]
        %v3270 = vld [vmem:[#allocation4 + $0x40] sm:$0xff]
        %v3271 = vld [vmem:[#allocation4 + $0x48] sm:$0xff]
        %v3272 = vld [vmem:[#allocation4 + $0x50] sm:$0xff]
        %v3273 = vld [vmem:[#allocation4 + $0x58] sm:$0xff]
        %v3274 = vld [vmem:[#allocation4 + $0x60] sm:$0xff]
        %v3275 = vld [vmem:[#allocation4 + $0x68] sm:$0xff]
        %v3276 = vld [vmem:[#allocation4 + $0x70] sm:$0xff]
        %v3277 = vld [vmem:[#allocation4 + $0x78] sm:$0xff]
        %v3278 = vld [vmem:[#allocation3 + $0x1] sm:$0xff]
        %v3279 = vld [vmem:[#allocation3 + $0x9] sm:$0xff]
        %v3280 = vld [vmem:[#allocation3 + $0x19] sm:$0xff]
        %v3281 = vld [vmem:[#allocation3 + $0x21] sm:$0xff]
        %v3282 = vld [vmem:[#allocation3 + $0x31] sm:$0xff]
        %v3283 = vld [vmem:[#allocation3 + $0x39] sm:$0xff]
        %v3284 = vld [vmem:[#allocation3 + $0x49] sm:$0xff]
        %v3285 = vld [vmem:[#allocation3 + $0x51] sm:$0xff]
        %v3286 = vld [vmem:[#allocation3 + $0x61] sm:$0xff]
        %v3287 = vld [vmem:[#allocation3 + $0x69] sm:$0xff]
        %v3288 = vld [vmem:[#allocation3 + $0x79] sm:$0xff]
        %v3289 = vld [vmem:[#allocation3 + $0x81] sm:$0xff]
        %v3290 = vld [vmem:[#allocation3 + $0x91] sm:$0xff]
        %v3291 = vld [vmem:[#allocation3 + $0x99] sm:$0xff]
        %v3292 = vld [vmem:[#allocation3 + $0xa9] sm:$0xff]
        %v3293 = vld [vmem:[#allocation3 + $0xb1] sm:$0xff]
        %v3294 = vld [vmem:[#allocation3 + $0xc1] sm:$0xff]
        %v3295 = vld [vmem:[#allocation3 + $0xc9] sm:$0xff]
        %v3296 = vld [vmem:[#allocation3 + $0xd9] sm:$0xff]
        %v3297 = vld [vmem:[#allocation3 + $0xe1] sm:$0xff]
        %v3298 = vld [vmem:[#allocation3 + $0xf1] sm:$0xff]
        %v3299 = vld [vmem:[#allocation3 + $0xf9] sm:$0xff]
        %v3300 = vld [vmem:[#allocation3 + $0x109] sm:$0xff]
        %v3301 = vld [vmem:[#allocation3 + $0x111] sm:$0xff]
        %v3302 = vld [vmem:[#allocation3 + $0x121] sm:$0xff]
        %v3303 = vld [vmem:[#allocation3 + $0x129] sm:$0xff]
        %v3304 = vld [vmem:[#allocation3 + $0x139] sm:$0xff]
        %v3305 = vld [vmem:[#allocation3 + $0x141] sm:$0xff]
        %v3306 = vld [vmem:[#allocation3 + $0x151] sm:$0xff]
        %v3307 = vld [vmem:[#allocation3 + $0x159] sm:$0xff]
        %v3308 = vld [vmem:[#allocation3 + $0x169] sm:$0xff]
        %v3309 = vld [vmem:[#allocation3 + $0x171] sm:$0xff]
        %v3310 = vpack.c.bf16 %v3279, %v3278
        %v3311 = vpack.c.bf16 %v3281, %v3280
        %v3312 = vpack.c.bf16 %v3283, %v3282
        %v3313 = vpack.c.bf16 %v3285, %v3284
        %v3314 = vpack.c.bf16 %v3287, %v3286
        %v3315 = vpack.c.bf16 %v3289, %v3288
        %v3316 = vpack.c.bf16 %v3291, %v3290
        %v3317 = vpack.c.bf16 %v3293, %v3292
        %v3318 = vpack.c.bf16 %v3295, %v3294
        %v3319 = vpack.c.bf16 %v3297, %v3296
        %v3320 = vpack.c.bf16 %v3299, %v3298
        %v3321 = vpack.c.bf16 %v3301, %v3300
        %v3322 = vpack.c.bf16 %v3303, %v3302
        %v3323 = vpack.c.bf16 %v3305, %v3304
        %v3324 = vpack.c.bf16 %v3307, %v3306
        %v3325 = vpack.c.bf16 %v3309, %v3308
        %s3326 = scalar_lea.vmem [#allocation4], 128
        %v3327 = vld [vmem:[%s3326] sm:$0xff]
        %v3328 = vld [vmem:[%s3326 + $0x8] sm:$0xff]
        %v3329 = vld [vmem:[%s3326 + $0x10] sm:$0xff]
        %v3330 = vld [vmem:[%s3326 + $0x18] sm:$0xff]
        %v3331 = vld [vmem:[%s3326 + $0x20] sm:$0xff]
        %v3332 = vld [vmem:[%s3326 + $0x28] sm:$0xff]
        %v3333 = vld [vmem:[%s3326 + $0x30] sm:$0xff]
        %v3334 = vld [vmem:[%s3326 + $0x38] sm:$0xff]
        %v3335 = vld [vmem:[%s3326 + $0x40] sm:$0xff]
        %v3336 = vld [vmem:[%s3326 + $0x48] sm:$0xff]
        %v3337 = vld [vmem:[%s3326 + $0x50] sm:$0xff]
        %v3338 = vld [vmem:[%s3326 + $0x58] sm:$0xff]
        %v3339 = vld [vmem:[%s3326 + $0x60] sm:$0xff]
        %v3340 = vld [vmem:[%s3326 + $0x68] sm:$0xff]
        %v3341 = vld [vmem:[%s3326 + $0x70] sm:$0xff]
        %v3342 = vld [vmem:[%s3326 + $0x78] sm:$0xff]
        %v3359 = vunpack.c.l.b16 %v3327
        %v3360 = vunpack.c.h.b16 %v3327
        %v3361 = vunpack.c.l.b16 %v3328
        %v3362 = vunpack.c.h.b16 %v3328
        %v3363 = vunpack.c.l.b16 %v3329
        %v3364 = vunpack.c.h.b16 %v3329
        %v3365 = vunpack.c.l.b16 %v3330
        %v3366 = vunpack.c.h.b16 %v3330
        %v3367 = vunpack.c.l.b16 %v3331
        %v3368 = vunpack.c.h.b16 %v3331
        %v3369 = vunpack.c.l.b16 %v3332
        %v3370 = vunpack.c.h.b16 %v3332
        %v3371 = vunpack.c.l.b16 %v3333
        %v3372 = vunpack.c.h.b16 %v3333
        %v3373 = vunpack.c.l.b16 %v3334
        %v3374 = vunpack.c.h.b16 %v3334
        %v3375 = vunpack.c.l.b16 %v3335
        %v3376 = vunpack.c.h.b16 %v3335
        %v3377 = vunpack.c.l.b16 %v3336
        %v3378 = vunpack.c.h.b16 %v3336
        %v3379 = vunpack.c.l.b16 %v3337
        %v3380 = vunpack.c.h.b16 %v3337
        %v3381 = vunpack.c.l.b16 %v3338
        %v3382 = vunpack.c.h.b16 %v3338
        %v3383 = vunpack.c.l.b16 %v3339
        %v3384 = vunpack.c.h.b16 %v3339
        %v3385 = vunpack.c.l.b16 %v3340
        %v3386 = vunpack.c.h.b16 %v3340
        %v3387 = vunpack.c.l.b16 %v3341
        %v3388 = vunpack.c.h.b16 %v3341
        %v3389 = vunpack.c.l.b16 %v3342
        %v3390 = vunpack.c.h.b16 %v3342
        %v3391 = vpack.c.b16 %v3361, %v3359
        %v3392 = vpack.c.b16 %v3362, %v3360
        %v3393 = vpack.c.b16 %v3365, %v3363
        %v3394 = vpack.c.b16 %v3366, %v3364
        %v3395 = vpack.c.b16 %v3369, %v3367
        %v3396 = vpack.c.b16 %v3370, %v3368
        %v3397 = vpack.c.b16 %v3373, %v3371
        %v3398 = vpack.c.b16 %v3374, %v3372
        %v3399 = vpack.c.b16 %v3377, %v3375
        %v3400 = vpack.c.b16 %v3378, %v3376
        %v3401 = vpack.c.b16 %v3381, %v3379
        %v3402 = vpack.c.b16 %v3382, %v3380
        %v3403 = vpack.c.b16 %v3385, %v3383
        %v3404 = vpack.c.b16 %v3386, %v3384
        %v3405 = vpack.c.b16 %v3389, %v3387
        %v3406 = vpack.c.b16 %v3390, %v3388
        %3423 = vmatprep.subr.bf16.mxu0 %v3392
        %3424 = vmatpush1.bf16.msra.mxu0 %v3391
        %3425 = vmatprep.subr.bf16.mxu0 %v3394
        %3426 = vmatpush1.bf16.msra.mxu0 %v3393
        %3427 = vmatprep.subr.bf16.mxu0 %v3396
        %3428 = vmatpush1.bf16.msra.mxu0 %v3395
        %3429 = vmatprep.subr.bf16.mxu0 %v3398
        %3430 = vmatpush1.bf16.msra.mxu0 %v3397
        %3431 = vmatprep.subr.bf16.mxu0 %v3400
        %3432 = vmatpush1.bf16.msra.mxu0 %v3399
        %3433 = vmatprep.subr.bf16.mxu0 %v3402
        %3434 = vmatpush1.bf16.msra.mxu0 %v3401
        %3435 = vmatprep.subr.bf16.mxu0 %v3404
        %3436 = vmatpush1.bf16.msra.mxu0 %v3403
        %3437 = vmatprep.subr.bf16.mxu0 %v3406
        %3438 = vmatpush1.bf16.msra.mxu0 %v3405
        %3439 = vmatprep.subr.bf16.mxu0 0
        %3440 = vmatpush1.bf16.msra.mxu0 0
        %3441 = vmatprep.subr.bf16.mxu0 0
        %3442 = vmatpush1.bf16.msra.mxu0 0
        %3443 = vmatprep.subr.bf16.mxu0 0
        %3444 = vmatpush1.bf16.msra.mxu0 0
        %3445 = vmatprep.subr.bf16.mxu0 0
        %3446 = vmatpush1.bf16.msra.mxu0 0
        %3447 = vmatprep.subr.bf16.mxu0 0
        %3448 = vmatpush1.bf16.msra.mxu0 0
        %3449 = vmatprep.subr.bf16.mxu0 0
        %3450 = vmatpush1.bf16.msra.mxu0 0
        %3451 = vmatprep.subr.bf16.mxu0 0
        %3452 = vmatpush1.bf16.msra.mxu0 0
        %3453 = vmatprep.subr.bf16.mxu0 0
        %3454 = vmatpush1.bf16.msra.mxu0 0
        %3455 = vmatprep.mubr.bf16.mxu0 0
        %3456 = vmatmul.mubr.bf16.gmra.mrb[0].mxu0 %v3310
        %v3457 = vpop.f32.mrb[0].mxu0
        %v3458 = vadd.f32 0.0, %v3457
        %v3459 = vpop.f32.mrb[0].mxu0
        %v3460 = vadd.f32 0.0, %v3459
        %v3461 = vpop.f32.mrb[0].mxu0
        %v3462 = vadd.f32 0.0, %v3461
        %v3463 = vpop.f32.mrb[0].mxu0
        %v3464 = vadd.f32 0.0, %v3463
        %3465 = vmatprep.mubr.bf16.mxu0 0
        %3466 = vmatmul.mubr.bf16.gmra.mrb[0].mxu0 %v3311
        %v3467 = vpop.f32.mrb[0].mxu0
        %v3468 = vadd.f32 0.0, %v3467
        %v3469 = vpop.f32.mrb[0].mxu0
        %v3470 = vadd.f32 0.0, %v3469
        %v3471 = vpop.f32.mrb[0].mxu0
        %v3472 = vadd.f32 0.0, %v3471
        %v3473 = vpop.f32.mrb[0].mxu0
        %v3474 = vadd.f32 0.0, %v3473
        %3475 = vmatprep.mubr.bf16.mxu0 0
        %3476 = vmatmul.mubr.bf16.gmra.mrb[0].mxu0 %v3312
        %v3477 = vpop.f32.mrb[0].mxu0
        %v3478 = vadd.f32 0.0, %v3477
        %v3479 = vpop.f32.mrb[0].mxu0
        %v3480 = vadd.f32 0.0, %v3479
        %v3481 = vpop.f32.mrb[0].mxu0
        %v3482 = vadd.f32 0.0, %v3481
        %v3483 = vpop.f32.mrb[0].mxu0
        %v3484 = vadd.f32 0.0, %v3483
        %3485 = vmatprep.mubr.bf16.mxu0 0
        %3486 = vmatmul.mubr.bf16.gmra.mrb[0].mxu0 %v3313
        %v3487 = vpop.f32.mrb[0].mxu0
        %v3488 = vadd.f32 0.0, %v3487
        %v3489 = vpop.f32.mrb[0].mxu0
        %v3490 = vadd.f32 0.0, %v3489
        %v3491 = vpop.f32.mrb[0].mxu0
        %v3492 = vadd.f32 0.0, %v3491
        %v3493 = vpop.f32.mrb[0].mxu0
        %v3494 = vadd.f32 0.0, %v3493
        %3495 = vmatprep.mubr.bf16.mxu0 0
        %3496 = vmatmul.mubr.bf16.gmra.mrb[0].mxu0 %v3314
        %v3497 = vpop.f32.mrb[0].mxu0
        %v3498 = vadd.f32 0.0, %v3497
        %v3499 = vpop.f32.mrb[0].mxu0
        %v3500 = vadd.f32 0.0, %v3499
        %v3501 = vpop.f32.mrb[0].mxu0
        %v3502 = vadd.f32 0.0, %v3501
        %v3503 = vpop.f32.mrb[0].mxu0
        %v3504 = vadd.f32 0.0, %v3503
        %3505 = vmatprep.mubr.bf16.mxu0 0
        %3506 = vmatmul.mubr.bf16.gmra.mrb[0].mxu0 %v3315
        %v3507 = vpop.f32.mrb[0].mxu0
        %v3508 = vadd.f32 0.0, %v3507
        %v3509 = vpop.f32.mrb[0].mxu0
        %v3510 = vadd.f32 0.0, %v3509
        %v3511 = vpop.f32.mrb[0].mxu0
        %v3512 = vadd.f32 0.0, %v3511
        %v3513 = vpop.f32.mrb[0].mxu0
        %v3514 = vadd.f32 0.0, %v3513
        %3515 = vmatprep.mubr.bf16.mxu0 0
        %3516 = vmatmul.mubr.bf16.gmra.mrb[0].mxu0 %v3316
        %v3517 = vpop.f32.mrb[0].mxu0
        %v3518 = vadd.f32 0.0, %v3517
        %v3519 = vpop.f32.mrb[0].mxu0
        %v3520 = vadd.f32 0.0, %v3519
        %v3521 = vpop.f32.mrb[0].mxu0
        %v3522 = vadd.f32 0.0, %v3521
        %v3523 = vpop.f32.mrb[0].mxu0
        %v3524 = vadd.f32 0.0, %v3523
        %3525 = vmatprep.mubr.bf16.mxu0 0
        %3526 = vmatmul.mubr.bf16.gmra.mrb[0].mxu0 %v3317
        %v3527 = vpop.f32.mrb[0].mxu0
        %v3528 = vadd.f32 0.0, %v3527
        %v3529 = vpop.f32.mrb[0].mxu0
        %v3530 = vadd.f32 0.0, %v3529
        %v3531 = vpop.f32.mrb[0].mxu0
        %v3532 = vadd.f32 0.0, %v3531
        %v3533 = vpop.f32.mrb[0].mxu0
        %v3534 = vadd.f32 0.0, %v3533
        %3535 = vmatprep.mubr.bf16.mxu0 0
        %3536 = vmatmul.mubr.bf16.gmra.mrb[0].mxu0 %v3318
        %v3537 = vpop.f32.mrb[0].mxu0
        %v3538 = vadd.f32 0.0, %v3537
        %v3539 = vpop.f32.mrb[0].mxu0
        %v3540 = vadd.f32 0.0, %v3539
        %v3541 = vpop.f32.mrb[0].mxu0
        %v3542 = vadd.f32 0.0, %v3541
        %v3543 = vpop.f32.mrb[0].mxu0
        %v3544 = vadd.f32 0.0, %v3543
        %3545 = vmatprep.mubr.bf16.mxu0 0
        %3546 = vmatmul.mubr.bf16.gmra.mrb[0].mxu0 %v3319
        %v3547 = vpop.f32.mrb[0].mxu0
        %v3548 = vadd.f32 0.0, %v3547
        %v3549 = vpop.f32.mrb[0].mxu0
        %v3550 = vadd.f32 0.0, %v3549
        %v3551 = vpop.f32.mrb[0].mxu0
        %v3552 = vadd.f32 0.0, %v3551
        %v3553 = vpop.f32.mrb[0].mxu0
        %v3554 = vadd.f32 0.0, %v3553
        %3555 = vmatprep.mubr.bf16.mxu0 0
        %3556 = vmatmul.mubr.bf16.gmra.mrb[0].mxu0 %v3320
        %v3557 = vpop.f32.mrb[0].mxu0
        %v3558 = vadd.f32 0.0, %v3557
        %v3559 = vpop.f32.mrb[0].mxu0
        %v3560 = vadd.f32 0.0, %v3559
        %v3561 = vpop.f32.mrb[0].mxu0
        %v3562 = vadd.f32 0.0, %v3561
        %v3563 = vpop.f32.mrb[0].mxu0
        %v3564 = vadd.f32 0.0, %v3563
        %3565 = vmatprep.mubr.bf16.mxu0 0
        %3566 = vmatmul.mubr.bf16.gmra.mrb[0].mxu0 %v3321
        %v3567 = vpop.f32.mrb[0].mxu0
        %v3568 = vadd.f32 0.0, %v3567
        %v3569 = vpop.f32.mrb[0].mxu0
        %v3570 = vadd.f32 0.0, %v3569
        %v3571 = vpop.f32.mrb[0].mxu0
        %v3572 = vadd.f32 0.0, %v3571
        %v3573 = vpop.f32.mrb[0].mxu0
        %v3574 = vadd.f32 0.0, %v3573
        %3575 = vmatprep.mubr.bf16.mxu0 0
        %3576 = vmatmul.mubr.bf16.gmra.mrb[0].mxu0 %v3322
        %v3577 = vpop.f32.mrb[0].mxu0
        %v3578 = vadd.f32 0.0, %v3577
        %v3579 = vpop.f32.mrb[0].mxu0
        %v3580 = vadd.f32 0.0, %v3579
        %v3581 = vpop.f32.mrb[0].mxu0
        %v3582 = vadd.f32 0.0, %v3581
        %v3583 = vpop.f32.mrb[0].mxu0
        %v3584 = vadd.f32 0.0, %v3583
        %3585 = vmatprep.mubr.bf16.mxu0 0
        %3586 = vmatmul.mubr.bf16.gmra.mrb[0].mxu0 %v3323
        %v3587 = vpop.f32.mrb[0].mxu0
        %v3588 = vadd.f32 0.0, %v3587
        %v3589 = vpop.f32.mrb[0].mxu0
        %v3590 = vadd.f32 0.0, %v3589
        %v3591 = vpop.f32.mrb[0].mxu0
        %v3592 = vadd.f32 0.0, %v3591
        %v3593 = vpop.f32.mrb[0].mxu0
        %v3594 = vadd.f32 0.0, %v3593
        %3595 = vmatprep.mubr.bf16.mxu0 0
        %3596 = vmatmul.mubr.bf16.gmra.mrb[0].mxu0 %v3324
        %v3597 = vpop.f32.mrb[0].mxu0
        %v3598 = vadd.f32 0.0, %v3597
        %v3599 = vpop.f32.mrb[0].mxu0
        %v3600 = vadd.f32 0.0, %v3599
        %v3601 = vpop.f32.mrb[0].mxu0
        %v3602 = vadd.f32 0.0, %v3601
        %v3603 = vpop.f32.mrb[0].mxu0
        %v3604 = vadd.f32 0.0, %v3603
        %3605 = vmatprep.mubr.bf16.mxu0 0
        %3606 = vmatmul.mubr.bf16.gmra.mrb[0].mxu0 %v3325
        %v3607 = vpop.f32.mrb[0].mxu0
        %v3608 = vadd.f32 0.0, %v3607
        %v3609 = vpop.f32.mrb[0].mxu0
        %v3610 = vadd.f32 0.0, %v3609
        %v3611 = vpop.f32.mrb[0].mxu0
        %v3612 = vadd.f32 0.0, %v3611
        %v3613 = vpop.f32.mrb[0].mxu0
        %v3614 = vadd.f32 0.0, %v3613
        %3615 = vdwg.mxu0
        %v3632 = vunpack.c.l.b16 %v3262
        %v3633 = vunpack.c.h.b16 %v3262
        %v3634 = vunpack.c.l.b16 %v3263
        %v3635 = vunpack.c.h.b16 %v3263
        %v3636 = vunpack.c.l.b16 %v3264
        %v3637 = vunpack.c.h.b16 %v3264
        %v3638 = vunpack.c.l.b16 %v3265
        %v3639 = vunpack.c.h.b16 %v3265
        %v3640 = vunpack.c.l.b16 %v3266
        %v3641 = vunpack.c.h.b16 %v3266
        %v3642 = vunpack.c.l.b16 %v3267
        %v3643 = vunpack.c.h.b16 %v3267
        %v3644 = vunpack.c.l.b16 %v3268
        %v3645 = vunpack.c.h.b16 %v3268
        %v3646 = vunpack.c.l.b16 %v3269
        %v3647 = vunpack.c.h.b16 %v3269
        %v3648 = vunpack.c.l.b16 %v3270
        %v3649 = vunpack.c.h.b16 %v3270
        %v3650 = vunpack.c.l.b16 %v3271
        %v3651 = vunpack.c.h.b16 %v3271
        %v3652 = vunpack.c.l.b16 %v3272
        %v3653 = vunpack.c.h.b16 %v3272
        %v3654 = vunpack.c.l.b16 %v3273
        %v3655 = vunpack.c.h.b16 %v3273
        %v3656 = vunpack.c.l.b16 %v3274
        %v3657 = vunpack.c.h.b16 %v3274
        %v3658 = vunpack.c.l.b16 %v3275
        %v3659 = vunpack.c.h.b16 %v3275
        %v3660 = vunpack.c.l.b16 %v3276
        %v3661 = vunpack.c.h.b16 %v3276
        %v3662 = vunpack.c.l.b16 %v3277
        %v3663 = vunpack.c.h.b16 %v3277
        %v3664 = vpack.c.b16 %v3634, %v3632
        %v3665 = vpack.c.b16 %v3635, %v3633
        %v3666 = vpack.c.b16 %v3638, %v3636
        %v3667 = vpack.c.b16 %v3639, %v3637
        %v3668 = vpack.c.b16 %v3642, %v3640
        %v3669 = vpack.c.b16 %v3643, %v3641
        %v3670 = vpack.c.b16 %v3646, %v3644
        %v3671 = vpack.c.b16 %v3647, %v3645
        %v3672 = vpack.c.b16 %v3650, %v3648
        %v3673 = vpack.c.b16 %v3651, %v3649
        %v3674 = vpack.c.b16 %v3654, %v3652
        %v3675 = vpack.c.b16 %v3655, %v3653
        %v3676 = vpack.c.b16 %v3658, %v3656
        %v3677 = vpack.c.b16 %v3659, %v3657
        %v3678 = vpack.c.b16 %v3662, %v3660
        %v3679 = vpack.c.b16 %v3663, %v3661
        %3696 = vmatprep.subr.bf16.mxu0 %v3665
        %3697 = vmatpush1.bf16.msra.mxu0 %v3664
        %3698 = vmatprep.subr.bf16.mxu0 %v3667
        %3699 = vmatpush1.bf16.msra.mxu0 %v3666
        %3700 = vmatprep.subr.bf16.mxu0 %v3669
        %3701 = vmatpush1.bf16.msra.mxu0 %v3668
        %3702 = vmatprep.subr.bf16.mxu0 %v3671
        %3703 = vmatpush1.bf16.msra.mxu0 %v3670
        %3704 = vmatprep.subr.bf16.mxu0 %v3673
        %3705 = vmatpush1.bf16.msra.mxu0 %v3672
        %3706 = vmatprep.subr.bf16.mxu0 %v3675
        %3707 = vmatpush1.bf16.msra.mxu0 %v3674
        %3708 = vmatprep.subr.bf16.mxu0 %v3677
        %3709 = vmatpush1.bf16.msra.mxu0 %v3676
        %3710 = vmatprep.subr.bf16.mxu0 %v3679
        %3711 = vmatpush1.bf16.msra.mxu0 %v3678
        %3712 = vmatprep.subr.bf16.mxu0 0
        %3713 = vmatpush1.bf16.msra.mxu0 0
        %3714 = vmatprep.subr.bf16.mxu0 0
        %3715 = vmatpush1.bf16.msra.mxu0 0
        %3716 = vmatprep.subr.bf16.mxu0 0
        %3717 = vmatpush1.bf16.msra.mxu0 0
        %3718 = vmatprep.subr.bf16.mxu0 0
        %3719 = vmatpush1.bf16.msra.mxu0 0
        %3720 = vmatprep.subr.bf16.mxu0 0
        %3721 = vmatpush1.bf16.msra.mxu0 0
        %3722 = vmatprep.subr.bf16.mxu0 0
        %3723 = vmatpush1.bf16.msra.mxu0 0
        %3724 = vmatprep.subr.bf16.mxu0 0
        %3725 = vmatpush1.bf16.msra.mxu0 0
        %3726 = vmatprep.subr.bf16.mxu0 0
        %3727 = vmatpush1.bf16.msra.mxu0 0
        %3728 = vmatprep.mubr.bf16.mxu0 0
        %3729 = vmatmul.mubr.bf16.gmra.mrb[0].mxu0 %v3246
        %v3730 = vpop.f32.mrb[0].mxu0
        %v3731 = vadd.f32 %v3458, %v3730
        %v3732 = vpop.f32.mrb[0].mxu0
        %v3733 = vadd.f32 %v3460, %v3732
        %v3734 = vpop.f32.mrb[0].mxu0
        %v3735 = vadd.f32 %v3462, %v3734
        %v3736 = vpop.f32.mrb[0].mxu0
        %v3737 = vadd.f32 %v3464, %v3736
        %3738 = vmatprep.mubr.bf16.mxu0 0
        %3739 = vmatmul.mubr.bf16.gmra.mrb[0].mxu0 %v3247
        %v3740 = vpop.f32.mrb[0].mxu0
        %v3741 = vadd.f32 %v3468, %v3740
        %v3742 = vpop.f32.mrb[0].mxu0
        %v3743 = vadd.f32 %v3470, %v3742
        %v3744 = vpop.f32.mrb[0].mxu0
        %v3745 = vadd.f32 %v3472, %v3744
        %v3746 = vpop.f32.mrb[0].mxu0
        %v3747 = vadd.f32 %v3474, %v3746
        %3748 = vmatprep.mubr.bf16.mxu0 0
        %3749 = vmatmul.mubr.bf16.gmra.mrb[0].mxu0 %v3248
        %v3750 = vpop.f32.mrb[0].mxu0
        %v3751 = vadd.f32 %v3478, %v3750
        %v3752 = vpop.f32.mrb[0].mxu0
        %v3753 = vadd.f32 %v3480, %v3752
        %v3754 = vpop.f32.mrb[0].mxu0
        %v3755 = vadd.f32 %v3482, %v3754
        %v3756 = vpop.f32.mrb[0].mxu0
        %v3757 = vadd.f32 %v3484, %v3756
        %3758 = vmatprep.mubr.bf16.mxu0 0
        %3759 = vmatmul.mubr.bf16.gmra.mrb[0].mxu0 %v3249
        %v3760 = vpop.f32.mrb[0].mxu0
        %v3761 = vadd.f32 %v3488, %v3760
        %v3762 = vpop.f32.mrb[0].mxu0
        %v3763 = vadd.f32 %v3490, %v3762
        %v3764 = vpop.f32.mrb[0].mxu0
        %v3765 = vadd.f32 %v3492, %v3764
        %v3766 = vpop.f32.mrb[0].mxu0
        %v3767 = vadd.f32 %v3494, %v3766
        %3768 = vmatprep.mubr.bf16.mxu0 0
        %3769 = vmatmul.mubr.bf16.gmra.mrb[0].mxu0 %v3250
        %v3770 = vpop.f32.mrb[0].mxu0
        %v3771 = vadd.f32 %v3498, %v3770
        %v3772 = vpop.f32.mrb[0].mxu0
        %v3773 = vadd.f32 %v3500, %v3772
        %v3774 = vpop.f32.mrb[0].mxu0
        %v3775 = vadd.f32 %v3502, %v3774
        %v3776 = vpop.f32.mrb[0].mxu0
        %v3777 = vadd.f32 %v3504, %v3776
        %3778 = vmatprep.mubr.bf16.mxu0 0
        %3779 = vmatmul.mubr.bf16.gmra.mrb[0].mxu0 %v3251
        %v3780 = vpop.f32.mrb[0].mxu0
        %v3781 = vadd.f32 %v3508, %v3780
        %v3782 = vpop.f32.mrb[0].mxu0
        %v3783 = vadd.f32 %v3510, %v3782
        %v3784 = vpop.f32.mrb[0].mxu0
        %v3785 = vadd.f32 %v3512, %v3784
        %v3786 = vpop.f32.mrb[0].mxu0
        %v3787 = vadd.f32 %v3514, %v3786
        %3788 = vmatprep.mubr.bf16.mxu0 0
        %3789 = vmatmul.mubr.bf16.gmra.mrb[0].mxu0 %v3252
        %v3790 = vpop.f32.mrb[0].mxu0
        %v3791 = vadd.f32 %v3518, %v3790
        %v3792 = vpop.f32.mrb[0].mxu0
        %v3793 = vadd.f32 %v3520, %v3792
        %v3794 = vpop.f32.mrb[0].mxu0
        %v3795 = vadd.f32 %v3522, %v3794
        %v3796 = vpop.f32.mrb[0].mxu0
        %v3797 = vadd.f32 %v3524, %v3796
        %3798 = vmatprep.mubr.bf16.mxu0 0
        %3799 = vmatmul.mubr.bf16.gmra.mrb[0].mxu0 %v3253
        %v3800 = vpop.f32.mrb[0].mxu0
        %v3801 = vadd.f32 %v3528, %v3800
        %v3802 = vpop.f32.mrb[0].mxu0
        %v3803 = vadd.f32 %v3530, %v3802
        %v3804 = vpop.f32.mrb[0].mxu0
        %v3805 = vadd.f32 %v3532, %v3804
        %v3806 = vpop.f32.mrb[0].mxu0
        %v3807 = vadd.f32 %v3534, %v3806
        %3808 = vmatprep.mubr.bf16.mxu0 0
        %3809 = vmatmul.mubr.bf16.gmra.mrb[0].mxu0 %v3254
        %v3810 = vpop.f32.mrb[0].mxu0
        %v3811 = vadd.f32 %v3538, %v3810
        %v3812 = vpop.f32.mrb[0].mxu0
        %v3813 = vadd.f32 %v3540, %v3812
        %v3814 = vpop.f32.mrb[0].mxu0
        %v3815 = vadd.f32 %v3542, %v3814
        %v3816 = vpop.f32.mrb[0].mxu0
        %v3817 = vadd.f32 %v3544, %v3816
        %3818 = vmatprep.mubr.bf16.mxu0 0
        %3819 = vmatmul.mubr.bf16.gmra.mrb[0].mxu0 %v3255
        %v3820 = vpop.f32.mrb[0].mxu0
        %v3821 = vadd.f32 %v3548, %v3820
        %v3822 = vpop.f32.mrb[0].mxu0
        %v3823 = vadd.f32 %v3550, %v3822
        %v3824 = vpop.f32.mrb[0].mxu0
        %v3825 = vadd.f32 %v3552, %v3824
        %v3826 = vpop.f32.mrb[0].mxu0
        %v3827 = vadd.f32 %v3554, %v3826
        %3828 = vmatprep.mubr.bf16.mxu0 0
        %3829 = vmatmul.mubr.bf16.gmra.mrb[0].mxu0 %v3256
        %v3830 = vpop.f32.mrb[0].mxu0
        %v3831 = vadd.f32 %v3558, %v3830
        %v3832 = vpop.f32.mrb[0].mxu0
        %v3833 = vadd.f32 %v3560, %v3832
        %v3834 = vpop.f32.mrb[0].mxu0
        %v3835 = vadd.f32 %v3562, %v3834
        %v3836 = vpop.f32.mrb[0].mxu0
        %v3837 = vadd.f32 %v3564, %v3836
        %3838 = vmatprep.mubr.bf16.mxu0 0
        %3839 = vmatmul.mubr.bf16.gmra.mrb[0].mxu0 %v3257
        %v3840 = vpop.f32.mrb[0].mxu0
        %v3841 = vadd.f32 %v3568, %v3840
        %v3842 = vpop.f32.mrb[0].mxu0
        %v3843 = vadd.f32 %v3570, %v3842
        %v3844 = vpop.f32.mrb[0].mxu0
        %v3845 = vadd.f32 %v3572, %v3844
        %v3846 = vpop.f32.mrb[0].mxu0
        %v3847 = vadd.f32 %v3574, %v3846
        %3848 = vmatprep.mubr.bf16.mxu0 0
        %3849 = vmatmul.mubr.bf16.gmra.mrb[0].mxu0 %v3258
        %v3850 = vpop.f32.mrb[0].mxu0
        %v3851 = vadd.f32 %v3578, %v3850
        %v3852 = vpop.f32.mrb[0].mxu0
        %v3853 = vadd.f32 %v3580, %v3852
        %v3854 = vpop.f32.mrb[0].mxu0
        %v3855 = vadd.f32 %v3582, %v3854
        %v3856 = vpop.f32.mrb[0].mxu0
        %v3857 = vadd.f32 %v3584, %v3856
        %3858 = vmatprep.mubr.bf16.mxu0 0
        %3859 = vmatmul.mubr.bf16.gmra.mrb[0].mxu0 %v3259
        %v3860 = vpop.f32.mrb[0].mxu0
        %v3861 = vadd.f32 %v3588, %v3860
        %v3862 = vpop.f32.mrb[0].mxu0
        %v3863 = vadd.f32 %v3590, %v3862
        %v3864 = vpop.f32.mrb[0].mxu0
        %v3865 = vadd.f32 %v3592, %v3864
        %v3866 = vpop.f32.mrb[0].mxu0
        %v3867 = vadd.f32 %v3594, %v3866
        %3868 = vmatprep.mubr.bf16.mxu0 0
        %3869 = vmatmul.mubr.bf16.gmra.mrb[0].mxu0 %v3260
        %v3870 = vpop.f32.mrb[0].mxu0
        %v3871 = vadd.f32 %v3598, %v3870
        %v3872 = vpop.f32.mrb[0].mxu0
        %v3873 = vadd.f32 %v3600, %v3872
        %v3874 = vpop.f32.mrb[0].mxu0
        %v3875 = vadd.f32 %v3602, %v3874
        %v3876 = vpop.f32.mrb[0].mxu0
        %v3877 = vadd.f32 %v3604, %v3876
        %3878 = vmatprep.mubr.bf16.mxu0 0
        %3879 = vmatmul.mubr.bf16.gmra.mrb[0].mxu0 %v3261
        %v3880 = vpop.f32.mrb[0].mxu0
        %v3881 = vadd.f32 %v3608, %v3880
        %v3882 = vpop.f32.mrb[0].mxu0
        %v3883 = vadd.f32 %v3610, %v3882
        %v3884 = vpop.f32.mrb[0].mxu0
        %v3885 = vadd.f32 %v3612, %v3884
        %v3886 = vpop.f32.mrb[0].mxu0
        %v3887 = vadd.f32 %v3614, %v3886
        %3888 = vdwg.mxu0
        %v3889 = vld [vmem:[#allocation3 + $0x2] sm:$0xff]
        %v3890 = vld [vmem:[#allocation3 + $0xa] sm:$0xff]
        %v3891 = vld [vmem:[#allocation3 + $0x1a] sm:$0xff]
        %v3892 = vld [vmem:[#allocation3 + $0x22] sm:$0xff]
        %v3893 = vld [vmem:[#allocation3 + $0x32] sm:$0xff]
        %v3894 = vld [vmem:[#allocation3 + $0x3a] sm:$0xff]
        %v3895 = vld [vmem:[#allocation3 + $0x4a] sm:$0xff]
        %v3896 = vld [vmem:[#allocation3 + $0x52] sm:$0xff]
        %v3897 = vld [vmem:[#allocation3 + $0x62] sm:$0xff]
        %v3898 = vld [vmem:[#allocation3 + $0x6a] sm:$0xff]
        %v3899 = vld [vmem:[#allocation3 + $0x7a] sm:$0xff]
        %v3900 = vld [vmem:[#allocation3 + $0x82] sm:$0xff]
        %v3901 = vld [vmem:[#allocation3 + $0x92] sm:$0xff]
        %v3902 = vld [vmem:[#allocation3 + $0x9a] sm:$0xff]
        %v3903 = vld [vmem:[#allocation3 + $0xaa] sm:$0xff]
        %v3904 = vld [vmem:[#allocation3 + $0xb2] sm:$0xff]
        %v3905 = vld [vmem:[#allocation3 + $0xc2] sm:$0xff]
        %v3906 = vld [vmem:[#allocation3 + $0xca] sm:$0xff]
        %v3907 = vld [vmem:[#allocation3 + $0xda] sm:$0xff]
        %v3908 = vld [vmem:[#allocation3 + $0xe2] sm:$0xff]
        %v3909 = vld [vmem:[#allocation3 + $0xf2] sm:$0xff]
        %v3910 = vld [vmem:[#allocation3 + $0xfa] sm:$0xff]
        %v3911 = vld [vmem:[#allocation3 + $0x10a] sm:$0xff]
        %v3912 = vld [vmem:[#allocation3 + $0x112] sm:$0xff]
        %v3913 = vld [vmem:[#allocation3 + $0x122] sm:$0xff]
        %v3914 = vld [vmem:[#allocation3 + $0x12a] sm:$0xff]
        %v3915 = vld [vmem:[#allocation3 + $0x13a] sm:$0xff]
        %v3916 = vld [vmem:[#allocation3 + $0x142] sm:$0xff]
        %v3917 = vld [vmem:[#allocation3 + $0x152] sm:$0xff]
        %v3918 = vld [vmem:[#allocation3 + $0x15a] sm:$0xff]
        %v3919 = vld [vmem:[#allocation3 + $0x16a] sm:$0xff]
        %v3920 = vld [vmem:[#allocation3 + $0x172] sm:$0xff]
        %v3921 = vpack.c.bf16 %v3890, %v3889
        %v3922 = vpack.c.bf16 %v3892, %v3891
        %v3923 = vpack.c.bf16 %v3894, %v3893
        %v3924 = vpack.c.bf16 %v3896, %v3895
        %v3925 = vpack.c.bf16 %v3898, %v3897
        %v3926 = vpack.c.bf16 %v3900, %v3899
        %v3927 = vpack.c.bf16 %v3902, %v3901
        %v3928 = vpack.c.bf16 %v3904, %v3903
        %v3929 = vpack.c.bf16 %v3906, %v3905
        %v3930 = vpack.c.bf16 %v3908, %v3907
        %v3931 = vpack.c.bf16 %v3910, %v3909
        %v3932 = vpack.c.bf16 %v3912, %v3911
        %v3933 = vpack.c.bf16 %v3914, %v3913
        %v3934 = vpack.c.bf16 %v3916, %v3915
        %v3935 = vpack.c.bf16 %v3918, %v3917
        %v3936 = vpack.c.bf16 %v3920, %v3919
        %s3937 = scalar_lea.vmem [#allocation4], 256
        %v3938 = vld [vmem:[%s3937] sm:$0xff]
        %v3939 = vld [vmem:[%s3937 + $0x8] sm:$0xff]
        %v3940 = vld [vmem:[%s3937 + $0x10] sm:$0xff]
        %v3941 = vld [vmem:[%s3937 + $0x18] sm:$0xff]
        %v3942 = vld [vmem:[%s3937 + $0x20] sm:$0xff]
        %v3943 = vld [vmem:[%s3937 + $0x28] sm:$0xff]
        %v3944 = vld [vmem:[%s3937 + $0x30] sm:$0xff]
        %v3945 = vld [vmem:[%s3937 + $0x38] sm:$0xff]
        %v3946 = vld [vmem:[%s3937 + $0x40] sm:$0xff]
        %v3947 = vld [vmem:[%s3937 + $0x48] sm:$0xff]
        %v3948 = vld [vmem:[%s3937 + $0x50] sm:$0xff]
        %v3949 = vld [vmem:[%s3937 + $0x58] sm:$0xff]
        %v3950 = vld [vmem:[%s3937 + $0x60] sm:$0xff]
        %v3951 = vld [vmem:[%s3937 + $0x68] sm:$0xff]
        %v3952 = vld [vmem:[%s3937 + $0x70] sm:$0xff]
        %v3953 = vld [vmem:[%s3937 + $0x78] sm:$0xff]
        %v3970 = vunpack.c.l.b16 %v3938
        %v3971 = vunpack.c.h.b16 %v3938
        %v3972 = vunpack.c.l.b16 %v3939
        %v3973 = vunpack.c.h.b16 %v3939
        %v3974 = vunpack.c.l.b16 %v3940
        %v3975 = vunpack.c.h.b16 %v3940
        %v3976 = vunpack.c.l.b16 %v3941
        %v3977 = vunpack.c.h.b16 %v3941
        %v3978 = vunpack.c.l.b16 %v3942
        %v3979 = vunpack.c.h.b16 %v3942
        %v3980 = vunpack.c.l.b16 %v3943
        %v3981 = vunpack.c.h.b16 %v3943
        %v3982 = vunpack.c.l.b16 %v3944
        %v3983 = vunpack.c.h.b16 %v3944
        %v3984 = vunpack.c.l.b16 %v3945
        %v3985 = vunpack.c.h.b16 %v3945
        %v3986 = vunpack.c.l.b16 %v3946
        %v3987 = vunpack.c.h.b16 %v3946
        %v3988 = vunpack.c.l.b16 %v3947
        %v3989 = vunpack.c.h.b16 %v3947
        %v3990 = vunpack.c.l.b16 %v3948
        %v3991 = vunpack.c.h.b16 %v3948
        %v3992 = vunpack.c.l.b16 %v3949
        %v3993 = vunpack.c.h.b16 %v3949
        %v3994 = vunpack.c.l.b16 %v3950
        %v3995 = vunpack.c.h.b16 %v3950
        %v3996 = vunpack.c.l.b16 %v3951
        %v3997 = vunpack.c.h.b16 %v3951
        %v3998 = vunpack.c.l.b16 %v3952
        %v3999 = vunpack.c.h.b16 %v3952
        %v4000 = vunpack.c.l.b16 %v3953
        %v4001 = vunpack.c.h.b16 %v3953
        %v4002 = vpack.c.b16 %v3972, %v3970
        %v4003 = vpack.c.b16 %v3973, %v3971
        %v4004 = vpack.c.b16 %v3976, %v3974
        %v4005 = vpack.c.b16 %v3977, %v3975
        %v4006 = vpack.c.b16 %v3980, %v3978
        %v4007 = vpack.c.b16 %v3981, %v3979
        %v4008 = vpack.c.b16 %v3984, %v3982
        %v4009 = vpack.c.b16 %v3985, %v3983
        %v4010 = vpack.c.b16 %v3988, %v3986
        %v4011 = vpack.c.b16 %v3989, %v3987
        %v4012 = vpack.c.b16 %v3992, %v3990
        %v4013 = vpack.c.b16 %v3993, %v3991
        %v4014 = vpack.c.b16 %v3996, %v3994
        %v4015 = vpack.c.b16 %v3997, %v3995
        %v4016 = vpack.c.b16 %v4000, %v3998
        %v4017 = vpack.c.b16 %v4001, %v3999
        %4034 = vmatprep.subr.bf16.mxu0 %v4003
        %4035 = vmatpush1.bf16.msra.mxu0 %v4002
        %4036 = vmatprep.subr.bf16.mxu0 %v4005
        %4037 = vmatpush1.bf16.msra.mxu0 %v4004
        %4038 = vmatprep.subr.bf16.mxu0 %v4007
        %4039 = vmatpush1.bf16.msra.mxu0 %v4006
        %4040 = vmatprep.subr.bf16.mxu0 %v4009
        %4041 = vmatpush1.bf16.msra.mxu0 %v4008
        %4042 = vmatprep.subr.bf16.mxu0 %v4011
        %4043 = vmatpush1.bf16.msra.mxu0 %v4010
        %4044 = vmatprep.subr.bf16.mxu0 %v4013
        %4045 = vmatpush1.bf16.msra.mxu0 %v4012
        %4046 = vmatprep.subr.bf16.mxu0 %v4015
        %4047 = vmatpush1.bf16.msra.mxu0 %v4014
        %4048 = vmatprep.subr.bf16.mxu0 %v4017
        %4049 = vmatpush1.bf16.msra.mxu0 %v4016
        %4050 = vmatprep.subr.bf16.mxu0 0
        %4051 = vmatpush1.bf16.msra.mxu0 0
        %4052 = vmatprep.subr.bf16.mxu0 0
        %4053 = vmatpush1.bf16.msra.mxu0 0
        %4054 = vmatprep.subr.bf16.mxu0 0
        %4055 = vmatpush1.bf16.msra.mxu0 0
        %4056 = vmatprep.subr.bf16.mxu0 0
        %4057 = vmatpush1.bf16.msra.mxu0 0
        %4058 = vmatprep.subr.bf16.mxu0 0
        %4059 = vmatpush1.bf16.msra.mxu0 0
        %4060 = vmatprep.subr.bf16.mxu0 0
        %4061 = vmatpush1.bf16.msra.mxu0 0
        %4062 = vmatprep.subr.bf16.mxu0 0
        %4063 = vmatpush1.bf16.msra.mxu0 0
        %4064 = vmatprep.subr.bf16.mxu0 0
        %4065 = vmatpush1.bf16.msra.mxu0 0
        %4066 = vmatprep.mubr.bf16.mxu0 0
        %4067 = vmatmul.mubr.bf16.gmra.mrb[0].mxu0 %v3921
        %v4068 = vpop.f32.mrb[0].mxu0
        %v4069 = vadd.f32 0.0, %v4068
        %v4070 = vpop.f32.mrb[0].mxu0
        %v4071 = vadd.f32 0.0, %v4070
        %v4072 = vpop.f32.mrb[0].mxu0
        %v4073 = vadd.f32 0.0, %v4072
        %v4074 = vpop.f32.mrb[0].mxu0
        %v4075 = vadd.f32 0.0, %v4074
        %4076 = vmatprep.mubr.bf16.mxu0 0
        %4077 = vmatmul.mubr.bf16.gmra.mrb[0].mxu0 %v3922
        %v4078 = vpop.f32.mrb[0].mxu0
        %v4079 = vadd.f32 0.0, %v4078
        %v4080 = vpop.f32.mrb[0].mxu0
        %v4081 = vadd.f32 0.0, %v4080
        %v4082 = vpop.f32.mrb[0].mxu0
        %v4083 = vadd.f32 0.0, %v4082
        %v4084 = vpop.f32.mrb[0].mxu0
        %v4085 = vadd.f32 0.0, %v4084
        %4086 = vmatprep.mubr.bf16.mxu0 0
        %4087 = vmatmul.mubr.bf16.gmra.mrb[0].mxu0 %v3923
        %v4088 = vpop.f32.mrb[0].mxu0
        %v4089 = vadd.f32 0.0, %v4088
        %v4090 = vpop.f32.mrb[0].mxu0
        %v4091 = vadd.f32 0.0, %v4090
        %v4092 = vpop.f32.mrb[0].mxu0
        %v4093 = vadd.f32 0.0, %v4092
        %v4094 = vpop.f32.mrb[0].mxu0
        %v4095 = vadd.f32 0.0, %v4094
        %4096 = vmatprep.mubr.bf16.mxu0 0
        %4097 = vmatmul.mubr.bf16.gmra.mrb[0].mxu0 %v3924
        %v4098 = vpop.f32.mrb[0].mxu0
        %v4099 = vadd.f32 0.0, %v4098
        %v4100 = vpop.f32.mrb[0].mxu0
        %v4101 = vadd.f32 0.0, %v4100
        %v4102 = vpop.f32.mrb[0].mxu0
        %v4103 = vadd.f32 0.0, %v4102
        %v4104 = vpop.f32.mrb[0].mxu0
        %v4105 = vadd.f32 0.0, %v4104
        %4106 = vmatprep.mubr.bf16.mxu0 0
        %4107 = vmatmul.mubr.bf16.gmra.mrb[0].mxu0 %v3925
        %v4108 = vpop.f32.mrb[0].mxu0
        %v4109 = vadd.f32 0.0, %v4108
        %v4110 = vpop.f32.mrb[0].mxu0
        %v4111 = vadd.f32 0.0, %v4110
        %v4112 = vpop.f32.mrb[0].mxu0
        %v4113 = vadd.f32 0.0, %v4112
        %v4114 = vpop.f32.mrb[0].mxu0
        %v4115 = vadd.f32 0.0, %v4114
        %4116 = vmatprep.mubr.bf16.mxu0 0
        %4117 = vmatmul.mubr.bf16.gmra.mrb[0].mxu0 %v3926
        %v4118 = vpop.f32.mrb[0].mxu0
        %v4119 = vadd.f32 0.0, %v4118
        %v4120 = vpop.f32.mrb[0].mxu0
        %v4121 = vadd.f32 0.0, %v4120
        %v4122 = vpop.f32.mrb[0].mxu0
        %v4123 = vadd.f32 0.0, %v4122
        %v4124 = vpop.f32.mrb[0].mxu0
        %v4125 = vadd.f32 0.0, %v4124
        %4126 = vmatprep.mubr.bf16.mxu0 0
        %4127 = vmatmul.mubr.bf16.gmra.mrb[0].mxu0 %v3927
        %v4128 = vpop.f32.mrb[0].mxu0
        %v4129 = vadd.f32 0.0, %v4128
        %v4130 = vpop.f32.mrb[0].mxu0
        %v4131 = vadd.f32 0.0, %v4130
        %v4132 = vpop.f32.mrb[0].mxu0
        %v4133 = vadd.f32 0.0, %v4132
        %v4134 = vpop.f32.mrb[0].mxu0
        %v4135 = vadd.f32 0.0, %v4134
        %4136 = vmatprep.mubr.bf16.mxu0 0
        %4137 = vmatmul.mubr.bf16.gmra.mrb[0].mxu0 %v3928
        %v4138 = vpop.f32.mrb[0].mxu0
        %v4139 = vadd.f32 0.0, %v4138
        %v4140 = vpop.f32.mrb[0].mxu0
        %v4141 = vadd.f32 0.0, %v4140
        %v4142 = vpop.f32.mrb[0].mxu0
        %v4143 = vadd.f32 0.0, %v4142
        %v4144 = vpop.f32.mrb[0].mxu0
        %v4145 = vadd.f32 0.0, %v4144
        %4146 = vmatprep.mubr.bf16.mxu0 0
        %4147 = vmatmul.mubr.bf16.gmra.mrb[0].mxu0 %v3929
        %v4148 = vpop.f32.mrb[0].mxu0
        %v4149 = vadd.f32 0.0, %v4148
        %v4150 = vpop.f32.mrb[0].mxu0
        %v4151 = vadd.f32 0.0, %v4150
        %v4152 = vpop.f32.mrb[0].mxu0
        %v4153 = vadd.f32 0.0, %v4152
        %v4154 = vpop.f32.mrb[0].mxu0
        %v4155 = vadd.f32 0.0, %v4154
        %4156 = vmatprep.mubr.bf16.mxu0 0
        %4157 = vmatmul.mubr.bf16.gmra.mrb[0].mxu0 %v3930
        %v4158 = vpop.f32.mrb[0].mxu0
        %v4159 = vadd.f32 0.0, %v4158
        %v4160 = vpop.f32.mrb[0].mxu0
        %v4161 = vadd.f32 0.0, %v4160
        %v4162 = vpop.f32.mrb[0].mxu0
        %v4163 = vadd.f32 0.0, %v4162
        %v4164 = vpop.f32.mrb[0].mxu0
        %v4165 = vadd.f32 0.0, %v4164
        %4166 = vmatprep.mubr.bf16.mxu0 0
        %4167 = vmatmul.mubr.bf16.gmra.mrb[0].mxu0 %v3931
        %v4168 = vpop.f32.mrb[0].mxu0
        %v4169 = vadd.f32 0.0, %v4168
        %v4170 = vpop.f32.mrb[0].mxu0
        %v4171 = vadd.f32 0.0, %v4170
        %v4172 = vpop.f32.mrb[0].mxu0
        %v4173 = vadd.f32 0.0, %v4172
        %v4174 = vpop.f32.mrb[0].mxu0
        %v4175 = vadd.f32 0.0, %v4174
        %4176 = vmatprep.mubr.bf16.mxu0 0
        %4177 = vmatmul.mubr.bf16.gmra.mrb[0].mxu0 %v3932
        %v4178 = vpop.f32.mrb[0].mxu0
        %v4179 = vadd.f32 0.0, %v4178
        %v4180 = vpop.f32.mrb[0].mxu0
        %v4181 = vadd.f32 0.0, %v4180
        %v4182 = vpop.f32.mrb[0].mxu0
        %v4183 = vadd.f32 0.0, %v4182
        %v4184 = vpop.f32.mrb[0].mxu0
        %v4185 = vadd.f32 0.0, %v4184
        %4186 = vmatprep.mubr.bf16.mxu0 0
        %4187 = vmatmul.mubr.bf16.gmra.mrb[0].mxu0 %v3933
        %v4188 = vpop.f32.mrb[0].mxu0
        %v4189 = vadd.f32 0.0, %v4188
        %v4190 = vpop.f32.mrb[0].mxu0
        %v4191 = vadd.f32 0.0, %v4190
        %v4192 = vpop.f32.mrb[0].mxu0
        %v4193 = vadd.f32 0.0, %v4192
        %v4194 = vpop.f32.mrb[0].mxu0
        %v4195 = vadd.f32 0.0, %v4194
        %4196 = vmatprep.mubr.bf16.mxu0 0
        %4197 = vmatmul.mubr.bf16.gmra.mrb[0].mxu0 %v3934
        %v4198 = vpop.f32.mrb[0].mxu0
        %v4199 = vadd.f32 0.0, %v4198
        %v4200 = vpop.f32.mrb[0].mxu0
        %v4201 = vadd.f32 0.0, %v4200
        %v4202 = vpop.f32.mrb[0].mxu0
        %v4203 = vadd.f32 0.0, %v4202
        %v4204 = vpop.f32.mrb[0].mxu0
        %v4205 = vadd.f32 0.0, %v4204
        %4206 = vmatprep.mubr.bf16.mxu0 0
        %4207 = vmatmul.mubr.bf16.gmra.mrb[0].mxu0 %v3935
        %v4208 = vpop.f32.mrb[0].mxu0
        %v4209 = vadd.f32 0.0, %v4208
        %v4210 = vpop.f32.mrb[0].mxu0
        %v4211 = vadd.f32 0.0, %v4210
        %v4212 = vpop.f32.mrb[0].mxu0
        %v4213 = vadd.f32 0.0, %v4212
        %v4214 = vpop.f32.mrb[0].mxu0
        %v4215 = vadd.f32 0.0, %v4214
        %4216 = vmatprep.mubr.bf16.mxu0 0
        %4217 = vmatmul.mubr.bf16.gmra.mrb[0].mxu0 %v3936
        %v4218 = vpop.f32.mrb[0].mxu0
        %v4219 = vadd.f32 0.0, %v4218
        %v4220 = vpop.f32.mrb[0].mxu0
        %v4221 = vadd.f32 0.0, %v4220
        %v4222 = vpop.f32.mrb[0].mxu0
        %v4223 = vadd.f32 0.0, %v4222
        %v4224 = vpop.f32.mrb[0].mxu0
        %v4225 = vadd.f32 0.0, %v4224
        %4226 = vdwg.mxu0
        %v4227 = vadd.f32 %v3731, %v4069
        %v4228 = vadd.f32 %v3733, %v4071
        %v4229 = vadd.f32 %v3735, %v4073
        %v4230 = vadd.f32 %v3737, %v4075
        %v4231 = vadd.f32 %v3741, %v4079
        %v4232 = vadd.f32 %v3743, %v4081
        %v4233 = vadd.f32 %v3745, %v4083
        %v4234 = vadd.f32 %v3747, %v4085
        %v4235 = vadd.f32 %v3751, %v4089
        %v4236 = vadd.f32 %v3753, %v4091
        %v4237 = vadd.f32 %v3755, %v4093
        %v4238 = vadd.f32 %v3757, %v4095
        %v4239 = vadd.f32 %v3761, %v4099
        %v4240 = vadd.f32 %v3763, %v4101
        %v4241 = vadd.f32 %v3765, %v4103
        %v4242 = vadd.f32 %v3767, %v4105
        %v4243 = vadd.f32 %v3771, %v4109
        %v4244 = vadd.f32 %v3773, %v4111
        %v4245 = vadd.f32 %v3775, %v4113
        %v4246 = vadd.f32 %v3777, %v4115
        %v4247 = vadd.f32 %v3781, %v4119
        %v4248 = vadd.f32 %v3783, %v4121
        %v4249 = vadd.f32 %v3785, %v4123
        %v4250 = vadd.f32 %v3787, %v4125
        %v4251 = vadd.f32 %v3791, %v4129
        %v4252 = vadd.f32 %v3793, %v4131
        %v4253 = vadd.f32 %v3795, %v4133
        %v4254 = vadd.f32 %v3797, %v4135
        %v4255 = vadd.f32 %v3801, %v4139
        %v4256 = vadd.f32 %v3803, %v4141
        %v4257 = vadd.f32 %v3805, %v4143
        %v4258 = vadd.f32 %v3807, %v4145
        %v4259 = vadd.f32 %v3811, %v4149
        %v4260 = vadd.f32 %v3813, %v4151
        %v4261 = vadd.f32 %v3815, %v4153
        %v4262 = vadd.f32 %v3817, %v4155
        %v4263 = vadd.f32 %v3821, %v4159
        %v4264 = vadd.f32 %v3823, %v4161
        %v4265 = vadd.f32 %v3825, %v4163
        %v4266 = vadd.f32 %v3827, %v4165
        %v4267 = vadd.f32 %v3831, %v4169
        %v4268 = vadd.f32 %v3833, %v4171
        %v4269 = vadd.f32 %v3835, %v4173
        %v4270 = vadd.f32 %v3837, %v4175
        %v4271 = vadd.f32 %v3841, %v4179
        %v4272 = vadd.f32 %v3843, %v4181
        %v4273 = vadd.f32 %v3845, %v4183
        %v4274 = vadd.f32 %v3847, %v4185
        %v4275 = vadd.f32 %v3851, %v4189
        %v4276 = vadd.f32 %v3853, %v4191
        %v4277 = vadd.f32 %v3855, %v4193
        %v4278 = vadd.f32 %v3857, %v4195
        %v4279 = vadd.f32 %v3861, %v4199
        %v4280 = vadd.f32 %v3863, %v4201
        %v4281 = vadd.f32 %v3865, %v4203
        %v4282 = vadd.f32 %v3867, %v4205
        %v4283 = vadd.f32 %v3871, %v4209
        %v4284 = vadd.f32 %v3873, %v4211
        %v4285 = vadd.f32 %v3875, %v4213
        %v4286 = vadd.f32 %v3877, %v4215
        %v4287 = vadd.f32 %v3881, %v4219
        %v4288 = vadd.f32 %v3883, %v4221
        %v4289 = vadd.f32 %v3885, %v4223
        %v4290 = vadd.f32 %v3887, %v4225
        %v4291 = vld [vmem:[%s3181] sm:$0xff]
        %v4292 = vld [vmem:[%s3181 + $0x8] sm:$0xff]
        %v4293 = vld [vmem:[%s3181 + $0x18] sm:$0xff]
        %v4294 = vld [vmem:[%s3181 + $0x20] sm:$0xff]
        %v4295 = vld [vmem:[%s3181 + $0x30] sm:$0xff]
        %v4296 = vld [vmem:[%s3181 + $0x38] sm:$0xff]
        %v4297 = vld [vmem:[%s3181 + $0x48] sm:$0xff]
        %v4298 = vld [vmem:[%s3181 + $0x50] sm:$0xff]
        %v4299 = vld [vmem:[%s3181 + $0x60] sm:$0xff]
        %v4300 = vld [vmem:[%s3181 + $0x68] sm:$0xff]
        %v4301 = vld [vmem:[%s3181 + $0x78] sm:$0xff]
        %v4302 = vld [vmem:[%s3181 + $0x80] sm:$0xff]
        %v4303 = vld [vmem:[%s3181 + $0x90] sm:$0xff]
        %v4304 = vld [vmem:[%s3181 + $0x98] sm:$0xff]
        %v4305 = vld [vmem:[%s3181 + $0xa8] sm:$0xff]
        %v4306 = vld [vmem:[%s3181 + $0xb0] sm:$0xff]
        %v4307 = vld [vmem:[%s3181 + $0xc0] sm:$0xff]
        %v4308 = vld [vmem:[%s3181 + $0xc8] sm:$0xff]
        %v4309 = vld [vmem:[%s3181 + $0xd8] sm:$0xff]
        %v4310 = vld [vmem:[%s3181 + $0xe0] sm:$0xff]
        %v4311 = vld [vmem:[%s3181 + $0xf0] sm:$0xff]
        %v4312 = vld [vmem:[%s3181 + $0xf8] sm:$0xff]
        %v4313 = vld [vmem:[%s3181 + $0x108] sm:$0xff]
        %v4314 = vld [vmem:[%s3181 + $0x110] sm:$0xff]
        %v4315 = vld [vmem:[%s3181 + $0x120] sm:$0xff]
        %v4316 = vld [vmem:[%s3181 + $0x128] sm:$0xff]
        %v4317 = vld [vmem:[%s3181 + $0x138] sm:$0xff]
        %v4318 = vld [vmem:[%s3181 + $0x140] sm:$0xff]
        %v4319 = vld [vmem:[%s3181 + $0x150] sm:$0xff]
        %v4320 = vld [vmem:[%s3181 + $0x158] sm:$0xff]
        %v4321 = vld [vmem:[%s3181 + $0x168] sm:$0xff]
        %v4322 = vld [vmem:[%s3181 + $0x170] sm:$0xff]
        %v4323 = vpack.c.bf16 %v4292, %v4291
        %v4324 = vpack.c.bf16 %v4294, %v4293
        %v4325 = vpack.c.bf16 %v4296, %v4295
        %v4326 = vpack.c.bf16 %v4298, %v4297
        %v4327 = vpack.c.bf16 %v4300, %v4299
        %v4328 = vpack.c.bf16 %v4302, %v4301
        %v4329 = vpack.c.bf16 %v4304, %v4303
        %v4330 = vpack.c.bf16 %v4306, %v4305
        %v4331 = vpack.c.bf16 %v4308, %v4307
        %v4332 = vpack.c.bf16 %v4310, %v4309
        %v4333 = vpack.c.bf16 %v4312, %v4311
        %v4334 = vpack.c.bf16 %v4314, %v4313
        %v4335 = vpack.c.bf16 %v4316, %v4315
        %v4336 = vpack.c.bf16 %v4318, %v4317
        %v4337 = vpack.c.bf16 %v4320, %v4319
        %v4338 = vpack.c.bf16 %v4322, %v4321
        %s4339 = scalar_lea.vmem [#allocation4], 384
        %v4340 = vld [vmem:[%s4339] sm:$0xff]
        %v4341 = vld [vmem:[%s4339 + $0x8] sm:$0xff]
        %v4342 = vld [vmem:[%s4339 + $0x10] sm:$0xff]
        %v4343 = vld [vmem:[%s4339 + $0x18] sm:$0xff]
        %v4344 = vld [vmem:[%s4339 + $0x20] sm:$0xff]
        %v4345 = vld [vmem:[%s4339 + $0x28] sm:$0xff]
        %v4346 = vld [vmem:[%s4339 + $0x30] sm:$0xff]
        %v4347 = vld [vmem:[%s4339 + $0x38] sm:$0xff]
        %v4348 = vld [vmem:[%s4339 + $0x40] sm:$0xff]
        %v4349 = vld [vmem:[%s4339 + $0x48] sm:$0xff]
        %v4350 = vld [vmem:[%s4339 + $0x50] sm:$0xff]
        %v4351 = vld [vmem:[%s4339 + $0x58] sm:$0xff]
        %v4352 = vld [vmem:[%s4339 + $0x60] sm:$0xff]
        %v4353 = vld [vmem:[%s4339 + $0x68] sm:$0xff]
        %v4354 = vld [vmem:[%s4339 + $0x70] sm:$0xff]
        %v4355 = vld [vmem:[%s4339 + $0x78] sm:$0xff]
        %v4372 = vunpack.c.l.b16 %v4340
        %v4373 = vunpack.c.h.b16 %v4340
        %v4374 = vunpack.c.l.b16 %v4341
        %v4375 = vunpack.c.h.b16 %v4341
        %v4376 = vunpack.c.l.b16 %v4342
        %v4377 = vunpack.c.h.b16 %v4342
        %v4378 = vunpack.c.l.b16 %v4343
        %v4379 = vunpack.c.h.b16 %v4343
        %v4380 = vunpack.c.l.b16 %v4344
        %v4381 = vunpack.c.h.b16 %v4344
        %v4382 = vunpack.c.l.b16 %v4345
        %v4383 = vunpack.c.h.b16 %v4345
        %v4384 = vunpack.c.l.b16 %v4346
        %v4385 = vunpack.c.h.b16 %v4346
        %v4386 = vunpack.c.l.b16 %v4347
        %v4387 = vunpack.c.h.b16 %v4347
        %v4388 = vunpack.c.l.b16 %v4348
        %v4389 = vunpack.c.h.b16 %v4348
        %v4390 = vunpack.c.l.b16 %v4349
        %v4391 = vunpack.c.h.b16 %v4349
        %v4392 = vunpack.c.l.b16 %v4350
        %v4393 = vunpack.c.h.b16 %v4350
        %v4394 = vunpack.c.l.b16 %v4351
        %v4395 = vunpack.c.h.b16 %v4351
        %v4396 = vunpack.c.l.b16 %v4352
        %v4397 = vunpack.c.h.b16 %v4352
        %v4398 = vunpack.c.l.b16 %v4353
        %v4399 = vunpack.c.h.b16 %v4353
        %v4400 = vunpack.c.l.b16 %v4354
        %v4401 = vunpack.c.h.b16 %v4354
        %v4402 = vunpack.c.l.b16 %v4355
        %v4403 = vunpack.c.h.b16 %v4355
        %v4404 = vpack.c.b16 %v4374, %v4372
        %v4405 = vpack.c.b16 %v4375, %v4373
        %v4406 = vpack.c.b16 %v4378, %v4376
        %v4407 = vpack.c.b16 %v4379, %v4377
        %v4408 = vpack.c.b16 %v4382, %v4380
        %v4409 = vpack.c.b16 %v4383, %v4381
        %v4410 = vpack.c.b16 %v4386, %v4384
        %v4411 = vpack.c.b16 %v4387, %v4385
        %v4412 = vpack.c.b16 %v4390, %v4388
        %v4413 = vpack.c.b16 %v4391, %v4389
        %v4414 = vpack.c.b16 %v4394, %v4392
        %v4415 = vpack.c.b16 %v4395, %v4393
        %v4416 = vpack.c.b16 %v4398, %v4396
        %v4417 = vpack.c.b16 %v4399, %v4397
        %v4418 = vpack.c.b16 %v4402, %v4400
        %v4419 = vpack.c.b16 %v4403, %v4401
        %4436 = vmatprep.subr.bf16.mxu0 %v4405
        %4437 = vmatpush1.bf16.msra.mxu0 %v4404
        %4438 = vmatprep.subr.bf16.mxu0 %v4407
        %4439 = vmatpush1.bf16.msra.mxu0 %v4406
        %4440 = vmatprep.subr.bf16.mxu0 %v4409
        %4441 = vmatpush1.bf16.msra.mxu0 %v4408
        %4442 = vmatprep.subr.bf16.mxu0 %v4411
        %4443 = vmatpush1.bf16.msra.mxu0 %v4410
        %4444 = vmatprep.subr.bf16.mxu0 %v4413
        %4445 = vmatpush1.bf16.msra.mxu0 %v4412
        %4446 = vmatprep.subr.bf16.mxu0 %v4415
        %4447 = vmatpush1.bf16.msra.mxu0 %v4414
        %4448 = vmatprep.subr.bf16.mxu0 %v4417
        %4449 = vmatpush1.bf16.msra.mxu0 %v4416
        %4450 = vmatprep.subr.bf16.mxu0 %v4419
        %4451 = vmatpush1.bf16.msra.mxu0 %v4418
        %4452 = vmatprep.subr.bf16.mxu0 0
        %4453 = vmatpush1.bf16.msra.mxu0 0
        %4454 = vmatprep.subr.bf16.mxu0 0
        %4455 = vmatpush1.bf16.msra.mxu0 0
        %4456 = vmatprep.subr.bf16.mxu0 0
        %4457 = vmatpush1.bf16.msra.mxu0 0
        %4458 = vmatprep.subr.bf16.mxu0 0
        %4459 = vmatpush1.bf16.msra.mxu0 0
        %4460 = vmatprep.subr.bf16.mxu0 0
        %4461 = vmatpush1.bf16.msra.mxu0 0
        %4462 = vmatprep.subr.bf16.mxu0 0
        %4463 = vmatpush1.bf16.msra.mxu0 0
        %4464 = vmatprep.subr.bf16.mxu0 0
        %4465 = vmatpush1.bf16.msra.mxu0 0
        %4466 = vmatprep.subr.bf16.mxu0 0
        %4467 = vmatpush1.bf16.msra.mxu0 0
        %4468 = vmatprep.mubr.bf16.mxu0 0
        %4469 = vmatmul.mubr.bf16.gmra.mrb[0].mxu0 %v4323
        %v4470 = vpop.f32.mrb[0].mxu0
        %v4471 = vadd.f32 0.0, %v4470
        %v4472 = vpop.f32.mrb[0].mxu0
        %v4473 = vadd.f32 0.0, %v4472
        %v4474 = vpop.f32.mrb[0].mxu0
        %v4475 = vadd.f32 0.0, %v4474
        %v4476 = vpop.f32.mrb[0].mxu0
        %v4477 = vadd.f32 0.0, %v4476
        %4478 = vmatprep.mubr.bf16.mxu0 0
        %4479 = vmatmul.mubr.bf16.gmra.mrb[0].mxu0 %v4324
        %v4480 = vpop.f32.mrb[0].mxu0
        %v4481 = vadd.f32 0.0, %v4480
        %v4482 = vpop.f32.mrb[0].mxu0
        %v4483 = vadd.f32 0.0, %v4482
        %v4484 = vpop.f32.mrb[0].mxu0
        %v4485 = vadd.f32 0.0, %v4484
        %v4486 = vpop.f32.mrb[0].mxu0
        %v4487 = vadd.f32 0.0, %v4486
        %4488 = vmatprep.mubr.bf16.mxu0 0
        %4489 = vmatmul.mubr.bf16.gmra.mrb[0].mxu0 %v4325
        %v4490 = vpop.f32.mrb[0].mxu0
        %v4491 = vadd.f32 0.0, %v4490
        %v4492 = vpop.f32.mrb[0].mxu0
        %v4493 = vadd.f32 0.0, %v4492
        %v4494 = vpop.f32.mrb[0].mxu0
        %v4495 = vadd.f32 0.0, %v4494
        %v4496 = vpop.f32.mrb[0].mxu0
        %v4497 = vadd.f32 0.0, %v4496
        %4498 = vmatprep.mubr.bf16.mxu0 0
        %4499 = vmatmul.mubr.bf16.gmra.mrb[0].mxu0 %v4326
        %v4500 = vpop.f32.mrb[0].mxu0
        %v4501 = vadd.f32 0.0, %v4500
        %v4502 = vpop.f32.mrb[0].mxu0
        %v4503 = vadd.f32 0.0, %v4502
        %v4504 = vpop.f32.mrb[0].mxu0
        %v4505 = vadd.f32 0.0, %v4504
        %v4506 = vpop.f32.mrb[0].mxu0
        %v4507 = vadd.f32 0.0, %v4506
        %4508 = vmatprep.mubr.bf16.mxu0 0
        %4509 = vmatmul.mubr.bf16.gmra.mrb[0].mxu0 %v4327
        %v4510 = vpop.f32.mrb[0].mxu0
        %v4511 = vadd.f32 0.0, %v4510
        %v4512 = vpop.f32.mrb[0].mxu0
        %v4513 = vadd.f32 0.0, %v4512
        %v4514 = vpop.f32.mrb[0].mxu0
        %v4515 = vadd.f32 0.0, %v4514
        %v4516 = vpop.f32.mrb[0].mxu0
        %v4517 = vadd.f32 0.0, %v4516
        %4518 = vmatprep.mubr.bf16.mxu0 0
        %4519 = vmatmul.mubr.bf16.gmra.mrb[0].mxu0 %v4328
        %v4520 = vpop.f32.mrb[0].mxu0
        %v4521 = vadd.f32 0.0, %v4520
        %v4522 = vpop.f32.mrb[0].mxu0
        %v4523 = vadd.f32 0.0, %v4522
        %v4524 = vpop.f32.mrb[0].mxu0
        %v4525 = vadd.f32 0.0, %v4524
        %v4526 = vpop.f32.mrb[0].mxu0
        %v4527 = vadd.f32 0.0, %v4526
        %4528 = vmatprep.mubr.bf16.mxu0 0
        %4529 = vmatmul.mubr.bf16.gmra.mrb[0].mxu0 %v4329
        %v4530 = vpop.f32.mrb[0].mxu0
        %v4531 = vadd.f32 0.0, %v4530
        %v4532 = vpop.f32.mrb[0].mxu0
        %v4533 = vadd.f32 0.0, %v4532
        %v4534 = vpop.f32.mrb[0].mxu0
        %v4535 = vadd.f32 0.0, %v4534
        %v4536 = vpop.f32.mrb[0].mxu0
        %v4537 = vadd.f32 0.0, %v4536
        %4538 = vmatprep.mubr.bf16.mxu0 0
        %4539 = vmatmul.mubr.bf16.gmra.mrb[0].mxu0 %v4330
        %v4540 = vpop.f32.mrb[0].mxu0
        %v4541 = vadd.f32 0.0, %v4540
        %v4542 = vpop.f32.mrb[0].mxu0
        %v4543 = vadd.f32 0.0, %v4542
        %v4544 = vpop.f32.mrb[0].mxu0
        %v4545 = vadd.f32 0.0, %v4544
        %v4546 = vpop.f32.mrb[0].mxu0
        %v4547 = vadd.f32 0.0, %v4546
        %4548 = vmatprep.mubr.bf16.mxu0 0
        %4549 = vmatmul.mubr.bf16.gmra.mrb[0].mxu0 %v4331
        %v4550 = vpop.f32.mrb[0].mxu0
        %v4551 = vadd.f32 0.0, %v4550
        %v4552 = vpop.f32.mrb[0].mxu0
        %v4553 = vadd.f32 0.0, %v4552
        %v4554 = vpop.f32.mrb[0].mxu0
        %v4555 = vadd.f32 0.0, %v4554
        %v4556 = vpop.f32.mrb[0].mxu0
        %v4557 = vadd.f32 0.0, %v4556
        %4558 = vmatprep.mubr.bf16.mxu0 0
        %4559 = vmatmul.mubr.bf16.gmra.mrb[0].mxu0 %v4332
        %v4560 = vpop.f32.mrb[0].mxu0
        %v4561 = vadd.f32 0.0, %v4560
        %v4562 = vpop.f32.mrb[0].mxu0
        %v4563 = vadd.f32 0.0, %v4562
        %v4564 = vpop.f32.mrb[0].mxu0
        %v4565 = vadd.f32 0.0, %v4564
        %v4566 = vpop.f32.mrb[0].mxu0
        %v4567 = vadd.f32 0.0, %v4566
        %4568 = vmatprep.mubr.bf16.mxu0 0
        %4569 = vmatmul.mubr.bf16.gmra.mrb[0].mxu0 %v4333
        %v4570 = vpop.f32.mrb[0].mxu0
        %v4571 = vadd.f32 0.0, %v4570
        %v4572 = vpop.f32.mrb[0].mxu0
        %v4573 = vadd.f32 0.0, %v4572
        %v4574 = vpop.f32.mrb[0].mxu0
        %v4575 = vadd.f32 0.0, %v4574
        %v4576 = vpop.f32.mrb[0].mxu0
        %v4577 = vadd.f32 0.0, %v4576
        %4578 = vmatprep.mubr.bf16.mxu0 0
        %4579 = vmatmul.mubr.bf16.gmra.mrb[0].mxu0 %v4334
        %v4580 = vpop.f32.mrb[0].mxu0
        %v4581 = vadd.f32 0.0, %v4580
        %v4582 = vpop.f32.mrb[0].mxu0
        %v4583 = vadd.f32 0.0, %v4582
        %v4584 = vpop.f32.mrb[0].mxu0
        %v4585 = vadd.f32 0.0, %v4584
        %v4586 = vpop.f32.mrb[0].mxu0
        %v4587 = vadd.f32 0.0, %v4586
        %4588 = vmatprep.mubr.bf16.mxu0 0
        %4589 = vmatmul.mubr.bf16.gmra.mrb[0].mxu0 %v4335
        %v4590 = vpop.f32.mrb[0].mxu0
        %v4591 = vadd.f32 0.0, %v4590
        %v4592 = vpop.f32.mrb[0].mxu0
        %v4593 = vadd.f32 0.0, %v4592
        %v4594 = vpop.f32.mrb[0].mxu0
        %v4595 = vadd.f32 0.0, %v4594
        %v4596 = vpop.f32.mrb[0].mxu0
        %v4597 = vadd.f32 0.0, %v4596
        %4598 = vmatprep.mubr.bf16.mxu0 0
        %4599 = vmatmul.mubr.bf16.gmra.mrb[0].mxu0 %v4336
        %v4600 = vpop.f32.mrb[0].mxu0
        %v4601 = vadd.f32 0.0, %v4600
        %v4602 = vpop.f32.mrb[0].mxu0
        %v4603 = vadd.f32 0.0, %v4602
        %v4604 = vpop.f32.mrb[0].mxu0
        %v4605 = vadd.f32 0.0, %v4604
        %v4606 = vpop.f32.mrb[0].mxu0
        %v4607 = vadd.f32 0.0, %v4606
        %4608 = vmatprep.mubr.bf16.mxu0 0
        %4609 = vmatmul.mubr.bf16.gmra.mrb[0].mxu0 %v4337
        %v4610 = vpop.f32.mrb[0].mxu0
        %v4611 = vadd.f32 0.0, %v4610
        %v4612 = vpop.f32.mrb[0].mxu0
        %v4613 = vadd.f32 0.0, %v4612
        %v4614 = vpop.f32.mrb[0].mxu0
        %v4615 = vadd.f32 0.0, %v4614
        %v4616 = vpop.f32.mrb[0].mxu0
        %v4617 = vadd.f32 0.0, %v4616
        %4618 = vmatprep.mubr.bf16.mxu0 0
        %4619 = vmatmul.mubr.bf16.gmra.mrb[0].mxu0 %v4338
        %v4620 = vpop.f32.mrb[0].mxu0
        %v4621 = vadd.f32 0.0, %v4620
        %v4622 = vpop.f32.mrb[0].mxu0
        %v4623 = vadd.f32 0.0, %v4622
        %v4624 = vpop.f32.mrb[0].mxu0
        %v4625 = vadd.f32 0.0, %v4624
        %v4626 = vpop.f32.mrb[0].mxu0
        %v4627 = vadd.f32 0.0, %v4626
        %4628 = vdwg.mxu0
        %v4629 = vadd.f32 %v4227, %v4471
        %v4630 = vadd.f32 %v4228, %v4473
        %v4631 = vadd.f32 %v4229, %v4475
        %v4632 = vadd.f32 %v4230, %v4477
        %v4633 = vadd.f32 %v4231, %v4481
        %v4634 = vadd.f32 %v4232, %v4483
        %v4635 = vadd.f32 %v4233, %v4485
        %v4636 = vadd.f32 %v4234, %v4487
        %v4637 = vadd.f32 %v4235, %v4491
        %v4638 = vadd.f32 %v4236, %v4493
        %v4639 = vadd.f32 %v4237, %v4495
        %v4640 = vadd.f32 %v4238, %v4497
        %v4641 = vadd.f32 %v4239, %v4501
        %v4642 = vadd.f32 %v4240, %v4503
        %v4643 = vadd.f32 %v4241, %v4505
        %v4644 = vadd.f32 %v4242, %v4507
        %v4645 = vadd.f32 %v4243, %v4511
        %v4646 = vadd.f32 %v4244, %v4513
        %v4647 = vadd.f32 %v4245, %v4515
        %v4648 = vadd.f32 %v4246, %v4517
        %v4649 = vadd.f32 %v4247, %v4521
        %v4650 = vadd.f32 %v4248, %v4523
        %v4651 = vadd.f32 %v4249, %v4525
        %v4652 = vadd.f32 %v4250, %v4527
        %v4653 = vadd.f32 %v4251, %v4531
        %v4654 = vadd.f32 %v4252, %v4533
        %v4655 = vadd.f32 %v4253, %v4535
        %v4656 = vadd.f32 %v4254, %v4537
        %v4657 = vadd.f32 %v4255, %v4541
        %v4658 = vadd.f32 %v4256, %v4543
        %v4659 = vadd.f32 %v4257, %v4545
        %v4660 = vadd.f32 %v4258, %v4547
        %v4661 = vadd.f32 %v4259, %v4551
        %v4662 = vadd.f32 %v4260, %v4553
        %v4663 = vadd.f32 %v4261, %v4555
        %v4664 = vadd.f32 %v4262, %v4557
        %v4665 = vadd.f32 %v4263, %v4561
        %v4666 = vadd.f32 %v4264, %v4563
        %v4667 = vadd.f32 %v4265, %v4565
        %v4668 = vadd.f32 %v4266, %v4567
        %v4669 = vadd.f32 %v4267, %v4571
        %v4670 = vadd.f32 %v4268, %v4573
        %v4671 = vadd.f32 %v4269, %v4575
        %v4672 = vadd.f32 %v4270, %v4577
        %v4673 = vadd.f32 %v4271, %v4581
        %v4674 = vadd.f32 %v4272, %v4583
        %v4675 = vadd.f32 %v4273, %v4585
        %v4676 = vadd.f32 %v4274, %v4587
        %v4677 = vadd.f32 %v4275, %v4591
        %v4678 = vadd.f32 %v4276, %v4593
        %v4679 = vadd.f32 %v4277, %v4595
        %v4680 = vadd.f32 %v4278, %v4597
        %v4681 = vadd.f32 %v4279, %v4601
        %v4682 = vadd.f32 %v4280, %v4603
        %v4683 = vadd.f32 %v4281, %v4605
        %v4684 = vadd.f32 %v4282, %v4607
        %v4685 = vadd.f32 %v4283, %v4611
        %v4686 = vadd.f32 %v4284, %v4613
        %v4687 = vadd.f32 %v4285, %v4615
        %v4688 = vadd.f32 %v4286, %v4617
        %v4689 = vadd.f32 %v4287, %v4621
        %v4690 = vadd.f32 %v4288, %v4623
        %v4691 = vadd.f32 %v4289, %v4625
        %v4692 = vadd.f32 %v4290, %v4627
        %v4693 = vld [vmem:[%s3181 + $0x1] sm:$0xff]
        %v4694 = vld [vmem:[%s3181 + $0x9] sm:$0xff]
        %v4695 = vld [vmem:[%s3181 + $0x19] sm:$0xff]
        %v4696 = vld [vmem:[%s3181 + $0x21] sm:$0xff]
        %v4697 = vld [vmem:[%s3181 + $0x31] sm:$0xff]
        %v4698 = vld [vmem:[%s3181 + $0x39] sm:$0xff]
        %v4699 = vld [vmem:[%s3181 + $0x49] sm:$0xff]
        %v4700 = vld [vmem:[%s3181 + $0x51] sm:$0xff]
        %v4701 = vld [vmem:[%s3181 + $0x61] sm:$0xff]
        %v4702 = vld [vmem:[%s3181 + $0x69] sm:$0xff]
        %v4703 = vld [vmem:[%s3181 + $0x79] sm:$0xff]
        %v4704 = vld [vmem:[%s3181 + $0x81] sm:$0xff]
        %v4705 = vld [vmem:[%s3181 + $0x91] sm:$0xff]
        %v4706 = vld [vmem:[%s3181 + $0x99] sm:$0xff]
        %v4707 = vld [vmem:[%s3181 + $0xa9] sm:$0xff]
        %v4708 = vld [vmem:[%s3181 + $0xb1] sm:$0xff]
        %v4709 = vld [vmem:[%s3181 + $0xc1] sm:$0xff]
        %v4710 = vld [vmem:[%s3181 + $0xc9] sm:$0xff]
        %v4711 = vld [vmem:[%s3181 + $0xd9] sm:$0xff]
        %v4712 = vld [vmem:[%s3181 + $0xe1] sm:$0xff]
        %v4713 = vld [vmem:[%s3181 + $0xf1] sm:$0xff]
        %v4714 = vld [vmem:[%s3181 + $0xf9] sm:$0xff]
        %v4715 = vld [vmem:[%s3181 + $0x109] sm:$0xff]
        %v4716 = vld [vmem:[%s3181 + $0x111] sm:$0xff]
        %v4717 = vld [vmem:[%s3181 + $0x121] sm:$0xff]
        %v4718 = vld [vmem:[%s3181 + $0x129] sm:$0xff]
        %v4719 = vld [vmem:[%s3181 + $0x139] sm:$0xff]
        %v4720 = vld [vmem:[%s3181 + $0x141] sm:$0xff]
        %v4721 = vld [vmem:[%s3181 + $0x151] sm:$0xff]
        %v4722 = vld [vmem:[%s3181 + $0x159] sm:$0xff]
        %v4723 = vld [vmem:[%s3181 + $0x169] sm:$0xff]
        %v4724 = vld [vmem:[%s3181 + $0x171] sm:$0xff]
        %v4725 = vpack.c.bf16 %v4694, %v4693
        %v4726 = vpack.c.bf16 %v4696, %v4695
        %v4727 = vpack.c.bf16 %v4698, %v4697
        %v4728 = vpack.c.bf16 %v4700, %v4699
        %v4729 = vpack.c.bf16 %v4702, %v4701
        %v4730 = vpack.c.bf16 %v4704, %v4703
        %v4731 = vpack.c.bf16 %v4706, %v4705
        %v4732 = vpack.c.bf16 %v4708, %v4707
        %v4733 = vpack.c.bf16 %v4710, %v4709
        %v4734 = vpack.c.bf16 %v4712, %v4711
        %v4735 = vpack.c.bf16 %v4714, %v4713
        %v4736 = vpack.c.bf16 %v4716, %v4715
        %v4737 = vpack.c.bf16 %v4718, %v4717
        %v4738 = vpack.c.bf16 %v4720, %v4719
        %v4739 = vpack.c.bf16 %v4722, %v4721
        %v4740 = vpack.c.bf16 %v4724, %v4723
        %s4741 = scalar_lea.vmem [#allocation4], 512
        %v4742 = vld [vmem:[%s4741] sm:$0xff]
        %v4743 = vld [vmem:[%s4741 + $0x8] sm:$0xff]
        %v4744 = vld [vmem:[%s4741 + $0x10] sm:$0xff]
        %v4745 = vld [vmem:[%s4741 + $0x18] sm:$0xff]
        %v4746 = vld [vmem:[%s4741 + $0x20] sm:$0xff]
        %v4747 = vld [vmem:[%s4741 + $0x28] sm:$0xff]
        %v4748 = vld [vmem:[%s4741 + $0x30] sm:$0xff]
        %v4749 = vld [vmem:[%s4741 + $0x38] sm:$0xff]
        %v4750 = vld [vmem:[%s4741 + $0x40] sm:$0xff]
        %v4751 = vld [vmem:[%s4741 + $0x48] sm:$0xff]
        %v4752 = vld [vmem:[%s4741 + $0x50] sm:$0xff]
        %v4753 = vld [vmem:[%s4741 + $0x58] sm:$0xff]
        %v4754 = vld [vmem:[%s4741 + $0x60] sm:$0xff]
        %v4755 = vld [vmem:[%s4741 + $0x68] sm:$0xff]
        %v4756 = vld [vmem:[%s4741 + $0x70] sm:$0xff]
        %v4757 = vld [vmem:[%s4741 + $0x78] sm:$0xff]
        %v4774 = vunpack.c.l.b16 %v4742
        %v4775 = vunpack.c.h.b16 %v4742
        %v4776 = vunpack.c.l.b16 %v4743
        %v4777 = vunpack.c.h.b16 %v4743
        %v4778 = vunpack.c.l.b16 %v4744
        %v4779 = vunpack.c.h.b16 %v4744
        %v4780 = vunpack.c.l.b16 %v4745
        %v4781 = vunpack.c.h.b16 %v4745
        %v4782 = vunpack.c.l.b16 %v4746
        %v4783 = vunpack.c.h.b16 %v4746
        %v4784 = vunpack.c.l.b16 %v4747
        %v4785 = vunpack.c.h.b16 %v4747
        %v4786 = vunpack.c.l.b16 %v4748
        %v4787 = vunpack.c.h.b16 %v4748
        %v4788 = vunpack.c.l.b16 %v4749
        %v4789 = vunpack.c.h.b16 %v4749
        %v4790 = vunpack.c.l.b16 %v4750
        %v4791 = vunpack.c.h.b16 %v4750
        %v4792 = vunpack.c.l.b16 %v4751
        %v4793 = vunpack.c.h.b16 %v4751
        %v4794 = vunpack.c.l.b16 %v4752
        %v4795 = vunpack.c.h.b16 %v4752
        %v4796 = vunpack.c.l.b16 %v4753
        %v4797 = vunpack.c.h.b16 %v4753
        %v4798 = vunpack.c.l.b16 %v4754
        %v4799 = vunpack.c.h.b16 %v4754
        %v4800 = vunpack.c.l.b16 %v4755
        %v4801 = vunpack.c.h.b16 %v4755
        %v4802 = vunpack.c.l.b16 %v4756
        %v4803 = vunpack.c.h.b16 %v4756
        %v4804 = vunpack.c.l.b16 %v4757
        %v4805 = vunpack.c.h.b16 %v4757
        %v4806 = vpack.c.b16 %v4776, %v4774
        %v4807 = vpack.c.b16 %v4777, %v4775
        %v4808 = vpack.c.b16 %v4780, %v4778
        %v4809 = vpack.c.b16 %v4781, %v4779
        %v4810 = vpack.c.b16 %v4784, %v4782
        %v4811 = vpack.c.b16 %v4785, %v4783
        %v4812 = vpack.c.b16 %v4788, %v4786
        %v4813 = vpack.c.b16 %v4789, %v4787
        %v4814 = vpack.c.b16 %v4792, %v4790
        %v4815 = vpack.c.b16 %v4793, %v4791
        %v4816 = vpack.c.b16 %v4796, %v4794
        %v4817 = vpack.c.b16 %v4797, %v4795
        %v4818 = vpack.c.b16 %v4800, %v4798
        %v4819 = vpack.c.b16 %v4801, %v4799
        %v4820 = vpack.c.b16 %v4804, %v4802
        %v4821 = vpack.c.b16 %v4805, %v4803
        %4838 = vmatprep.subr.bf16.mxu0 %v4807
        %4839 = vmatpush1.bf16.msra.mxu0 %v4806
        %4840 = vmatprep.subr.bf16.mxu0 %v4809
        %4841 = vmatpush1.bf16.msra.mxu0 %v4808
        %4842 = vmatprep.subr.bf16.mxu0 %v4811
        %4843 = vmatpush1.bf16.msra.mxu0 %v4810
        %4844 = vmatprep.subr.bf16.mxu0 %v4813
        %4845 = vmatpush1.bf16.msra.mxu0 %v4812
        %4846 = vmatprep.subr.bf16.mxu0 %v4815
        %4847 = vmatpush1.bf16.msra.mxu0 %v4814
        %4848 = vmatprep.subr.bf16.mxu0 %v4817
        %4849 = vmatpush1.bf16.msra.mxu0 %v4816
        %4850 = vmatprep.subr.bf16.mxu0 %v4819
        %4851 = vmatpush1.bf16.msra.mxu0 %v4818
        %4852 = vmatprep.subr.bf16.mxu0 %v4821
        %4853 = vmatpush1.bf16.msra.mxu0 %v4820
        %4854 = vmatprep.subr.bf16.mxu0 0
        %4855 = vmatpush1.bf16.msra.mxu0 0
        %4856 = vmatprep.subr.bf16.mxu0 0
        %4857 = vmatpush1.bf16.msra.mxu0 0
        %4858 = vmatprep.subr.bf16.mxu0 0
        %4859 = vmatpush1.bf16.msra.mxu0 0
        %4860 = vmatprep.subr.bf16.mxu0 0
        %4861 = vmatpush1.bf16.msra.mxu0 0
        %4862 = vmatprep.subr.bf16.mxu0 0
        %4863 = vmatpush1.bf16.msra.mxu0 0
        %4864 = vmatprep.subr.bf16.mxu0 0
        %4865 = vmatpush1.bf16.msra.mxu0 0
        %4866 = vmatprep.subr.bf16.mxu0 0
        %4867 = vmatpush1.bf16.msra.mxu0 0
        %4868 = vmatprep.subr.bf16.mxu0 0
        %4869 = vmatpush1.bf16.msra.mxu0 0
        %4870 = vmatprep.mubr.bf16.mxu0 0
        %4871 = vmatmul.mubr.bf16.gmra.mrb[0].mxu0 %v4725
        %v4872 = vpop.f32.mrb[0].mxu0
        %v4873 = vadd.f32 0.0, %v4872
        %v4874 = vpop.f32.mrb[0].mxu0
        %v4875 = vadd.f32 0.0, %v4874
        %v4876 = vpop.f32.mrb[0].mxu0
        %v4877 = vadd.f32 0.0, %v4876
        %v4878 = vpop.f32.mrb[0].mxu0
        %v4879 = vadd.f32 0.0, %v4878
        %4880 = vmatprep.mubr.bf16.mxu0 0
        %4881 = vmatmul.mubr.bf16.gmra.mrb[0].mxu0 %v4726
        %v4882 = vpop.f32.mrb[0].mxu0
        %v4883 = vadd.f32 0.0, %v4882
        %v4884 = vpop.f32.mrb[0].mxu0
        %v4885 = vadd.f32 0.0, %v4884
        %v4886 = vpop.f32.mrb[0].mxu0
        %v4887 = vadd.f32 0.0, %v4886
        %v4888 = vpop.f32.mrb[0].mxu0
        %v4889 = vadd.f32 0.0, %v4888
        %4890 = vmatprep.mubr.bf16.mxu0 0
        %4891 = vmatmul.mubr.bf16.gmra.mrb[0].mxu0 %v4727
        %v4892 = vpop.f32.mrb[0].mxu0
        %v4893 = vadd.f32 0.0, %v4892
        %v4894 = vpop.f32.mrb[0].mxu0
        %v4895 = vadd.f32 0.0, %v4894
        %v4896 = vpop.f32.mrb[0].mxu0
        %v4897 = vadd.f32 0.0, %v4896
        %v4898 = vpop.f32.mrb[0].mxu0
        %v4899 = vadd.f32 0.0, %v4898
        %4900 = vmatprep.mubr.bf16.mxu0 0
        %4901 = vmatmul.mubr.bf16.gmra.mrb[0].mxu0 %v4728
        %v4902 = vpop.f32.mrb[0].mxu0
        %v4903 = vadd.f32 0.0, %v4902
        %v4904 = vpop.f32.mrb[0].mxu0
        %v4905 = vadd.f32 0.0, %v4904
        %v4906 = vpop.f32.mrb[0].mxu0
        %v4907 = vadd.f32 0.0, %v4906
        %v4908 = vpop.f32.mrb[0].mxu0
        %v4909 = vadd.f32 0.0, %v4908
        %4910 = vmatprep.mubr.bf16.mxu0 0
        %4911 = vmatmul.mubr.bf16.gmra.mrb[0].mxu0 %v4729
        %v4912 = vpop.f32.mrb[0].mxu0
        %v4913 = vadd.f32 0.0, %v4912
        %v4914 = vpop.f32.mrb[0].mxu0
        %v4915 = vadd.f32 0.0, %v4914
        %v4916 = vpop.f32.mrb[0].mxu0
        %v4917 = vadd.f32 0.0, %v4916
        %v4918 = vpop.f32.mrb[0].mxu0
        %v4919 = vadd.f32 0.0, %v4918
        %4920 = vmatprep.mubr.bf16.mxu0 0
        %4921 = vmatmul.mubr.bf16.gmra.mrb[0].mxu0 %v4730
        %v4922 = vpop.f32.mrb[0].mxu0
        %v4923 = vadd.f32 0.0, %v4922
        %v4924 = vpop.f32.mrb[0].mxu0
        %v4925 = vadd.f32 0.0, %v4924
        %v4926 = vpop.f32.mrb[0].mxu0
        %v4927 = vadd.f32 0.0, %v4926
        %v4928 = vpop.f32.mrb[0].mxu0
        %v4929 = vadd.f32 0.0, %v4928
        %4930 = vmatprep.mubr.bf16.mxu0 0
        %4931 = vmatmul.mubr.bf16.gmra.mrb[0].mxu0 %v4731
        %v4932 = vpop.f32.mrb[0].mxu0
        %v4933 = vadd.f32 0.0, %v4932
        %v4934 = vpop.f32.mrb[0].mxu0
        %v4935 = vadd.f32 0.0, %v4934
        %v4936 = vpop.f32.mrb[0].mxu0
        %v4937 = vadd.f32 0.0, %v4936
        %v4938 = vpop.f32.mrb[0].mxu0
        %v4939 = vadd.f32 0.0, %v4938
        %4940 = vmatprep.mubr.bf16.mxu0 0
        %4941 = vmatmul.mubr.bf16.gmra.mrb[0].mxu0 %v4732
        %v4942 = vpop.f32.mrb[0].mxu0
        %v4943 = vadd.f32 0.0, %v4942
        %v4944 = vpop.f32.mrb[0].mxu0
        %v4945 = vadd.f32 0.0, %v4944
        %v4946 = vpop.f32.mrb[0].mxu0
        %v4947 = vadd.f32 0.0, %v4946
        %v4948 = vpop.f32.mrb[0].mxu0
        %v4949 = vadd.f32 0.0, %v4948
        %4950 = vmatprep.mubr.bf16.mxu0 0
        %4951 = vmatmul.mubr.bf16.gmra.mrb[0].mxu0 %v4733
        %v4952 = vpop.f32.mrb[0].mxu0
        %v4953 = vadd.f32 0.0, %v4952
        %v4954 = vpop.f32.mrb[0].mxu0
        %v4955 = vadd.f32 0.0, %v4954
        %v4956 = vpop.f32.mrb[0].mxu0
        %v4957 = vadd.f32 0.0, %v4956
        %v4958 = vpop.f32.mrb[0].mxu0
        %v4959 = vadd.f32 0.0, %v4958
        %4960 = vmatprep.mubr.bf16.mxu0 0
        %4961 = vmatmul.mubr.bf16.gmra.mrb[0].mxu0 %v4734
        %v4962 = vpop.f32.mrb[0].mxu0
        %v4963 = vadd.f32 0.0, %v4962
        %v4964 = vpop.f32.mrb[0].mxu0
        %v4965 = vadd.f32 0.0, %v4964
        %v4966 = vpop.f32.mrb[0].mxu0
        %v4967 = vadd.f32 0.0, %v4966
        %v4968 = vpop.f32.mrb[0].mxu0
        %v4969 = vadd.f32 0.0, %v4968
        %4970 = vmatprep.mubr.bf16.mxu0 0
        %4971 = vmatmul.mubr.bf16.gmra.mrb[0].mxu0 %v4735
        %v4972 = vpop.f32.mrb[0].mxu0
        %v4973 = vadd.f32 0.0, %v4972
        %v4974 = vpop.f32.mrb[0].mxu0
        %v4975 = vadd.f32 0.0, %v4974
        %v4976 = vpop.f32.mrb[0].mxu0
        %v4977 = vadd.f32 0.0, %v4976
        %v4978 = vpop.f32.mrb[0].mxu0
        %v4979 = vadd.f32 0.0, %v4978
        %4980 = vmatprep.mubr.bf16.mxu0 0
        %4981 = vmatmul.mubr.bf16.gmra.mrb[0].mxu0 %v4736
        %v4982 = vpop.f32.mrb[0].mxu0
        %v4983 = vadd.f32 0.0, %v4982
        %v4984 = vpop.f32.mrb[0].mxu0
        %v4985 = vadd.f32 0.0, %v4984
        %v4986 = vpop.f32.mrb[0].mxu0
        %v4987 = vadd.f32 0.0, %v4986
        %v4988 = vpop.f32.mrb[0].mxu0
        %v4989 = vadd.f32 0.0, %v4988
        %4990 = vmatprep.mubr.bf16.mxu0 0
        %4991 = vmatmul.mubr.bf16.gmra.mrb[0].mxu0 %v4737
        %v4992 = vpop.f32.mrb[0].mxu0
        %v4993 = vadd.f32 0.0, %v4992
        %v4994 = vpop.f32.mrb[0].mxu0
        %v4995 = vadd.f32 0.0, %v4994
        %v4996 = vpop.f32.mrb[0].mxu0
        %v4997 = vadd.f32 0.0, %v4996
        %v4998 = vpop.f32.mrb[0].mxu0
        %v4999 = vadd.f32 0.0, %v4998
        %5000 = vmatprep.mubr.bf16.mxu0 0
        %5001 = vmatmul.mubr.bf16.gmra.mrb[0].mxu0 %v4738
        %v5002 = vpop.f32.mrb[0].mxu0
        %v5003 = vadd.f32 0.0, %v5002
        %v5004 = vpop.f32.mrb[0].mxu0
        %v5005 = vadd.f32 0.0, %v5004
        %v5006 = vpop.f32.mrb[0].mxu0
        %v5007 = vadd.f32 0.0, %v5006
        %v5008 = vpop.f32.mrb[0].mxu0
        %v5009 = vadd.f32 0.0, %v5008
        %5010 = vmatprep.mubr.bf16.mxu0 0
        %5011 = vmatmul.mubr.bf16.gmra.mrb[0].mxu0 %v4739
        %v5012 = vpop.f32.mrb[0].mxu0
        %v5013 = vadd.f32 0.0, %v5012
        %v5014 = vpop.f32.mrb[0].mxu0
        %v5015 = vadd.f32 0.0, %v5014
        %v5016 = vpop.f32.mrb[0].mxu0
        %v5017 = vadd.f32 0.0, %v5016
        %v5018 = vpop.f32.mrb[0].mxu0
        %v5019 = vadd.f32 0.0, %v5018
        %5020 = vmatprep.mubr.bf16.mxu0 0
        %5021 = vmatmul.mubr.bf16.gmra.mrb[0].mxu0 %v4740
        %v5022 = vpop.f32.mrb[0].mxu0
        %v5023 = vadd.f32 0.0, %v5022
        %v5024 = vpop.f32.mrb[0].mxu0
        %v5025 = vadd.f32 0.0, %v5024
        %v5026 = vpop.f32.mrb[0].mxu0
        %v5027 = vadd.f32 0.0, %v5026
        %v5028 = vpop.f32.mrb[0].mxu0
        %v5029 = vadd.f32 0.0, %v5028
        %5030 = vdwg.mxu0
        %v5031 = vadd.f32 %v4629, %v4873
        %v5032 = vadd.f32 %v4630, %v4875
        %v5033 = vadd.f32 %v4631, %v4877
        %v5034 = vadd.f32 %v4632, %v4879
        %v5035 = vadd.f32 %v4633, %v4883
        %v5036 = vadd.f32 %v4634, %v4885
        %v5037 = vadd.f32 %v4635, %v4887
        %v5038 = vadd.f32 %v4636, %v4889
        %v5039 = vadd.f32 %v4637, %v4893
        %v5040 = vadd.f32 %v4638, %v4895
        %v5041 = vadd.f32 %v4639, %v4897
        %v5042 = vadd.f32 %v4640, %v4899
        %v5043 = vadd.f32 %v4641, %v4903
        %v5044 = vadd.f32 %v4642, %v4905
        %v5045 = vadd.f32 %v4643, %v4907
        %v5046 = vadd.f32 %v4644, %v4909
        %v5047 = vadd.f32 %v4645, %v4913
        %v5048 = vadd.f32 %v4646, %v4915
        %v5049 = vadd.f32 %v4647, %v4917
        %v5050 = vadd.f32 %v4648, %v4919
        %v5051 = vadd.f32 %v4649, %v4923
        %v5052 = vadd.f32 %v4650, %v4925
        %v5053 = vadd.f32 %v4651, %v4927
        %v5054 = vadd.f32 %v4652, %v4929
        %v5055 = vadd.f32 %v4653, %v4933
        %v5056 = vadd.f32 %v4654, %v4935
        %v5057 = vadd.f32 %v4655, %v4937
        %v5058 = vadd.f32 %v4656, %v4939
        %v5059 = vadd.f32 %v4657, %v4943
        %v5060 = vadd.f32 %v4658, %v4945
        %v5061 = vadd.f32 %v4659, %v4947
        %v5062 = vadd.f32 %v4660, %v4949
        %v5063 = vadd.f32 %v4661, %v4953
        %v5064 = vadd.f32 %v4662, %v4955
        %v5065 = vadd.f32 %v4663, %v4957
        %v5066 = vadd.f32 %v4664, %v4959
        %v5067 = vadd.f32 %v4665, %v4963
        %v5068 = vadd.f32 %v4666, %v4965
        %v5069 = vadd.f32 %v4667, %v4967
        %v5070 = vadd.f32 %v4668, %v4969
        %v5071 = vadd.f32 %v4669, %v4973
        %v5072 = vadd.f32 %v4670, %v4975
        %v5073 = vadd.f32 %v4671, %v4977
        %v5074 = vadd.f32 %v4672, %v4979
        %v5075 = vadd.f32 %v4673, %v4983
        %v5076 = vadd.f32 %v4674, %v4985
        %v5077 = vadd.f32 %v4675, %v4987
        %v5078 = vadd.f32 %v4676, %v4989
        %v5079 = vadd.f32 %v4677, %v4993
        %v5080 = vadd.f32 %v4678, %v4995
        %v5081 = vadd.f32 %v4679, %v4997
        %v5082 = vadd.f32 %v4680, %v4999
        %v5083 = vadd.f32 %v4681, %v5003
        %v5084 = vadd.f32 %v4682, %v5005
        %v5085 = vadd.f32 %v4683, %v5007
        %v5086 = vadd.f32 %v4684, %v5009
        %v5087 = vadd.f32 %v4685, %v5013
        %v5088 = vadd.f32 %v4686, %v5015
        %v5089 = vadd.f32 %v4687, %v5017
        %v5090 = vadd.f32 %v4688, %v5019
        %v5091 = vadd.f32 %v4689, %v5023
        %v5092 = vadd.f32 %v4690, %v5025
        %v5093 = vadd.f32 %v4691, %v5027
        %v5094 = vadd.f32 %v4692, %v5029
        %v5095 = vld [vmem:[%s3181 + $0x2] sm:$0xff]
        %v5096 = vld [vmem:[%s3181 + $0xa] sm:$0xff]
        %v5097 = vld [vmem:[%s3181 + $0x1a] sm:$0xff]
        %v5098 = vld [vmem:[%s3181 + $0x22] sm:$0xff]
        %v5099 = vld [vmem:[%s3181 + $0x32] sm:$0xff]
        %v5100 = vld [vmem:[%s3181 + $0x3a] sm:$0xff]
        %v5101 = vld [vmem:[%s3181 + $0x4a] sm:$0xff]
        %v5102 = vld [vmem:[%s3181 + $0x52] sm:$0xff]
        %v5103 = vld [vmem:[%s3181 + $0x62] sm:$0xff]
        %v5104 = vld [vmem:[%s3181 + $0x6a] sm:$0xff]
        %v5105 = vld [vmem:[%s3181 + $0x7a] sm:$0xff]
        %v5106 = vld [vmem:[%s3181 + $0x82] sm:$0xff]
        %v5107 = vld [vmem:[%s3181 + $0x92] sm:$0xff]
        %v5108 = vld [vmem:[%s3181 + $0x9a] sm:$0xff]
        %v5109 = vld [vmem:[%s3181 + $0xaa] sm:$0xff]
        %v5110 = vld [vmem:[%s3181 + $0xb2] sm:$0xff]
        %v5111 = vld [vmem:[%s3181 + $0xc2] sm:$0xff]
        %v5112 = vld [vmem:[%s3181 + $0xca] sm:$0xff]
        %v5113 = vld [vmem:[%s3181 + $0xda] sm:$0xff]
        %v5114 = vld [vmem:[%s3181 + $0xe2] sm:$0xff]
        %v5115 = vld [vmem:[%s3181 + $0xf2] sm:$0xff]
        %v5116 = vld [vmem:[%s3181 + $0xfa] sm:$0xff]
        %v5117 = vld [vmem:[%s3181 + $0x10a] sm:$0xff]
        %v5118 = vld [vmem:[%s3181 + $0x112] sm:$0xff]
        %v5119 = vld [vmem:[%s3181 + $0x122] sm:$0xff]
        %v5120 = vld [vmem:[%s3181 + $0x12a] sm:$0xff]
        %v5121 = vld [vmem:[%s3181 + $0x13a] sm:$0xff]
        %v5122 = vld [vmem:[%s3181 + $0x142] sm:$0xff]
        %v5123 = vld [vmem:[%s3181 + $0x152] sm:$0xff]
        %v5124 = vld [vmem:[%s3181 + $0x15a] sm:$0xff]
        %v5125 = vld [vmem:[%s3181 + $0x16a] sm:$0xff]
        %v5126 = vld [vmem:[%s3181 + $0x172] sm:$0xff]
        %v5127 = vpack.c.bf16 %v5096, %v5095
        %v5128 = vpack.c.bf16 %v5098, %v5097
        %v5129 = vpack.c.bf16 %v5100, %v5099
        %v5130 = vpack.c.bf16 %v5102, %v5101
        %v5131 = vpack.c.bf16 %v5104, %v5103
        %v5132 = vpack.c.bf16 %v5106, %v5105
        %v5133 = vpack.c.bf16 %v5108, %v5107
        %v5134 = vpack.c.bf16 %v5110, %v5109
        %v5135 = vpack.c.bf16 %v5112, %v5111
        %v5136 = vpack.c.bf16 %v5114, %v5113
        %v5137 = vpack.c.bf16 %v5116, %v5115
        %v5138 = vpack.c.bf16 %v5118, %v5117
        %v5139 = vpack.c.bf16 %v5120, %v5119
        %v5140 = vpack.c.bf16 %v5122, %v5121
        %v5141 = vpack.c.bf16 %v5124, %v5123
        %v5142 = vpack.c.bf16 %v5126, %v5125
        %s5143 = scalar_lea.vmem [#allocation4], 640
        %v5144 = vld [vmem:[%s5143] sm:$0xff]
        %v5145 = vld [vmem:[%s5143 + $0x8] sm:$0xff]
        %v5146 = vld [vmem:[%s5143 + $0x10] sm:$0xff]
        %v5147 = vld [vmem:[%s5143 + $0x18] sm:$0xff]
        %v5148 = vld [vmem:[%s5143 + $0x20] sm:$0xff]
        %v5149 = vld [vmem:[%s5143 + $0x28] sm:$0xff]
        %v5150 = vld [vmem:[%s5143 + $0x30] sm:$0xff]
        %v5151 = vld [vmem:[%s5143 + $0x38] sm:$0xff]
        %v5152 = vld [vmem:[%s5143 + $0x40] sm:$0xff]
        %v5153 = vld [vmem:[%s5143 + $0x48] sm:$0xff]
        %v5154 = vld [vmem:[%s5143 + $0x50] sm:$0xff]
        %v5155 = vld [vmem:[%s5143 + $0x58] sm:$0xff]
        %v5156 = vld [vmem:[%s5143 + $0x60] sm:$0xff]
        %v5157 = vld [vmem:[%s5143 + $0x68] sm:$0xff]
        %v5158 = vld [vmem:[%s5143 + $0x70] sm:$0xff]
        %v5159 = vld [vmem:[%s5143 + $0x78] sm:$0xff]
        %v5176 = vunpack.c.l.b16 %v5144
        %v5177 = vunpack.c.h.b16 %v5144
        %v5178 = vunpack.c.l.b16 %v5145
        %v5179 = vunpack.c.h.b16 %v5145
        %v5180 = vunpack.c.l.b16 %v5146
        %v5181 = vunpack.c.h.b16 %v5146
        %v5182 = vunpack.c.l.b16 %v5147
        %v5183 = vunpack.c.h.b16 %v5147
        %v5184 = vunpack.c.l.b16 %v5148
        %v5185 = vunpack.c.h.b16 %v5148
        %v5186 = vunpack.c.l.b16 %v5149
        %v5187 = vunpack.c.h.b16 %v5149
        %v5188 = vunpack.c.l.b16 %v5150
        %v5189 = vunpack.c.h.b16 %v5150
        %v5190 = vunpack.c.l.b16 %v5151
        %v5191 = vunpack.c.h.b16 %v5151
        %v5192 = vunpack.c.l.b16 %v5152
        %v5193 = vunpack.c.h.b16 %v5152
        %v5194 = vunpack.c.l.b16 %v5153
        %v5195 = vunpack.c.h.b16 %v5153
        %v5196 = vunpack.c.l.b16 %v5154
        %v5197 = vunpack.c.h.b16 %v5154
        %v5198 = vunpack.c.l.b16 %v5155
        %v5199 = vunpack.c.h.b16 %v5155
        %v5200 = vunpack.c.l.b16 %v5156
        %v5201 = vunpack.c.h.b16 %v5156
        %v5202 = vunpack.c.l.b16 %v5157
        %v5203 = vunpack.c.h.b16 %v5157
        %v5204 = vunpack.c.l.b16 %v5158
        %v5205 = vunpack.c.h.b16 %v5158
        %v5206 = vunpack.c.l.b16 %v5159
        %v5207 = vunpack.c.h.b16 %v5159
        %v5208 = vpack.c.b16 %v5178, %v5176
        %v5209 = vpack.c.b16 %v5179, %v5177
        %v5210 = vpack.c.b16 %v5182, %v5180
        %v5211 = vpack.c.b16 %v5183, %v5181
        %v5212 = vpack.c.b16 %v5186, %v5184
        %v5213 = vpack.c.b16 %v5187, %v5185
        %v5214 = vpack.c.b16 %v5190, %v5188
        %v5215 = vpack.c.b16 %v5191, %v5189
        %v5216 = vpack.c.b16 %v5194, %v5192
        %v5217 = vpack.c.b16 %v5195, %v5193
        %v5218 = vpack.c.b16 %v5198, %v5196
        %v5219 = vpack.c.b16 %v5199, %v5197
        %v5220 = vpack.c.b16 %v5202, %v5200
        %v5221 = vpack.c.b16 %v5203, %v5201
        %v5222 = vpack.c.b16 %v5206, %v5204
        %v5223 = vpack.c.b16 %v5207, %v5205
        %5240 = vmatprep.subr.bf16.mxu0 %v5209
        %5241 = vmatpush1.bf16.msra.mxu0 %v5208
        %5242 = vmatprep.subr.bf16.mxu0 %v5211
        %5243 = vmatpush1.bf16.msra.mxu0 %v5210
        %5244 = vmatprep.subr.bf16.mxu0 %v5213
        %5245 = vmatpush1.bf16.msra.mxu0 %v5212
        %5246 = vmatprep.subr.bf16.mxu0 %v5215
        %5247 = vmatpush1.bf16.msra.mxu0 %v5214
        %5248 = vmatprep.subr.bf16.mxu0 %v5217
        %5249 = vmatpush1.bf16.msra.mxu0 %v5216
        %5250 = vmatprep.subr.bf16.mxu0 %v5219
        %5251 = vmatpush1.bf16.msra.mxu0 %v5218
        %5252 = vmatprep.subr.bf16.mxu0 %v5221
        %5253 = vmatpush1.bf16.msra.mxu0 %v5220
        %5254 = vmatprep.subr.bf16.mxu0 %v5223
        %5255 = vmatpush1.bf16.msra.mxu0 %v5222
        %5256 = vmatprep.subr.bf16.mxu0 0
        %5257 = vmatpush1.bf16.msra.mxu0 0
        %5258 = vmatprep.subr.bf16.mxu0 0
        %5259 = vmatpush1.bf16.msra.mxu0 0
        %5260 = vmatprep.subr.bf16.mxu0 0
        %5261 = vmatpush1.bf16.msra.mxu0 0
        %5262 = vmatprep.subr.bf16.mxu0 0
        %5263 = vmatpush1.bf16.msra.mxu0 0
        %5264 = vmatprep.subr.bf16.mxu0 0
        %5265 = vmatpush1.bf16.msra.mxu0 0
        %5266 = vmatprep.subr.bf16.mxu0 0
        %5267 = vmatpush1.bf16.msra.mxu0 0
        %5268 = vmatprep.subr.bf16.mxu0 0
        %5269 = vmatpush1.bf16.msra.mxu0 0
        %5270 = vmatprep.subr.bf16.mxu0 0
        %5271 = vmatpush1.bf16.msra.mxu0 0
        %5272 = vmatprep.mubr.bf16.mxu0 0
        %5273 = vmatmul.mubr.bf16.gmra.mrb[0].mxu0 %v5127
        %v5274 = vpop.f32.mrb[0].mxu0
        %v5275 = vadd.f32 0.0, %v5274
        %v5276 = vpop.f32.mrb[0].mxu0
        %v5277 = vadd.f32 0.0, %v5276
        %v5278 = vpop.f32.mrb[0].mxu0
        %v5279 = vadd.f32 0.0, %v5278
        %v5280 = vpop.f32.mrb[0].mxu0
        %v5281 = vadd.f32 0.0, %v5280
        %5282 = vmatprep.mubr.bf16.mxu0 0
        %5283 = vmatmul.mubr.bf16.gmra.mrb[0].mxu0 %v5128
        %v5284 = vpop.f32.mrb[0].mxu0
        %v5285 = vadd.f32 0.0, %v5284
        %v5286 = vpop.f32.mrb[0].mxu0
        %v5287 = vadd.f32 0.0, %v5286
        %v5288 = vpop.f32.mrb[0].mxu0
        %v5289 = vadd.f32 0.0, %v5288
        %v5290 = vpop.f32.mrb[0].mxu0
        %v5291 = vadd.f32 0.0, %v5290
        %5292 = vmatprep.mubr.bf16.mxu0 0
        %5293 = vmatmul.mubr.bf16.gmra.mrb[0].mxu0 %v5129
        %v5294 = vpop.f32.mrb[0].mxu0
        %v5295 = vadd.f32 0.0, %v5294
        %v5296 = vpop.f32.mrb[0].mxu0
        %v5297 = vadd.f32 0.0, %v5296
        %v5298 = vpop.f32.mrb[0].mxu0
        %v5299 = vadd.f32 0.0, %v5298
        %v5300 = vpop.f32.mrb[0].mxu0
        %v5301 = vadd.f32 0.0, %v5300
        %5302 = vmatprep.mubr.bf16.mxu0 0
        %5303 = vmatmul.mubr.bf16.gmra.mrb[0].mxu0 %v5130
        %v5304 = vpop.f32.mrb[0].mxu0
        %v5305 = vadd.f32 0.0, %v5304
        %v5306 = vpop.f32.mrb[0].mxu0
        %v5307 = vadd.f32 0.0, %v5306
        %v5308 = vpop.f32.mrb[0].mxu0
        %v5309 = vadd.f32 0.0, %v5308
        %v5310 = vpop.f32.mrb[0].mxu0
        %v5311 = vadd.f32 0.0, %v5310
        %5312 = vmatprep.mubr.bf16.mxu0 0
        %5313 = vmatmul.mubr.bf16.gmra.mrb[0].mxu0 %v5131
        %v5314 = vpop.f32.mrb[0].mxu0
        %v5315 = vadd.f32 0.0, %v5314
        %v5316 = vpop.f32.mrb[0].mxu0
        %v5317 = vadd.f32 0.0, %v5316
        %v5318 = vpop.f32.mrb[0].mxu0
        %v5319 = vadd.f32 0.0, %v5318
        %v5320 = vpop.f32.mrb[0].mxu0
        %v5321 = vadd.f32 0.0, %v5320
        %5322 = vmatprep.mubr.bf16.mxu0 0
        %5323 = vmatmul.mubr.bf16.gmra.mrb[0].mxu0 %v5132
        %v5324 = vpop.f32.mrb[0].mxu0
        %v5325 = vadd.f32 0.0, %v5324
        %v5326 = vpop.f32.mrb[0].mxu0
        %v5327 = vadd.f32 0.0, %v5326
        %v5328 = vpop.f32.mrb[0].mxu0
        %v5329 = vadd.f32 0.0, %v5328
        %v5330 = vpop.f32.mrb[0].mxu0
        %v5331 = vadd.f32 0.0, %v5330
        %5332 = vmatprep.mubr.bf16.mxu0 0
        %5333 = vmatmul.mubr.bf16.gmra.mrb[0].mxu0 %v5133
        %v5334 = vpop.f32.mrb[0].mxu0
        %v5335 = vadd.f32 0.0, %v5334
        %v5336 = vpop.f32.mrb[0].mxu0
        %v5337 = vadd.f32 0.0, %v5336
        %v5338 = vpop.f32.mrb[0].mxu0
        %v5339 = vadd.f32 0.0, %v5338
        %v5340 = vpop.f32.mrb[0].mxu0
        %v5341 = vadd.f32 0.0, %v5340
        %5342 = vmatprep.mubr.bf16.mxu0 0
        %5343 = vmatmul.mubr.bf16.gmra.mrb[0].mxu0 %v5134
        %v5344 = vpop.f32.mrb[0].mxu0
        %v5345 = vadd.f32 0.0, %v5344
        %v5346 = vpop.f32.mrb[0].mxu0
        %v5347 = vadd.f32 0.0, %v5346
        %v5348 = vpop.f32.mrb[0].mxu0
        %v5349 = vadd.f32 0.0, %v5348
        %v5350 = vpop.f32.mrb[0].mxu0
        %v5351 = vadd.f32 0.0, %v5350
        %5352 = vmatprep.mubr.bf16.mxu0 0
        %5353 = vmatmul.mubr.bf16.gmra.mrb[0].mxu0 %v5135
        %v5354 = vpop.f32.mrb[0].mxu0
        %v5355 = vadd.f32 0.0, %v5354
        %v5356 = vpop.f32.mrb[0].mxu0
        %v5357 = vadd.f32 0.0, %v5356
        %v5358 = vpop.f32.mrb[0].mxu0
        %v5359 = vadd.f32 0.0, %v5358
        %v5360 = vpop.f32.mrb[0].mxu0
        %v5361 = vadd.f32 0.0, %v5360
        %5362 = vmatprep.mubr.bf16.mxu0 0
        %5363 = vmatmul.mubr.bf16.gmra.mrb[0].mxu0 %v5136
        %v5364 = vpop.f32.mrb[0].mxu0
        %v5365 = vadd.f32 0.0, %v5364
        %v5366 = vpop.f32.mrb[0].mxu0
        %v5367 = vadd.f32 0.0, %v5366
        %v5368 = vpop.f32.mrb[0].mxu0
        %v5369 = vadd.f32 0.0, %v5368
        %v5370 = vpop.f32.mrb[0].mxu0
        %v5371 = vadd.f32 0.0, %v5370
        %5372 = vmatprep.mubr.bf16.mxu0 0
        %5373 = vmatmul.mubr.bf16.gmra.mrb[0].mxu0 %v5137
        %v5374 = vpop.f32.mrb[0].mxu0
        %v5375 = vadd.f32 0.0, %v5374
        %v5376 = vpop.f32.mrb[0].mxu0
        %v5377 = vadd.f32 0.0, %v5376
        %v5378 = vpop.f32.mrb[0].mxu0
        %v5379 = vadd.f32 0.0, %v5378
        %v5380 = vpop.f32.mrb[0].mxu0
        %v5381 = vadd.f32 0.0, %v5380
        %5382 = vmatprep.mubr.bf16.mxu0 0
        %5383 = vmatmul.mubr.bf16.gmra.mrb[0].mxu0 %v5138
        %v5384 = vpop.f32.mrb[0].mxu0
        %v5385 = vadd.f32 0.0, %v5384
        %v5386 = vpop.f32.mrb[0].mxu0
        %v5387 = vadd.f32 0.0, %v5386
        %v5388 = vpop.f32.mrb[0].mxu0
        %v5389 = vadd.f32 0.0, %v5388
        %v5390 = vpop.f32.mrb[0].mxu0
        %v5391 = vadd.f32 0.0, %v5390
        %5392 = vmatprep.mubr.bf16.mxu0 0
        %5393 = vmatmul.mubr.bf16.gmra.mrb[0].mxu0 %v5139
        %v5394 = vpop.f32.mrb[0].mxu0
        %v5395 = vadd.f32 0.0, %v5394
        %v5396 = vpop.f32.mrb[0].mxu0
        %v5397 = vadd.f32 0.0, %v5396
        %v5398 = vpop.f32.mrb[0].mxu0
        %v5399 = vadd.f32 0.0, %v5398
        %v5400 = vpop.f32.mrb[0].mxu0
        %v5401 = vadd.f32 0.0, %v5400
        %5402 = vmatprep.mubr.bf16.mxu0 0
        %5403 = vmatmul.mubr.bf16.gmra.mrb[0].mxu0 %v5140
        %v5404 = vpop.f32.mrb[0].mxu0
        %v5405 = vadd.f32 0.0, %v5404
        %v5406 = vpop.f32.mrb[0].mxu0
        %v5407 = vadd.f32 0.0, %v5406
        %v5408 = vpop.f32.mrb[0].mxu0
        %v5409 = vadd.f32 0.0, %v5408
        %v5410 = vpop.f32.mrb[0].mxu0
        %v5411 = vadd.f32 0.0, %v5410
        %5412 = vmatprep.mubr.bf16.mxu0 0
        %5413 = vmatmul.mubr.bf16.gmra.mrb[0].mxu0 %v5141
        %v5414 = vpop.f32.mrb[0].mxu0
        %v5415 = vadd.f32 0.0, %v5414
        %v5416 = vpop.f32.mrb[0].mxu0
        %v5417 = vadd.f32 0.0, %v5416
        %v5418 = vpop.f32.mrb[0].mxu0
        %v5419 = vadd.f32 0.0, %v5418
        %v5420 = vpop.f32.mrb[0].mxu0
        %v5421 = vadd.f32 0.0, %v5420
        %5422 = vmatprep.mubr.bf16.mxu0 0
        %5423 = vmatmul.mubr.bf16.gmra.mrb[0].mxu0 %v5142
        %v5424 = vpop.f32.mrb[0].mxu0
        %v5425 = vadd.f32 0.0, %v5424
        %v5426 = vpop.f32.mrb[0].mxu0
        %v5427 = vadd.f32 0.0, %v5426
        %v5428 = vpop.f32.mrb[0].mxu0
        %v5429 = vadd.f32 0.0, %v5428
        %v5430 = vpop.f32.mrb[0].mxu0
        %v5431 = vadd.f32 0.0, %v5430
        %5432 = vdwg.mxu0
        %v5433 = vadd.f32 %v5031, %v5275
        %v5434 = vadd.f32 %v5032, %v5277
        %v5435 = vadd.f32 %v5033, %v5279
        %v5436 = vadd.f32 %v5034, %v5281
        %v5437 = vadd.f32 %v5035, %v5285
        %v5438 = vadd.f32 %v5036, %v5287
        %v5439 = vadd.f32 %v5037, %v5289
        %v5440 = vadd.f32 %v5038, %v5291
        %v5441 = vadd.f32 %v5039, %v5295
        %v5442 = vadd.f32 %v5040, %v5297
        %v5443 = vadd.f32 %v5041, %v5299
        %v5444 = vadd.f32 %v5042, %v5301
        %v5445 = vadd.f32 %v5043, %v5305
        %v5446 = vadd.f32 %v5044, %v5307
        %v5447 = vadd.f32 %v5045, %v5309
        %v5448 = vadd.f32 %v5046, %v5311
        %v5449 = vadd.f32 %v5047, %v5315
        %v5450 = vadd.f32 %v5048, %v5317
        %v5451 = vadd.f32 %v5049, %v5319
        %v5452 = vadd.f32 %v5050, %v5321
        %v5453 = vadd.f32 %v5051, %v5325
        %v5454 = vadd.f32 %v5052, %v5327
        %v5455 = vadd.f32 %v5053, %v5329
        %v5456 = vadd.f32 %v5054, %v5331
        %v5457 = vadd.f32 %v5055, %v5335
        %v5458 = vadd.f32 %v5056, %v5337
        %v5459 = vadd.f32 %v5057, %v5339
        %v5460 = vadd.f32 %v5058, %v5341
        %v5461 = vadd.f32 %v5059, %v5345
        %v5462 = vadd.f32 %v5060, %v5347
        %v5463 = vadd.f32 %v5061, %v5349
        %v5464 = vadd.f32 %v5062, %v5351
        %v5465 = vadd.f32 %v5063, %v5355
        %v5466 = vadd.f32 %v5064, %v5357
        %v5467 = vadd.f32 %v5065, %v5359
        %v5468 = vadd.f32 %v5066, %v5361
        %v5469 = vadd.f32 %v5067, %v5365
        %v5470 = vadd.f32 %v5068, %v5367
        %v5471 = vadd.f32 %v5069, %v5369
        %v5472 = vadd.f32 %v5070, %v5371
        %v5473 = vadd.f32 %v5071, %v5375
        %v5474 = vadd.f32 %v5072, %v5377
        %v5475 = vadd.f32 %v5073, %v5379
        %v5476 = vadd.f32 %v5074, %v5381
        %v5477 = vadd.f32 %v5075, %v5385
        %v5478 = vadd.f32 %v5076, %v5387
        %v5479 = vadd.f32 %v5077, %v5389
        %v5480 = vadd.f32 %v5078, %v5391
        %v5481 = vadd.f32 %v5079, %v5395
        %v5482 = vadd.f32 %v5080, %v5397
        %v5483 = vadd.f32 %v5081, %v5399
        %v5484 = vadd.f32 %v5082, %v5401
        %v5485 = vadd.f32 %v5083, %v5405
        %v5486 = vadd.f32 %v5084, %v5407
        %v5487 = vadd.f32 %v5085, %v5409
        %v5488 = vadd.f32 %v5086, %v5411
        %v5489 = vadd.f32 %v5087, %v5415
        %v5490 = vadd.f32 %v5088, %v5417
        %v5491 = vadd.f32 %v5089, %v5419
        %v5492 = vadd.f32 %v5090, %v5421
        %v5493 = vadd.f32 %v5091, %v5425
        %v5494 = vadd.f32 %v5092, %v5427
        %v5495 = vadd.f32 %v5093, %v5429
        %v5496 = vadd.f32 %v5094, %v5431
        %s5497 = scalar_lea.vmem [#allocation3], 48
        %v5498 = vld [vmem:[%s5497] sm:$0xff]
        %v5499 = vld [vmem:[%s5497 + $0x8] sm:$0xff]
        %v5500 = vld [vmem:[%s5497 + $0x18] sm:$0xff]
        %v5501 = vld [vmem:[%s5497 + $0x20] sm:$0xff]
        %v5502 = vld [vmem:[%s5497 + $0x30] sm:$0xff]
        %v5503 = vld [vmem:[%s5497 + $0x38] sm:$0xff]
        %v5504 = vld [vmem:[%s5497 + $0x48] sm:$0xff]
        %v5505 = vld [vmem:[%s5497 + $0x50] sm:$0xff]
        %v5506 = vld [vmem:[%s5497 + $0x60] sm:$0xff]
        %v5507 = vld [vmem:[%s5497 + $0x68] sm:$0xff]
        %v5508 = vld [vmem:[%s5497 + $0x78] sm:$0xff]
        %v5509 = vld [vmem:[%s5497 + $0x80] sm:$0xff]
        %v5510 = vld [vmem:[%s5497 + $0x90] sm:$0xff]
        %v5511 = vld [vmem:[%s5497 + $0x98] sm:$0xff]
        %v5512 = vld [vmem:[%s5497 + $0xa8] sm:$0xff]
        %v5513 = vld [vmem:[%s5497 + $0xb0] sm:$0xff]
        %v5514 = vld [vmem:[%s5497 + $0xc0] sm:$0xff]
        %v5515 = vld [vmem:[%s5497 + $0xc8] sm:$0xff]
        %v5516 = vld [vmem:[%s5497 + $0xd8] sm:$0xff]
        %v5517 = vld [vmem:[%s5497 + $0xe0] sm:$0xff]
        %v5518 = vld [vmem:[%s5497 + $0xf0] sm:$0xff]
        %v5519 = vld [vmem:[%s5497 + $0xf8] sm:$0xff]
        %v5520 = vld [vmem:[%s5497 + $0x108] sm:$0xff]
        %v5521 = vld [vmem:[%s5497 + $0x110] sm:$0xff]
        %v5522 = vld [vmem:[%s5497 + $0x120] sm:$0xff]
        %v5523 = vld [vmem:[%s5497 + $0x128] sm:$0xff]
        %v5524 = vld [vmem:[%s5497 + $0x138] sm:$0xff]
        %v5525 = vld [vmem:[%s5497 + $0x140] sm:$0xff]
        %v5526 = vld [vmem:[%s5497 + $0x150] sm:$0xff]
        %v5527 = vld [vmem:[%s5497 + $0x158] sm:$0xff]
        %v5528 = vld [vmem:[%s5497 + $0x168] sm:$0xff]
        %v5529 = vld [vmem:[%s5497 + $0x170] sm:$0xff]
        %v5530 = vpack.c.bf16 %v5499, %v5498
        %v5531 = vpack.c.bf16 %v5501, %v5500
        %v5532 = vpack.c.bf16 %v5503, %v5502
        %v5533 = vpack.c.bf16 %v5505, %v5504
        %v5534 = vpack.c.bf16 %v5507, %v5506
        %v5535 = vpack.c.bf16 %v5509, %v5508
        %v5536 = vpack.c.bf16 %v5511, %v5510
        %v5537 = vpack.c.bf16 %v5513, %v5512
        %v5538 = vpack.c.bf16 %v5515, %v5514
        %v5539 = vpack.c.bf16 %v5517, %v5516
        %v5540 = vpack.c.bf16 %v5519, %v5518
        %v5541 = vpack.c.bf16 %v5521, %v5520
        %v5542 = vpack.c.bf16 %v5523, %v5522
        %v5543 = vpack.c.bf16 %v5525, %v5524
        %v5544 = vpack.c.bf16 %v5527, %v5526
        %v5545 = vpack.c.bf16 %v5529, %v5528
        %s5546 = scalar_lea.vmem [#allocation4], 768
        %v5547 = vld [vmem:[%s5546] sm:$0xff]
        %v5548 = vld [vmem:[%s5546 + $0x8] sm:$0xff]
        %v5549 = vld [vmem:[%s5546 + $0x10] sm:$0xff]
        %v5550 = vld [vmem:[%s5546 + $0x18] sm:$0xff]
        %v5551 = vld [vmem:[%s5546 + $0x20] sm:$0xff]
        %v5552 = vld [vmem:[%s5546 + $0x28] sm:$0xff]
        %v5553 = vld [vmem:[%s5546 + $0x30] sm:$0xff]
        %v5554 = vld [vmem:[%s5546 + $0x38] sm:$0xff]
        %v5555 = vld [vmem:[%s5546 + $0x40] sm:$0xff]
        %v5556 = vld [vmem:[%s5546 + $0x48] sm:$0xff]
        %v5557 = vld [vmem:[%s5546 + $0x50] sm:$0xff]
        %v5558 = vld [vmem:[%s5546 + $0x58] sm:$0xff]
        %v5559 = vld [vmem:[%s5546 + $0x60] sm:$0xff]
        %v5560 = vld [vmem:[%s5546 + $0x68] sm:$0xff]
        %v5561 = vld [vmem:[%s5546 + $0x70] sm:$0xff]
        %v5562 = vld [vmem:[%s5546 + $0x78] sm:$0xff]
        %v5579 = vunpack.c.l.b16 %v5547
        %v5580 = vunpack.c.h.b16 %v5547
        %v5581 = vunpack.c.l.b16 %v5548
        %v5582 = vunpack.c.h.b16 %v5548
        %v5583 = vunpack.c.l.b16 %v5549
        %v5584 = vunpack.c.h.b16 %v5549
        %v5585 = vunpack.c.l.b16 %v5550
        %v5586 = vunpack.c.h.b16 %v5550
        %v5587 = vunpack.c.l.b16 %v5551
        %v5588 = vunpack.c.h.b16 %v5551
        %v5589 = vunpack.c.l.b16 %v5552
        %v5590 = vunpack.c.h.b16 %v5552
        %v5591 = vunpack.c.l.b16 %v5553
        %v5592 = vunpack.c.h.b16 %v5553
        %v5593 = vunpack.c.l.b16 %v5554
        %v5594 = vunpack.c.h.b16 %v5554
        %v5595 = vunpack.c.l.b16 %v5555
        %v5596 = vunpack.c.h.b16 %v5555
        %v5597 = vunpack.c.l.b16 %v5556
        %v5598 = vunpack.c.h.b16 %v5556
        %v5599 = vunpack.c.l.b16 %v5557
        %v5600 = vunpack.c.h.b16 %v5557
        %v5601 = vunpack.c.l.b16 %v5558
        %v5602 = vunpack.c.h.b16 %v5558
        %v5603 = vunpack.c.l.b16 %v5559
        %v5604 = vunpack.c.h.b16 %v5559
        %v5605 = vunpack.c.l.b16 %v5560
        %v5606 = vunpack.c.h.b16 %v5560
        %v5607 = vunpack.c.l.b16 %v5561
        %v5608 = vunpack.c.h.b16 %v5561
        %v5609 = vunpack.c.l.b16 %v5562
        %v5610 = vunpack.c.h.b16 %v5562
        %v5611 = vpack.c.b16 %v5581, %v5579
        %v5612 = vpack.c.b16 %v5582, %v5580
        %v5613 = vpack.c.b16 %v5585, %v5583
        %v5614 = vpack.c.b16 %v5586, %v5584
        %v5615 = vpack.c.b16 %v5589, %v5587
        %v5616 = vpack.c.b16 %v5590, %v5588
        %v5617 = vpack.c.b16 %v5593, %v5591
        %v5618 = vpack.c.b16 %v5594, %v5592
        %v5619 = vpack.c.b16 %v5597, %v5595
        %v5620 = vpack.c.b16 %v5598, %v5596
        %v5621 = vpack.c.b16 %v5601, %v5599
        %v5622 = vpack.c.b16 %v5602, %v5600
        %v5623 = vpack.c.b16 %v5605, %v5603
        %v5624 = vpack.c.b16 %v5606, %v5604
        %v5625 = vpack.c.b16 %v5609, %v5607
        %v5626 = vpack.c.b16 %v5610, %v5608
        %5643 = vmatprep.subr.bf16.mxu0 %v5612
        %5644 = vmatpush1.bf16.msra.mxu0 %v5611
        %5645 = vmatprep.subr.bf16.mxu0 %v5614
        %5646 = vmatpush1.bf16.msra.mxu0 %v5613
        %5647 = vmatprep.subr.bf16.mxu0 %v5616
        %5648 = vmatpush1.bf16.msra.mxu0 %v5615
        %5649 = vmatprep.subr.bf16.mxu0 %v5618
        %5650 = vmatpush1.bf16.msra.mxu0 %v5617
        %5651 = vmatprep.subr.bf16.mxu0 %v5620
        %5652 = vmatpush1.bf16.msra.mxu0 %v5619
        %5653 = vmatprep.subr.bf16.mxu0 %v5622
        %5654 = vmatpush1.bf16.msra.mxu0 %v5621
        %5655 = vmatprep.subr.bf16.mxu0 %v5624
        %5656 = vmatpush1.bf16.msra.mxu0 %v5623
        %5657 = vmatprep.subr.bf16.mxu0 %v5626
        %5658 = vmatpush1.bf16.msra.mxu0 %v5625
        %5659 = vmatprep.subr.bf16.mxu0 0
        %5660 = vmatpush1.bf16.msra.mxu0 0
        %5661 = vmatprep.subr.bf16.mxu0 0
        %5662 = vmatpush1.bf16.msra.mxu0 0
        %5663 = vmatprep.subr.bf16.mxu0 0
        %5664 = vmatpush1.bf16.msra.mxu0 0
        %5665 = vmatprep.subr.bf16.mxu0 0
        %5666 = vmatpush1.bf16.msra.mxu0 0
        %5667 = vmatprep.subr.bf16.mxu0 0
        %5668 = vmatpush1.bf16.msra.mxu0 0
        %5669 = vmatprep.subr.bf16.mxu0 0
        %5670 = vmatpush1.bf16.msra.mxu0 0
        %5671 = vmatprep.subr.bf16.mxu0 0
        %5672 = vmatpush1.bf16.msra.mxu0 0
        %5673 = vmatprep.subr.bf16.mxu0 0
        %5674 = vmatpush1.bf16.msra.mxu0 0
        %5675 = vmatprep.mubr.bf16.mxu0 0
        %5676 = vmatmul.mubr.bf16.gmra.mrb[0].mxu0 %v5530
        %v5677 = vpop.f32.mrb[0].mxu0
        %v5678 = vadd.f32 0.0, %v5677
        %v5679 = vpop.f32.mrb[0].mxu0
        %v5680 = vadd.f32 0.0, %v5679
        %v5681 = vpop.f32.mrb[0].mxu0
        %v5682 = vadd.f32 0.0, %v5681
        %v5683 = vpop.f32.mrb[0].mxu0
        %v5684 = vadd.f32 0.0, %v5683
        %5685 = vmatprep.mubr.bf16.mxu0 0
        %5686 = vmatmul.mubr.bf16.gmra.mrb[0].mxu0 %v5531
        %v5687 = vpop.f32.mrb[0].mxu0
        %v5688 = vadd.f32 0.0, %v5687
        %v5689 = vpop.f32.mrb[0].mxu0
        %v5690 = vadd.f32 0.0, %v5689
        %v5691 = vpop.f32.mrb[0].mxu0
        %v5692 = vadd.f32 0.0, %v5691
        %v5693 = vpop.f32.mrb[0].mxu0
        %v5694 = vadd.f32 0.0, %v5693
        %5695 = vmatprep.mubr.bf16.mxu0 0
        %5696 = vmatmul.mubr.bf16.gmra.mrb[0].mxu0 %v5532
        %v5697 = vpop.f32.mrb[0].mxu0
        %v5698 = vadd.f32 0.0, %v5697
        %v5699 = vpop.f32.mrb[0].mxu0
        %v5700 = vadd.f32 0.0, %v5699
        %v5701 = vpop.f32.mrb[0].mxu0
        %v5702 = vadd.f32 0.0, %v5701
        %v5703 = vpop.f32.mrb[0].mxu0
        %v5704 = vadd.f32 0.0, %v5703
        %5705 = vmatprep.mubr.bf16.mxu0 0
        %5706 = vmatmul.mubr.bf16.gmra.mrb[0].mxu0 %v5533
        %v5707 = vpop.f32.mrb[0].mxu0
        %v5708 = vadd.f32 0.0, %v5707
        %v5709 = vpop.f32.mrb[0].mxu0
        %v5710 = vadd.f32 0.0, %v5709
        %v5711 = vpop.f32.mrb[0].mxu0
        %v5712 = vadd.f32 0.0, %v5711
        %v5713 = vpop.f32.mrb[0].mxu0
        %v5714 = vadd.f32 0.0, %v5713
        %5715 = vmatprep.mubr.bf16.mxu0 0
        %5716 = vmatmul.mubr.bf16.gmra.mrb[0].mxu0 %v5534
        %v5717 = vpop.f32.mrb[0].mxu0
        %v5718 = vadd.f32 0.0, %v5717
        %v5719 = vpop.f32.mrb[0].mxu0
        %v5720 = vadd.f32 0.0, %v5719
        %v5721 = vpop.f32.mrb[0].mxu0
        %v5722 = vadd.f32 0.0, %v5721
        %v5723 = vpop.f32.mrb[0].mxu0
        %v5724 = vadd.f32 0.0, %v5723
        %5725 = vmatprep.mubr.bf16.mxu0 0
        %5726 = vmatmul.mubr.bf16.gmra.mrb[0].mxu0 %v5535
        %v5727 = vpop.f32.mrb[0].mxu0
        %v5728 = vadd.f32 0.0, %v5727
        %v5729 = vpop.f32.mrb[0].mxu0
        %v5730 = vadd.f32 0.0, %v5729
        %v5731 = vpop.f32.mrb[0].mxu0
        %v5732 = vadd.f32 0.0, %v5731
        %v5733 = vpop.f32.mrb[0].mxu0
        %v5734 = vadd.f32 0.0, %v5733
        %5735 = vmatprep.mubr.bf16.mxu0 0
        %5736 = vmatmul.mubr.bf16.gmra.mrb[0].mxu0 %v5536
        %v5737 = vpop.f32.mrb[0].mxu0
        %v5738 = vadd.f32 0.0, %v5737
        %v5739 = vpop.f32.mrb[0].mxu0
        %v5740 = vadd.f32 0.0, %v5739
        %v5741 = vpop.f32.mrb[0].mxu0
        %v5742 = vadd.f32 0.0, %v5741
        %v5743 = vpop.f32.mrb[0].mxu0
        %v5744 = vadd.f32 0.0, %v5743
        %5745 = vmatprep.mubr.bf16.mxu0 0
        %5746 = vmatmul.mubr.bf16.gmra.mrb[0].mxu0 %v5537
        %v5747 = vpop.f32.mrb[0].mxu0
        %v5748 = vadd.f32 0.0, %v5747
        %v5749 = vpop.f32.mrb[0].mxu0
        %v5750 = vadd.f32 0.0, %v5749
        %v5751 = vpop.f32.mrb[0].mxu0
        %v5752 = vadd.f32 0.0, %v5751
        %v5753 = vpop.f32.mrb[0].mxu0
        %v5754 = vadd.f32 0.0, %v5753
        %5755 = vmatprep.mubr.bf16.mxu0 0
        %5756 = vmatmul.mubr.bf16.gmra.mrb[0].mxu0 %v5538
        %v5757 = vpop.f32.mrb[0].mxu0
        %v5758 = vadd.f32 0.0, %v5757
        %v5759 = vpop.f32.mrb[0].mxu0
        %v5760 = vadd.f32 0.0, %v5759
        %v5761 = vpop.f32.mrb[0].mxu0
        %v5762 = vadd.f32 0.0, %v5761
        %v5763 = vpop.f32.mrb[0].mxu0
        %v5764 = vadd.f32 0.0, %v5763
        %5765 = vmatprep.mubr.bf16.mxu0 0
        %5766 = vmatmul.mubr.bf16.gmra.mrb[0].mxu0 %v5539
        %v5767 = vpop.f32.mrb[0].mxu0
        %v5768 = vadd.f32 0.0, %v5767
        %v5769 = vpop.f32.mrb[0].mxu0
        %v5770 = vadd.f32 0.0, %v5769
        %v5771 = vpop.f32.mrb[0].mxu0
        %v5772 = vadd.f32 0.0, %v5771
        %v5773 = vpop.f32.mrb[0].mxu0
        %v5774 = vadd.f32 0.0, %v5773
        %5775 = vmatprep.mubr.bf16.mxu0 0
        %5776 = vmatmul.mubr.bf16.gmra.mrb[0].mxu0 %v5540
        %v5777 = vpop.f32.mrb[0].mxu0
        %v5778 = vadd.f32 0.0, %v5777
        %v5779 = vpop.f32.mrb[0].mxu0
        %v5780 = vadd.f32 0.0, %v5779
        %v5781 = vpop.f32.mrb[0].mxu0
        %v5782 = vadd.f32 0.0, %v5781
        %v5783 = vpop.f32.mrb[0].mxu0
        %v5784 = vadd.f32 0.0, %v5783
        %5785 = vmatprep.mubr.bf16.mxu0 0
        %5786 = vmatmul.mubr.bf16.gmra.mrb[0].mxu0 %v5541
        %v5787 = vpop.f32.mrb[0].mxu0
        %v5788 = vadd.f32 0.0, %v5787
        %v5789 = vpop.f32.mrb[0].mxu0
        %v5790 = vadd.f32 0.0, %v5789
        %v5791 = vpop.f32.mrb[0].mxu0
        %v5792 = vadd.f32 0.0, %v5791
        %v5793 = vpop.f32.mrb[0].mxu0
        %v5794 = vadd.f32 0.0, %v5793
        %5795 = vmatprep.mubr.bf16.mxu0 0
        %5796 = vmatmul.mubr.bf16.gmra.mrb[0].mxu0 %v5542
        %v5797 = vpop.f32.mrb[0].mxu0
        %v5798 = vadd.f32 0.0, %v5797
        %v5799 = vpop.f32.mrb[0].mxu0
        %v5800 = vadd.f32 0.0, %v5799
        %v5801 = vpop.f32.mrb[0].mxu0
        %v5802 = vadd.f32 0.0, %v5801
        %v5803 = vpop.f32.mrb[0].mxu0
        %v5804 = vadd.f32 0.0, %v5803
        %5805 = vmatprep.mubr.bf16.mxu0 0
        %5806 = vmatmul.mubr.bf16.gmra.mrb[0].mxu0 %v5543
        %v5807 = vpop.f32.mrb[0].mxu0
        %v5808 = vadd.f32 0.0, %v5807
        %v5809 = vpop.f32.mrb[0].mxu0
        %v5810 = vadd.f32 0.0, %v5809
        %v5811 = vpop.f32.mrb[0].mxu0
        %v5812 = vadd.f32 0.0, %v5811
        %v5813 = vpop.f32.mrb[0].mxu0
        %v5814 = vadd.f32 0.0, %v5813
        %5815 = vmatprep.mubr.bf16.mxu0 0
        %5816 = vmatmul.mubr.bf16.gmra.mrb[0].mxu0 %v5544
        %v5817 = vpop.f32.mrb[0].mxu0
        %v5818 = vadd.f32 0.0, %v5817
        %v5819 = vpop.f32.mrb[0].mxu0
        %v5820 = vadd.f32 0.0, %v5819
        %v5821 = vpop.f32.mrb[0].mxu0
        %v5822 = vadd.f32 0.0, %v5821
        %v5823 = vpop.f32.mrb[0].mxu0
        %v5824 = vadd.f32 0.0, %v5823
        %5825 = vmatprep.mubr.bf16.mxu0 0
        %5826 = vmatmul.mubr.bf16.gmra.mrb[0].mxu0 %v5545
        %v5827 = vpop.f32.mrb[0].mxu0
        %v5828 = vadd.f32 0.0, %v5827
        %v5829 = vpop.f32.mrb[0].mxu0
        %v5830 = vadd.f32 0.0, %v5829
        %v5831 = vpop.f32.mrb[0].mxu0
        %v5832 = vadd.f32 0.0, %v5831
        %v5833 = vpop.f32.mrb[0].mxu0
        %v5834 = vadd.f32 0.0, %v5833
        %5835 = vdwg.mxu0
        %v5836 = vadd.f32 %v5433, %v5678
        %v5837 = vadd.f32 %v5434, %v5680
        %v5838 = vadd.f32 %v5435, %v5682
        %v5839 = vadd.f32 %v5436, %v5684
        %v5840 = vadd.f32 %v5437, %v5688
        %v5841 = vadd.f32 %v5438, %v5690
        %v5842 = vadd.f32 %v5439, %v5692
        %v5843 = vadd.f32 %v5440, %v5694
        %v5844 = vadd.f32 %v5441, %v5698
        %v5845 = vadd.f32 %v5442, %v5700
        %v5846 = vadd.f32 %v5443, %v5702
        %v5847 = vadd.f32 %v5444, %v5704
        %v5848 = vadd.f32 %v5445, %v5708
        %v5849 = vadd.f32 %v5446, %v5710
        %v5850 = vadd.f32 %v5447, %v5712
        %v5851 = vadd.f32 %v5448, %v5714
        %v5852 = vadd.f32 %v5449, %v5718
        %v5853 = vadd.f32 %v5450, %v5720
        %v5854 = vadd.f32 %v5451, %v5722
        %v5855 = vadd.f32 %v5452, %v5724
        %v5856 = vadd.f32 %v5453, %v5728
        %v5857 = vadd.f32 %v5454, %v5730
        %v5858 = vadd.f32 %v5455, %v5732
        %v5859 = vadd.f32 %v5456, %v5734
        %v5860 = vadd.f32 %v5457, %v5738
        %v5861 = vadd.f32 %v5458, %v5740
        %v5862 = vadd.f32 %v5459, %v5742
        %v5863 = vadd.f32 %v5460, %v5744
        %v5864 = vadd.f32 %v5461, %v5748
        %v5865 = vadd.f32 %v5462, %v5750
        %v5866 = vadd.f32 %v5463, %v5752
        %v5867 = vadd.f32 %v5464, %v5754
        %v5868 = vadd.f32 %v5465, %v5758
        %v5869 = vadd.f32 %v5466, %v5760
        %v5870 = vadd.f32 %v5467, %v5762
        %v5871 = vadd.f32 %v5468, %v5764
        %v5872 = vadd.f32 %v5469, %v5768
        %v5873 = vadd.f32 %v5470, %v5770
        %v5874 = vadd.f32 %v5471, %v5772
        %v5875 = vadd.f32 %v5472, %v5774
        %v5876 = vadd.f32 %v5473, %v5778
        %v5877 = vadd.f32 %v5474, %v5780
        %v5878 = vadd.f32 %v5475, %v5782
        %v5879 = vadd.f32 %v5476, %v5784
        %v5880 = vadd.f32 %v5477, %v5788
        %v5881 = vadd.f32 %v5478, %v5790
        %v5882 = vadd.f32 %v5479, %v5792
        %v5883 = vadd.f32 %v5480, %v5794
        %v5884 = vadd.f32 %v5481, %v5798
        %v5885 = vadd.f32 %v5482, %v5800
        %v5886 = vadd.f32 %v5483, %v5802
        %v5887 = vadd.f32 %v5484, %v5804
        %v5888 = vadd.f32 %v5485, %v5808
        %v5889 = vadd.f32 %v5486, %v5810
        %v5890 = vadd.f32 %v5487, %v5812
        %v5891 = vadd.f32 %v5488, %v5814
        %v5892 = vadd.f32 %v5489, %v5818
        %v5893 = vadd.f32 %v5490, %v5820
        %v5894 = vadd.f32 %v5491, %v5822
        %v5895 = vadd.f32 %v5492, %v5824
        %v5896 = vadd.f32 %v5493, %v5828
        %v5897 = vadd.f32 %v5494, %v5830
        %v5898 = vadd.f32 %v5495, %v5832
        %v5899 = vadd.f32 %v5496, %v5834
        %v5900 = vld [vmem:[%s5497 + $0x1] sm:$0xff]
        %v5901 = vld [vmem:[%s5497 + $0x9] sm:$0xff]
        %v5902 = vld [vmem:[%s5497 + $0x19] sm:$0xff]
        %v5903 = vld [vmem:[%s5497 + $0x21] sm:$0xff]
        %v5904 = vld [vmem:[%s5497 + $0x31] sm:$0xff]
        %v5905 = vld [vmem:[%s5497 + $0x39] sm:$0xff]
        %v5906 = vld [vmem:[%s5497 + $0x49] sm:$0xff]
        %v5907 = vld [vmem:[%s5497 + $0x51] sm:$0xff]
        %v5908 = vld [vmem:[%s5497 + $0x61] sm:$0xff]
        %v5909 = vld [vmem:[%s5497 + $0x69] sm:$0xff]
        %v5910 = vld [vmem:[%s5497 + $0x79] sm:$0xff]
        %v5911 = vld [vmem:[%s5497 + $0x81] sm:$0xff]
        %v5912 = vld [vmem:[%s5497 + $0x91] sm:$0xff]
        %v5913 = vld [vmem:[%s5497 + $0x99] sm:$0xff]
        %v5914 = vld [vmem:[%s5497 + $0xa9] sm:$0xff]
        %v5915 = vld [vmem:[%s5497 + $0xb1] sm:$0xff]
        %v5916 = vld [vmem:[%s5497 + $0xc1] sm:$0xff]
        %v5917 = vld [vmem:[%s5497 + $0xc9] sm:$0xff]
        %v5918 = vld [vmem:[%s5497 + $0xd9] sm:$0xff]
        %v5919 = vld [vmem:[%s5497 + $0xe1] sm:$0xff]
        %v5920 = vld [vmem:[%s5497 + $0xf1] sm:$0xff]
        %v5921 = vld [vmem:[%s5497 + $0xf9] sm:$0xff]
        %v5922 = vld [vmem:[%s5497 + $0x109] sm:$0xff]
        %v5923 = vld [vmem:[%s5497 + $0x111] sm:$0xff]
        %v5924 = vld [vmem:[%s5497 + $0x121] sm:$0xff]
        %v5925 = vld [vmem:[%s5497 + $0x129] sm:$0xff]
        %v5926 = vld [vmem:[%s5497 + $0x139] sm:$0xff]
        %v5927 = vld [vmem:[%s5497 + $0x141] sm:$0xff]
        %v5928 = vld [vmem:[%s5497 + $0x151] sm:$0xff]
        %v5929 = vld [vmem:[%s5497 + $0x159] sm:$0xff]
        %v5930 = vld [vmem:[%s5497 + $0x169] sm:$0xff]
        %v5931 = vld [vmem:[%s5497 + $0x171] sm:$0xff]
        %v5932 = vpack.c.bf16 %v5901, %v5900
        %v5933 = vpack.c.bf16 %v5903, %v5902
        %v5934 = vpack.c.bf16 %v5905, %v5904
        %v5935 = vpack.c.bf16 %v5907, %v5906
        %v5936 = vpack.c.bf16 %v5909, %v5908
        %v5937 = vpack.c.bf16 %v5911, %v5910
        %v5938 = vpack.c.bf16 %v5913, %v5912
        %v5939 = vpack.c.bf16 %v5915, %v5914
        %v5940 = vpack.c.bf16 %v5917, %v5916
        %v5941 = vpack.c.bf16 %v5919, %v5918
        %v5942 = vpack.c.bf16 %v5921, %v5920
        %v5943 = vpack.c.bf16 %v5923, %v5922
        %v5944 = vpack.c.bf16 %v5925, %v5924
        %v5945 = vpack.c.bf16 %v5927, %v5926
        %v5946 = vpack.c.bf16 %v5929, %v5928
        %v5947 = vpack.c.bf16 %v5931, %v5930
        %s5948 = scalar_lea.vmem [#allocation4], 896
        %v5949 = vld [vmem:[%s5948] sm:$0xff]
        %v5950 = vld [vmem:[%s5948 + $0x8] sm:$0xff]
        %v5951 = vld [vmem:[%s5948 + $0x10] sm:$0xff]
        %v5952 = vld [vmem:[%s5948 + $0x18] sm:$0xff]
        %v5953 = vld [vmem:[%s5948 + $0x20] sm:$0xff]
        %v5954 = vld [vmem:[%s5948 + $0x28] sm:$0xff]
        %v5955 = vld [vmem:[%s5948 + $0x30] sm:$0xff]
        %v5956 = vld [vmem:[%s5948 + $0x38] sm:$0xff]
        %v5957 = vld [vmem:[%s5948 + $0x40] sm:$0xff]
        %v5958 = vld [vmem:[%s5948 + $0x48] sm:$0xff]
        %v5959 = vld [vmem:[%s5948 + $0x50] sm:$0xff]
        %v5960 = vld [vmem:[%s5948 + $0x58] sm:$0xff]
        %v5961 = vld [vmem:[%s5948 + $0x60] sm:$0xff]
        %v5962 = vld [vmem:[%s5948 + $0x68] sm:$0xff]
        %v5963 = vld [vmem:[%s5948 + $0x70] sm:$0xff]
        %v5964 = vld [vmem:[%s5948 + $0x78] sm:$0xff]
        %v5981 = vunpack.c.l.b16 %v5949
        %v5982 = vunpack.c.h.b16 %v5949
        %v5983 = vunpack.c.l.b16 %v5950
        %v5984 = vunpack.c.h.b16 %v5950
        %v5985 = vunpack.c.l.b16 %v5951
        %v5986 = vunpack.c.h.b16 %v5951
        %v5987 = vunpack.c.l.b16 %v5952
        %v5988 = vunpack.c.h.b16 %v5952
        %v5989 = vunpack.c.l.b16 %v5953
        %v5990 = vunpack.c.h.b16 %v5953
        %v5991 = vunpack.c.l.b16 %v5954
        %v5992 = vunpack.c.h.b16 %v5954
        %v5993 = vunpack.c.l.b16 %v5955
        %v5994 = vunpack.c.h.b16 %v5955
        %v5995 = vunpack.c.l.b16 %v5956
        %v5996 = vunpack.c.h.b16 %v5956
        %v5997 = vunpack.c.l.b16 %v5957
        %v5998 = vunpack.c.h.b16 %v5957
        %v5999 = vunpack.c.l.b16 %v5958
        %v6000 = vunpack.c.h.b16 %v5958
        %v6001 = vunpack.c.l.b16 %v5959
        %v6002 = vunpack.c.h.b16 %v5959
        %v6003 = vunpack.c.l.b16 %v5960
        %v6004 = vunpack.c.h.b16 %v5960
        %v6005 = vunpack.c.l.b16 %v5961
        %v6006 = vunpack.c.h.b16 %v5961
        %v6007 = vunpack.c.l.b16 %v5962
        %v6008 = vunpack.c.h.b16 %v5962
        %v6009 = vunpack.c.l.b16 %v5963
        %v6010 = vunpack.c.h.b16 %v5963
        %v6011 = vunpack.c.l.b16 %v5964
        %v6012 = vunpack.c.h.b16 %v5964
        %v6013 = vpack.c.b16 %v5983, %v5981
        %v6014 = vpack.c.b16 %v5984, %v5982
        %v6015 = vpack.c.b16 %v5987, %v5985
        %v6016 = vpack.c.b16 %v5988, %v5986
        %v6017 = vpack.c.b16 %v5991, %v5989
        %v6018 = vpack.c.b16 %v5992, %v5990
        %v6019 = vpack.c.b16 %v5995, %v5993
        %v6020 = vpack.c.b16 %v5996, %v5994
        %v6021 = vpack.c.b16 %v5999, %v5997
        %v6022 = vpack.c.b16 %v6000, %v5998
        %v6023 = vpack.c.b16 %v6003, %v6001
        %v6024 = vpack.c.b16 %v6004, %v6002
        %v6025 = vpack.c.b16 %v6007, %v6005
        %v6026 = vpack.c.b16 %v6008, %v6006
        %v6027 = vpack.c.b16 %v6011, %v6009
        %v6028 = vpack.c.b16 %v6012, %v6010
        %6045 = vmatprep.subr.bf16.mxu0 %v6014
        %6046 = vmatpush1.bf16.msra.mxu0 %v6013
        %6047 = vmatprep.subr.bf16.mxu0 %v6016
        %6048 = vmatpush1.bf16.msra.mxu0 %v6015
        %6049 = vmatprep.subr.bf16.mxu0 %v6018
        %6050 = vmatpush1.bf16.msra.mxu0 %v6017
        %6051 = vmatprep.subr.bf16.mxu0 %v6020
        %6052 = vmatpush1.bf16.msra.mxu0 %v6019
        %6053 = vmatprep.subr.bf16.mxu0 %v6022
        %6054 = vmatpush1.bf16.msra.mxu0 %v6021
        %6055 = vmatprep.subr.bf16.mxu0 %v6024
        %6056 = vmatpush1.bf16.msra.mxu0 %v6023
        %6057 = vmatprep.subr.bf16.mxu0 %v6026
        %6058 = vmatpush1.bf16.msra.mxu0 %v6025
        %6059 = vmatprep.subr.bf16.mxu0 %v6028
        %6060 = vmatpush1.bf16.msra.mxu0 %v6027
        %6061 = vmatprep.subr.bf16.mxu0 0
        %6062 = vmatpush1.bf16.msra.mxu0 0
        %6063 = vmatprep.subr.bf16.mxu0 0
        %6064 = vmatpush1.bf16.msra.mxu0 0
        %6065 = vmatprep.subr.bf16.mxu0 0
        %6066 = vmatpush1.bf16.msra.mxu0 0
        %6067 = vmatprep.subr.bf16.mxu0 0
        %6068 = vmatpush1.bf16.msra.mxu0 0
        %6069 = vmatprep.subr.bf16.mxu0 0
        %6070 = vmatpush1.bf16.msra.mxu0 0
        %6071 = vmatprep.subr.bf16.mxu0 0
        %6072 = vmatpush1.bf16.msra.mxu0 0
        %6073 = vmatprep.subr.bf16.mxu0 0
        %6074 = vmatpush1.bf16.msra.mxu0 0
        %6075 = vmatprep.subr.bf16.mxu0 0
        %6076 = vmatpush1.bf16.msra.mxu0 0
        %6077 = vmatprep.mubr.bf16.mxu0 0
        %6078 = vmatmul.mubr.bf16.gmra.mrb[0].mxu0 %v5932
        %v6079 = vpop.f32.mrb[0].mxu0
        %v6080 = vadd.f32 0.0, %v6079
        %v6081 = vpop.f32.mrb[0].mxu0
        %v6082 = vadd.f32 0.0, %v6081
        %v6083 = vpop.f32.mrb[0].mxu0
        %v6084 = vadd.f32 0.0, %v6083
        %v6085 = vpop.f32.mrb[0].mxu0
        %v6086 = vadd.f32 0.0, %v6085
        %6087 = vmatprep.mubr.bf16.mxu0 0
        %6088 = vmatmul.mubr.bf16.gmra.mrb[0].mxu0 %v5933
        %v6089 = vpop.f32.mrb[0].mxu0
        %v6090 = vadd.f32 0.0, %v6089
        %v6091 = vpop.f32.mrb[0].mxu0
        %v6092 = vadd.f32 0.0, %v6091
        %v6093 = vpop.f32.mrb[0].mxu0
        %v6094 = vadd.f32 0.0, %v6093
        %v6095 = vpop.f32.mrb[0].mxu0
        %v6096 = vadd.f32 0.0, %v6095
        %6097 = vmatprep.mubr.bf16.mxu0 0
        %6098 = vmatmul.mubr.bf16.gmra.mrb[0].mxu0 %v5934
        %v6099 = vpop.f32.mrb[0].mxu0
        %v6100 = vadd.f32 0.0, %v6099
        %v6101 = vpop.f32.mrb[0].mxu0
        %v6102 = vadd.f32 0.0, %v6101
        %v6103 = vpop.f32.mrb[0].mxu0
        %v6104 = vadd.f32 0.0, %v6103
        %v6105 = vpop.f32.mrb[0].mxu0
        %v6106 = vadd.f32 0.0, %v6105
        %6107 = vmatprep.mubr.bf16.mxu0 0
        %6108 = vmatmul.mubr.bf16.gmra.mrb[0].mxu0 %v5935
        %v6109 = vpop.f32.mrb[0].mxu0
        %v6110 = vadd.f32 0.0, %v6109
        %v6111 = vpop.f32.mrb[0].mxu0
        %v6112 = vadd.f32 0.0, %v6111
        %v6113 = vpop.f32.mrb[0].mxu0
        %v6114 = vadd.f32 0.0, %v6113
        %v6115 = vpop.f32.mrb[0].mxu0
        %v6116 = vadd.f32 0.0, %v6115
        %6117 = vmatprep.mubr.bf16.mxu0 0
        %6118 = vmatmul.mubr.bf16.gmra.mrb[0].mxu0 %v5936
        %v6119 = vpop.f32.mrb[0].mxu0
        %v6120 = vadd.f32 0.0, %v6119
        %v6121 = vpop.f32.mrb[0].mxu0
        %v6122 = vadd.f32 0.0, %v6121
        %v6123 = vpop.f32.mrb[0].mxu0
        %v6124 = vadd.f32 0.0, %v6123
        %v6125 = vpop.f32.mrb[0].mxu0
        %v6126 = vadd.f32 0.0, %v6125
        %6127 = vmatprep.mubr.bf16.mxu0 0
        %6128 = vmatmul.mubr.bf16.gmra.mrb[0].mxu0 %v5937
        %v6129 = vpop.f32.mrb[0].mxu0
        %v6130 = vadd.f32 0.0, %v6129
        %v6131 = vpop.f32.mrb[0].mxu0
        %v6132 = vadd.f32 0.0, %v6131
        %v6133 = vpop.f32.mrb[0].mxu0
        %v6134 = vadd.f32 0.0, %v6133
        %v6135 = vpop.f32.mrb[0].mxu0
        %v6136 = vadd.f32 0.0, %v6135
        %6137 = vmatprep.mubr.bf16.mxu0 0
        %6138 = vmatmul.mubr.bf16.gmra.mrb[0].mxu0 %v5938
        %v6139 = vpop.f32.mrb[0].mxu0
        %v6140 = vadd.f32 0.0, %v6139
        %v6141 = vpop.f32.mrb[0].mxu0
        %v6142 = vadd.f32 0.0, %v6141
        %v6143 = vpop.f32.mrb[0].mxu0
        %v6144 = vadd.f32 0.0, %v6143
        %v6145 = vpop.f32.mrb[0].mxu0
        %v6146 = vadd.f32 0.0, %v6145
        %6147 = vmatprep.mubr.bf16.mxu0 0
        %6148 = vmatmul.mubr.bf16.gmra.mrb[0].mxu0 %v5939
        %v6149 = vpop.f32.mrb[0].mxu0
        %v6150 = vadd.f32 0.0, %v6149
        %v6151 = vpop.f32.mrb[0].mxu0
        %v6152 = vadd.f32 0.0, %v6151
        %v6153 = vpop.f32.mrb[0].mxu0
        %v6154 = vadd.f32 0.0, %v6153
        %v6155 = vpop.f32.mrb[0].mxu0
        %v6156 = vadd.f32 0.0, %v6155
        %6157 = vmatprep.mubr.bf16.mxu0 0
        %6158 = vmatmul.mubr.bf16.gmra.mrb[0].mxu0 %v5940
        %v6159 = vpop.f32.mrb[0].mxu0
        %v6160 = vadd.f32 0.0, %v6159
        %v6161 = vpop.f32.mrb[0].mxu0
        %v6162 = vadd.f32 0.0, %v6161
        %v6163 = vpop.f32.mrb[0].mxu0
        %v6164 = vadd.f32 0.0, %v6163
        %v6165 = vpop.f32.mrb[0].mxu0
        %v6166 = vadd.f32 0.0, %v6165
        %6167 = vmatprep.mubr.bf16.mxu0 0
        %6168 = vmatmul.mubr.bf16.gmra.mrb[0].mxu0 %v5941
        %v6169 = vpop.f32.mrb[0].mxu0
        %v6170 = vadd.f32 0.0, %v6169
        %v6171 = vpop.f32.mrb[0].mxu0
        %v6172 = vadd.f32 0.0, %v6171
        %v6173 = vpop.f32.mrb[0].mxu0
        %v6174 = vadd.f32 0.0, %v6173
        %v6175 = vpop.f32.mrb[0].mxu0
        %v6176 = vadd.f32 0.0, %v6175
        %6177 = vmatprep.mubr.bf16.mxu0 0
        %6178 = vmatmul.mubr.bf16.gmra.mrb[0].mxu0 %v5942
        %v6179 = vpop.f32.mrb[0].mxu0
        %v6180 = vadd.f32 0.0, %v6179
        %v6181 = vpop.f32.mrb[0].mxu0
        %v6182 = vadd.f32 0.0, %v6181
        %v6183 = vpop.f32.mrb[0].mxu0
        %v6184 = vadd.f32 0.0, %v6183
        %v6185 = vpop.f32.mrb[0].mxu0
        %v6186 = vadd.f32 0.0, %v6185
        %6187 = vmatprep.mubr.bf16.mxu0 0
        %6188 = vmatmul.mubr.bf16.gmra.mrb[0].mxu0 %v5943
        %v6189 = vpop.f32.mrb[0].mxu0
        %v6190 = vadd.f32 0.0, %v6189
        %v6191 = vpop.f32.mrb[0].mxu0
        %v6192 = vadd.f32 0.0, %v6191
        %v6193 = vpop.f32.mrb[0].mxu0
        %v6194 = vadd.f32 0.0, %v6193
        %v6195 = vpop.f32.mrb[0].mxu0
        %v6196 = vadd.f32 0.0, %v6195
        %6197 = vmatprep.mubr.bf16.mxu0 0
        %6198 = vmatmul.mubr.bf16.gmra.mrb[0].mxu0 %v5944
        %v6199 = vpop.f32.mrb[0].mxu0
        %v6200 = vadd.f32 0.0, %v6199
        %v6201 = vpop.f32.mrb[0].mxu0
        %v6202 = vadd.f32 0.0, %v6201
        %v6203 = vpop.f32.mrb[0].mxu0
        %v6204 = vadd.f32 0.0, %v6203
        %v6205 = vpop.f32.mrb[0].mxu0
        %v6206 = vadd.f32 0.0, %v6205
        %6207 = vmatprep.mubr.bf16.mxu0 0
        %6208 = vmatmul.mubr.bf16.gmra.mrb[0].mxu0 %v5945
        %v6209 = vpop.f32.mrb[0].mxu0
        %v6210 = vadd.f32 0.0, %v6209
        %v6211 = vpop.f32.mrb[0].mxu0
        %v6212 = vadd.f32 0.0, %v6211
        %v6213 = vpop.f32.mrb[0].mxu0
        %v6214 = vadd.f32 0.0, %v6213
        %v6215 = vpop.f32.mrb[0].mxu0
        %v6216 = vadd.f32 0.0, %v6215
        %6217 = vmatprep.mubr.bf16.mxu0 0
        %6218 = vmatmul.mubr.bf16.gmra.mrb[0].mxu0 %v5946
        %v6219 = vpop.f32.mrb[0].mxu0
        %v6220 = vadd.f32 0.0, %v6219
        %v6221 = vpop.f32.mrb[0].mxu0
        %v6222 = vadd.f32 0.0, %v6221
        %v6223 = vpop.f32.mrb[0].mxu0
        %v6224 = vadd.f32 0.0, %v6223
        %v6225 = vpop.f32.mrb[0].mxu0
        %v6226 = vadd.f32 0.0, %v6225
        %6227 = vmatprep.mubr.bf16.mxu0 0
        %6228 = vmatmul.mubr.bf16.gmra.mrb[0].mxu0 %v5947
        %v6229 = vpop.f32.mrb[0].mxu0
        %v6230 = vadd.f32 0.0, %v6229
        %v6231 = vpop.f32.mrb[0].mxu0
        %v6232 = vadd.f32 0.0, %v6231
        %v6233 = vpop.f32.mrb[0].mxu0
        %v6234 = vadd.f32 0.0, %v6233
        %v6235 = vpop.f32.mrb[0].mxu0
        %v6236 = vadd.f32 0.0, %v6235
        %6237 = vdwg.mxu0
        %v6238 = vadd.f32 %v5836, %v6080
        %v6239 = vadd.f32 %v5837, %v6082
        %v6240 = vadd.f32 %v5838, %v6084
        %v6241 = vadd.f32 %v5839, %v6086
        %v6242 = vadd.f32 %v5840, %v6090
        %v6243 = vadd.f32 %v5841, %v6092
        %v6244 = vadd.f32 %v5842, %v6094
        %v6245 = vadd.f32 %v5843, %v6096
        %v6246 = vadd.f32 %v5844, %v6100
        %v6247 = vadd.f32 %v5845, %v6102
        %v6248 = vadd.f32 %v5846, %v6104
        %v6249 = vadd.f32 %v5847, %v6106
        %v6250 = vadd.f32 %v5848, %v6110
        %v6251 = vadd.f32 %v5849, %v6112
        %v6252 = vadd.f32 %v5850, %v6114
        %v6253 = vadd.f32 %v5851, %v6116
        %v6254 = vadd.f32 %v5852, %v6120
        %v6255 = vadd.f32 %v5853, %v6122
        %v6256 = vadd.f32 %v5854, %v6124
        %v6257 = vadd.f32 %v5855, %v6126
        %v6258 = vadd.f32 %v5856, %v6130
        %v6259 = vadd.f32 %v5857, %v6132
        %v6260 = vadd.f32 %v5858, %v6134
        %v6261 = vadd.f32 %v5859, %v6136
        %v6262 = vadd.f32 %v5860, %v6140
        %v6263 = vadd.f32 %v5861, %v6142
        %v6264 = vadd.f32 %v5862, %v6144
        %v6265 = vadd.f32 %v5863, %v6146
        %v6266 = vadd.f32 %v5864, %v6150
        %v6267 = vadd.f32 %v5865, %v6152
        %v6268 = vadd.f32 %v5866, %v6154
        %v6269 = vadd.f32 %v5867, %v6156
        %v6270 = vadd.f32 %v5868, %v6160
        %v6271 = vadd.f32 %v5869, %v6162
        %v6272 = vadd.f32 %v5870, %v6164
        %v6273 = vadd.f32 %v5871, %v6166
        %v6274 = vadd.f32 %v5872, %v6170
        %v6275 = vadd.f32 %v5873, %v6172
        %v6276 = vadd.f32 %v5874, %v6174
        %v6277 = vadd.f32 %v5875, %v6176
        %v6278 = vadd.f32 %v5876, %v6180
        %v6279 = vadd.f32 %v5877, %v6182
        %v6280 = vadd.f32 %v5878, %v6184
        %v6281 = vadd.f32 %v5879, %v6186
        %v6282 = vadd.f32 %v5880, %v6190
        %v6283 = vadd.f32 %v5881, %v6192
        %v6284 = vadd.f32 %v5882, %v6194
        %v6285 = vadd.f32 %v5883, %v6196
        %v6286 = vadd.f32 %v5884, %v6200
        %v6287 = vadd.f32 %v5885, %v6202
        %v6288 = vadd.f32 %v5886, %v6204
        %v6289 = vadd.f32 %v5887, %v6206
        %v6290 = vadd.f32 %v5888, %v6210
        %v6291 = vadd.f32 %v5889, %v6212
        %v6292 = vadd.f32 %v5890, %v6214
        %v6293 = vadd.f32 %v5891, %v6216
        %v6294 = vadd.f32 %v5892, %v6220
        %v6295 = vadd.f32 %v5893, %v6222
        %v6296 = vadd.f32 %v5894, %v6224
        %v6297 = vadd.f32 %v5895, %v6226
        %v6298 = vadd.f32 %v5896, %v6230
        %v6299 = vadd.f32 %v5897, %v6232
        %v6300 = vadd.f32 %v5898, %v6234
        %v6301 = vadd.f32 %v5899, %v6236
        %v6302 = vld [vmem:[%s5497 + $0x2] sm:$0xff]
        %v6303 = vld [vmem:[%s5497 + $0xa] sm:$0xff]
        %v6304 = vld [vmem:[%s5497 + $0x1a] sm:$0xff]
        %v6305 = vld [vmem:[%s5497 + $0x22] sm:$0xff]
        %v6306 = vld [vmem:[%s5497 + $0x32] sm:$0xff]
        %v6307 = vld [vmem:[%s5497 + $0x3a] sm:$0xff]
        %v6308 = vld [vmem:[%s5497 + $0x4a] sm:$0xff]
        %v6309 = vld [vmem:[%s5497 + $0x52] sm:$0xff]
        %v6310 = vld [vmem:[%s5497 + $0x62] sm:$0xff]
        %v6311 = vld [vmem:[%s5497 + $0x6a] sm:$0xff]
        %v6312 = vld [vmem:[%s5497 + $0x7a] sm:$0xff]
        %v6313 = vld [vmem:[%s5497 + $0x82] sm:$0xff]
        %v6314 = vld [vmem:[%s5497 + $0x92] sm:$0xff]
        %v6315 = vld [vmem:[%s5497 + $0x9a] sm:$0xff]
        %v6316 = vld [vmem:[%s5497 + $0xaa] sm:$0xff]
        %v6317 = vld [vmem:[%s5497 + $0xb2] sm:$0xff]
        %v6318 = vld [vmem:[%s5497 + $0xc2] sm:$0xff]
        %v6319 = vld [vmem:[%s5497 + $0xca] sm:$0xff]
        %v6320 = vld [vmem:[%s5497 + $0xda] sm:$0xff]
        %v6321 = vld [vmem:[%s5497 + $0xe2] sm:$0xff]
        %v6322 = vld [vmem:[%s5497 + $0xf2] sm:$0xff]
        %v6323 = vld [vmem:[%s5497 + $0xfa] sm:$0xff]
        %v6324 = vld [vmem:[%s5497 + $0x10a] sm:$0xff]
        %v6325 = vld [vmem:[%s5497 + $0x112] sm:$0xff]
        %v6326 = vld [vmem:[%s5497 + $0x122] sm:$0xff]
        %v6327 = vld [vmem:[%s5497 + $0x12a] sm:$0xff]
        %v6328 = vld [vmem:[%s5497 + $0x13a] sm:$0xff]
        %v6329 = vld [vmem:[%s5497 + $0x142] sm:$0xff]
        %v6330 = vld [vmem:[%s5497 + $0x152] sm:$0xff]
        %v6331 = vld [vmem:[%s5497 + $0x15a] sm:$0xff]
        %v6332 = vld [vmem:[%s5497 + $0x16a] sm:$0xff]
        %v6333 = vld [vmem:[%s5497 + $0x172] sm:$0xff]
        %v6334 = vpack.c.bf16 %v6303, %v6302
        %v6335 = vpack.c.bf16 %v6305, %v6304
        %v6336 = vpack.c.bf16 %v6307, %v6306
        %v6337 = vpack.c.bf16 %v6309, %v6308
        %v6338 = vpack.c.bf16 %v6311, %v6310
        %v6339 = vpack.c.bf16 %v6313, %v6312
        %v6340 = vpack.c.bf16 %v6315, %v6314
        %v6341 = vpack.c.bf16 %v6317, %v6316
        %v6342 = vpack.c.bf16 %v6319, %v6318
        %v6343 = vpack.c.bf16 %v6321, %v6320
        %v6344 = vpack.c.bf16 %v6323, %v6322
        %v6345 = vpack.c.bf16 %v6325, %v6324
        %v6346 = vpack.c.bf16 %v6327, %v6326
        %v6347 = vpack.c.bf16 %v6329, %v6328
        %v6348 = vpack.c.bf16 %v6331, %v6330
        %v6349 = vpack.c.bf16 %v6333, %v6332
        %s6350 = scalar_lea.vmem [#allocation4], 1024
        %v6351 = vld [vmem:[%s6350] sm:$0xff]
        %v6352 = vld [vmem:[%s6350 + $0x8] sm:$0xff]
        %v6353 = vld [vmem:[%s6350 + $0x10] sm:$0xff]
        %v6354 = vld [vmem:[%s6350 + $0x18] sm:$0xff]
        %v6355 = vld [vmem:[%s6350 + $0x20] sm:$0xff]
        %v6356 = vld [vmem:[%s6350 + $0x28] sm:$0xff]
        %v6357 = vld [vmem:[%s6350 + $0x30] sm:$0xff]
        %v6358 = vld [vmem:[%s6350 + $0x38] sm:$0xff]
        %v6359 = vld [vmem:[%s6350 + $0x40] sm:$0xff]
        %v6360 = vld [vmem:[%s6350 + $0x48] sm:$0xff]
        %v6361 = vld [vmem:[%s6350 + $0x50] sm:$0xff]
        %v6362 = vld [vmem:[%s6350 + $0x58] sm:$0xff]
        %v6363 = vld [vmem:[%s6350 + $0x60] sm:$0xff]
        %v6364 = vld [vmem:[%s6350 + $0x68] sm:$0xff]
        %v6365 = vld [vmem:[%s6350 + $0x70] sm:$0xff]
        %v6366 = vld [vmem:[%s6350 + $0x78] sm:$0xff]
        %v6383 = vunpack.c.l.b16 %v6351
        %v6384 = vunpack.c.h.b16 %v6351
        %v6385 = vunpack.c.l.b16 %v6352
        %v6386 = vunpack.c.h.b16 %v6352
        %v6387 = vunpack.c.l.b16 %v6353
        %v6388 = vunpack.c.h.b16 %v6353
        %v6389 = vunpack.c.l.b16 %v6354
        %v6390 = vunpack.c.h.b16 %v6354
        %v6391 = vunpack.c.l.b16 %v6355
        %v6392 = vunpack.c.h.b16 %v6355
        %v6393 = vunpack.c.l.b16 %v6356
        %v6394 = vunpack.c.h.b16 %v6356
        %v6395 = vunpack.c.l.b16 %v6357
        %v6396 = vunpack.c.h.b16 %v6357
        %v6397 = vunpack.c.l.b16 %v6358
        %v6398 = vunpack.c.h.b16 %v6358
        %v6399 = vunpack.c.l.b16 %v6359
        %v6400 = vunpack.c.h.b16 %v6359
        %v6401 = vunpack.c.l.b16 %v6360
        %v6402 = vunpack.c.h.b16 %v6360
        %v6403 = vunpack.c.l.b16 %v6361
        %v6404 = vunpack.c.h.b16 %v6361
        %v6405 = vunpack.c.l.b16 %v6362
        %v6406 = vunpack.c.h.b16 %v6362
        %v6407 = vunpack.c.l.b16 %v6363
        %v6408 = vunpack.c.h.b16 %v6363
        %v6409 = vunpack.c.l.b16 %v6364
        %v6410 = vunpack.c.h.b16 %v6364
        %v6411 = vunpack.c.l.b16 %v6365
        %v6412 = vunpack.c.h.b16 %v6365
        %v6413 = vunpack.c.l.b16 %v6366
        %v6414 = vunpack.c.h.b16 %v6366
        %v6415 = vpack.c.b16 %v6385, %v6383
        %v6416 = vpack.c.b16 %v6386, %v6384
        %v6417 = vpack.c.b16 %v6389, %v6387
        %v6418 = vpack.c.b16 %v6390, %v6388
        %v6419 = vpack.c.b16 %v6393, %v6391
        %v6420 = vpack.c.b16 %v6394, %v6392
        %v6421 = vpack.c.b16 %v6397, %v6395
        %v6422 = vpack.c.b16 %v6398, %v6396
        %v6423 = vpack.c.b16 %v6401, %v6399
        %v6424 = vpack.c.b16 %v6402, %v6400
        %v6425 = vpack.c.b16 %v6405, %v6403
        %v6426 = vpack.c.b16 %v6406, %v6404
        %v6427 = vpack.c.b16 %v6409, %v6407
        %v6428 = vpack.c.b16 %v6410, %v6408
        %v6429 = vpack.c.b16 %v6413, %v6411
        %v6430 = vpack.c.b16 %v6414, %v6412
        %6447 = vmatprep.subr.bf16.mxu0 %v6416
        %6448 = vmatpush1.bf16.msra.mxu0 %v6415
        %6449 = vmatprep.subr.bf16.mxu0 %v6418
        %6450 = vmatpush1.bf16.msra.mxu0 %v6417
        %6451 = vmatprep.subr.bf16.mxu0 %v6420
        %6452 = vmatpush1.bf16.msra.mxu0 %v6419
        %6453 = vmatprep.subr.bf16.mxu0 %v6422
        %6454 = vmatpush1.bf16.msra.mxu0 %v6421
        %6455 = vmatprep.subr.bf16.mxu0 %v6424
        %6456 = vmatpush1.bf16.msra.mxu0 %v6423
        %6457 = vmatprep.subr.bf16.mxu0 %v6426
        %6458 = vmatpush1.bf16.msra.mxu0 %v6425
        %6459 = vmatprep.subr.bf16.mxu0 %v6428
        %6460 = vmatpush1.bf16.msra.mxu0 %v6427
        %6461 = vmatprep.subr.bf16.mxu0 %v6430
        %6462 = vmatpush1.bf16.msra.mxu0 %v6429
        %6463 = vmatprep.subr.bf16.mxu0 0
        %6464 = vmatpush1.bf16.msra.mxu0 0
        %6465 = vmatprep.subr.bf16.mxu0 0
        %6466 = vmatpush1.bf16.msra.mxu0 0
        %6467 = vmatprep.subr.bf16.mxu0 0
        %6468 = vmatpush1.bf16.msra.mxu0 0
        %6469 = vmatprep.subr.bf16.mxu0 0
        %6470 = vmatpush1.bf16.msra.mxu0 0
        %6471 = vmatprep.subr.bf16.mxu0 0
        %6472 = vmatpush1.bf16.msra.mxu0 0
        %6473 = vmatprep.subr.bf16.mxu0 0
        %6474 = vmatpush1.bf16.msra.mxu0 0
        %6475 = vmatprep.subr.bf16.mxu0 0
        %6476 = vmatpush1.bf16.msra.mxu0 0
        %6477 = vmatprep.subr.bf16.mxu0 0
        %6478 = vmatpush1.bf16.msra.mxu0 0
        %6479 = vmatprep.mubr.bf16.mxu0 0
        %6480 = vmatmul.mubr.bf16.gmra.mrb[0].mxu0 %v6334
        %v6481 = vpop.f32.mrb[0].mxu0
        %v6482 = vadd.f32 0.0, %v6481
        %v6483 = vpop.f32.mrb[0].mxu0
        %v6484 = vadd.f32 0.0, %v6483
        %v6485 = vpop.f32.mrb[0].mxu0
        %v6486 = vadd.f32 0.0, %v6485
        %v6487 = vpop.f32.mrb[0].mxu0
        %v6488 = vadd.f32 0.0, %v6487
        %6489 = vmatprep.mubr.bf16.mxu0 0
        %6490 = vmatmul.mubr.bf16.gmra.mrb[0].mxu0 %v6335
        %v6491 = vpop.f32.mrb[0].mxu0
        %v6492 = vadd.f32 0.0, %v6491
        %v6493 = vpop.f32.mrb[0].mxu0
        %v6494 = vadd.f32 0.0, %v6493
        %v6495 = vpop.f32.mrb[0].mxu0
        %v6496 = vadd.f32 0.0, %v6495
        %v6497 = vpop.f32.mrb[0].mxu0
        %v6498 = vadd.f32 0.0, %v6497
        %6499 = vmatprep.mubr.bf16.mxu0 0
        %6500 = vmatmul.mubr.bf16.gmra.mrb[0].mxu0 %v6336
        %v6501 = vpop.f32.mrb[0].mxu0
        %v6502 = vadd.f32 0.0, %v6501
        %v6503 = vpop.f32.mrb[0].mxu0
        %v6504 = vadd.f32 0.0, %v6503
        %v6505 = vpop.f32.mrb[0].mxu0
        %v6506 = vadd.f32 0.0, %v6505
        %v6507 = vpop.f32.mrb[0].mxu0
        %v6508 = vadd.f32 0.0, %v6507
        %6509 = vmatprep.mubr.bf16.mxu0 0
        %6510 = vmatmul.mubr.bf16.gmra.mrb[0].mxu0 %v6337
        %v6511 = vpop.f32.mrb[0].mxu0
        %v6512 = vadd.f32 0.0, %v6511
        %v6513 = vpop.f32.mrb[0].mxu0
        %v6514 = vadd.f32 0.0, %v6513
        %v6515 = vpop.f32.mrb[0].mxu0
        %v6516 = vadd.f32 0.0, %v6515
        %v6517 = vpop.f32.mrb[0].mxu0
        %v6518 = vadd.f32 0.0, %v6517
        %6519 = vmatprep.mubr.bf16.mxu0 0
        %6520 = vmatmul.mubr.bf16.gmra.mrb[0].mxu0 %v6338
        %v6521 = vpop.f32.mrb[0].mxu0
        %v6522 = vadd.f32 0.0, %v6521
        %v6523 = vpop.f32.mrb[0].mxu0
        %v6524 = vadd.f32 0.0, %v6523
        %v6525 = vpop.f32.mrb[0].mxu0
        %v6526 = vadd.f32 0.0, %v6525
        %v6527 = vpop.f32.mrb[0].mxu0
        %v6528 = vadd.f32 0.0, %v6527
        %6529 = vmatprep.mubr.bf16.mxu0 0
        %6530 = vmatmul.mubr.bf16.gmra.mrb[0].mxu0 %v6339
        %v6531 = vpop.f32.mrb[0].mxu0
        %v6532 = vadd.f32 0.0, %v6531
        %v6533 = vpop.f32.mrb[0].mxu0
        %v6534 = vadd.f32 0.0, %v6533
        %v6535 = vpop.f32.mrb[0].mxu0
        %v6536 = vadd.f32 0.0, %v6535
        %v6537 = vpop.f32.mrb[0].mxu0
        %v6538 = vadd.f32 0.0, %v6537
        %6539 = vmatprep.mubr.bf16.mxu0 0
        %6540 = vmatmul.mubr.bf16.gmra.mrb[0].mxu0 %v6340
        %v6541 = vpop.f32.mrb[0].mxu0
        %v6542 = vadd.f32 0.0, %v6541
        %v6543 = vpop.f32.mrb[0].mxu0
        %v6544 = vadd.f32 0.0, %v6543
        %v6545 = vpop.f32.mrb[0].mxu0
        %v6546 = vadd.f32 0.0, %v6545
        %v6547 = vpop.f32.mrb[0].mxu0
        %v6548 = vadd.f32 0.0, %v6547
        %6549 = vmatprep.mubr.bf16.mxu0 0
        %6550 = vmatmul.mubr.bf16.gmra.mrb[0].mxu0 %v6341
        %v6551 = vpop.f32.mrb[0].mxu0
        %v6552 = vadd.f32 0.0, %v6551
        %v6553 = vpop.f32.mrb[0].mxu0
        %v6554 = vadd.f32 0.0, %v6553
        %v6555 = vpop.f32.mrb[0].mxu0
        %v6556 = vadd.f32 0.0, %v6555
        %v6557 = vpop.f32.mrb[0].mxu0
        %v6558 = vadd.f32 0.0, %v6557
        %6559 = vmatprep.mubr.bf16.mxu0 0
        %6560 = vmatmul.mubr.bf16.gmra.mrb[0].mxu0 %v6342
        %v6561 = vpop.f32.mrb[0].mxu0
        %v6562 = vadd.f32 0.0, %v6561
        %v6563 = vpop.f32.mrb[0].mxu0
        %v6564 = vadd.f32 0.0, %v6563
        %v6565 = vpop.f32.mrb[0].mxu0
        %v6566 = vadd.f32 0.0, %v6565
        %v6567 = vpop.f32.mrb[0].mxu0
        %v6568 = vadd.f32 0.0, %v6567
        %6569 = vmatprep.mubr.bf16.mxu0 0
        %6570 = vmatmul.mubr.bf16.gmra.mrb[0].mxu0 %v6343
        %v6571 = vpop.f32.mrb[0].mxu0
        %v6572 = vadd.f32 0.0, %v6571
        %v6573 = vpop.f32.mrb[0].mxu0
        %v6574 = vadd.f32 0.0, %v6573
        %v6575 = vpop.f32.mrb[0].mxu0
        %v6576 = vadd.f32 0.0, %v6575
        %v6577 = vpop.f32.mrb[0].mxu0
        %v6578 = vadd.f32 0.0, %v6577
        %6579 = vmatprep.mubr.bf16.mxu0 0
        %6580 = vmatmul.mubr.bf16.gmra.mrb[0].mxu0 %v6344
        %v6581 = vpop.f32.mrb[0].mxu0
        %v6582 = vadd.f32 0.0, %v6581
        %v6583 = vpop.f32.mrb[0].mxu0
        %v6584 = vadd.f32 0.0, %v6583
        %v6585 = vpop.f32.mrb[0].mxu0
        %v6586 = vadd.f32 0.0, %v6585
        %v6587 = vpop.f32.mrb[0].mxu0
        %v6588 = vadd.f32 0.0, %v6587
        %6589 = vmatprep.mubr.bf16.mxu0 0
        %6590 = vmatmul.mubr.bf16.gmra.mrb[0].mxu0 %v6345
        %v6591 = vpop.f32.mrb[0].mxu0
        %v6592 = vadd.f32 0.0, %v6591
        %v6593 = vpop.f32.mrb[0].mxu0
        %v6594 = vadd.f32 0.0, %v6593
        %v6595 = vpop.f32.mrb[0].mxu0
        %v6596 = vadd.f32 0.0, %v6595
        %v6597 = vpop.f32.mrb[0].mxu0
        %v6598 = vadd.f32 0.0, %v6597
        %6599 = vmatprep.mubr.bf16.mxu0 0
        %6600 = vmatmul.mubr.bf16.gmra.mrb[0].mxu0 %v6346
        %v6601 = vpop.f32.mrb[0].mxu0
        %v6602 = vadd.f32 0.0, %v6601
        %v6603 = vpop.f32.mrb[0].mxu0
        %v6604 = vadd.f32 0.0, %v6603
        %v6605 = vpop.f32.mrb[0].mxu0
        %v6606 = vadd.f32 0.0, %v6605
        %v6607 = vpop.f32.mrb[0].mxu0
        %v6608 = vadd.f32 0.0, %v6607
        %6609 = vmatprep.mubr.bf16.mxu0 0
        %6610 = vmatmul.mubr.bf16.gmra.mrb[0].mxu0 %v6347
        %v6611 = vpop.f32.mrb[0].mxu0
        %v6612 = vadd.f32 0.0, %v6611
        %v6613 = vpop.f32.mrb[0].mxu0
        %v6614 = vadd.f32 0.0, %v6613
        %v6615 = vpop.f32.mrb[0].mxu0
        %v6616 = vadd.f32 0.0, %v6615
        %v6617 = vpop.f32.mrb[0].mxu0
        %v6618 = vadd.f32 0.0, %v6617
        %6619 = vmatprep.mubr.bf16.mxu0 0
        %6620 = vmatmul.mubr.bf16.gmra.mrb[0].mxu0 %v6348
        %v6621 = vpop.f32.mrb[0].mxu0
        %v6622 = vadd.f32 0.0, %v6621
        %v6623 = vpop.f32.mrb[0].mxu0
        %v6624 = vadd.f32 0.0, %v6623
        %v6625 = vpop.f32.mrb[0].mxu0
        %v6626 = vadd.f32 0.0, %v6625
        %v6627 = vpop.f32.mrb[0].mxu0
        %v6628 = vadd.f32 0.0, %v6627
        %6629 = vmatprep.mubr.bf16.mxu0 0
        %6630 = vmatmul.mubr.bf16.gmra.mrb[0].mxu0 %v6349
        %v6631 = vpop.f32.mrb[0].mxu0
        %v6632 = vadd.f32 0.0, %v6631
        %v6633 = vpop.f32.mrb[0].mxu0
        %v6634 = vadd.f32 0.0, %v6633
        %v6635 = vpop.f32.mrb[0].mxu0
        %v6636 = vadd.f32 0.0, %v6635
        %v6637 = vpop.f32.mrb[0].mxu0
        %v6638 = vadd.f32 0.0, %v6637
        %6639 = vdwg.mxu0
        %v6640 = vadd.f32 %v6238, %v6482
        %v6641 = vadd.f32 %v6239, %v6484
        %v6642 = vadd.f32 %v6240, %v6486
        %v6643 = vadd.f32 %v6241, %v6488
        %v6644 = vadd.f32 %v6242, %v6492
        %v6645 = vadd.f32 %v6243, %v6494
        %v6646 = vadd.f32 %v6244, %v6496
        %v6647 = vadd.f32 %v6245, %v6498
        %v6648 = vadd.f32 %v6246, %v6502
        %v6649 = vadd.f32 %v6247, %v6504
        %v6650 = vadd.f32 %v6248, %v6506
        %v6651 = vadd.f32 %v6249, %v6508
        %v6652 = vadd.f32 %v6250, %v6512
        %v6653 = vadd.f32 %v6251, %v6514
        %v6654 = vadd.f32 %v6252, %v6516
        %v6655 = vadd.f32 %v6253, %v6518
        %v6656 = vadd.f32 %v6254, %v6522
        %v6657 = vadd.f32 %v6255, %v6524
        %v6658 = vadd.f32 %v6256, %v6526
        %v6659 = vadd.f32 %v6257, %v6528
        %v6660 = vadd.f32 %v6258, %v6532
        %v6661 = vadd.f32 %v6259, %v6534
        %v6662 = vadd.f32 %v6260, %v6536
        %v6663 = vadd.f32 %v6261, %v6538
        %v6664 = vadd.f32 %v6262, %v6542
        %v6665 = vadd.f32 %v6263, %v6544
        %v6666 = vadd.f32 %v6264, %v6546
        %v6667 = vadd.f32 %v6265, %v6548
        %v6668 = vadd.f32 %v6266, %v6552
        %v6669 = vadd.f32 %v6267, %v6554
        %v6670 = vadd.f32 %v6268, %v6556
        %v6671 = vadd.f32 %v6269, %v6558
        %v6672 = vadd.f32 %v6270, %v6562
        %v6673 = vadd.f32 %v6271, %v6564
        %v6674 = vadd.f32 %v6272, %v6566
        %v6675 = vadd.f32 %v6273, %v6568
        %v6676 = vadd.f32 %v6274, %v6572
        %v6677 = vadd.f32 %v6275, %v6574
        %v6678 = vadd.f32 %v6276, %v6576
        %v6679 = vadd.f32 %v6277, %v6578
        %v6680 = vadd.f32 %v6278, %v6582
        %v6681 = vadd.f32 %v6279, %v6584
        %v6682 = vadd.f32 %v6280, %v6586
        %v6683 = vadd.f32 %v6281, %v6588
        %v6684 = vadd.f32 %v6282, %v6592
        %v6685 = vadd.f32 %v6283, %v6594
        %v6686 = vadd.f32 %v6284, %v6596
        %v6687 = vadd.f32 %v6285, %v6598
        %v6688 = vadd.f32 %v6286, %v6602
        %v6689 = vadd.f32 %v6287, %v6604
        %v6690 = vadd.f32 %v6288, %v6606
        %v6691 = vadd.f32 %v6289, %v6608
        %v6692 = vadd.f32 %v6290, %v6612
        %v6693 = vadd.f32 %v6291, %v6614
        %v6694 = vadd.f32 %v6292, %v6616
        %v6695 = vadd.f32 %v6293, %v6618
        %v6696 = vadd.f32 %v6294, %v6622
        %v6697 = vadd.f32 %v6295, %v6624
        %v6698 = vadd.f32 %v6296, %v6626
        %v6699 = vadd.f32 %v6297, %v6628
        %v6700 = vadd.f32 %v6298, %v6632
        %v6701 = vadd.f32 %v6299, %v6634
        %v6702 = vadd.f32 %v6300, %v6636
        %v6703 = vadd.f32 %v6301, %v6638
        %v6704 = vld [vmem:[%s5] sm:$0x3]
        %v6706 = vlaneseq
        %v6707 = vshrl.u32 %v6706, 7
        %v6708 = vsub.s32 0, %v6707
        %v6709 = vrot.slane %v6704, %v6708
        %v6710 = vlaneseq
        %v6711 = vshrl.u32 %v6710, 7
        %v6712 = vsub.s32 1, %v6711
        %v6713 = vrot.slane %v6704, %v6712
        %v6716 = vadd.f32 %v6640, %v6709
        %v6717 = vadd.f32 %v6641, %v6713
        %v6718 = vadd.f32 %v6642, %v6709
        %v6719 = vadd.f32 %v6643, %v6713
        %v6720 = vadd.f32 %v6644, %v6709
        %v6721 = vadd.f32 %v6645, %v6713
        %v6722 = vadd.f32 %v6646, %v6709
        %v6723 = vadd.f32 %v6647, %v6713
        %v6724 = vadd.f32 %v6648, %v6709
        %v6725 = vadd.f32 %v6649, %v6713
        %v6726 = vadd.f32 %v6650, %v6709
        %v6727 = vadd.f32 %v6651, %v6713
        %v6728 = vadd.f32 %v6652, %v6709
        %v6729 = vadd.f32 %v6653, %v6713
        %v6730 = vadd.f32 %v6654, %v6709
        %v6731 = vadd.f32 %v6655, %v6713
        %v6732 = vadd.f32 %v6656, %v6709
        %v6733 = vadd.f32 %v6657, %v6713
        %v6734 = vadd.f32 %v6658, %v6709
        %v6735 = vadd.f32 %v6659, %v6713
        %v6736 = vadd.f32 %v6660, %v6709
        %v6737 = vadd.f32 %v6661, %v6713
        %v6738 = vadd.f32 %v6662, %v6709
        %v6739 = vadd.f32 %v6663, %v6713
        %v6740 = vadd.f32 %v6664, %v6709
        %v6741 = vadd.f32 %v6665, %v6713
        %v6742 = vadd.f32 %v6666, %v6709
        %v6743 = vadd.f32 %v6667, %v6713
        %v6744 = vadd.f32 %v6668, %v6709
        %v6745 = vadd.f32 %v6669, %v6713
        %v6746 = vadd.f32 %v6670, %v6709
        %v6747 = vadd.f32 %v6671, %v6713
        %v6748 = vadd.f32 %v6672, %v6709
        %v6749 = vadd.f32 %v6673, %v6713
        %v6750 = vadd.f32 %v6674, %v6709
        %v6751 = vadd.f32 %v6675, %v6713
        %v6752 = vadd.f32 %v6676, %v6709
        %v6753 = vadd.f32 %v6677, %v6713
        %v6754 = vadd.f32 %v6678, %v6709
        %v6755 = vadd.f32 %v6679, %v6713
        %v6756 = vadd.f32 %v6680, %v6709
        %v6757 = vadd.f32 %v6681, %v6713
        %v6758 = vadd.f32 %v6682, %v6709
        %v6759 = vadd.f32 %v6683, %v6713
        %v6760 = vadd.f32 %v6684, %v6709
        %v6761 = vadd.f32 %v6685, %v6713
        %v6762 = vadd.f32 %v6686, %v6709
        %v6763 = vadd.f32 %v6687, %v6713
        %v6764 = vadd.f32 %v6688, %v6709
        %v6765 = vadd.f32 %v6689, %v6713
        %v6766 = vadd.f32 %v6690, %v6709
        %v6767 = vadd.f32 %v6691, %v6713
        %v6768 = vadd.f32 %v6692, %v6709
        %v6769 = vadd.f32 %v6693, %v6713
        %v6770 = vadd.f32 %v6694, %v6709
        %v6771 = vadd.f32 %v6695, %v6713
        %v6772 = vadd.f32 %v6696, %v6709
        %v6773 = vadd.f32 %v6697, %v6713
        %v6774 = vadd.f32 %v6698, %v6709
        %v6775 = vadd.f32 %v6699, %v6713
        %v6776 = vadd.f32 %v6700, %v6709
        %v6777 = vadd.f32 %v6701, %v6713
        %v6778 = vadd.f32 %v6702, %v6709
        %v6779 = vadd.f32 %v6703, %v6713
        %v6780 = vld [vmem:[%s303] sm:$0xff]
        %v6781 = vld [vmem:[%s303 + $0x8] sm:$0xff]
        %v6782 = vld [vmem:[%s303 + $0x10] sm:$0xff]
        %v6783 = vld [vmem:[%s303 + $0x18] sm:$0xff]
        %v6784 = vld [vmem:[%s303 + $0x20] sm:$0xff]
        %v6785 = vld [vmem:[%s303 + $0x28] sm:$0xff]
        %v6786 = vld [vmem:[%s303 + $0x30] sm:$0xff]
        %v6787 = vld [vmem:[%s303 + $0x38] sm:$0xff]
        %v6788 = vld [vmem:[%s303 + $0x40] sm:$0xff]
        %v6789 = vld [vmem:[%s303 + $0x48] sm:$0xff]
        %v6790 = vld [vmem:[%s303 + $0x50] sm:$0xff]
        %v6791 = vld [vmem:[%s303 + $0x58] sm:$0xff]
        %v6792 = vld [vmem:[%s303 + $0x60] sm:$0xff]
        %v6793 = vld [vmem:[%s303 + $0x68] sm:$0xff]
        %v6794 = vld [vmem:[%s303 + $0x70] sm:$0xff]
        %v6795 = vld [vmem:[%s303 + $0x78] sm:$0xff]
        %v6796 = vld [vmem:[%s303 + $0x80] sm:$0xff]
        %v6797 = vld [vmem:[%s303 + $0x88] sm:$0xff]
        %v6798 = vld [vmem:[%s303 + $0x90] sm:$0xff]
        %v6799 = vld [vmem:[%s303 + $0x98] sm:$0xff]
        %v6800 = vld [vmem:[%s303 + $0xa0] sm:$0xff]
        %v6801 = vld [vmem:[%s303 + $0xa8] sm:$0xff]
        %v6802 = vld [vmem:[%s303 + $0xb0] sm:$0xff]
        %v6803 = vld [vmem:[%s303 + $0xb8] sm:$0xff]
        %v6804 = vld [vmem:[%s303 + $0xc0] sm:$0xff]
        %v6805 = vld [vmem:[%s303 + $0xc8] sm:$0xff]
        %v6806 = vld [vmem:[%s303 + $0xd0] sm:$0xff]
        %v6807 = vld [vmem:[%s303 + $0xd8] sm:$0xff]
        %v6808 = vld [vmem:[%s303 + $0xe0] sm:$0xff]
        %v6809 = vld [vmem:[%s303 + $0xe8] sm:$0xff]
        %v6810 = vld [vmem:[%s303 + $0xf0] sm:$0xff]
        %v6811 = vld [vmem:[%s303 + $0xf8] sm:$0xff]
        %vm6812 = vcmask 31744
        %v6813 = vsel %vm6812, %v6780, 0.0
        %v6814 = vsel %vm6812, %v6781, 0.0
        %v6815 = vadd.f32 %v6813, %v6814
        %v6816 = vsel %vm6812, %v6782, 0.0
        %v6817 = vadd.f32 %v6815, %v6816
        %v6818 = vsel %vm6812, %v6783, 0.0
        %v6819 = vadd.f32 %v6817, %v6818
        %v6820 = vsel %vm6812, %v6784, 0.0
        %v6821 = vadd.f32 %v6819, %v6820
        %v6822 = vsel %vm6812, %v6785, 0.0
        %v6823 = vadd.f32 %v6821, %v6822
        %v6824 = vsel %vm6812, %v6786, 0.0
        %v6825 = vadd.f32 %v6823, %v6824
        %v6826 = vsel %vm6812, %v6787, 0.0
        %v6827 = vadd.f32 %v6825, %v6826
        %v6828 = vsel %vm6812, %v6788, 0.0
        %v6829 = vadd.f32 %v6827, %v6828
        %v6830 = vsel %vm6812, %v6789, 0.0
        %v6831 = vadd.f32 %v6829, %v6830
        %v6832 = vsel %vm6812, %v6790, 0.0
        %v6833 = vadd.f32 %v6831, %v6832
        %v6834 = vsel %vm6812, %v6791, 0.0
        %v6835 = vadd.f32 %v6833, %v6834
        %v6836 = vsel %vm6812, %v6792, 0.0
        %v6837 = vadd.f32 %v6835, %v6836
        %v6838 = vsel %vm6812, %v6793, 0.0
        %v6839 = vadd.f32 %v6837, %v6838
        %v6840 = vsel %vm6812, %v6794, 0.0
        %v6841 = vadd.f32 %v6839, %v6840
        %v6842 = vsel %vm6812, %v6795, 0.0
        %v6843 = vadd.f32 %v6841, %v6842
        %v6844 = vsel %vm6812, %v6796, 0.0
        %v6845 = vadd.f32 %v6843, %v6844
        %v6846 = vsel %vm6812, %v6797, 0.0
        %v6847 = vadd.f32 %v6845, %v6846
        %v6848 = vsel %vm6812, %v6798, 0.0
        %v6849 = vadd.f32 %v6847, %v6848
        %v6850 = vsel %vm6812, %v6799, 0.0
        %v6851 = vadd.f32 %v6849, %v6850
        %v6852 = vsel %vm6812, %v6800, 0.0
        %v6853 = vadd.f32 %v6851, %v6852
        %v6854 = vsel %vm6812, %v6801, 0.0
        %v6855 = vadd.f32 %v6853, %v6854
        %v6856 = vsel %vm6812, %v6802, 0.0
        %v6857 = vadd.f32 %v6855, %v6856
        %v6858 = vsel %vm6812, %v6803, 0.0
        %v6859 = vadd.f32 %v6857, %v6858
        %v6860 = vsel %vm6812, %v6804, 0.0
        %v6861 = vadd.f32 %v6859, %v6860
        %v6862 = vsel %vm6812, %v6805, 0.0
        %v6863 = vadd.f32 %v6861, %v6862
        %v6864 = vsel %vm6812, %v6806, 0.0
        %v6865 = vadd.f32 %v6863, %v6864
        %v6866 = vsel %vm6812, %v6807, 0.0
        %v6867 = vadd.f32 %v6865, %v6866
        %v6868 = vsel %vm6812, %v6808, 0.0
        %v6869 = vadd.f32 %v6867, %v6868
        %v6870 = vsel %vm6812, %v6809, 0.0
        %v6871 = vadd.f32 %v6869, %v6870
        %v6872 = vsel %vm6812, %v6810, 0.0
        %v6873 = vadd.f32 %v6871, %v6872
        %v6874 = vsel %vm6812, %v6811, 0.0
        %v6875 = vadd.f32 %v6873, %v6874
        %v6876 = vrot.slane %v6875, 4
        %v6877 = vadd.f32 %v6875, %v6876
        %v6878 = vrot.slane %v6877, 2
        %v6879 = vadd.f32 %v6877, %v6878
        %v6880 = vrot.slane %v6879, 1
        %v6881 = vadd.f32 %v6879, %v6880
        %v6882 = vmul.f32 %v6881, 0.00390625
        %v6883 = vsub.f32 %v6780, %v6882
        %v6884 = vsub.f32 %v6781, %v6882
        %v6885 = vsub.f32 %v6782, %v6882
        %v6886 = vsub.f32 %v6783, %v6882
        %v6887 = vsub.f32 %v6784, %v6882
        %v6888 = vsub.f32 %v6785, %v6882
        %v6889 = vsub.f32 %v6786, %v6882
        %v6890 = vsub.f32 %v6787, %v6882
        %v6891 = vsub.f32 %v6788, %v6882
        %v6892 = vsub.f32 %v6789, %v6882
        %v6893 = vsub.f32 %v6790, %v6882
        %v6894 = vsub.f32 %v6791, %v6882
        %v6895 = vsub.f32 %v6792, %v6882
        %v6896 = vsub.f32 %v6793, %v6882
        %v6897 = vsub.f32 %v6794, %v6882
        %v6898 = vsub.f32 %v6795, %v6882
        %v6899 = vsub.f32 %v6796, %v6882
        %v6900 = vsub.f32 %v6797, %v6882
        %v6901 = vsub.f32 %v6798, %v6882
        %v6902 = vsub.f32 %v6799, %v6882
        %v6903 = vsub.f32 %v6800, %v6882
        %v6904 = vsub.f32 %v6801, %v6882
        %v6905 = vsub.f32 %v6802, %v6882
        %v6906 = vsub.f32 %v6803, %v6882
        %v6907 = vsub.f32 %v6804, %v6882
        %v6908 = vsub.f32 %v6805, %v6882
        %v6909 = vsub.f32 %v6806, %v6882
        %v6910 = vsub.f32 %v6807, %v6882
        %v6911 = vsub.f32 %v6808, %v6882
        %v6912 = vsub.f32 %v6809, %v6882
        %v6913 = vsub.f32 %v6810, %v6882
        %v6914 = vsub.f32 %v6811, %v6882
        %v6915 = vmul.f32 %v6883, %v6883
        %v6916 = vmul.f32 %v6884, %v6884
        %v6917 = vmul.f32 %v6885, %v6885
        %v6918 = vmul.f32 %v6886, %v6886
        %v6919 = vmul.f32 %v6887, %v6887
        %v6920 = vmul.f32 %v6888, %v6888
        %v6921 = vmul.f32 %v6889, %v6889
        %v6922 = vmul.f32 %v6890, %v6890
        %v6923 = vmul.f32 %v6891, %v6891
        %v6924 = vmul.f32 %v6892, %v6892
        %v6925 = vmul.f32 %v6893, %v6893
        %v6926 = vmul.f32 %v6894, %v6894
        %v6927 = vmul.f32 %v6895, %v6895
        %v6928 = vmul.f32 %v6896, %v6896
        %v6929 = vmul.f32 %v6897, %v6897
        %v6930 = vmul.f32 %v6898, %v6898
        %v6931 = vmul.f32 %v6899, %v6899
        %v6932 = vmul.f32 %v6900, %v6900
        %v6933 = vmul.f32 %v6901, %v6901
        %v6934 = vmul.f32 %v6902, %v6902
        %v6935 = vmul.f32 %v6903, %v6903
        %v6936 = vmul.f32 %v6904, %v6904
        %v6937 = vmul.f32 %v6905, %v6905
        %v6938 = vmul.f32 %v6906, %v6906
        %v6939 = vmul.f32 %v6907, %v6907
        %v6940 = vmul.f32 %v6908, %v6908
        %v6941 = vmul.f32 %v6909, %v6909
        %v6942 = vmul.f32 %v6910, %v6910
        %v6943 = vmul.f32 %v6911, %v6911
        %v6944 = vmul.f32 %v6912, %v6912
        %v6945 = vmul.f32 %v6913, %v6913
        %v6946 = vmul.f32 %v6914, %v6914
        %v6947 = vsel %vm6812, %v6915, 0.0
        %v6948 = vsel %vm6812, %v6916, 0.0
        %v6949 = vadd.f32 %v6947, %v6948
        %v6950 = vsel %vm6812, %v6917, 0.0
        %v6951 = vadd.f32 %v6949, %v6950
        %v6952 = vsel %vm6812, %v6918, 0.0
        %v6953 = vadd.f32 %v6951, %v6952
        %v6954 = vsel %vm6812, %v6919, 0.0
        %v6955 = vadd.f32 %v6953, %v6954
        %v6956 = vsel %vm6812, %v6920, 0.0
        %v6957 = vadd.f32 %v6955, %v6956
        %v6958 = vsel %vm6812, %v6921, 0.0
        %v6959 = vadd.f32 %v6957, %v6958
        %v6960 = vsel %vm6812, %v6922, 0.0
        %v6961 = vadd.f32 %v6959, %v6960
        %v6962 = vsel %vm6812, %v6923, 0.0
        %v6963 = vadd.f32 %v6961, %v6962
        %v6964 = vsel %vm6812, %v6924, 0.0
        %v6965 = vadd.f32 %v6963, %v6964
        %v6966 = vsel %vm6812, %v6925, 0.0
        %v6967 = vadd.f32 %v6965, %v6966
        %v6968 = vsel %vm6812, %v6926, 0.0
        %v6969 = vadd.f32 %v6967, %v6968
        %v6970 = vsel %vm6812, %v6927, 0.0
        %v6971 = vadd.f32 %v6969, %v6970
        %v6972 = vsel %vm6812, %v6928, 0.0
        %v6973 = vadd.f32 %v6971, %v6972
        %v6974 = vsel %vm6812, %v6929, 0.0
        %v6975 = vadd.f32 %v6973, %v6974
        %v6976 = vsel %vm6812, %v6930, 0.0
        %v6977 = vadd.f32 %v6975, %v6976
        %v6978 = vsel %vm6812, %v6931, 0.0
        %v6979 = vadd.f32 %v6977, %v6978
        %v6980 = vsel %vm6812, %v6932, 0.0
        %v6981 = vadd.f32 %v6979, %v6980
        %v6982 = vsel %vm6812, %v6933, 0.0
        %v6983 = vadd.f32 %v6981, %v6982
        %v6984 = vsel %vm6812, %v6934, 0.0
        %v6985 = vadd.f32 %v6983, %v6984
        %v6986 = vsel %vm6812, %v6935, 0.0
        %v6987 = vadd.f32 %v6985, %v6986
        %v6988 = vsel %vm6812, %v6936, 0.0
        %v6989 = vadd.f32 %v6987, %v6988
        %v6990 = vsel %vm6812, %v6937, 0.0
        %v6991 = vadd.f32 %v6989, %v6990
        %v6992 = vsel %vm6812, %v6938, 0.0
        %v6993 = vadd.f32 %v6991, %v6992
        %v6994 = vsel %vm6812, %v6939, 0.0
        %v6995 = vadd.f32 %v6993, %v6994
        %v6996 = vsel %vm6812, %v6940, 0.0
        %v6997 = vadd.f32 %v6995, %v6996
        %v6998 = vsel %vm6812, %v6941, 0.0
        %v6999 = vadd.f32 %v6997, %v6998
        %v7000 = vsel %vm6812, %v6942, 0.0
        %v7001 = vadd.f32 %v6999, %v7000
        %v7002 = vsel %vm6812, %v6943, 0.0
        %v7003 = vadd.f32 %v7001, %v7002
        %v7004 = vsel %vm6812, %v6944, 0.0
        %v7005 = vadd.f32 %v7003, %v7004
        %v7006 = vsel %vm6812, %v6945, 0.0
        %v7007 = vadd.f32 %v7005, %v7006
        %v7008 = vsel %vm6812, %v6946, 0.0
        %v7009 = vadd.f32 %v7007, %v7008
        %v7010 = vrot.slane %v7009, 4
        %v7011 = vadd.f32 %v7009, %v7010
        %v7012 = vrot.slane %v7011, 2
        %v7013 = vadd.f32 %v7011, %v7012
        %v7014 = vrot.slane %v7013, 1
        %v7015 = vadd.f32 %v7013, %v7014
        %v7016 = vmul.f32 %v7015, 0.00390625
        %v7017 = vadd.f32 %v7016, 1e-05
        %v7018 = vrsqrt.pop %v7017
        %v7019 = vmul.f32 %v6883, %v7018
        %v7020 = vmul.f32 %v6884, %v7018
        %v7021 = vmul.f32 %v6885, %v7018
        %v7022 = vmul.f32 %v6886, %v7018
        %v7023 = vmul.f32 %v6887, %v7018
        %v7024 = vmul.f32 %v6888, %v7018
        %v7025 = vmul.f32 %v6889, %v7018
        %v7026 = vmul.f32 %v6890, %v7018
        %v7027 = vmul.f32 %v6891, %v7018
        %v7028 = vmul.f32 %v6892, %v7018
        %v7029 = vmul.f32 %v6893, %v7018
        %v7030 = vmul.f32 %v6894, %v7018
        %v7031 = vmul.f32 %v6895, %v7018
        %v7032 = vmul.f32 %v6896, %v7018
        %v7033 = vmul.f32 %v6897, %v7018
        %v7034 = vmul.f32 %v6898, %v7018
        %v7035 = vmul.f32 %v6899, %v7018
        %v7036 = vmul.f32 %v6900, %v7018
        %v7037 = vmul.f32 %v6901, %v7018
        %v7038 = vmul.f32 %v6902, %v7018
        %v7039 = vmul.f32 %v6903, %v7018
        %v7040 = vmul.f32 %v6904, %v7018
        %v7041 = vmul.f32 %v6905, %v7018
        %v7042 = vmul.f32 %v6906, %v7018
        %v7043 = vmul.f32 %v6907, %v7018
        %v7044 = vmul.f32 %v6908, %v7018
        %v7045 = vmul.f32 %v6909, %v7018
        %v7046 = vmul.f32 %v6910, %v7018
        %v7047 = vmul.f32 %v6911, %v7018
        %v7048 = vmul.f32 %v6912, %v7018
        %v7049 = vmul.f32 %v6913, %v7018
        %v7050 = vmul.f32 %v6914, %v7018
        %v7051 = vmul.f32 %v7019, %v6716
        %v7052 = vmul.f32 %v7020, %v6718
        %v7053 = vmul.f32 %v7021, %v6720
        %v7054 = vmul.f32 %v7022, %v6722
        %v7055 = vmul.f32 %v7023, %v6724
        %v7056 = vmul.f32 %v7024, %v6726
        %v7057 = vmul.f32 %v7025, %v6728
        %v7058 = vmul.f32 %v7026, %v6730
        %v7059 = vmul.f32 %v7027, %v6732
        %v7060 = vmul.f32 %v7028, %v6734
        %v7061 = vmul.f32 %v7029, %v6736
        %v7062 = vmul.f32 %v7030, %v6738
        %v7063 = vmul.f32 %v7031, %v6740
        %v7064 = vmul.f32 %v7032, %v6742
        %v7065 = vmul.f32 %v7033, %v6744
        %v7066 = vmul.f32 %v7034, %v6746
        %v7067 = vmul.f32 %v7035, %v6748
        %v7068 = vmul.f32 %v7036, %v6750
        %v7069 = vmul.f32 %v7037, %v6752
        %v7070 = vmul.f32 %v7038, %v6754
        %v7071 = vmul.f32 %v7039, %v6756
        %v7072 = vmul.f32 %v7040, %v6758
        %v7073 = vmul.f32 %v7041, %v6760
        %v7074 = vmul.f32 %v7042, %v6762
        %v7075 = vmul.f32 %v7043, %v6764
        %v7076 = vmul.f32 %v7044, %v6766
        %v7077 = vmul.f32 %v7045, %v6768
        %v7078 = vmul.f32 %v7046, %v6770
        %v7079 = vmul.f32 %v7047, %v6772
        %v7080 = vmul.f32 %v7048, %v6774
        %v7081 = vmul.f32 %v7049, %v6776
        %v7082 = vmul.f32 %v7050, %v6778
        %v7083 = vadd.f32 %v7051, %v6717
        %v7084 = vadd.f32 %v7052, %v6719
        %v7085 = vadd.f32 %v7053, %v6721
        %v7086 = vadd.f32 %v7054, %v6723
        %v7087 = vadd.f32 %v7055, %v6725
        %v7088 = vadd.f32 %v7056, %v6727
        %v7089 = vadd.f32 %v7057, %v6729
        %v7090 = vadd.f32 %v7058, %v6731
        %v7091 = vadd.f32 %v7059, %v6733
        %v7092 = vadd.f32 %v7060, %v6735
        %v7093 = vadd.f32 %v7061, %v6737
        %v7094 = vadd.f32 %v7062, %v6739
        %v7095 = vadd.f32 %v7063, %v6741
        %v7096 = vadd.f32 %v7064, %v6743
        %v7097 = vadd.f32 %v7065, %v6745
        %v7098 = vadd.f32 %v7066, %v6747
        %v7099 = vadd.f32 %v7067, %v6749
        %v7100 = vadd.f32 %v7068, %v6751
        %v7101 = vadd.f32 %v7069, %v6753
        %v7102 = vadd.f32 %v7070, %v6755
        %v7103 = vadd.f32 %v7071, %v6757
        %v7104 = vadd.f32 %v7072, %v6759
        %v7105 = vadd.f32 %v7073, %v6761
        %v7106 = vadd.f32 %v7074, %v6763
        %v7107 = vadd.f32 %v7075, %v6765
        %v7108 = vadd.f32 %v7076, %v6767
        %v7109 = vadd.f32 %v7077, %v6769
        %v7110 = vadd.f32 %v7078, %v6771
        %v7111 = vadd.f32 %v7079, %v6773
        %v7112 = vadd.f32 %v7080, %v6775
        %v7113 = vadd.f32 %v7081, %v6777
        %v7114 = vadd.f32 %v7082, %v6779
        %v7115 = vpack.c.bf16 %v7084, %v7083
        %v7116 = vpack.c.bf16 %v7086, %v7085
        %v7117 = vpack.c.bf16 %v7088, %v7087
        %v7118 = vpack.c.bf16 %v7090, %v7089
        %v7119 = vpack.c.bf16 %v7092, %v7091
        %v7120 = vpack.c.bf16 %v7094, %v7093
        %v7121 = vpack.c.bf16 %v7096, %v7095
        %v7122 = vpack.c.bf16 %v7098, %v7097
        %v7123 = vpack.c.bf16 %v7100, %v7099
        %v7124 = vpack.c.bf16 %v7102, %v7101
        %v7125 = vpack.c.bf16 %v7104, %v7103
        %v7126 = vpack.c.bf16 %v7106, %v7105
        %v7127 = vpack.c.bf16 %v7108, %v7107
        %v7128 = vpack.c.bf16 %v7110, %v7109
        %v7129 = vpack.c.bf16 %v7112, %v7111
        %v7130 = vpack.c.bf16 %v7114, %v7113
        %v7131 = vld [vmem:[%s6] sm:$0x3]
        %v7133 = vsel %vm6812, %v7115, 0
        %v7136 = vsel %vm6812, %v7116, 0
        %v7139 = vsel %vm6812, %v7117, 0
        %v7142 = vsel %vm6812, %v7118, 0
        %v7145 = vsel %vm6812, %v7119, 0
        %v7148 = vsel %vm6812, %v7120, 0
        %v7151 = vsel %vm6812, %v7121, 0
        %v7154 = vsel %vm6812, %v7122, 0
        %v7157 = vsel %vm6812, %v7123, 0
        %v7160 = vsel %vm6812, %v7124, 0
        %v7163 = vsel %vm6812, %v7125, 0
        %v7166 = vsel %vm6812, %v7126, 0
        %v7169 = vsel %vm6812, %v7127, 0
        %v7172 = vsel %vm6812, %v7128, 0
        %v7175 = vsel %vm6812, %v7129, 0
        %v7178 = vsel %vm6812, %v7130, 0
        %vm7180 = vcmask 1041408
        %v7182 = vsel %vm7180, %v7131, 0
        %7184 = vmatprep.subr.bf16.mxu0 0
        %7185 = vmatpush1.bf16.msra.mxu0 %v7182
        %7186 = vmatprep.subr.bf16.mxu0 0
        %7187 = vmatpush1.bf16.msra.mxu0 0
        %7188 = vmatprep.subr.bf16.mxu0 0
        %7189 = vmatpush1.bf16.msra.mxu0 0
        %7190 = vmatprep.subr.bf16.mxu0 0
        %7191 = vmatpush1.bf16.msra.mxu0 0
        %7192 = vmatprep.subr.bf16.mxu0 0
        %7193 = vmatpush1.bf16.msra.mxu0 0
        %7194 = vmatprep.subr.bf16.mxu0 0
        %7195 = vmatpush1.bf16.msra.mxu0 0
        %7196 = vmatprep.subr.bf16.mxu0 0
        %7197 = vmatpush1.bf16.msra.mxu0 0
        %7198 = vmatprep.subr.bf16.mxu0 0
        %7199 = vmatpush1.bf16.msra.mxu0 0
        %7200 = vmatprep.subr.bf16.mxu0 0
        %7201 = vmatpush1.bf16.msra.mxu0 0
        %7202 = vmatprep.subr.bf16.mxu0 0
        %7203 = vmatpush1.bf16.msra.mxu0 0
        %7204 = vmatprep.subr.bf16.mxu0 0
        %7205 = vmatpush1.bf16.msra.mxu0 0
        %7206 = vmatprep.subr.bf16.mxu0 0
        %7207 = vmatpush1.bf16.msra.mxu0 0
        %7208 = vmatprep.subr.bf16.mxu0 0
        %7209 = vmatpush1.bf16.msra.mxu0 0
        %7210 = vmatprep.subr.bf16.mxu0 0
        %7211 = vmatpush1.bf16.msra.mxu0 0
        %7212 = vmatprep.subr.bf16.mxu0 0
        %7213 = vmatpush1.bf16.msra.mxu0 0
        %7214 = vmatprep.subr.bf16.mxu0 0
        %7215 = vmatpush1.bf16.msra.mxu0 0
        %7216 = vmatprep.mubr.bf16.mxu0 0
        %7217 = vmatmul.mubr.bf16.gmra.mrb[0].mxu0 %v7133
        %v7218 = vpop.f32.mrb[0].mxu0
        %v7219 = vadd.f32 0.0, %v7218
        %v7220 = vpop.f32.mrb[0].mxu0
        %v7221 = vpop.f32.mrb[0].mxu0
        %v7222 = vadd.f32 0.0, %v7221
        %v7223 = vpop.f32.mrb[0].mxu0
        %7224 = vmatprep.mubr.bf16.mxu0 0
        %7225 = vmatmul.mubr.bf16.gmra.mrb[0].mxu0 %v7136
        %v7226 = vpop.f32.mrb[0].mxu0
        %v7227 = vadd.f32 0.0, %v7226
        %v7228 = vpop.f32.mrb[0].mxu0
        %v7229 = vpop.f32.mrb[0].mxu0
        %v7230 = vadd.f32 0.0, %v7229
        %v7231 = vpop.f32.mrb[0].mxu0
        %7232 = vmatprep.mubr.bf16.mxu0 0
        %7233 = vmatmul.mubr.bf16.gmra.mrb[0].mxu0 %v7139
        %v7234 = vpop.f32.mrb[0].mxu0
        %v7235 = vadd.f32 0.0, %v7234
        %v7236 = vpop.f32.mrb[0].mxu0
        %v7237 = vpop.f32.mrb[0].mxu0
        %v7238 = vadd.f32 0.0, %v7237
        %v7239 = vpop.f32.mrb[0].mxu0
        %7240 = vmatprep.mubr.bf16.mxu0 0
        %7241 = vmatmul.mubr.bf16.gmra.mrb[0].mxu0 %v7142
        %v7242 = vpop.f32.mrb[0].mxu0
        %v7243 = vadd.f32 0.0, %v7242
        %v7244 = vpop.f32.mrb[0].mxu0
        %v7245 = vpop.f32.mrb[0].mxu0
        %v7246 = vadd.f32 0.0, %v7245
        %v7247 = vpop.f32.mrb[0].mxu0
        %7248 = vmatprep.mubr.bf16.mxu0 0
        %7249 = vmatmul.mubr.bf16.gmra.mrb[0].mxu0 %v7145
        %v7250 = vpop.f32.mrb[0].mxu0
        %v7251 = vadd.f32 0.0, %v7250
        %v7252 = vpop.f32.mrb[0].mxu0
        %v7253 = vpop.f32.mrb[0].mxu0
        %v7254 = vadd.f32 0.0, %v7253
        %v7255 = vpop.f32.mrb[0].mxu0
        %7256 = vmatprep.mubr.bf16.mxu0 0
        %7257 = vmatmul.mubr.bf16.gmra.mrb[0].mxu0 %v7148
        %v7258 = vpop.f32.mrb[0].mxu0
        %v7259 = vadd.f32 0.0, %v7258
        %v7260 = vpop.f32.mrb[0].mxu0
        %v7261 = vpop.f32.mrb[0].mxu0
        %v7262 = vadd.f32 0.0, %v7261
        %v7263 = vpop.f32.mrb[0].mxu0
        %7264 = vmatprep.mubr.bf16.mxu0 0
        %7265 = vmatmul.mubr.bf16.gmra.mrb[0].mxu0 %v7151
        %v7266 = vpop.f32.mrb[0].mxu0
        %v7267 = vadd.f32 0.0, %v7266
        %v7268 = vpop.f32.mrb[0].mxu0
        %v7269 = vpop.f32.mrb[0].mxu0
        %v7270 = vadd.f32 0.0, %v7269
        %v7271 = vpop.f32.mrb[0].mxu0
        %7272 = vmatprep.mubr.bf16.mxu0 0
        %7273 = vmatmul.mubr.bf16.gmra.mrb[0].mxu0 %v7154
        %v7274 = vpop.f32.mrb[0].mxu0
        %v7275 = vadd.f32 0.0, %v7274
        %v7276 = vpop.f32.mrb[0].mxu0
        %v7277 = vpop.f32.mrb[0].mxu0
        %v7278 = vadd.f32 0.0, %v7277
        %v7279 = vpop.f32.mrb[0].mxu0
        %7280 = vmatprep.mubr.bf16.mxu0 0
        %7281 = vmatmul.mubr.bf16.gmra.mrb[0].mxu0 %v7157
        %v7282 = vpop.f32.mrb[0].mxu0
        %v7283 = vadd.f32 0.0, %v7282
        %v7284 = vpop.f32.mrb[0].mxu0
        %v7285 = vpop.f32.mrb[0].mxu0
        %v7286 = vadd.f32 0.0, %v7285
        %v7287 = vpop.f32.mrb[0].mxu0
        %7288 = vmatprep.mubr.bf16.mxu0 0
        %7289 = vmatmul.mubr.bf16.gmra.mrb[0].mxu0 %v7160
        %v7290 = vpop.f32.mrb[0].mxu0
        %v7291 = vadd.f32 0.0, %v7290
        %v7292 = vpop.f32.mrb[0].mxu0
        %v7293 = vpop.f32.mrb[0].mxu0
        %v7294 = vadd.f32 0.0, %v7293
        %v7295 = vpop.f32.mrb[0].mxu0
        %7296 = vmatprep.mubr.bf16.mxu0 0
        %7297 = vmatmul.mubr.bf16.gmra.mrb[0].mxu0 %v7163
        %v7298 = vpop.f32.mrb[0].mxu0
        %v7299 = vadd.f32 0.0, %v7298
        %v7300 = vpop.f32.mrb[0].mxu0
        %v7301 = vpop.f32.mrb[0].mxu0
        %v7302 = vadd.f32 0.0, %v7301
        %v7303 = vpop.f32.mrb[0].mxu0
        %7304 = vmatprep.mubr.bf16.mxu0 0
        %7305 = vmatmul.mubr.bf16.gmra.mrb[0].mxu0 %v7166
        %v7306 = vpop.f32.mrb[0].mxu0
        %v7307 = vadd.f32 0.0, %v7306
        %v7308 = vpop.f32.mrb[0].mxu0
        %v7309 = vpop.f32.mrb[0].mxu0
        %v7310 = vadd.f32 0.0, %v7309
        %v7311 = vpop.f32.mrb[0].mxu0
        %7312 = vmatprep.mubr.bf16.mxu0 0
        %7313 = vmatmul.mubr.bf16.gmra.mrb[0].mxu0 %v7169
        %v7314 = vpop.f32.mrb[0].mxu0
        %v7315 = vadd.f32 0.0, %v7314
        %v7316 = vpop.f32.mrb[0].mxu0
        %v7317 = vpop.f32.mrb[0].mxu0
        %v7318 = vadd.f32 0.0, %v7317
        %v7319 = vpop.f32.mrb[0].mxu0
        %7320 = vmatprep.mubr.bf16.mxu0 0
        %7321 = vmatmul.mubr.bf16.gmra.mrb[0].mxu0 %v7172
        %v7322 = vpop.f32.mrb[0].mxu0
        %v7323 = vadd.f32 0.0, %v7322
        %v7324 = vpop.f32.mrb[0].mxu0
        %v7325 = vpop.f32.mrb[0].mxu0
        %v7326 = vadd.f32 0.0, %v7325
        %v7327 = vpop.f32.mrb[0].mxu0
        %7328 = vmatprep.mubr.bf16.mxu0 0
        %7329 = vmatmul.mubr.bf16.gmra.mrb[0].mxu0 %v7175
        %v7330 = vpop.f32.mrb[0].mxu0
        %v7331 = vadd.f32 0.0, %v7330
        %v7332 = vpop.f32.mrb[0].mxu0
        %v7333 = vpop.f32.mrb[0].mxu0
        %v7334 = vadd.f32 0.0, %v7333
        %v7335 = vpop.f32.mrb[0].mxu0
        %7336 = vmatprep.mubr.bf16.mxu0 0
        %7337 = vmatmul.mubr.bf16.gmra.mrb[0].mxu0 %v7178
        %v7338 = vpop.f32.mrb[0].mxu0
        %v7339 = vadd.f32 0.0, %v7338
        %v7340 = vpop.f32.mrb[0].mxu0
        %v7341 = vpop.f32.mrb[0].mxu0
        %v7342 = vadd.f32 0.0, %v7341
        %v7343 = vpop.f32.mrb[0].mxu0
        %7344 = vdwg.mxu0
        %7345 = vst.msk [vmem:[%s313] sm:$0xff] %vm494, %v7219
        %7346 = vst.msk [vmem:[%s313 + $0x8] sm:$0xff] %vm494, %v7222
        %7347 = vst.msk [vmem:[%s313 + $0x10] sm:$0xff] %vm494, %v7227
        %7348 = vst.msk [vmem:[%s313 + $0x18] sm:$0xff] %vm494, %v7230
        %7349 = vst.msk [vmem:[%s313 + $0x20] sm:$0xff] %vm494, %v7235
        %7350 = vst.msk [vmem:[%s313 + $0x28] sm:$0xff] %vm494, %v7238
        %7351 = vst.msk [vmem:[%s313 + $0x30] sm:$0xff] %vm494, %v7243
        %7352 = vst.msk [vmem:[%s313 + $0x38] sm:$0xff] %vm494, %v7246
        %7353 = vst.msk [vmem:[%s313 + $0x40] sm:$0xff] %vm494, %v7251
        %7354 = vst.msk [vmem:[%s313 + $0x48] sm:$0xff] %vm494, %v7254
        %7355 = vst.msk [vmem:[%s313 + $0x50] sm:$0xff] %vm494, %v7259
        %7356 = vst.msk [vmem:[%s313 + $0x58] sm:$0xff] %vm494, %v7262
        %7357 = vst.msk [vmem:[%s313 + $0x60] sm:$0xff] %vm494, %v7267
        %7358 = vst.msk [vmem:[%s313 + $0x68] sm:$0xff] %vm494, %v7270
        %7359 = vst.msk [vmem:[%s313 + $0x70] sm:$0xff] %vm494, %v7275
        %7360 = vst.msk [vmem:[%s313 + $0x78] sm:$0xff] %vm494, %v7278
        %7361 = vst.msk [vmem:[%s313 + $0x80] sm:$0xff] %vm494, %v7283
        %7362 = vst.msk [vmem:[%s313 + $0x88] sm:$0xff] %vm494, %v7286
        %7363 = vst.msk [vmem:[%s313 + $0x90] sm:$0xff] %vm494, %v7291
        %7364 = vst.msk [vmem:[%s313 + $0x98] sm:$0xff] %vm494, %v7294
        %7365 = vst.msk [vmem:[%s313 + $0xa0] sm:$0xff] %vm494, %v7299
        %7366 = vst.msk [vmem:[%s313 + $0xa8] sm:$0xff] %vm494, %v7302
        %7367 = vst.msk [vmem:[%s313 + $0xb0] sm:$0xff] %vm494, %v7307
        %7368 = vst.msk [vmem:[%s313 + $0xb8] sm:$0xff] %vm494, %v7310
        %7369 = vst.msk [vmem:[%s313 + $0xc0] sm:$0xff] %vm494, %v7315
        %7370 = vst.msk [vmem:[%s313 + $0xc8] sm:$0xff] %vm494, %v7318
        %7371 = vst.msk [vmem:[%s313 + $0xd0] sm:$0xff] %vm494, %v7323
        %7372 = vst.msk [vmem:[%s313 + $0xd8] sm:$0xff] %vm494, %v7326
        %7373 = vst.msk [vmem:[%s313 + $0xe0] sm:$0xff] %vm494, %v7331
        %7374 = vst.msk [vmem:[%s313 + $0xe8] sm:$0xff] %vm494, %v7334
        %7375 = vst.msk [vmem:[%s313 + $0xf0] sm:$0xff] %vm494, %v7339
        %7376 = vst.msk [vmem:[%s313 + $0xf8] sm:$0xff] %vm494, %v7342
        %p7377 = scmp.lt.s32.totalorder %s19, 1
        %s7378 = scalar_select %p7377, %s19, 1
        %s7379 = smul.addr %s7378, 32
        %s7380 = smul.addr %s7379, 8
        %s7381 = scalar_lea.vmem %s7, %s7380
        // Predicated region
        $region57: #{tpu_custom_call.1} parent=47 // pred_check
          %p7382 = pneg %p194
        $region58: #{tpu_custom_call.1} parent=47 // pred_check_branch
          %7384 = sbr.rel (%p7382) target = $region60
        $region59: #{tpu_custom_call.1} parent=47 // pred_region
          _
        $region60: #{tpu_custom_call.1} parent=47 // pred_fallthru
          _
      $region48: #{tpu_custom_call.1} parent=5 // pred_fallthru
        _
      %p7385 = scmp.le.s32.totalorder 2, %s14
      // Predicated region
      $region61: #{tpu_custom_call.1} parent=5 // pred_check
        %p7386 = pneg %p7385
      $region62: #{tpu_custom_call.1} parent=5 // pred_check_branch
        %7388 = sbr.rel (%p7386) target = $region64
      $region63: #{tpu_custom_call.1} parent=5 // pred_region
        %s7389 = ssub.s32 %s14, 2
        // Predicated region
        $region65: #{tpu_custom_call.1} parent=63 // pred_check
          %p7390 = pneg %p200
        $region66: #{tpu_custom_call.1} parent=63 // pred_check_branch
          %7392 = sbr.rel (%p7390) target = $region68
        $region67: #{tpu_custom_call.1} parent=63 // pred_region
          %p7393 = scmp.lt.s32.totalorder %s20, 1
          %s7394 = scalar_select %p7393, %s20, 1
          %s7395 = smul.addr %s7394, 32
          %s7396 = smul.addr %s7395, 8
          %s7397 = scalar_lea.vmem %s7, %s7396
        $region68: #{tpu_custom_call.1} parent=63 // pred_fallthru
          _
      $region64: #{tpu_custom_call.1} parent=5 // pred_fallthru
        _
    $region6: #{tpu_custom_call.1} parent=1 // loop_footer
      %s18 = sadd.s32 1, %s14
    $region7: #{tpu_custom_call.1} parent=1 // loop_footer_branch
      %13 = sbr.rel target = $region3
    $region8: #{tpu_custom_call.1} parent=1 // loop_exit
      _
    %7398 = vsyncpa [#allocation5], 1
    %s7399 = scalar_lea.sflag [#allocation5], 1
    %7400 = vsyncpa %s7399, 1

</llo_original>
